<compile_context>
chip_gen: v6e
topology: v6e:2x2x1
jax: 0.10.0
libtpu: 0.0.40
codegen_flags: <defaults>
</compile_context>

<pallas_src>
import jax
import jax.numpy as jnp
from jax import lax
from jax.experimental import pallas as pl
from jax.experimental.pallas import tpu as pltpu

# ---- model dimensions (fixed by the PyTorch module / FLATTEN_SHAPE) ----
N_FILTERS = 32
EMBED_DIM = 128                    # conv "length" axis
NUM_FEATURES_SMILE = 63
VOCAB = NUM_FEATURES_SMILE + 1     # 64
OUTPUT_DIM = 128
IN_CHANNELS = 100                  # seq length of smile_deep == conv1 in_channels
K = 8                              # conv kernel size
W1_LEN = EMBED_DIM - K + 1         # 121
W2_LEN = W1_LEN - K + 1            # 114
W3_LEN = W2_LEN - K + 1            # 107
C1 = N_FILTERS                     # 32
C2 = 2 * N_FILTERS                 # 64
C3 = 3 * N_FILTERS                 # 96
FLATTEN_SHAPE = C3 * W3_LEN        # 10272

# ---- in-kernel (lane-padded) dimensions ----
CP = 128                           # all channel axes padded to 128 lanes
KCP = K * CP                       # 1024 : im2col contraction width
FLAT_PAD = W3_LEN * CP             # 13696: padded flatten width fed to fc1


def _embed_conv_kernel(idx_ref, tableT_ref, w1_ref, b1_ref, w2_ref, b2_ref,
                       w3_ref, b3_ref, o_ref, x0_scr, x1_scr, x2_scr):
    """BT batch elements per grid step: embedding + 3x (im2col conv1d + relu).

    Layout inside the kernel is (length, channels) with channels padded to 128
    lanes; conv weights arrive as (K*128, 128) im2col matrices.
    """
    bt_block = idx_ref.shape[0]
    # Hoisted: same iota for every element (JAX does not CSE broadcasts).
    vocab_iota = lax.broadcasted_iota(jnp.int32, (VOCAB, CP), 0)

    for bt in range(bt_block):                       # static unroll over the block
        # --- embedding lookup as one-hot matmul (MXU) ---
        idx_row = idx_ref[pl.ds(bt, 1), :]                         # (1, 128) int32
        one_hot = jnp.where(vocab_iota == idx_row, 1.0, 0.0)       # (64, 128) f32
        # x0[t, ci] = table[idx[ci], t]  -> (128, 128); padded cols are exactly 0.
        x0_scr[...] = jnp.dot(tableT_ref[...], one_hot,
                              preferred_element_type=jnp.float32)

        # --- conv1: im2col (121, 1024) @ (1024, 128) ---
        p1 = jnp.concatenate(
            [x0_scr[pl.ds(k, W1_LEN), :] for k in range(K)], axis=1)
        x1_scr[...] = jnp.maximum(
            jnp.dot(p1, w1_ref[...], preferred_element_type=jnp.float32)
            + b1_ref[...], 0.0)                                    # (121, 128)

        # --- conv2: im2col (114, 1024) @ (1024, 128) ---
        p2 = jnp.concatenate(
            [x1_scr[pl.ds(k, W2_LEN), :] for k in range(K)], axis=1)
        x2_scr[...] = jnp.maximum(
            jnp.dot(p2, w2_ref[...], preferred_element_type=jnp.float32)
            + b2_ref[...], 0.0)                                    # (114, 128)

        # --- conv3: im2col (107, 1024) @ (1024, 128), lane-dense output ---
        p3 = jnp.concatenate(
            [x2_scr[pl.ds(k, W3_LEN), :] for k in range(K)], axis=1)
        o_ref[bt] = jnp.maximum(
            jnp.dot(p3, w3_ref[...], preferred_element_type=jnp.float32)
            + b3_ref[...], 0.0)                                    # (107, 128)


def _fc_kernel(x_ref, w_ref, b_ref, o_ref):
    """(BT, 13696) @ (13696, 128) + bias  (fc_w rows pre-permuted/padded)."""
    o_ref[...] = jnp.dot(x_ref[...], w_ref[...],
                         preferred_element_type=jnp.float32) + b_ref[...]


def embedding_smile_forward(smile_idx, p, block_b=8):
    """smile_idx: int (B, 100) in [0, 64). Returns (B, 128) float32."""
    B = smile_idx.shape[0]
    bt = min(block_b, B)
    b_pad = ((B + bt - 1) // bt) * bt
    n_blocks = b_pad // bt

    # ---- glue: parameter / input re-layouts (PyTorch layouts -> kernel layouts) ----
    idx = smile_idx.astype(jnp.int32)
    # pad token axis 100->128 and batch to b_pad with out-of-vocab value (never matches)
    idx_pad = jnp.full((b_pad, CP), VOCAB, jnp.int32).at[:B, :IN_CHANNELS].set(idx)

    tableT = p["table"].T.astype(jnp.float32)                      # (128, 64)

    def conv_w(w, cin, cout):
        # torch (cout, cin, K) -> im2col (K*128, 128), row index = k*128 + ci
        wt = jnp.transpose(w, (2, 1, 0)).astype(jnp.float32)       # (K, cin, cout)
        wp = jnp.zeros((K, CP, CP), jnp.float32).at[:, :cin, :cout].set(wt)
        return wp.reshape(KCP, CP)

    def conv_b(b, cout):
        return jnp.zeros((1, CP), jnp.float32).at[0, :cout].set(b.astype(jnp.float32))

    w1p, b1p = conv_w(p["w1"], IN_CHANNELS, C1), conv_b(p["b1"], C1)
    w2p, b2p = conv_w(p["w2"], C1, C2), conv_b(p["b2"], C2)
    w3p, b3p = conv_w(p["w3"], C2, C3), conv_b(p["b3"], C3)

    # fc1 weight: torch flat index is c*107 + w (channel-major view of (C, W));
    # kernel flatten index is w*128 + c_pad. Permute + zero-pad rows once here.
    fc_w = p["fc_w"].astype(jnp.float32).reshape(OUTPUT_DIM, C3, W3_LEN)  # (o, c, w)
    fc_w = jnp.transpose(fc_w, (2, 1, 0))                                 # (w, c, o)
    fc_wp = jnp.zeros((W3_LEN, CP, OUTPUT_DIM), jnp.float32).at[:, :C3, :].set(fc_w)
    fc_wp = fc_wp.reshape(FLAT_PAD, OUTPUT_DIM)                           # (13696, 128)
    fc_bp = p["fc_b"].astype(jnp.float32).reshape(1, OUTPUT_DIM)

    # ---- kernel 1: embedding + conv chain ----
    conv3 = pl.pallas_call(
        _embed_conv_kernel,
        out_shape=jax.ShapeDtypeStruct((b_pad, W3_LEN, CP), jnp.float32),
        grid_spec=pltpu.PrefetchScalarGridSpec(
            num_scalar_prefetch=0,
            grid=(n_blocks,),
            in_specs=[
                pl.BlockSpec((bt, CP), lambda i: (i, 0)),
                pl.BlockSpec((EMBED_DIM, VOCAB), lambda i: (0, 0)),
                pl.BlockSpec((KCP, CP), lambda i: (0, 0)),
                pl.BlockSpec((1, CP), lambda i: (0, 0)),
                pl.BlockSpec((KCP, CP), lambda i: (0, 0)),
                pl.BlockSpec((1, CP), lambda i: (0, 0)),
                pl.BlockSpec((KCP, CP), lambda i: (0, 0)),
                pl.BlockSpec((1, CP), lambda i: (0, 0)),
            ],
            out_specs=pl.BlockSpec((bt, W3_LEN, CP), lambda i: (i, 0, 0)),
            scratch_shapes=[
                pltpu.VMEM((EMBED_DIM, CP), jnp.float32),   # x0 (128, 128)
                pltpu.VMEM((W1_LEN, CP), jnp.float32),      # x1 (121, 128)
                pltpu.VMEM((W2_LEN, CP), jnp.float32),      # x2 (114, 128)
            ],
        ),
        compiler_params=pltpu.CompilerParams(
            dimension_semantics=("parallel",)),
    )(idx_pad, tableT, w1p, b1p, w2p, b2p, w3p, b3p)

    # Free row-major view: flat[b, w*128 + c] = conv3[b, w, c]  (no transpose).
    flat = conv3.reshape(b_pad, FLAT_PAD)

    # ---- kernel 2: fc1 ----
    out = pl.pallas_call(
        _fc_kernel,
        out_shape=jax.ShapeDtypeStruct((b_pad, OUTPUT_DIM), jnp.float32),
        grid_spec=pltpu.PrefetchScalarGridSpec(
            num_scalar_prefetch=0,
            grid=(n_blocks,),
            in_specs=[
                pl.BlockSpec((bt, FLAT_PAD), lambda i: (i, 0)),
                pl.BlockSpec((FLAT_PAD, OUTPUT_DIM), lambda i: (0, 0)),
                pl.BlockSpec((1, OUTPUT_DIM), lambda i: (0, 0)),
            ],
            out_specs=pl.BlockSpec((bt, OUTPUT_DIM), lambda i: (i, 0)),
        ),
        compiler_params=pltpu.CompilerParams(
            dimension_semantics=("parallel",),
            vmem_limit_bytes=32 * 1024 * 1024),   # fc_w (7 MiB) x2 + blocks, with headroom
    )(flat, fc_wp, fc_bp)

    return out[:B]


def reference_forward(smile_idx, p):
    """Pure-JAX reference following the PyTorch forward exactly."""
    x = p["table"][smile_idx]                          # (B, 100, 128) == NCW for conv1d

    def conv1d(x, w, b):
        y = jax.lax.conv_general_dilated(
            x, w, window_strides=(1,), padding="VALID",
            dimension_numbers=("NCH", "OIH", "NCH"),
            precision=jax.lax.Precision.HIGHEST)
        return y + b[None, :, None]

    x = jax.nn.relu(conv1d(x, p["w1"], p["b1"]))
    x = jax.nn.relu(conv1d(x, p["w2"], p["b2"]))
    x = jax.nn.relu(conv1d(x, p["w3"], p["b3"]))
    flat = x.reshape(x.shape[0], FLATTEN_SHAPE)
    return jnp.dot(flat, p["fc_w"].T,
                   precision=jax.lax.Precision.HIGHEST) + p["fc_b"]


if __name__ == "__main__":
    B = 2
    key = jax.random.PRNGKey(0)
    (k_idx, k_tab, k_w1, k_b1, k_w2, k_b2,
     k_w3, k_b3, k_fw, k_fb) = jax.random.split(key, 10)

    # drug.smile_deep: token indices (B, 100) in [0, 64)
    smile_idx = jax.random.randint(k_idx, (B, IN_CHANNELS), 0, VOCAB,
                                   dtype=jnp.int32)

    # deterministic synthetic parameters in PyTorch layouts
    params = {
        "table": jax.random.normal(k_tab, (VOCAB, EMBED_DIM), jnp.float32),
        "w1": 0.05 * jax.random.normal(k_w1, (C1, IN_CHANNELS, K), jnp.float32),
        "b1": 0.05 * jax.random.normal(k_b1, (C1,), jnp.float32),
        "w2": 0.05 * jax.random.normal(k_w2, (C2, C1, K), jnp.float32),
        "b2": 0.05 * jax.random.normal(k_b2, (C2,), jnp.float32),
        "w3": 0.05 * jax.random.normal(k_w3, (C3, C2, K), jnp.float32),
        "b3": 0.05 * jax.random.normal(k_b3, (C3,), jnp.float32),
        "fc_w": 0.02 * jax.random.normal(k_fw, (OUTPUT_DIM, FLATTEN_SHAPE), jnp.float32),
        "fc_b": 0.02 * jax.random.normal(k_fb, (OUTPUT_DIM,), jnp.float32),
    }

    out = embedding_smile_forward(smile_idx, params)
    out = jax.block_until_ready(out)

    ref = reference_forward(smile_idx, params)
    assert out.shape == (B, OUTPUT_DIM), out.shape
    max_err = float(jnp.max(jnp.abs(out - ref)))
    assert jnp.allclose(out, ref, rtol=5e-2, atol=5e-2), f"max_err={max_err}"

    print("KERNEL_OK")
</pallas_src>

<mosaic_0001>
module attributes {stable_mosaic.version = 11 : i64} {
  func.func @_embed_conv_kernel(%arg0: i32, %arg1: memref<2x128xi32, #tpu.memory_space<vmem>>, %arg2: memref<128x64xf32, #tpu.memory_space<vmem>>, %arg3: memref<1024x128xf32, #tpu.memory_space<vmem>>, %arg4: memref<1x128xf32, #tpu.memory_space<vmem>>, %arg5: memref<1024x128xf32, #tpu.memory_space<vmem>>, %arg6: memref<1x128xf32, #tpu.memory_space<vmem>>, %arg7: memref<1024x128xf32, #tpu.memory_space<vmem>>, %arg8: memref<1x128xf32, #tpu.memory_space<vmem>>, %arg9: memref<2x107x128xf32, #tpu.memory_space<vmem>>, %arg10: memref<128x128xf32, #tpu.memory_space<vmem>>, %arg11: memref<121x128xf32, #tpu.memory_space<vmem>>, %arg12: memref<114x128xf32, #tpu.memory_space<vmem>>) attributes {dimension_semantics = [#tpu.dimension_semantics<parallel>], iteration_bounds = array<i64: 1>, scalar_prefetch = 0 : i64, scratch_operands = 3 : i64, tpu.core_type = #tpu.core_type<tc>, window_params = [{transform_indices = @transform_0, window_bounds = array<i64: 2, 128>}, {pipeline_mode = #tpu.pipeline_mode<synchronous>, transform_indices = @transform_1, window_bounds = array<i64: 128, 64>}, {pipeline_mode = #tpu.pipeline_mode<synchronous>, transform_indices = @transform_2, window_bounds = array<i64: 1024, 128>}, {pipeline_mode = #tpu.pipeline_mode<synchronous>, transform_indices = @transform_3, window_bounds = array<i64: 1, 128>}, {pipeline_mode = #tpu.pipeline_mode<synchronous>, transform_indices = @transform_4, window_bounds = array<i64: 1024, 128>}, {pipeline_mode = #tpu.pipeline_mode<synchronous>, transform_indices = @transform_5, window_bounds = array<i64: 1, 128>}, {pipeline_mode = #tpu.pipeline_mode<synchronous>, transform_indices = @transform_6, window_bounds = array<i64: 1024, 128>}, {pipeline_mode = #tpu.pipeline_mode<synchronous>, transform_indices = @transform_7, window_bounds = array<i64: 1, 128>}, {transform_indices = @transform_8, window_bounds = array<i64: 2, 107, 128>}]} {
    %0 = tpu.iota {dimensions = array<i32: 0>} : vector<64x128xi32>
    %c0 = arith.constant 0 : index
    %c0_0 = arith.constant 0 : index
    %1 = vector.load %arg1[%c0, %c0_0] : memref<2x128xi32, #tpu.memory_space<vmem>>, vector<1x128xi32>
    %2 = vector.broadcast %1 : vector<1x128xi32> to vector<64x128xi32>
    %3 = arith.cmpi eq, %0, %2 : vector<64x128xi32>
    %cst = arith.constant 1.000000e+00 : f32
    %cst_1 = arith.constant 0.000000e+00 : f32
    %4 = vector.broadcast %cst : f32 to vector<64x128xf32>
    %5 = vector.broadcast %cst_1 : f32 to vector<64x128xf32>
    %6 = arith.select %3, %4, %5 : vector<64x128xi1>, vector<64x128xf32>
    %c0_2 = arith.constant 0 : index
    %c0_3 = arith.constant 0 : index
    %7 = vector.load %arg2[%c0_2, %c0_3] : memref<128x64xf32, #tpu.memory_space<vmem>>, vector<128x64xf32>
    %cst_4 = arith.constant dense<0.000000e+00> : vector<128x128xf32>
    %8 = tpu.matmul %7, %6, %cst_4 {dimension_numbers = #tpu.dot_dimension_numbers<[1], [0], [0], [1], [0, 0, 1, 1], [], []>} : vector<128x64xf32>, vector<64x128xf32>, vector<128x128xf32> -> vector<128x128xf32>
    %c0_5 = arith.constant 0 : index
    %c0_6 = arith.constant 0 : index
    %9 = vector.load %arg10[%c0_5, %c0_6] : memref<128x128xf32, #tpu.memory_space<vmem>>, vector<128x128xf32>
    tpu.vector_store %arg10[%c0_5, %c0_6], %8 {strides = array<i32>} : memref<128x128xf32, #tpu.memory_space<vmem>>, vector<128x128xf32>,
    %c0_7 = arith.constant 0 : index
    %c0_8 = arith.constant 0 : index
    %10 = vector.load %arg10[%c0_7, %c0_8] : memref<128x128xf32, #tpu.memory_space<vmem>>, vector<121x128xf32>
    %c1 = arith.constant 1 : index
    %c0_9 = arith.constant 0 : index
    %11 = vector.load %arg10[%c1, %c0_9] : memref<128x128xf32, #tpu.memory_space<vmem>>, vector<121x128xf32>
    %c2 = arith.constant 2 : index
    %c0_10 = arith.constant 0 : index
    %12 = vector.load %arg10[%c2, %c0_10] : memref<128x128xf32, #tpu.memory_space<vmem>>, vector<121x128xf32>
    %c3 = arith.constant 3 : index
    %c0_11 = arith.constant 0 : index
    %13 = vector.load %arg10[%c3, %c0_11] : memref<128x128xf32, #tpu.memory_space<vmem>>, vector<121x128xf32>
    %c4 = arith.constant 4 : index
    %c0_12 = arith.constant 0 : index
    %14 = vector.load %arg10[%c4, %c0_12] : memref<128x128xf32, #tpu.memory_space<vmem>>, vector<121x128xf32>
    %c5 = arith.constant 5 : index
    %c0_13 = arith.constant 0 : index
    %15 = vector.load %arg10[%c5, %c0_13] : memref<128x128xf32, #tpu.memory_space<vmem>>, vector<121x128xf32>
    %c6 = arith.constant 6 : index
    %c0_14 = arith.constant 0 : index
    %16 = vector.load %arg10[%c6, %c0_14] : memref<128x128xf32, #tpu.memory_space<vmem>>, vector<121x128xf32>
    %c7 = arith.constant 7 : index
    %c0_15 = arith.constant 0 : index
    %17 = vector.load %arg10[%c7, %c0_15] : memref<128x128xf32, #tpu.memory_space<vmem>>, vector<121x128xf32>
    %18 = tpu.concatenate %10, %11, %12, %13, %14, %15, %16, %17 in 1 : vector<121x128xf32>, vector<121x128xf32>, vector<121x128xf32>, vector<121x128xf32>, vector<121x128xf32>, vector<121x128xf32>, vector<121x128xf32>, vector<121x128xf32> -> vector<121x1024xf32>
    %c0_16 = arith.constant 0 : index
    %c0_17 = arith.constant 0 : index
    %19 = vector.load %arg3[%c0_16, %c0_17] : memref<1024x128xf32, #tpu.memory_space<vmem>>, vector<1024x128xf32>
    %cst_18 = arith.constant dense<0.000000e+00> : vector<121x128xf32>
    %20 = tpu.matmul %18, %19, %cst_18 {dimension_numbers = #tpu.dot_dimension_numbers<[1], [0], [0], [1], [0, 0, 1, 1], [], []>} : vector<121x1024xf32>, vector<1024x128xf32>, vector<121x128xf32> -> vector<121x128xf32>
    %c0_19 = arith.constant 0 : index
    %c0_20 = arith.constant 0 : index
    %21 = vector.load %arg4[%c0_19, %c0_20] : memref<1x128xf32, #tpu.memory_space<vmem>>, vector<1x128xf32>
    %22 = vector.broadcast %21 : vector<1x128xf32> to vector<121x128xf32>
    %23 = arith.addf %20, %22 : vector<121x128xf32>
    %cst_21 = arith.constant 0.000000e+00 : f32
    %24 = vector.broadcast %cst_21 : f32 to vector<121x128xf32>
    %25 = arith.maximumf %23, %24 : vector<121x128xf32>
    %c0_22 = arith.constant 0 : index
    %c0_23 = arith.constant 0 : index
    %26 = vector.load %arg11[%c0_22, %c0_23] : memref<121x128xf32, #tpu.memory_space<vmem>>, vector<121x128xf32>
    tpu.vector_store %arg11[%c0_22, %c0_23], %25 {strides = array<i32>} : memref<121x128xf32, #tpu.memory_space<vmem>>, vector<121x128xf32>,
    %c0_24 = arith.constant 0 : index
    %c0_25 = arith.constant 0 : index
    %27 = vector.load %arg11[%c0_24, %c0_25] : memref<121x128xf32, #tpu.memory_space<vmem>>, vector<114x128xf32>
    %c1_26 = arith.constant 1 : index
    %c0_27 = arith.constant 0 : index
    %28 = vector.load %arg11[%c1_26, %c0_27] : memref<121x128xf32, #tpu.memory_space<vmem>>, vector<114x128xf32>
    %c2_28 = arith.constant 2 : index
    %c0_29 = arith.constant 0 : index
    %29 = vector.load %arg11[%c2_28, %c0_29] : memref<121x128xf32, #tpu.memory_space<vmem>>, vector<114x128xf32>
    %c3_30 = arith.constant 3 : index
    %c0_31 = arith.constant 0 : index
    %30 = vector.load %arg11[%c3_30, %c0_31] : memref<121x128xf32, #tpu.memory_space<vmem>>, vector<114x128xf32>
    %c4_32 = arith.constant 4 : index
    %c0_33 = arith.constant 0 : index
    %31 = vector.load %arg11[%c4_32, %c0_33] : memref<121x128xf32, #tpu.memory_space<vmem>>, vector<114x128xf32>
    %c5_34 = arith.constant 5 : index
    %c0_35 = arith.constant 0 : index
    %32 = vector.load %arg11[%c5_34, %c0_35] : memref<121x128xf32, #tpu.memory_space<vmem>>, vector<114x128xf32>
    %c6_36 = arith.constant 6 : index
    %c0_37 = arith.constant 0 : index
    %33 = vector.load %arg11[%c6_36, %c0_37] : memref<121x128xf32, #tpu.memory_space<vmem>>, vector<114x128xf32>
    %c7_38 = arith.constant 7 : index
    %c0_39 = arith.constant 0 : index
    %34 = vector.load %arg11[%c7_38, %c0_39] : memref<121x128xf32, #tpu.memory_space<vmem>>, vector<114x128xf32>
    %35 = tpu.concatenate %27, %28, %29, %30, %31, %32, %33, %34 in 1 : vector<114x128xf32>, vector<114x128xf32>, vector<114x128xf32>, vector<114x128xf32>, vector<114x128xf32>, vector<114x128xf32>, vector<114x128xf32>, vector<114x128xf32> -> vector<114x1024xf32>
    %c0_40 = arith.constant 0 : index
    %c0_41 = arith.constant 0 : index
    %36 = vector.load %arg5[%c0_40, %c0_41] : memref<1024x128xf32, #tpu.memory_space<vmem>>, vector<1024x128xf32>
    %cst_42 = arith.constant dense<0.000000e+00> : vector<114x128xf32>
    %37 = tpu.matmul %35, %36, %cst_42 {dimension_numbers = #tpu.dot_dimension_numbers<[1], [0], [0], [1], [0, 0, 1, 1], [], []>} : vector<114x1024xf32>, vector<1024x128xf32>, vector<114x128xf32> -> vector<114x128xf32>
    %c0_43 = arith.constant 0 : index
    %c0_44 = arith.constant 0 : index
    %38 = vector.load %arg6[%c0_43, %c0_44] : memref<1x128xf32, #tpu.memory_space<vmem>>, vector<1x128xf32>
    %39 = vector.broadcast %38 : vector<1x128xf32> to vector<114x128xf32>
    %40 = arith.addf %37, %39 : vector<114x128xf32>
    %cst_45 = arith.constant 0.000000e+00 : f32
    %41 = vector.broadcast %cst_45 : f32 to vector<114x128xf32>
    %42 = arith.maximumf %40, %41 : vector<114x128xf32>
    %c0_46 = arith.constant 0 : index
    %c0_47 = arith.constant 0 : index
    %43 = vector.load %arg12[%c0_46, %c0_47] : memref<114x128xf32, #tpu.memory_space<vmem>>, vector<114x128xf32>
    tpu.vector_store %arg12[%c0_46, %c0_47], %42 {strides = array<i32>} : memref<114x128xf32, #tpu.memory_space<vmem>>, vector<114x128xf32>,
    %c0_48 = arith.constant 0 : index
    %c0_49 = arith.constant 0 : index
    %44 = vector.load %arg12[%c0_48, %c0_49] : memref<114x128xf32, #tpu.memory_space<vmem>>, vector<107x128xf32>
    %c1_50 = arith.constant 1 : index
    %c0_51 = arith.constant 0 : index
    %45 = vector.load %arg12[%c1_50, %c0_51] : memref<114x128xf32, #tpu.memory_space<vmem>>, vector<107x128xf32>
    %c2_52 = arith.constant 2 : index
    %c0_53 = arith.constant 0 : index
    %46 = vector.load %arg12[%c2_52, %c0_53] : memref<114x128xf32, #tpu.memory_space<vmem>>, vector<107x128xf32>
    %c3_54 = arith.constant 3 : index
    %c0_55 = arith.constant 0 : index
    %47 = vector.load %arg12[%c3_54, %c0_55] : memref<114x128xf32, #tpu.memory_space<vmem>>, vector<107x128xf32>
    %c4_56 = arith.constant 4 : index
    %c0_57 = arith.constant 0 : index
    %48 = vector.load %arg12[%c4_56, %c0_57] : memref<114x128xf32, #tpu.memory_space<vmem>>, vector<107x128xf32>
    %c5_58 = arith.constant 5 : index
    %c0_59 = arith.constant 0 : index
    %49 = vector.load %arg12[%c5_58, %c0_59] : memref<114x128xf32, #tpu.memory_space<vmem>>, vector<107x128xf32>
    %c6_60 = arith.constant 6 : index
    %c0_61 = arith.constant 0 : index
    %50 = vector.load %arg12[%c6_60, %c0_61] : memref<114x128xf32, #tpu.memory_space<vmem>>, vector<107x128xf32>
    %c7_62 = arith.constant 7 : index
    %c0_63 = arith.constant 0 : index
    %51 = vector.load %arg12[%c7_62, %c0_63] : memref<114x128xf32, #tpu.memory_space<vmem>>, vector<107x128xf32>
    %52 = tpu.concatenate %44, %45, %46, %47, %48, %49, %50, %51 in 1 : vector<107x128xf32>, vector<107x128xf32>, vector<107x128xf32>, vector<107x128xf32>, vector<107x128xf32>, vector<107x128xf32>, vector<107x128xf32>, vector<107x128xf32> -> vector<107x1024xf32>
    %c0_64 = arith.constant 0 : index
    %c0_65 = arith.constant 0 : index
    %53 = vector.load %arg7[%c0_64, %c0_65] : memref<1024x128xf32, #tpu.memory_space<vmem>>, vector<1024x128xf32>
    %cst_66 = arith.constant dense<0.000000e+00> : vector<107x128xf32>
    %54 = tpu.matmul %52, %53, %cst_66 {dimension_numbers = #tpu.dot_dimension_numbers<[1], [0], [0], [1], [0, 0, 1, 1], [], []>} : vector<107x1024xf32>, vector<1024x128xf32>, vector<107x128xf32> -> vector<107x128xf32>
    %c0_67 = arith.constant 0 : index
    %c0_68 = arith.constant 0 : index
    %55 = vector.load %arg8[%c0_67, %c0_68] : memref<1x128xf32, #tpu.memory_space<vmem>>, vector<1x128xf32>
    %56 = vector.broadcast %55 : vector<1x128xf32> to vector<107x128xf32>
    %57 = arith.addf %54, %56 : vector<107x128xf32>
    %cst_69 = arith.constant 0.000000e+00 : f32
    %58 = vector.broadcast %cst_69 : f32 to vector<107x128xf32>
    %59 = arith.maximumf %57, %58 : vector<107x128xf32>
    %c0_70 = arith.constant 0 : index
    %c0_71 = arith.constant 0 : index
    %c0_72 = arith.constant 0 : index
    %60 = vector.load %arg9[%c0_70, %c0_71, %c0_72] : memref<2x107x128xf32, #tpu.memory_space<vmem>>, vector<1x107x128xf32>
    %61 = vector.shape_cast %60 : vector<1x107x128xf32> to vector<107x128xf32>
    %62 = vector.shape_cast %59 : vector<107x128xf32> to vector<1x107x128xf32>
    tpu.vector_store %arg9[%c0_70, %c0_71, %c0_72], %62 {strides = array<i32>} : memref<2x107x128xf32, #tpu.memory_space<vmem>>, vector<1x107x128xf32>,
    %c1_73 = arith.constant 1 : index
    %c0_74 = arith.constant 0 : index
    %63 = vector.load %arg1[%c1_73, %c0_74] : memref<2x128xi32, #tpu.memory_space<vmem>>, vector<1x128xi32>
    %64 = vector.broadcast %63 : vector<1x128xi32> to vector<64x128xi32>
    %65 = arith.cmpi eq, %0, %64 : vector<64x128xi32>
    %cst_75 = arith.constant 1.000000e+00 : f32
    %cst_76 = arith.constant 0.000000e+00 : f32
    %66 = vector.broadcast %cst_75 : f32 to vector<64x128xf32>
    %67 = vector.broadcast %cst_76 : f32 to vector<64x128xf32>
    %68 = arith.select %65, %66, %67 : vector<64x128xi1>, vector<64x128xf32>
    %c0_77 = arith.constant 0 : index
    %c0_78 = arith.constant 0 : index
    %69 = vector.load %arg2[%c0_77, %c0_78] : memref<128x64xf32, #tpu.memory_space<vmem>>, vector<128x64xf32>
    %cst_79 = arith.constant dense<0.000000e+00> : vector<128x128xf32>
    %70 = tpu.matmul %69, %68, %cst_79 {dimension_numbers = #tpu.dot_dimension_numbers<[1], [0], [0], [1], [0, 0, 1, 1], [], []>} : vector<128x64xf32>, vector<64x128xf32>, vector<128x128xf32> -> vector<128x128xf32>
    %c0_80 = arith.constant 0 : index
    %c0_81 = arith.constant 0 : index
    %71 = vector.load %arg10[%c0_80, %c0_81] : memref<128x128xf32, #tpu.memory_space<vmem>>, vector<128x128xf32>
    tpu.vector_store %arg10[%c0_80, %c0_81], %70 {strides = array<i32>} : memref<128x128xf32, #tpu.memory_space<vmem>>, vector<128x128xf32>,
    %c0_82 = arith.constant 0 : index
    %c0_83 = arith.constant 0 : index
    %72 = vector.load %arg10[%c0_82, %c0_83] : memref<128x128xf32, #tpu.memory_space<vmem>>, vector<121x128xf32>
    %c1_84 = arith.constant 1 : index
    %c0_85 = arith.constant 0 : index
    %73 = vector.load %arg10[%c1_84, %c0_85] : memref<128x128xf32, #tpu.memory_space<vmem>>, vector<121x128xf32>
    %c2_86 = arith.constant 2 : index
    %c0_87 = arith.constant 0 : index
    %74 = vector.load %arg10[%c2_86, %c0_87] : memref<128x128xf32, #tpu.memory_space<vmem>>, vector<121x128xf32>
    %c3_88 = arith.constant 3 : index
    %c0_89 = arith.constant 0 : index
    %75 = vector.load %arg10[%c3_88, %c0_89] : memref<128x128xf32, #tpu.memory_space<vmem>>, vector<121x128xf32>
    %c4_90 = arith.constant 4 : index
    %c0_91 = arith.constant 0 : index
    %76 = vector.load %arg10[%c4_90, %c0_91] : memref<128x128xf32, #tpu.memory_space<vmem>>, vector<121x128xf32>
    %c5_92 = arith.constant 5 : index
    %c0_93 = arith.constant 0 : index
    %77 = vector.load %arg10[%c5_92, %c0_93] : memref<128x128xf32, #tpu.memory_space<vmem>>, vector<121x128xf32>
    %c6_94 = arith.constant 6 : index
    %c0_95 = arith.constant 0 : index
    %78 = vector.load %arg10[%c6_94, %c0_95] : memref<128x128xf32, #tpu.memory_space<vmem>>, vector<121x128xf32>
    %c7_96 = arith.constant 7 : index
    %c0_97 = arith.constant 0 : index
    %79 = vector.load %arg10[%c7_96, %c0_97] : memref<128x128xf32, #tpu.memory_space<vmem>>, vector<121x128xf32>
    %80 = tpu.concatenate %72, %73, %74, %75, %76, %77, %78, %79 in 1 : vector<121x128xf32>, vector<121x128xf32>, vector<121x128xf32>, vector<121x128xf32>, vector<121x128xf32>, vector<121x128xf32>, vector<121x128xf32>, vector<121x128xf32> -> vector<121x1024xf32>
    %c0_98 = arith.constant 0 : index
    %c0_99 = arith.constant 0 : index
    %81 = vector.load %arg3[%c0_98, %c0_99] : memref<1024x128xf32, #tpu.memory_space<vmem>>, vector<1024x128xf32>
    %cst_100 = arith.constant dense<0.000000e+00> : vector<121x128xf32>
    %82 = tpu.matmul %80, %81, %cst_100 {dimension_numbers = #tpu.dot_dimension_numbers<[1], [0], [0], [1], [0, 0, 1, 1], [], []>} : vector<121x1024xf32>, vector<1024x128xf32>, vector<121x128xf32> -> vector<121x128xf32>
    %c0_101 = arith.constant 0 : index
    %c0_102 = arith.constant 0 : index
    %83 = vector.load %arg4[%c0_101, %c0_102] : memref<1x128xf32, #tpu.memory_space<vmem>>, vector<1x128xf32>
    %84 = vector.broadcast %83 : vector<1x128xf32> to vector<121x128xf32>
    %85 = arith.addf %82, %84 : vector<121x128xf32>
    %cst_103 = arith.constant 0.000000e+00 : f32
    %86 = vector.broadcast %cst_103 : f32 to vector<121x128xf32>
    %87 = arith.maximumf %85, %86 : vector<121x128xf32>
    %c0_104 = arith.constant 0 : index
    %c0_105 = arith.constant 0 : index
    %88 = vector.load %arg11[%c0_104, %c0_105] : memref<121x128xf32, #tpu.memory_space<vmem>>, vector<121x128xf32>
    tpu.vector_store %arg11[%c0_104, %c0_105], %87 {strides = array<i32>} : memref<121x128xf32, #tpu.memory_space<vmem>>, vector<121x128xf32>,
    %c0_106 = arith.constant 0 : index
    %c0_107 = arith.constant 0 : index
    %89 = vector.load %arg11[%c0_106, %c0_107] : memref<121x128xf32, #tpu.memory_space<vmem>>, vector<114x128xf32>
    %c1_108 = arith.constant 1 : index
    %c0_109 = arith.constant 0 : index
    %90 = vector.load %arg11[%c1_108, %c0_109] : memref<121x128xf32, #tpu.memory_space<vmem>>, vector<114x128xf32>
    %c2_110 = arith.constant 2 : index
    %c0_111 = arith.constant 0 : index
    %91 = vector.load %arg11[%c2_110, %c0_111] : memref<121x128xf32, #tpu.memory_space<vmem>>, vector<114x128xf32>
    %c3_112 = arith.constant 3 : index
    %c0_113 = arith.constant 0 : index
    %92 = vector.load %arg11[%c3_112, %c0_113] : memref<121x128xf32, #tpu.memory_space<vmem>>, vector<114x128xf32>
    %c4_114 = arith.constant 4 : index
    %c0_115 = arith.constant 0 : index
    %93 = vector.load %arg11[%c4_114, %c0_115] : memref<121x128xf32, #tpu.memory_space<vmem>>, vector<114x128xf32>
    %c5_116 = arith.constant 5 : index
    %c0_117 = arith.constant 0 : index
    %94 = vector.load %arg11[%c5_116, %c0_117] : memref<121x128xf32, #tpu.memory_space<vmem>>, vector<114x128xf32>
    %c6_118 = arith.constant 6 : index
    %c0_119 = arith.constant 0 : index
    %95 = vector.load %arg11[%c6_118, %c0_119] : memref<121x128xf32, #tpu.memory_space<vmem>>, vector<114x128xf32>
    %c7_120 = arith.constant 7 : index
    %c0_121 = arith.constant 0 : index
    %96 = vector.load %arg11[%c7_120, %c0_121] : memref<121x128xf32, #tpu.memory_space<vmem>>, vector<114x128xf32>
    %97 = tpu.concatenate %89, %90, %91, %92, %93, %94, %95, %96 in 1 : vector<114x128xf32>, vector<114x128xf32>, vector<114x128xf32>, vector<114x128xf32>, vector<114x128xf32>, vector<114x128xf32>, vector<114x128xf32>, vector<114x128xf32> -> vector<114x1024xf32>
    %c0_122 = arith.constant 0 : index
    %c0_123 = arith.constant 0 : index
    %98 = vector.load %arg5[%c0_122, %c0_123] : memref<1024x128xf32, #tpu.memory_space<vmem>>, vector<1024x128xf32>
    %cst_124 = arith.constant dense<0.000000e+00> : vector<114x128xf32>
    %99 = tpu.matmul %97, %98, %cst_124 {dimension_numbers = #tpu.dot_dimension_numbers<[1], [0], [0], [1], [0, 0, 1, 1], [], []>} : vector<114x1024xf32>, vector<1024x128xf32>, vector<114x128xf32> -> vector<114x128xf32>
    %c0_125 = arith.constant 0 : index
    %c0_126 = arith.constant 0 : index
    %100 = vector.load %arg6[%c0_125, %c0_126] : memref<1x128xf32, #tpu.memory_space<vmem>>, vector<1x128xf32>
    %101 = vector.broadcast %100 : vector<1x128xf32> to vector<114x128xf32>
    %102 = arith.addf %99, %101 : vector<114x128xf32>
    %cst_127 = arith.constant 0.000000e+00 : f32
    %103 = vector.broadcast %cst_127 : f32 to vector<114x128xf32>
    %104 = arith.maximumf %102, %103 : vector<114x128xf32>
    %c0_128 = arith.constant 0 : index
    %c0_129 = arith.constant 0 : index
    %105 = vector.load %arg12[%c0_128, %c0_129] : memref<114x128xf32, #tpu.memory_space<vmem>>, vector<114x128xf32>
    tpu.vector_store %arg12[%c0_128, %c0_129], %104 {strides = array<i32>} : memref<114x128xf32, #tpu.memory_space<vmem>>, vector<114x128xf32>,
    %c0_130 = arith.constant 0 : index
    %c0_131 = arith.constant 0 : index
    %106 = vector.load %arg12[%c0_130, %c0_131] : memref<114x128xf32, #tpu.memory_space<vmem>>, vector<107x128xf32>
    %c1_132 = arith.constant 1 : index
    %c0_133 = arith.constant 0 : index
    %107 = vector.load %arg12[%c1_132, %c0_133] : memref<114x128xf32, #tpu.memory_space<vmem>>, vector<107x128xf32>
    %c2_134 = arith.constant 2 : index
    %c0_135 = arith.constant 0 : index
    %108 = vector.load %arg12[%c2_134, %c0_135] : memref<114x128xf32, #tpu.memory_space<vmem>>, vector<107x128xf32>
    %c3_136 = arith.constant 3 : index
    %c0_137 = arith.constant 0 : index
    %109 = vector.load %arg12[%c3_136, %c0_137] : memref<114x128xf32, #tpu.memory_space<vmem>>, vector<107x128xf32>
    %c4_138 = arith.constant 4 : index
    %c0_139 = arith.constant 0 : index
    %110 = vector.load %arg12[%c4_138, %c0_139] : memref<114x128xf32, #tpu.memory_space<vmem>>, vector<107x128xf32>
    %c5_140 = arith.constant 5 : index
    %c0_141 = arith.constant 0 : index
    %111 = vector.load %arg12[%c5_140, %c0_141] : memref<114x128xf32, #tpu.memory_space<vmem>>, vector<107x128xf32>
    %c6_142 = arith.constant 6 : index
    %c0_143 = arith.constant 0 : index
    %112 = vector.load %arg12[%c6_142, %c0_143] : memref<114x128xf32, #tpu.memory_space<vmem>>, vector<107x128xf32>
    %c7_144 = arith.constant 7 : index
    %c0_145 = arith.constant 0 : index
    %113 = vector.load %arg12[%c7_144, %c0_145] : memref<114x128xf32, #tpu.memory_space<vmem>>, vector<107x128xf32>
    %114 = tpu.concatenate %106, %107, %108, %109, %110, %111, %112, %113 in 1 : vector<107x128xf32>, vector<107x128xf32>, vector<107x128xf32>, vector<107x128xf32>, vector<107x128xf32>, vector<107x128xf32>, vector<107x128xf32>, vector<107x128xf32> -> vector<107x1024xf32>
    %c0_146 = arith.constant 0 : index
    %c0_147 = arith.constant 0 : index
    %115 = vector.load %arg7[%c0_146, %c0_147] : memref<1024x128xf32, #tpu.memory_space<vmem>>, vector<1024x128xf32>
    %cst_148 = arith.constant dense<0.000000e+00> : vector<107x128xf32>
    %116 = tpu.matmul %114, %115, %cst_148 {dimension_numbers = #tpu.dot_dimension_numbers<[1], [0], [0], [1], [0, 0, 1, 1], [], []>} : vector<107x1024xf32>, vector<1024x128xf32>, vector<107x128xf32> -> vector<107x128xf32>
    %c0_149 = arith.constant 0 : index
    %c0_150 = arith.constant 0 : index
    %117 = vector.load %arg8[%c0_149, %c0_150] : memref<1x128xf32, #tpu.memory_space<vmem>>, vector<1x128xf32>
    %118 = vector.broadcast %117 : vector<1x128xf32> to vector<107x128xf32>
    %119 = arith.addf %116, %118 : vector<107x128xf32>
    %cst_151 = arith.constant 0.000000e+00 : f32
    %120 = vector.broadcast %cst_151 : f32 to vector<107x128xf32>
    %121 = arith.maximumf %119, %120 : vector<107x128xf32>
    %c1_152 = arith.constant 1 : index
    %c0_153 = arith.constant 0 : index
    %c0_154 = arith.constant 0 : index
    %122 = vector.load %arg9[%c1_152, %c0_153, %c0_154] : memref<2x107x128xf32, #tpu.memory_space<vmem>>, vector<1x107x128xf32>
    %123 = vector.shape_cast %122 : vector<1x107x128xf32> to vector<107x128xf32>
    %124 = vector.shape_cast %121 : vector<107x128xf32> to vector<1x107x128xf32>
    tpu.vector_store %arg9[%c1_152, %c0_153, %c0_154], %124 {strides = array<i32>} : memref<2x107x128xf32, #tpu.memory_space<vmem>>, vector<1x107x128xf32>,
    return
  }
  func.func @transform_0(%arg0: i32) -> (i32, i32) {
    %c0_i32 = arith.constant 0 : i32
    %c0_i32_0 = arith.constant 0 : i32
    return %arg0, %c0_i32 : i32, i32
  }
  func.func @transform_1(%arg0: i32) -> (i32, i32) {
    %c0_i32 = arith.constant 0 : i32
    %c0_i32_0 = arith.constant 0 : i32
    %c0_i32_1 = arith.constant 0 : i32
    return %c0_i32, %c0_i32_0 : i32, i32
  }
  func.func @transform_2(%arg0: i32) -> (i32, i32) {
    %c0_i32 = arith.constant 0 : i32
    %c0_i32_0 = arith.constant 0 : i32
    %c0_i32_1 = arith.constant 0 : i32
    return %c0_i32, %c0_i32_0 : i32, i32
  }
  func.func @transform_3(%arg0: i32) -> (i32, i32) {
    %c0_i32 = arith.constant 0 : i32
    %c0_i32_0 = arith.constant 0 : i32
    %c0_i32_1 = arith.constant 0 : i32
    return %c0_i32, %c0_i32_0 : i32, i32
  }
  func.func @transform_4(%arg0: i32) -> (i32, i32) {
    %c0_i32 = arith.constant 0 : i32
    %c0_i32_0 = arith.constant 0 : i32
    %c0_i32_1 = arith.constant 0 : i32
    return %c0_i32, %c0_i32_0 : i32, i32
  }
  func.func @transform_5(%arg0: i32) -> (i32, i32) {
    %c0_i32 = arith.constant 0 : i32
    %c0_i32_0 = arith.constant 0 : i32
    %c0_i32_1 = arith.constant 0 : i32
    return %c0_i32, %c0_i32_0 : i32, i32
  }
  func.func @transform_6(%arg0: i32) -> (i32, i32) {
    %c0_i32 = arith.constant 0 : i32
    %c0_i32_0 = arith.constant 0 : i32
    %c0_i32_1 = arith.constant 0 : i32
    return %c0_i32, %c0_i32_0 : i32, i32
  }
  func.func @transform_7(%arg0: i32) -> (i32, i32) {
    %c0_i32 = arith.constant 0 : i32
    %c0_i32_0 = arith.constant 0 : i32
    %c0_i32_1 = arith.constant 0 : i32
    return %c0_i32, %c0_i32_0 : i32, i32
  }
  func.func @transform_8(%arg0: i32) -> (i32, i32, i32) {
    %c0_i32 = arith.constant 0 : i32
    %c0_i32_0 = arith.constant 0 : i32
    %c0_i32_1 = arith.constant 0 : i32
    return %arg0, %c0_i32, %c0_i32_0 : i32, i32, i32
  }
}

</mosaic_0001>

<llo_original>
// kernel: tpu_custom_call.1
$region0: #{tpu_custom_call.1}
  #allocation0 [shape = 'u32[]', space=smem, size = 0x4, offset = 0x4, fixed_abs, tag = 'smem constant byte address 0x4 - core index']
  #allocation1 [shape = 'u32[144,128]{1,0:T(1,128)}', space=vmem, size = 0x12000, scoped, tag = 'internal scratch']
  #allocation2 [shape = 'f32[128,128]{1,0:T(8,128)}', space=vmem, size = 0x10000, scoped, tag = 'scratch operand']
  #allocation3 [shape = 'f32[121,128]{1,0:T(8,128)}', space=vmem, size = 0x10000, scoped, tag = 'scratch operand']
  #allocation4 [shape = 'f32[114,128]{1,0:T(8,128)}', space=vmem, size = 0xf000, scoped, tag = 'scratch operand']
  %s0 = inlined_call_operand.vmem [shape: s32[2,128], index: 0, kind: input, shape index: {}]
  %s1 = inlined_call_operand.vmem [shape: f32[128,64], index: 1, kind: input, shape index: {}]
  %s2 = inlined_call_operand.hbm [shape: f32[1024,128], index: 2, kind: input, shape index: {}]
  %s3 = inlined_call_operand.vmem [shape: f32[1,128], index: 3, kind: input, shape index: {}]
  %s4 = inlined_call_operand.hbm [shape: f32[1024,128], index: 4, kind: input, shape index: {}]
  %s5 = inlined_call_operand.vmem [shape: f32[1,128], index: 5, kind: input, shape index: {}]
  %s6 = inlined_call_operand.hbm [shape: f32[1024,128], index: 6, kind: input, shape index: {}]
  %s7 = inlined_call_operand.vmem [shape: f32[1,128], index: 7, kind: input, shape index: {}]
  %s8 = inlined_call_operand.vmem [shape: f32[2,107,128], index: 8, kind: output, shape index: {}]
  %s9 = sld [smem:[#allocation0]]
  $region54: #{tpu_custom_call.1} parent=0
    _
  %s11 = ssub.s32 1, %s9
  %s12 = scalar_select 0, %s11, %s9
  $region1: #{tpu_custom_call.1} parent=0
    #allocation5 [shape = 'u8[524288]{0}', space=vmem, size = 0x80000, scoped, tag = 'input window, operand 2, single buffered']
    #allocation6 [shape = 's32[1]{0}', space=sflag, size = 0x4, scoped, tag = 'scoped memory for tpu_custom_call.1']
    #allocation7 [shape = 'u8[524288]{0}', space=vmem, size = 0x80000, scoped, tag = 'input window, operand 4, single buffered']
    #allocation8 [shape = 's32[1]{0}', space=sflag, size = 0x4, scoped, tag = 'scoped memory for tpu_custom_call.1']
    #allocation9 [shape = 'u8[524288]{0}', space=vmem, size = 0x80000, scoped, tag = 'input window, operand 6, single buffered']
    %13 = vsyncpa [#allocation6], 0
    %14 = vsyncpa [#allocation8], 0
    // Predicated region
    $region2: #{tpu_custom_call.1} parent=1 // pred_check
      _
    $region3: #{tpu_custom_call.1} parent=1 // pred_check_branch
      %16 = sbr.rel (0) target = $region5
    $region4: #{tpu_custom_call.1} parent=1 // pred_region
      _
    $region5: #{tpu_custom_call.1} parent=1 // pred_fallthru
      _
    // Predicated region
    $region6: #{tpu_custom_call.1} parent=1 // pred_check
      _
    $region7: #{tpu_custom_call.1} parent=1 // pred_check_branch
      %18 = sbr.rel (0) target = $region9
    $region8: #{tpu_custom_call.1} parent=1 // pred_region
      _
    $region9: #{tpu_custom_call.1} parent=1 // pred_fallthru
      _
    // Predicated region
    $region10: #{tpu_custom_call.1} parent=1 // pred_check
      _
    $region11: #{tpu_custom_call.1} parent=1 // pred_check_branch
      %20 = sbr.rel (0) target = $region13
    $region12: #{tpu_custom_call.1} parent=1 // pred_region
      %s22 = ssub.s32 16384, 16384
      %23 = vsyncadd [#allocation6], %s22
      %s24 = sshll.u32 [#allocation5], 4
      %s25 = int_to_ptr.vmem [resolvable:$true] %s24
      %30 = dma.hbm_to_vmem [thread:$0]  %s2, 16384, %s25, [#allocation6], 128, 128, 8
    $region13: #{tpu_custom_call.1} parent=1 // pred_fallthru
      _
    // Predicated region
    $region14: #{tpu_custom_call.1} parent=1 // pred_check
      _
    $region15: #{tpu_custom_call.1} parent=1 // pred_check_branch
      %32 = sbr.rel (0) target = $region17
    $region16: #{tpu_custom_call.1} parent=1 // pred_region
      _
    $region17: #{tpu_custom_call.1} parent=1 // pred_fallthru
      _
    // Predicated region
    $region18: #{tpu_custom_call.1} parent=1 // pred_check
      _
    $region19: #{tpu_custom_call.1} parent=1 // pred_check_branch
      %34 = sbr.rel (0) target = $region21
    $region20: #{tpu_custom_call.1} parent=1 // pred_region
      %s36 = ssub.s32 16384, 16384
      %37 = vsyncadd [#allocation8], %s36
      %s38 = sshll.u32 [#allocation7], 4
      %s39 = int_to_ptr.vmem [resolvable:$true] %s38
      %44 = dma.hbm_to_vmem [thread:$0]  %s4, 16384, %s39, [#allocation8], 128, 128, 8
    $region21: #{tpu_custom_call.1} parent=1 // pred_fallthru
      _
    // Predicated region
    $region22: #{tpu_custom_call.1} parent=1 // pred_check
      _
    $region23: #{tpu_custom_call.1} parent=1 // pred_check_branch
      %46 = sbr.rel (0) target = $region25
    $region24: #{tpu_custom_call.1} parent=1 // pred_region
      _
    $region25: #{tpu_custom_call.1} parent=1 // pred_fallthru
      _
    // Predicated region
    $region26: #{tpu_custom_call.1} parent=1 // pred_check
      _
    $region27: #{tpu_custom_call.1} parent=1 // pred_check_branch
      %48 = sbr.rel (0) target = $region29
    $region28: #{tpu_custom_call.1} parent=1 // pred_region
      %s50 = ssub.s32 16384, 16384
      %51 = vsyncadd [#allocation8], %s50
      %s52 = sshll.u32 [#allocation9], 4
      %s53 = int_to_ptr.vmem [resolvable:$true] %s52
      %58 = dma.hbm_to_vmem [thread:$0]  %s6, 16384, %s53, [#allocation8], 128, 128, 8
    $region29: #{tpu_custom_call.1} parent=1 // pred_fallthru
      _
    // Predicated region
    $region30: #{tpu_custom_call.1} parent=1 // pred_check
      _
    $region31: #{tpu_custom_call.1} parent=1 // pred_check_branch
      %60 = sbr.rel (0) target = $region33
    $region32: #{tpu_custom_call.1} parent=1 // pred_region
      _
    $region33: #{tpu_custom_call.1} parent=1 // pred_fallthru
      _
    // Predicated region
    $region34: #{tpu_custom_call.1} parent=1 // pred_check
      _
    $region35: #{tpu_custom_call.1} parent=1 // pred_check_branch
      %62 = sbr.rel (0) target = $region37
    $region36: #{tpu_custom_call.1} parent=1 // pred_region
      %63 = dma.done [#allocation6], 16384
    $region37: #{tpu_custom_call.1} parent=1 // pred_fallthru
      _
    // Predicated region
    $region38: #{tpu_custom_call.1} parent=1 // pred_check
      _
    $region39: #{tpu_custom_call.1} parent=1 // pred_check_branch
      %65 = sbr.rel (0) target = $region41
    $region40: #{tpu_custom_call.1} parent=1 // pred_region
      %66 = dma.done [#allocation8], 16384
    $region41: #{tpu_custom_call.1} parent=1 // pred_fallthru
      _
    // Predicated region
    $region42: #{tpu_custom_call.1} parent=1 // pred_check
      _
    $region43: #{tpu_custom_call.1} parent=1 // pred_check_branch
      %68 = sbr.rel (0) target = $region45
    $region44: #{tpu_custom_call.1} parent=1 // pred_region
      %69 = dma.done [#allocation8], 16384
    $region45: #{tpu_custom_call.1} parent=1 // pred_fallthru
      _
    %v70 = vlaneseq
    %v71 = vshrl.u32 %v70, 7
    %v72 = vadd.s32 %v71, 8
    %v73 = vadd.s32 %v71, 16
    %v74 = vadd.s32 %v71, 24
    %v75 = vadd.s32 %v71, 32
    %v76 = vadd.s32 %v71, 40
    %v77 = vadd.s32 %v71, 48
    %v78 = vadd.s32 %v71, 56
    %v79 = vld [vmem:[%s0] sm:$0x1]
    %v80 = vlaneseq
    %v81 = vshrl.u32 %v80, 7
    %v82 = vsub.s32 0, %v81
    %v83 = vrot.slane %v79, %v82
    %vm84 = vcmp.eq.s32.totalorder %v71, %v83
    %vm85 = vcmp.eq.s32.totalorder %v72, %v83
    %vm86 = vcmp.eq.s32.totalorder %v73, %v83
    %vm87 = vcmp.eq.s32.totalorder %v74, %v83
    %vm88 = vcmp.eq.s32.totalorder %v75, %v83
    %vm89 = vcmp.eq.s32.totalorder %v76, %v83
    %vm90 = vcmp.eq.s32.totalorder %v77, %v83
    %vm91 = vcmp.eq.s32.totalorder %v78, %v83
    %v92 = vsel %vm84, 1.0, 0.0
    %v93 = vsel %vm85, 1.0, 0.0
    %v94 = vsel %vm86, 1.0, 0.0
    %v95 = vsel %vm87, 1.0, 0.0
    %v96 = vsel %vm88, 1.0, 0.0
    %v97 = vsel %vm89, 1.0, 0.0
    %v98 = vsel %vm90, 1.0, 0.0
    %v99 = vsel %vm91, 1.0, 0.0
    %v100 = vld [vmem:[%s1] sm:$0xff]
    %v101 = vld [vmem:[%s1 + $0x8] sm:$0xff]
    %v102 = vld [vmem:[%s1 + $0x10] sm:$0xff]
    %v103 = vld [vmem:[%s1 + $0x18] sm:$0xff]
    %v104 = vld [vmem:[%s1 + $0x20] sm:$0xff]
    %v105 = vld [vmem:[%s1 + $0x28] sm:$0xff]
    %v106 = vld [vmem:[%s1 + $0x30] sm:$0xff]
    %v107 = vld [vmem:[%s1 + $0x38] sm:$0xff]
    %v108 = vld [vmem:[%s1 + $0x40] sm:$0xff]
    %v109 = vld [vmem:[%s1 + $0x48] sm:$0xff]
    %v110 = vld [vmem:[%s1 + $0x50] sm:$0xff]
    %v111 = vld [vmem:[%s1 + $0x58] sm:$0xff]
    %v112 = vld [vmem:[%s1 + $0x60] sm:$0xff]
    %v113 = vld [vmem:[%s1 + $0x68] sm:$0xff]
    %v114 = vld [vmem:[%s1 + $0x70] sm:$0xff]
    %v115 = vld [vmem:[%s1 + $0x78] sm:$0xff]
    %vm116 = vcmask 523264
    %v118 = vsel %vm116, %v100, 0
    %v121 = vsel %vm116, %v101, 0
    %v124 = vsel %vm116, %v102, 0
    %v127 = vsel %vm116, %v103, 0
    %v130 = vsel %vm116, %v104, 0
    %v133 = vsel %vm116, %v105, 0
    %v136 = vsel %vm116, %v106, 0
    %v139 = vsel %vm116, %v107, 0
    %v142 = vsel %vm116, %v108, 0
    %v145 = vsel %vm116, %v109, 0
    %v148 = vsel %vm116, %v110, 0
    %v151 = vsel %vm116, %v111, 0
    %v154 = vsel %vm116, %v112, 0
    %v157 = vsel %vm116, %v113, 0
    %v160 = vsel %vm116, %v114, 0
    %v163 = vsel %vm116, %v115, 0
    %165 = vmatprep.subr.mxu0 0.0
    %166 = vmatpush1.msra.mxu0 0.0
    %167 = vmatprep.subr.mxu0 0.0
    %168 = vmatpush1.msra.mxu0 0.0
    %169 = vmatprep.subr.mxu0 0.0
    %170 = vmatpush1.msra.mxu0 0.0
    %171 = vmatprep.subr.mxu0 0.0
    %172 = vmatpush1.msra.mxu0 0.0
    %173 = vmatprep.subr.mxu0 0.0
    %174 = vmatpush1.msra.mxu0 0.0
    %175 = vmatprep.subr.mxu0 0.0
    %176 = vmatpush1.msra.mxu0 0.0
    %177 = vmatprep.subr.mxu0 0.0
    %178 = vmatpush1.msra.mxu0 0.0
    %179 = vmatprep.subr.mxu0 0.0
    %180 = vmatpush1.msra.mxu0 0.0
    %181 = vmatprep.subr.mxu0 0.0
    %182 = vmatpush1.msra.mxu0 %v99
    %183 = vmatprep.subr.mxu0 0.0
    %184 = vmatpush1.msra.mxu0 %v98
    %185 = vmatprep.subr.mxu0 0.0
    %186 = vmatpush1.msra.mxu0 %v97
    %187 = vmatprep.subr.mxu0 0.0
    %188 = vmatpush1.msra.mxu0 %v96
    %189 = vmatprep.subr.mxu0 0.0
    %190 = vmatpush1.msra.mxu0 %v95
    %191 = vmatprep.subr.mxu0 0.0
    %192 = vmatpush1.msra.mxu0 %v94
    %193 = vmatprep.subr.mxu0 0.0
    %194 = vmatpush1.msra.mxu0 %v93
    %195 = vmatprep.subr.mxu0 0.0
    %196 = vmatpush1.msra.mxu0 %v92
    %197 = vmatprep.subr.mxu0 0.0
    %198 = vmatpush2.msra.mxu0 0.0
    %199 = vmatprep.subr.mxu0 0.0
    %200 = vmatpush2.msra.mxu0 0.0
    %201 = vmatprep.subr.mxu0 0.0
    %202 = vmatpush2.msra.mxu0 0.0
    %203 = vmatprep.subr.mxu0 0.0
    %204 = vmatpush2.msra.mxu0 0.0
    %205 = vmatprep.subr.mxu0 0.0
    %206 = vmatpush2.msra.mxu0 0.0
    %207 = vmatprep.subr.mxu0 0.0
    %208 = vmatpush2.msra.mxu0 0.0
    %209 = vmatprep.subr.mxu0 0.0
    %210 = vmatpush2.msra.mxu0 0.0
    %211 = vmatprep.subr.mxu0 0.0
    %212 = vmatpush2.msra.mxu0 0.0
    %213 = vmatprep.subr.mxu0 0.0
    %214 = vmatpush2.msra.mxu0 0.0
    %215 = vmatprep.subr.mxu0 0.0
    %216 = vmatpush2.msra.mxu0 0.0
    %217 = vmatprep.subr.mxu0 0.0
    %218 = vmatpush2.msra.mxu0 0.0
    %219 = vmatprep.subr.mxu0 0.0
    %220 = vmatpush2.msra.mxu0 0.0
    %221 = vmatprep.subr.mxu0 0.0
    %222 = vmatpush2.msra.mxu0 0.0
    %223 = vmatprep.subr.mxu0 0.0
    %224 = vmatpush2.msra.mxu0 0.0
    %225 = vmatprep.subr.mxu0 0.0
    %226 = vmatpush2.msra.mxu0 0.0
    %227 = vmatprep.subr.mxu0 0.0
    %228 = vmatpush2.msra.mxu0 0.0
    %229 = vmatprep.mubr.f32.mxu0 0.0
    %230 = vmatmul.mubr.f32.gmra.mxu0 %v118
    %v231 = vpop.f32.mrf.mxu0
    %v232 = vadd.f32 0.0, %v231
    %v233 = vpop.f32.mrf.mxu0
    %234 = vmatprep.mubr.f32.mxu0 0.0
    %235 = vmatmul.mubr.f32.gmra.mxu0 %v121
    %v236 = vpop.f32.mrf.mxu0
    %v237 = vadd.f32 0.0, %v236
    %v238 = vpop.f32.mrf.mxu0
    %239 = vmatprep.mubr.f32.mxu0 0.0
    %240 = vmatmul.mubr.f32.gmra.mxu0 %v124
    %v241 = vpop.f32.mrf.mxu0
    %v242 = vadd.f32 0.0, %v241
    %v243 = vpop.f32.mrf.mxu0
    %244 = vmatprep.mubr.f32.mxu0 0.0
    %245 = vmatmul.mubr.f32.gmra.mxu0 %v127
    %v246 = vpop.f32.mrf.mxu0
    %v247 = vadd.f32 0.0, %v246
    %v248 = vpop.f32.mrf.mxu0
    %249 = vmatprep.mubr.f32.mxu0 0.0
    %250 = vmatmul.mubr.f32.gmra.mxu0 %v130
    %v251 = vpop.f32.mrf.mxu0
    %v252 = vadd.f32 0.0, %v251
    %v253 = vpop.f32.mrf.mxu0
    %254 = vmatprep.mubr.f32.mxu0 0.0
    %255 = vmatmul.mubr.f32.gmra.mxu0 %v133
    %v256 = vpop.f32.mrf.mxu0
    %v257 = vadd.f32 0.0, %v256
    %v258 = vpop.f32.mrf.mxu0
    %259 = vmatprep.mubr.f32.mxu0 0.0
    %260 = vmatmul.mubr.f32.gmra.mxu0 %v136
    %v261 = vpop.f32.mrf.mxu0
    %v262 = vadd.f32 0.0, %v261
    %v263 = vpop.f32.mrf.mxu0
    %264 = vmatprep.mubr.f32.mxu0 0.0
    %265 = vmatmul.mubr.f32.gmra.mxu0 %v139
    %v266 = vpop.f32.mrf.mxu0
    %v267 = vadd.f32 0.0, %v266
    %v268 = vpop.f32.mrf.mxu0
    %269 = vmatprep.mubr.f32.mxu0 0.0
    %270 = vmatmul.mubr.f32.gmra.mxu0 %v142
    %v271 = vpop.f32.mrf.mxu0
    %v272 = vadd.f32 0.0, %v271
    %v273 = vpop.f32.mrf.mxu0
    %274 = vmatprep.mubr.f32.mxu0 0.0
    %275 = vmatmul.mubr.f32.gmra.mxu0 %v145
    %v276 = vpop.f32.mrf.mxu0
    %v277 = vadd.f32 0.0, %v276
    %v278 = vpop.f32.mrf.mxu0
    %279 = vmatprep.mubr.f32.mxu0 0.0
    %280 = vmatmul.mubr.f32.gmra.mxu0 %v148
    %v281 = vpop.f32.mrf.mxu0
    %v282 = vadd.f32 0.0, %v281
    %v283 = vpop.f32.mrf.mxu0
    %284 = vmatprep.mubr.f32.mxu0 0.0
    %285 = vmatmul.mubr.f32.gmra.mxu0 %v151
    %v286 = vpop.f32.mrf.mxu0
    %v287 = vadd.f32 0.0, %v286
    %v288 = vpop.f32.mrf.mxu0
    %289 = vmatprep.mubr.f32.mxu0 0.0
    %290 = vmatmul.mubr.f32.gmra.mxu0 %v154
    %v291 = vpop.f32.mrf.mxu0
    %v292 = vadd.f32 0.0, %v291
    %v293 = vpop.f32.mrf.mxu0
    %294 = vmatprep.mubr.f32.mxu0 0.0
    %295 = vmatmul.mubr.f32.gmra.mxu0 %v157
    %v296 = vpop.f32.mrf.mxu0
    %v297 = vadd.f32 0.0, %v296
    %v298 = vpop.f32.mrf.mxu0
    %299 = vmatprep.mubr.f32.mxu0 0.0
    %300 = vmatmul.mubr.f32.gmra.mxu0 %v160
    %v301 = vpop.f32.mrf.mxu0
    %v302 = vadd.f32 0.0, %v301
    %v303 = vpop.f32.mrf.mxu0
    %304 = vmatprep.mubr.f32.mxu0 0.0
    %305 = vmatmul.mubr.f32.gmra.mxu0 %v163
    %v306 = vpop.f32.mrf.mxu0
    %v307 = vadd.f32 0.0, %v306
    %v308 = vpop.f32.mrf.mxu0
    %309 = vdwg.mxu0
    %310 = vst [vmem:[#allocation2] sm:$0xff] %v232
    %311 = vst [vmem:[#allocation2 + $0x8] sm:$0xff] %v237
    %312 = vst [vmem:[#allocation2 + $0x10] sm:$0xff] %v242
    %313 = vst [vmem:[#allocation2 + $0x18] sm:$0xff] %v247
    %314 = vst [vmem:[#allocation2 + $0x20] sm:$0xff] %v252
    %315 = vst [vmem:[#allocation2 + $0x28] sm:$0xff] %v257
    %316 = vst [vmem:[#allocation2 + $0x30] sm:$0xff] %v262
    %317 = vst [vmem:[#allocation2 + $0x38] sm:$0xff] %v267
    %318 = vst [vmem:[#allocation2 + $0x40] sm:$0xff] %v272
    %319 = vst [vmem:[#allocation2 + $0x48] sm:$0xff] %v277
    %320 = vst [vmem:[#allocation2 + $0x50] sm:$0xff] %v282
    %321 = vst [vmem:[#allocation2 + $0x58] sm:$0xff] %v287
    %322 = vst [vmem:[#allocation2 + $0x60] sm:$0xff] %v292
    %323 = vst [vmem:[#allocation2 + $0x68] sm:$0xff] %v297
    %324 = vst [vmem:[#allocation2 + $0x70] sm:$0xff] %v302
    %325 = vst [vmem:[#allocation2 + $0x78] sm:$0xff] %v307
    %v326 = vld [vmem:[#allocation2] sm:$0xff]
    %v327 = vld [vmem:[#allocation2 + $0x8] sm:$0xff]
    %v328 = vld [vmem:[#allocation2 + $0x10] sm:$0xff]
    %v329 = vld [vmem:[#allocation2 + $0x18] sm:$0xff]
    %v330 = vld [vmem:[#allocation2 + $0x20] sm:$0xff]
    %v331 = vld [vmem:[#allocation2 + $0x28] sm:$0xff]
    %v332 = vld [vmem:[#allocation2 + $0x30] sm:$0xff]
    %v333 = vld [vmem:[#allocation2 + $0x38] sm:$0xff]
    %v334 = vld [vmem:[#allocation2 + $0x40] sm:$0xff]
    %v335 = vld [vmem:[#allocation2 + $0x48] sm:$0xff]
    %v336 = vld [vmem:[#allocation2 + $0x50] sm:$0xff]
    %v337 = vld [vmem:[#allocation2 + $0x58] sm:$0xff]
    %v338 = vld [vmem:[#allocation2 + $0x60] sm:$0xff]
    %v339 = vld [vmem:[#allocation2 + $0x68] sm:$0xff]
    %v340 = vld [vmem:[#allocation2 + $0x70] sm:$0xff]
    %v341 = vld [vmem:[#allocation2 + $0x78] sm:$0x1]
    %v342 = vld [vmem:[#allocation2 + $0x1] sm:$0xff]
    %v343 = vld [vmem:[#allocation2 + $0x9] sm:$0xff]
    %v344 = vld [vmem:[#allocation2 + $0x11] sm:$0xff]
    %v345 = vld [vmem:[#allocation2 + $0x19] sm:$0xff]
    %v346 = vld [vmem:[#allocation2 + $0x21] sm:$0xff]
    %v347 = vld [vmem:[#allocation2 + $0x29] sm:$0xff]
    %v348 = vld [vmem:[#allocation2 + $0x31] sm:$0xff]
    %v349 = vld [vmem:[#allocation2 + $0x39] sm:$0xff]
    %v350 = vld [vmem:[#allocation2 + $0x41] sm:$0xff]
    %v351 = vld [vmem:[#allocation2 + $0x49] sm:$0xff]
    %v352 = vld [vmem:[#allocation2 + $0x51] sm:$0xff]
    %v353 = vld [vmem:[#allocation2 + $0x59] sm:$0xff]
    %v354 = vld [vmem:[#allocation2 + $0x61] sm:$0xff]
    %v355 = vld [vmem:[#allocation2 + $0x69] sm:$0xff]
    %v356 = vld [vmem:[#allocation2 + $0x71] sm:$0xff]
    %v357 = vld [vmem:[#allocation2 + $0x79] sm:$0x1]
    %v358 = vld [vmem:[#allocation2 + $0x2] sm:$0xff]
    %v359 = vld [vmem:[#allocation2 + $0xa] sm:$0xff]
    %v360 = vld [vmem:[#allocation2 + $0x12] sm:$0xff]
    %v361 = vld [vmem:[#allocation2 + $0x1a] sm:$0xff]
    %v362 = vld [vmem:[#allocation2 + $0x22] sm:$0xff]
    %v363 = vld [vmem:[#allocation2 + $0x2a] sm:$0xff]
    %v364 = vld [vmem:[#allocation2 + $0x32] sm:$0xff]
    %v365 = vld [vmem:[#allocation2 + $0x3a] sm:$0xff]
    %v366 = vld [vmem:[#allocation2 + $0x42] sm:$0xff]
    %v367 = vld [vmem:[#allocation2 + $0x4a] sm:$0xff]
    %v368 = vld [vmem:[#allocation2 + $0x52] sm:$0xff]
    %v369 = vld [vmem:[#allocation2 + $0x5a] sm:$0xff]
    %v370 = vld [vmem:[#allocation2 + $0x62] sm:$0xff]
    %v371 = vld [vmem:[#allocation2 + $0x6a] sm:$0xff]
    %v372 = vld [vmem:[#allocation2 + $0x72] sm:$0xff]
    %v373 = vld [vmem:[#allocation2 + $0x7a] sm:$0x1]
    %v374 = vld [vmem:[#allocation2 + $0x3] sm:$0xff]
    %v375 = vld [vmem:[#allocation2 + $0xb] sm:$0xff]
    %v376 = vld [vmem:[#allocation2 + $0x13] sm:$0xff]
    %v377 = vld [vmem:[#allocation2 + $0x1b] sm:$0xff]
    %v378 = vld [vmem:[#allocation2 + $0x23] sm:$0xff]
    %v379 = vld [vmem:[#allocation2 + $0x2b] sm:$0xff]
    %v380 = vld [vmem:[#allocation2 + $0x33] sm:$0xff]
    %v381 = vld [vmem:[#allocation2 + $0x3b] sm:$0xff]
    %v382 = vld [vmem:[#allocation2 + $0x43] sm:$0xff]
    %v383 = vld [vmem:[#allocation2 + $0x4b] sm:$0xff]
    %v384 = vld [vmem:[#allocation2 + $0x53] sm:$0xff]
    %v385 = vld [vmem:[#allocation2 + $0x5b] sm:$0xff]
    %v386 = vld [vmem:[#allocation2 + $0x63] sm:$0xff]
    %v387 = vld [vmem:[#allocation2 + $0x6b] sm:$0xff]
    %v388 = vld [vmem:[#allocation2 + $0x73] sm:$0xff]
    %v389 = vld [vmem:[#allocation2 + $0x7b] sm:$0x1]
    %v390 = vld [vmem:[#allocation2 + $0x4] sm:$0xff]
    %v391 = vld [vmem:[#allocation2 + $0xc] sm:$0xff]
    %v392 = vld [vmem:[#allocation2 + $0x14] sm:$0xff]
    %v393 = vld [vmem:[#allocation2 + $0x1c] sm:$0xff]
    %v394 = vld [vmem:[#allocation2 + $0x24] sm:$0xff]
    %v395 = vld [vmem:[#allocation2 + $0x2c] sm:$0xff]
    %v396 = vld [vmem:[#allocation2 + $0x34] sm:$0xff]
    %v397 = vld [vmem:[#allocation2 + $0x3c] sm:$0xff]
    %v398 = vld [vmem:[#allocation2 + $0x44] sm:$0xff]
    %v399 = vld [vmem:[#allocation2 + $0x4c] sm:$0xff]
    %v400 = vld [vmem:[#allocation2 + $0x54] sm:$0xff]
    %v401 = vld [vmem:[#allocation2 + $0x5c] sm:$0xff]
    %v402 = vld [vmem:[#allocation2 + $0x64] sm:$0xff]
    %v403 = vld [vmem:[#allocation2 + $0x6c] sm:$0xff]
    %v404 = vld [vmem:[#allocation2 + $0x74] sm:$0xff]
    %v405 = vld [vmem:[#allocation2 + $0x7c] sm:$0x1]
    %v406 = vld [vmem:[#allocation2 + $0x5] sm:$0xff]
    %v407 = vld [vmem:[#allocation2 + $0xd] sm:$0xff]
    %v408 = vld [vmem:[#allocation2 + $0x15] sm:$0xff]
    %v409 = vld [vmem:[#allocation2 + $0x1d] sm:$0xff]
    %v410 = vld [vmem:[#allocation2 + $0x25] sm:$0xff]
    %v411 = vld [vmem:[#allocation2 + $0x2d] sm:$0xff]
    %v412 = vld [vmem:[#allocation2 + $0x35] sm:$0xff]
    %v413 = vld [vmem:[#allocation2 + $0x3d] sm:$0xff]
    %v414 = vld [vmem:[#allocation2 + $0x45] sm:$0xff]
    %v415 = vld [vmem:[#allocation2 + $0x4d] sm:$0xff]
    %v416 = vld [vmem:[#allocation2 + $0x55] sm:$0xff]
    %v417 = vld [vmem:[#allocation2 + $0x5d] sm:$0xff]
    %v418 = vld [vmem:[#allocation2 + $0x65] sm:$0xff]
    %v419 = vld [vmem:[#allocation2 + $0x6d] sm:$0xff]
    %v420 = vld [vmem:[#allocation2 + $0x75] sm:$0xff]
    %v421 = vld [vmem:[#allocation2 + $0x7d] sm:$0x1]
    %v422 = vld [vmem:[#allocation2 + $0x6] sm:$0xff]
    %v423 = vld [vmem:[#allocation2 + $0xe] sm:$0xff]
    %v424 = vld [vmem:[#allocation2 + $0x16] sm:$0xff]
    %v425 = vld [vmem:[#allocation2 + $0x1e] sm:$0xff]
    %v426 = vld [vmem:[#allocation2 + $0x26] sm:$0xff]
    %v427 = vld [vmem:[#allocation2 + $0x2e] sm:$0xff]
    %v428 = vld [vmem:[#allocation2 + $0x36] sm:$0xff]
    %v429 = vld [vmem:[#allocation2 + $0x3e] sm:$0xff]
    %v430 = vld [vmem:[#allocation2 + $0x46] sm:$0xff]
    %v431 = vld [vmem:[#allocation2 + $0x4e] sm:$0xff]
    %v432 = vld [vmem:[#allocation2 + $0x56] sm:$0xff]
    %v433 = vld [vmem:[#allocation2 + $0x5e] sm:$0xff]
    %v434 = vld [vmem:[#allocation2 + $0x66] sm:$0xff]
    %v435 = vld [vmem:[#allocation2 + $0x6e] sm:$0xff]
    %v436 = vld [vmem:[#allocation2 + $0x76] sm:$0xff]
    %v437 = vld [vmem:[#allocation2 + $0x7e] sm:$0x1]
    %v438 = vld [vmem:[#allocation2 + $0x7] sm:$0xff]
    %v439 = vld [vmem:[#allocation2 + $0xf] sm:$0xff]
    %v440 = vld [vmem:[#allocation2 + $0x17] sm:$0xff]
    %v441 = vld [vmem:[#allocation2 + $0x1f] sm:$0xff]
    %v442 = vld [vmem:[#allocation2 + $0x27] sm:$0xff]
    %v443 = vld [vmem:[#allocation2 + $0x2f] sm:$0xff]
    %v444 = vld [vmem:[#allocation2 + $0x37] sm:$0xff]
    %v445 = vld [vmem:[#allocation2 + $0x3f] sm:$0xff]
    %v446 = vld [vmem:[#allocation2 + $0x47] sm:$0xff]
    %v447 = vld [vmem:[#allocation2 + $0x4f] sm:$0xff]
    %v448 = vld [vmem:[#allocation2 + $0x57] sm:$0xff]
    %v449 = vld [vmem:[#allocation2 + $0x5f] sm:$0xff]
    %v450 = vld [vmem:[#allocation2 + $0x67] sm:$0xff]
    %v451 = vld [vmem:[#allocation2 + $0x6f] sm:$0xff]
    %v452 = vld [vmem:[#allocation2 + $0x77] sm:$0xff]
    %v453 = vld [vmem:[#allocation2 + $0x7f] sm:$0x1]
    %v454 = vld [vmem:[#allocation5] sm:$0xff]
    %v455 = vld [vmem:[#allocation5 + $0x8] sm:$0xff]
    %v456 = vld [vmem:[#allocation5 + $0x10] sm:$0xff]
    %v457 = vld [vmem:[#allocation5 + $0x18] sm:$0xff]
    %v458 = vld [vmem:[#allocation5 + $0x20] sm:$0xff]
    %v459 = vld [vmem:[#allocation5 + $0x28] sm:$0xff]
    %v460 = vld [vmem:[#allocation5 + $0x30] sm:$0xff]
    %v461 = vld [vmem:[#allocation5 + $0x38] sm:$0xff]
    %v462 = vld [vmem:[#allocation5 + $0x40] sm:$0xff]
    %v463 = vld [vmem:[#allocation5 + $0x48] sm:$0xff]
    %v464 = vld [vmem:[#allocation5 + $0x50] sm:$0xff]
    %v465 = vld [vmem:[#allocation5 + $0x58] sm:$0xff]
    %v466 = vld [vmem:[#allocation5 + $0x60] sm:$0xff]
    %v467 = vld [vmem:[#allocation5 + $0x68] sm:$0xff]
    %v468 = vld [vmem:[#allocation5 + $0x70] sm:$0xff]
    %v469 = vld [vmem:[#allocation5 + $0x78] sm:$0xff]
    %v470 = vld [vmem:[#allocation5 + $0x80] sm:$0xff]
    %v471 = vld [vmem:[#allocation5 + $0x88] sm:$0xff]
    %v472 = vld [vmem:[#allocation5 + $0x90] sm:$0xff]
    %v473 = vld [vmem:[#allocation5 + $0x98] sm:$0xff]
    %v474 = vld [vmem:[#allocation5 + $0xa0] sm:$0xff]
    %v475 = vld [vmem:[#allocation5 + $0xa8] sm:$0xff]
    %v476 = vld [vmem:[#allocation5 + $0xb0] sm:$0xff]
    %v477 = vld [vmem:[#allocation5 + $0xb8] sm:$0xff]
    %v478 = vld [vmem:[#allocation5 + $0xc0] sm:$0xff]
    %v479 = vld [vmem:[#allocation5 + $0xc8] sm:$0xff]
    %v480 = vld [vmem:[#allocation5 + $0xd0] sm:$0xff]
    %v481 = vld [vmem:[#allocation5 + $0xd8] sm:$0xff]
    %v482 = vld [vmem:[#allocation5 + $0xe0] sm:$0xff]
    %v483 = vld [vmem:[#allocation5 + $0xe8] sm:$0xff]
    %v484 = vld [vmem:[#allocation5 + $0xf0] sm:$0xff]
    %v485 = vld [vmem:[#allocation5 + $0xf8] sm:$0xff]
    %v486 = vld [vmem:[#allocation5 + $0x100] sm:$0xff]
    %v487 = vld [vmem:[#allocation5 + $0x108] sm:$0xff]
    %v488 = vld [vmem:[#allocation5 + $0x110] sm:$0xff]
    %v489 = vld [vmem:[#allocation5 + $0x118] sm:$0xff]
    %v490 = vld [vmem:[#allocation5 + $0x120] sm:$0xff]
    %v491 = vld [vmem:[#allocation5 + $0x128] sm:$0xff]
    %v492 = vld [vmem:[#allocation5 + $0x130] sm:$0xff]
    %v493 = vld [vmem:[#allocation5 + $0x138] sm:$0xff]
    %v494 = vld [vmem:[#allocation5 + $0x140] sm:$0xff]
    %v495 = vld [vmem:[#allocation5 + $0x148] sm:$0xff]
    %v496 = vld [vmem:[#allocation5 + $0x150] sm:$0xff]
    %v497 = vld [vmem:[#allocation5 + $0x158] sm:$0xff]
    %v498 = vld [vmem:[#allocation5 + $0x160] sm:$0xff]
    %v499 = vld [vmem:[#allocation5 + $0x168] sm:$0xff]
    %v500 = vld [vmem:[#allocation5 + $0x170] sm:$0xff]
    %v501 = vld [vmem:[#allocation5 + $0x178] sm:$0xff]
    %v502 = vld [vmem:[#allocation5 + $0x180] sm:$0xff]
    %v503 = vld [vmem:[#allocation5 + $0x188] sm:$0xff]
    %v504 = vld [vmem:[#allocation5 + $0x190] sm:$0xff]
    %v505 = vld [vmem:[#allocation5 + $0x198] sm:$0xff]
    %v506 = vld [vmem:[#allocation5 + $0x1a0] sm:$0xff]
    %v507 = vld [vmem:[#allocation5 + $0x1a8] sm:$0xff]
    %v508 = vld [vmem:[#allocation5 + $0x1b0] sm:$0xff]
    %v509 = vld [vmem:[#allocation5 + $0x1b8] sm:$0xff]
    %v510 = vld [vmem:[#allocation5 + $0x1c0] sm:$0xff]
    %v511 = vld [vmem:[#allocation5 + $0x1c8] sm:$0xff]
    %v512 = vld [vmem:[#allocation5 + $0x1d0] sm:$0xff]
    %v513 = vld [vmem:[#allocation5 + $0x1d8] sm:$0xff]
    %v514 = vld [vmem:[#allocation5 + $0x1e0] sm:$0xff]
    %v515 = vld [vmem:[#allocation5 + $0x1e8] sm:$0xff]
    %v516 = vld [vmem:[#allocation5 + $0x1f0] sm:$0xff]
    %v517 = vld [vmem:[#allocation5 + $0x1f8] sm:$0xff]
    %v518 = vld [vmem:[#allocation5 + $0x200] sm:$0xff]
    %v519 = vld [vmem:[#allocation5 + $0x208] sm:$0xff]
    %v520 = vld [vmem:[#allocation5 + $0x210] sm:$0xff]
    %v521 = vld [vmem:[#allocation5 + $0x218] sm:$0xff]
    %v522 = vld [vmem:[#allocation5 + $0x220] sm:$0xff]
    %v523 = vld [vmem:[#allocation5 + $0x228] sm:$0xff]
    %v524 = vld [vmem:[#allocation5 + $0x230] sm:$0xff]
    %v525 = vld [vmem:[#allocation5 + $0x238] sm:$0xff]
    %v526 = vld [vmem:[#allocation5 + $0x240] sm:$0xff]
    %v527 = vld [vmem:[#allocation5 + $0x248] sm:$0xff]
    %v528 = vld [vmem:[#allocation5 + $0x250] sm:$0xff]
    %v529 = vld [vmem:[#allocation5 + $0x258] sm:$0xff]
    %v530 = vld [vmem:[#allocation5 + $0x260] sm:$0xff]
    %v531 = vld [vmem:[#allocation5 + $0x268] sm:$0xff]
    %v532 = vld [vmem:[#allocation5 + $0x270] sm:$0xff]
    %v533 = vld [vmem:[#allocation5 + $0x278] sm:$0xff]
    %v534 = vld [vmem:[#allocation5 + $0x280] sm:$0xff]
    %v535 = vld [vmem:[#allocation5 + $0x288] sm:$0xff]
    %v536 = vld [vmem:[#allocation5 + $0x290] sm:$0xff]
    %v537 = vld [vmem:[#allocation5 + $0x298] sm:$0xff]
    %v538 = vld [vmem:[#allocation5 + $0x2a0] sm:$0xff]
    %v539 = vld [vmem:[#allocation5 + $0x2a8] sm:$0xff]
    %v540 = vld [vmem:[#allocation5 + $0x2b0] sm:$0xff]
    %v541 = vld [vmem:[#allocation5 + $0x2b8] sm:$0xff]
    %v542 = vld [vmem:[#allocation5 + $0x2c0] sm:$0xff]
    %v543 = vld [vmem:[#allocation5 + $0x2c8] sm:$0xff]
    %v544 = vld [vmem:[#allocation5 + $0x2d0] sm:$0xff]
    %v545 = vld [vmem:[#allocation5 + $0x2d8] sm:$0xff]
    %v546 = vld [vmem:[#allocation5 + $0x2e0] sm:$0xff]
    %v547 = vld [vmem:[#allocation5 + $0x2e8] sm:$0xff]
    %v548 = vld [vmem:[#allocation5 + $0x2f0] sm:$0xff]
    %v549 = vld [vmem:[#allocation5 + $0x2f8] sm:$0xff]
    %v550 = vld [vmem:[#allocation5 + $0x300] sm:$0xff]
    %v551 = vld [vmem:[#allocation5 + $0x308] sm:$0xff]
    %v552 = vld [vmem:[#allocation5 + $0x310] sm:$0xff]
    %v553 = vld [vmem:[#allocation5 + $0x318] sm:$0xff]
    %v554 = vld [vmem:[#allocation5 + $0x320] sm:$0xff]
    %v555 = vld [vmem:[#allocation5 + $0x328] sm:$0xff]
    %v556 = vld [vmem:[#allocation5 + $0x330] sm:$0xff]
    %v557 = vld [vmem:[#allocation5 + $0x338] sm:$0xff]
    %v558 = vld [vmem:[#allocation5 + $0x340] sm:$0xff]
    %v559 = vld [vmem:[#allocation5 + $0x348] sm:$0xff]
    %v560 = vld [vmem:[#allocation5 + $0x350] sm:$0xff]
    %v561 = vld [vmem:[#allocation5 + $0x358] sm:$0xff]
    %v562 = vld [vmem:[#allocation5 + $0x360] sm:$0xff]
    %v563 = vld [vmem:[#allocation5 + $0x368] sm:$0xff]
    %v564 = vld [vmem:[#allocation5 + $0x370] sm:$0xff]
    %v565 = vld [vmem:[#allocation5 + $0x378] sm:$0xff]
    %v566 = vld [vmem:[#allocation5 + $0x380] sm:$0xff]
    %v567 = vld [vmem:[#allocation5 + $0x388] sm:$0xff]
    %v568 = vld [vmem:[#allocation5 + $0x390] sm:$0xff]
    %v569 = vld [vmem:[#allocation5 + $0x398] sm:$0xff]
    %v570 = vld [vmem:[#allocation5 + $0x3a0] sm:$0xff]
    %v571 = vld [vmem:[#allocation5 + $0x3a8] sm:$0xff]
    %v572 = vld [vmem:[#allocation5 + $0x3b0] sm:$0xff]
    %v573 = vld [vmem:[#allocation5 + $0x3b8] sm:$0xff]
    %v574 = vld [vmem:[#allocation5 + $0x3c0] sm:$0xff]
    %v575 = vld [vmem:[#allocation5 + $0x3c8] sm:$0xff]
    %v576 = vld [vmem:[#allocation5 + $0x3d0] sm:$0xff]
    %v577 = vld [vmem:[#allocation5 + $0x3d8] sm:$0xff]
    %v578 = vld [vmem:[#allocation5 + $0x3e0] sm:$0xff]
    %v579 = vld [vmem:[#allocation5 + $0x3e8] sm:$0xff]
    %v580 = vld [vmem:[#allocation5 + $0x3f0] sm:$0xff]
    %v581 = vld [vmem:[#allocation5 + $0x3f8] sm:$0xff]
    %v582 = vld [vmem:[%s3] sm:$0x1]
    %v584 = vlaneseq
    %v585 = vshrl.u32 %v584, 7
    %v586 = vsub.s32 0, %v585
    %v587 = vrot.slane %v582, %v586
    %589 = vmatprep.subr.mxu0 0.0
    %590 = vmatpush1.msra.mxu0 %v469
    %591 = vmatprep.subr.mxu0 0.0
    %592 = vmatpush1.msra.mxu0 %v468
    %593 = vmatprep.subr.mxu0 0.0
    %594 = vmatpush1.msra.mxu0 %v467
    %595 = vmatprep.subr.mxu0 0.0
    %596 = vmatpush1.msra.mxu0 %v466
    %597 = vmatprep.subr.mxu0 0.0
    %598 = vmatpush1.msra.mxu0 %v465
    %599 = vmatprep.subr.mxu0 0.0
    %600 = vmatpush1.msra.mxu0 %v464
    %601 = vmatprep.subr.mxu0 0.0
    %602 = vmatpush1.msra.mxu0 %v463
    %603 = vmatprep.subr.mxu0 0.0
    %604 = vmatpush1.msra.mxu0 %v462
    %605 = vmatprep.subr.mxu0 0.0
    %606 = vmatpush1.msra.mxu0 %v461
    %607 = vmatprep.subr.mxu0 0.0
    %608 = vmatpush1.msra.mxu0 %v460
    %609 = vmatprep.subr.mxu0 0.0
    %610 = vmatpush1.msra.mxu0 %v459
    %611 = vmatprep.subr.mxu0 0.0
    %612 = vmatpush1.msra.mxu0 %v458
    %613 = vmatprep.subr.mxu0 0.0
    %614 = vmatpush1.msra.mxu0 %v457
    %615 = vmatprep.subr.mxu0 0.0
    %616 = vmatpush1.msra.mxu0 %v456
    %617 = vmatprep.subr.mxu0 0.0
    %618 = vmatpush1.msra.mxu0 %v455
    %619 = vmatprep.subr.mxu0 0.0
    %620 = vmatpush1.msra.mxu0 %v454
    %621 = vmatprep.subr.mxu0 0.0
    %622 = vmatpush2.msra.mxu0 %v485
    %623 = vmatprep.subr.mxu0 0.0
    %624 = vmatpush2.msra.mxu0 %v484
    %625 = vmatprep.subr.mxu0 0.0
    %626 = vmatpush2.msra.mxu0 %v483
    %627 = vmatprep.subr.mxu0 0.0
    %628 = vmatpush2.msra.mxu0 %v482
    %629 = vmatprep.subr.mxu0 0.0
    %630 = vmatpush2.msra.mxu0 %v481
    %631 = vmatprep.subr.mxu0 0.0
    %632 = vmatpush2.msra.mxu0 %v480
    %633 = vmatprep.subr.mxu0 0.0
    %634 = vmatpush2.msra.mxu0 %v479
    %635 = vmatprep.subr.mxu0 0.0
    %636 = vmatpush2.msra.mxu0 %v478
    %637 = vmatprep.subr.mxu0 0.0
    %638 = vmatpush2.msra.mxu0 %v477
    %639 = vmatprep.subr.mxu0 0.0
    %640 = vmatpush2.msra.mxu0 %v476
    %641 = vmatprep.subr.mxu0 0.0
    %642 = vmatpush2.msra.mxu0 %v475
    %643 = vmatprep.subr.mxu0 0.0
    %644 = vmatpush2.msra.mxu0 %v474
    %645 = vmatprep.subr.mxu0 0.0
    %646 = vmatpush2.msra.mxu0 %v473
    %647 = vmatprep.subr.mxu0 0.0
    %648 = vmatpush2.msra.mxu0 %v472
    %649 = vmatprep.subr.mxu0 0.0
    %650 = vmatpush2.msra.mxu0 %v471
    %651 = vmatprep.subr.mxu0 0.0
    %652 = vmatpush2.msra.mxu0 %v470
    %653 = vmatprep.mubr.f32.mxu0 %v342
    %654 = vmatmul.mubr.f32.gmra.mxu0 %v326
    %v655 = vpop.f32.mrf.mxu0
    %v656 = vadd.f32 %v587, %v655
    %v657 = vpop.f32.mrf.mxu0
    %658 = vmatprep.mubr.f32.mxu0 %v343
    %659 = vmatmul.mubr.f32.gmra.mxu0 %v327
    %v660 = vpop.f32.mrf.mxu0
    %v661 = vadd.f32 %v587, %v660
    %v662 = vpop.f32.mrf.mxu0
    %663 = vmatprep.mubr.f32.mxu0 %v344
    %664 = vmatmul.mubr.f32.gmra.mxu0 %v328
    %v665 = vpop.f32.mrf.mxu0
    %v666 = vadd.f32 %v587, %v665
    %v667 = vpop.f32.mrf.mxu0
    %668 = vmatprep.mubr.f32.mxu0 %v345
    %669 = vmatmul.mubr.f32.gmra.mxu0 %v329
    %v670 = vpop.f32.mrf.mxu0
    %v671 = vadd.f32 %v587, %v670
    %v672 = vpop.f32.mrf.mxu0
    %673 = vmatprep.mubr.f32.mxu0 %v346
    %674 = vmatmul.mubr.f32.gmra.mxu0 %v330
    %v675 = vpop.f32.mrf.mxu0
    %v676 = vadd.f32 %v587, %v675
    %v677 = vpop.f32.mrf.mxu0
    %678 = vmatprep.mubr.f32.mxu0 %v347
    %679 = vmatmul.mubr.f32.gmra.mxu0 %v331
    %v680 = vpop.f32.mrf.mxu0
    %v681 = vadd.f32 %v587, %v680
    %v682 = vpop.f32.mrf.mxu0
    %683 = vmatprep.mubr.f32.mxu0 %v348
    %684 = vmatmul.mubr.f32.gmra.mxu0 %v332
    %v685 = vpop.f32.mrf.mxu0
    %v686 = vadd.f32 %v587, %v685
    %v687 = vpop.f32.mrf.mxu0
    %688 = vmatprep.mubr.f32.mxu0 %v349
    %689 = vmatmul.mubr.f32.gmra.mxu0 %v333
    %v690 = vpop.f32.mrf.mxu0
    %v691 = vadd.f32 %v587, %v690
    %v692 = vpop.f32.mrf.mxu0
    %693 = vmatprep.mubr.f32.mxu0 %v350
    %694 = vmatmul.mubr.f32.gmra.mxu0 %v334
    %v695 = vpop.f32.mrf.mxu0
    %v696 = vadd.f32 %v587, %v695
    %v697 = vpop.f32.mrf.mxu0
    %698 = vmatprep.mubr.f32.mxu0 %v351
    %699 = vmatmul.mubr.f32.gmra.mxu0 %v335
    %v700 = vpop.f32.mrf.mxu0
    %v701 = vadd.f32 %v587, %v700
    %v702 = vpop.f32.mrf.mxu0
    %703 = vmatprep.mubr.f32.mxu0 %v352
    %704 = vmatmul.mubr.f32.gmra.mxu0 %v336
    %v705 = vpop.f32.mrf.mxu0
    %v706 = vadd.f32 %v587, %v705
    %v707 = vpop.f32.mrf.mxu0
    %708 = vmatprep.mubr.f32.mxu0 %v353
    %709 = vmatmul.mubr.f32.gmra.mxu0 %v337
    %v710 = vpop.f32.mrf.mxu0
    %v711 = vadd.f32 %v587, %v710
    %v712 = vpop.f32.mrf.mxu0
    %713 = vmatprep.mubr.f32.mxu0 %v354
    %714 = vmatmul.mubr.f32.gmra.mxu0 %v338
    %v715 = vpop.f32.mrf.mxu0
    %v716 = vadd.f32 %v587, %v715
    %v717 = vpop.f32.mrf.mxu0
    %718 = vmatprep.mubr.f32.mxu0 %v355
    %719 = vmatmul.mubr.f32.gmra.mxu0 %v339
    %v720 = vpop.f32.mrf.mxu0
    %v721 = vadd.f32 %v587, %v720
    %v722 = vpop.f32.mrf.mxu0
    %723 = vmatprep.mubr.f32.mxu0 %v356
    %724 = vmatmul.mubr.f32.gmra.mxu0 %v340
    %v725 = vpop.f32.mrf.mxu0
    %v726 = vadd.f32 %v587, %v725
    %v727 = vpop.f32.mrf.mxu0
    %728 = vmatprep.mubr.f32.mxu0 %v357
    %729 = vmatmul.mubr.f32.gmra.mxu0 %v341
    %v730 = vpop.f32.mrf.mxu0
    %v731 = vadd.f32 %v587, %v730
    %v732 = vpop.f32.mrf.mxu0
    %733 = vdwg.mxu0
    %734 = vmatprep.subr.mxu0 0.0
    %735 = vmatpush1.msra.mxu0 %v501
    %736 = vmatprep.subr.mxu0 0.0
    %737 = vmatpush1.msra.mxu0 %v500
    %738 = vmatprep.subr.mxu0 0.0
    %739 = vmatpush1.msra.mxu0 %v499
    %740 = vmatprep.subr.mxu0 0.0
    %741 = vmatpush1.msra.mxu0 %v498
    %742 = vmatprep.subr.mxu0 0.0
    %743 = vmatpush1.msra.mxu0 %v497
    %744 = vmatprep.subr.mxu0 0.0
    %745 = vmatpush1.msra.mxu0 %v496
    %746 = vmatprep.subr.mxu0 0.0
    %747 = vmatpush1.msra.mxu0 %v495
    %748 = vmatprep.subr.mxu0 0.0
    %749 = vmatpush1.msra.mxu0 %v494
    %750 = vmatprep.subr.mxu0 0.0
    %751 = vmatpush1.msra.mxu0 %v493
    %752 = vmatprep.subr.mxu0 0.0
    %753 = vmatpush1.msra.mxu0 %v492
    %754 = vmatprep.subr.mxu0 0.0
    %755 = vmatpush1.msra.mxu0 %v491
    %756 = vmatprep.subr.mxu0 0.0
    %757 = vmatpush1.msra.mxu0 %v490
    %758 = vmatprep.subr.mxu0 0.0
    %759 = vmatpush1.msra.mxu0 %v489
    %760 = vmatprep.subr.mxu0 0.0
    %761 = vmatpush1.msra.mxu0 %v488
    %762 = vmatprep.subr.mxu0 0.0
    %763 = vmatpush1.msra.mxu0 %v487
    %764 = vmatprep.subr.mxu0 0.0
    %765 = vmatpush1.msra.mxu0 %v486
    %766 = vmatprep.subr.mxu0 0.0
    %767 = vmatpush2.msra.mxu0 %v517
    %768 = vmatprep.subr.mxu0 0.0
    %769 = vmatpush2.msra.mxu0 %v516
    %770 = vmatprep.subr.mxu0 0.0
    %771 = vmatpush2.msra.mxu0 %v515
    %772 = vmatprep.subr.mxu0 0.0
    %773 = vmatpush2.msra.mxu0 %v514
    %774 = vmatprep.subr.mxu0 0.0
    %775 = vmatpush2.msra.mxu0 %v513
    %776 = vmatprep.subr.mxu0 0.0
    %777 = vmatpush2.msra.mxu0 %v512
    %778 = vmatprep.subr.mxu0 0.0
    %779 = vmatpush2.msra.mxu0 %v511
    %780 = vmatprep.subr.mxu0 0.0
    %781 = vmatpush2.msra.mxu0 %v510
    %782 = vmatprep.subr.mxu0 0.0
    %783 = vmatpush2.msra.mxu0 %v509
    %784 = vmatprep.subr.mxu0 0.0
    %785 = vmatpush2.msra.mxu0 %v508
    %786 = vmatprep.subr.mxu0 0.0
    %787 = vmatpush2.msra.mxu0 %v507
    %788 = vmatprep.subr.mxu0 0.0
    %789 = vmatpush2.msra.mxu0 %v506
    %790 = vmatprep.subr.mxu0 0.0
    %791 = vmatpush2.msra.mxu0 %v505
    %792 = vmatprep.subr.mxu0 0.0
    %793 = vmatpush2.msra.mxu0 %v504
    %794 = vmatprep.subr.mxu0 0.0
    %795 = vmatpush2.msra.mxu0 %v503
    %796 = vmatprep.subr.mxu0 0.0
    %797 = vmatpush2.msra.mxu0 %v502
    %798 = vmatprep.mubr.f32.mxu0 %v374
    %799 = vmatmul.mubr.f32.gmra.mxu0 %v358
    %v800 = vpop.f32.mrf.mxu0
    %v801 = vadd.f32 %v656, %v800
    %v802 = vpop.f32.mrf.mxu0
    %803 = vmatprep.mubr.f32.mxu0 %v375
    %804 = vmatmul.mubr.f32.gmra.mxu0 %v359
    %v805 = vpop.f32.mrf.mxu0
    %v806 = vadd.f32 %v661, %v805
    %v807 = vpop.f32.mrf.mxu0
    %808 = vmatprep.mubr.f32.mxu0 %v376
    %809 = vmatmul.mubr.f32.gmra.mxu0 %v360
    %v810 = vpop.f32.mrf.mxu0
    %v811 = vadd.f32 %v666, %v810
    %v812 = vpop.f32.mrf.mxu0
    %813 = vmatprep.mubr.f32.mxu0 %v377
    %814 = vmatmul.mubr.f32.gmra.mxu0 %v361
    %v815 = vpop.f32.mrf.mxu0
    %v816 = vadd.f32 %v671, %v815
    %v817 = vpop.f32.mrf.mxu0
    %818 = vmatprep.mubr.f32.mxu0 %v378
    %819 = vmatmul.mubr.f32.gmra.mxu0 %v362
    %v820 = vpop.f32.mrf.mxu0
    %v821 = vadd.f32 %v676, %v820
    %v822 = vpop.f32.mrf.mxu0
    %823 = vmatprep.mubr.f32.mxu0 %v379
    %824 = vmatmul.mubr.f32.gmra.mxu0 %v363
    %v825 = vpop.f32.mrf.mxu0
    %v826 = vadd.f32 %v681, %v825
    %v827 = vpop.f32.mrf.mxu0
    %828 = vmatprep.mubr.f32.mxu0 %v380
    %829 = vmatmul.mubr.f32.gmra.mxu0 %v364
    %v830 = vpop.f32.mrf.mxu0
    %v831 = vadd.f32 %v686, %v830
    %v832 = vpop.f32.mrf.mxu0
    %833 = vmatprep.mubr.f32.mxu0 %v381
    %834 = vmatmul.mubr.f32.gmra.mxu0 %v365
    %v835 = vpop.f32.mrf.mxu0
    %v836 = vadd.f32 %v691, %v835
    %v837 = vpop.f32.mrf.mxu0
    %838 = vmatprep.mubr.f32.mxu0 %v382
    %839 = vmatmul.mubr.f32.gmra.mxu0 %v366
    %v840 = vpop.f32.mrf.mxu0
    %v841 = vadd.f32 %v696, %v840
    %v842 = vpop.f32.mrf.mxu0
    %843 = vmatprep.mubr.f32.mxu0 %v383
    %844 = vmatmul.mubr.f32.gmra.mxu0 %v367
    %v845 = vpop.f32.mrf.mxu0
    %v846 = vadd.f32 %v701, %v845
    %v847 = vpop.f32.mrf.mxu0
    %848 = vmatprep.mubr.f32.mxu0 %v384
    %849 = vmatmul.mubr.f32.gmra.mxu0 %v368
    %v850 = vpop.f32.mrf.mxu0
    %v851 = vadd.f32 %v706, %v850
    %v852 = vpop.f32.mrf.mxu0
    %853 = vmatprep.mubr.f32.mxu0 %v385
    %854 = vmatmul.mubr.f32.gmra.mxu0 %v369
    %v855 = vpop.f32.mrf.mxu0
    %v856 = vadd.f32 %v711, %v855
    %v857 = vpop.f32.mrf.mxu0
    %858 = vmatprep.mubr.f32.mxu0 %v386
    %859 = vmatmul.mubr.f32.gmra.mxu0 %v370
    %v860 = vpop.f32.mrf.mxu0
    %v861 = vadd.f32 %v716, %v860
    %v862 = vpop.f32.mrf.mxu0
    %863 = vmatprep.mubr.f32.mxu0 %v387
    %864 = vmatmul.mubr.f32.gmra.mxu0 %v371
    %v865 = vpop.f32.mrf.mxu0
    %v866 = vadd.f32 %v721, %v865
    %v867 = vpop.f32.mrf.mxu0
    %868 = vmatprep.mubr.f32.mxu0 %v388
    %869 = vmatmul.mubr.f32.gmra.mxu0 %v372
    %v870 = vpop.f32.mrf.mxu0
    %v871 = vadd.f32 %v726, %v870
    %v872 = vpop.f32.mrf.mxu0
    %873 = vmatprep.mubr.f32.mxu0 %v389
    %874 = vmatmul.mubr.f32.gmra.mxu0 %v373
    %v875 = vpop.f32.mrf.mxu0
    %v876 = vadd.f32 %v731, %v875
    %v877 = vpop.f32.mrf.mxu0
    %878 = vdwg.mxu0
    %879 = vmatprep.subr.mxu0 0.0
    %880 = vmatpush1.msra.mxu0 %v533
    %881 = vmatprep.subr.mxu0 0.0
    %882 = vmatpush1.msra.mxu0 %v532
    %883 = vmatprep.subr.mxu0 0.0
    %884 = vmatpush1.msra.mxu0 %v531
    %885 = vmatprep.subr.mxu0 0.0
    %886 = vmatpush1.msra.mxu0 %v530
    %887 = vmatprep.subr.mxu0 0.0
    %888 = vmatpush1.msra.mxu0 %v529
    %889 = vmatprep.subr.mxu0 0.0
    %890 = vmatpush1.msra.mxu0 %v528
    %891 = vmatprep.subr.mxu0 0.0
    %892 = vmatpush1.msra.mxu0 %v527
    %893 = vmatprep.subr.mxu0 0.0
    %894 = vmatpush1.msra.mxu0 %v526
    %895 = vmatprep.subr.mxu0 0.0
    %896 = vmatpush1.msra.mxu0 %v525
    %897 = vmatprep.subr.mxu0 0.0
    %898 = vmatpush1.msra.mxu0 %v524
    %899 = vmatprep.subr.mxu0 0.0
    %900 = vmatpush1.msra.mxu0 %v523
    %901 = vmatprep.subr.mxu0 0.0
    %902 = vmatpush1.msra.mxu0 %v522
    %903 = vmatprep.subr.mxu0 0.0
    %904 = vmatpush1.msra.mxu0 %v521
    %905 = vmatprep.subr.mxu0 0.0
    %906 = vmatpush1.msra.mxu0 %v520
    %907 = vmatprep.subr.mxu0 0.0
    %908 = vmatpush1.msra.mxu0 %v519
    %909 = vmatprep.subr.mxu0 0.0
    %910 = vmatpush1.msra.mxu0 %v518
    %911 = vmatprep.subr.mxu0 0.0
    %912 = vmatpush2.msra.mxu0 %v549
    %913 = vmatprep.subr.mxu0 0.0
    %914 = vmatpush2.msra.mxu0 %v548
    %915 = vmatprep.subr.mxu0 0.0
    %916 = vmatpush2.msra.mxu0 %v547
    %917 = vmatprep.subr.mxu0 0.0
    %918 = vmatpush2.msra.mxu0 %v546
    %919 = vmatprep.subr.mxu0 0.0
    %920 = vmatpush2.msra.mxu0 %v545
    %921 = vmatprep.subr.mxu0 0.0
    %922 = vmatpush2.msra.mxu0 %v544
    %923 = vmatprep.subr.mxu0 0.0
    %924 = vmatpush2.msra.mxu0 %v543
    %925 = vmatprep.subr.mxu0 0.0
    %926 = vmatpush2.msra.mxu0 %v542
    %927 = vmatprep.subr.mxu0 0.0
    %928 = vmatpush2.msra.mxu0 %v541
    %929 = vmatprep.subr.mxu0 0.0
    %930 = vmatpush2.msra.mxu0 %v540
    %931 = vmatprep.subr.mxu0 0.0
    %932 = vmatpush2.msra.mxu0 %v539
    %933 = vmatprep.subr.mxu0 0.0
    %934 = vmatpush2.msra.mxu0 %v538
    %935 = vmatprep.subr.mxu0 0.0
    %936 = vmatpush2.msra.mxu0 %v537
    %937 = vmatprep.subr.mxu0 0.0
    %938 = vmatpush2.msra.mxu0 %v536
    %939 = vmatprep.subr.mxu0 0.0
    %940 = vmatpush2.msra.mxu0 %v535
    %941 = vmatprep.subr.mxu0 0.0
    %942 = vmatpush2.msra.mxu0 %v534
    %943 = vmatprep.mubr.f32.mxu0 %v406
    %944 = vmatmul.mubr.f32.gmra.mxu0 %v390
    %v945 = vpop.f32.mrf.mxu0
    %v946 = vadd.f32 %v801, %v945
    %v947 = vpop.f32.mrf.mxu0
    %948 = vmatprep.mubr.f32.mxu0 %v407
    %949 = vmatmul.mubr.f32.gmra.mxu0 %v391
    %v950 = vpop.f32.mrf.mxu0
    %v951 = vadd.f32 %v806, %v950
    %v952 = vpop.f32.mrf.mxu0
    %953 = vmatprep.mubr.f32.mxu0 %v408
    %954 = vmatmul.mubr.f32.gmra.mxu0 %v392
    %v955 = vpop.f32.mrf.mxu0
    %v956 = vadd.f32 %v811, %v955
    %v957 = vpop.f32.mrf.mxu0
    %958 = vmatprep.mubr.f32.mxu0 %v409
    %959 = vmatmul.mubr.f32.gmra.mxu0 %v393
    %v960 = vpop.f32.mrf.mxu0
    %v961 = vadd.f32 %v816, %v960
    %v962 = vpop.f32.mrf.mxu0
    %963 = vmatprep.mubr.f32.mxu0 %v410
    %964 = vmatmul.mubr.f32.gmra.mxu0 %v394
    %v965 = vpop.f32.mrf.mxu0
    %v966 = vadd.f32 %v821, %v965
    %v967 = vpop.f32.mrf.mxu0
    %968 = vmatprep.mubr.f32.mxu0 %v411
    %969 = vmatmul.mubr.f32.gmra.mxu0 %v395
    %v970 = vpop.f32.mrf.mxu0
    %v971 = vadd.f32 %v826, %v970
    %v972 = vpop.f32.mrf.mxu0
    %973 = vmatprep.mubr.f32.mxu0 %v412
    %974 = vmatmul.mubr.f32.gmra.mxu0 %v396
    %v975 = vpop.f32.mrf.mxu0
    %v976 = vadd.f32 %v831, %v975
    %v977 = vpop.f32.mrf.mxu0
    %978 = vmatprep.mubr.f32.mxu0 %v413
    %979 = vmatmul.mubr.f32.gmra.mxu0 %v397
    %v980 = vpop.f32.mrf.mxu0
    %v981 = vadd.f32 %v836, %v980
    %v982 = vpop.f32.mrf.mxu0
    %983 = vmatprep.mubr.f32.mxu0 %v414
    %984 = vmatmul.mubr.f32.gmra.mxu0 %v398
    %v985 = vpop.f32.mrf.mxu0
    %v986 = vadd.f32 %v841, %v985
    %v987 = vpop.f32.mrf.mxu0
    %988 = vmatprep.mubr.f32.mxu0 %v415
    %989 = vmatmul.mubr.f32.gmra.mxu0 %v399
    %v990 = vpop.f32.mrf.mxu0
    %v991 = vadd.f32 %v846, %v990
    %v992 = vpop.f32.mrf.mxu0
    %993 = vmatprep.mubr.f32.mxu0 %v416
    %994 = vmatmul.mubr.f32.gmra.mxu0 %v400
    %v995 = vpop.f32.mrf.mxu0
    %v996 = vadd.f32 %v851, %v995
    %v997 = vpop.f32.mrf.mxu0
    %998 = vmatprep.mubr.f32.mxu0 %v417
    %999 = vmatmul.mubr.f32.gmra.mxu0 %v401
    %v1000 = vpop.f32.mrf.mxu0
    %v1001 = vadd.f32 %v856, %v1000
    %v1002 = vpop.f32.mrf.mxu0
    %1003 = vmatprep.mubr.f32.mxu0 %v418
    %1004 = vmatmul.mubr.f32.gmra.mxu0 %v402
    %v1005 = vpop.f32.mrf.mxu0
    %v1006 = vadd.f32 %v861, %v1005
    %v1007 = vpop.f32.mrf.mxu0
    %1008 = vmatprep.mubr.f32.mxu0 %v419
    %1009 = vmatmul.mubr.f32.gmra.mxu0 %v403
    %v1010 = vpop.f32.mrf.mxu0
    %v1011 = vadd.f32 %v866, %v1010
    %v1012 = vpop.f32.mrf.mxu0
    %1013 = vmatprep.mubr.f32.mxu0 %v420
    %1014 = vmatmul.mubr.f32.gmra.mxu0 %v404
    %v1015 = vpop.f32.mrf.mxu0
    %v1016 = vadd.f32 %v871, %v1015
    %v1017 = vpop.f32.mrf.mxu0
    %1018 = vmatprep.mubr.f32.mxu0 %v421
    %1019 = vmatmul.mubr.f32.gmra.mxu0 %v405
    %v1020 = vpop.f32.mrf.mxu0
    %v1021 = vadd.f32 %v876, %v1020
    %v1022 = vpop.f32.mrf.mxu0
    %1023 = vdwg.mxu0
    %1024 = vmatprep.subr.mxu0 0.0
    %1025 = vmatpush1.msra.mxu0 %v565
    %1026 = vmatprep.subr.mxu0 0.0
    %1027 = vmatpush1.msra.mxu0 %v564
    %1028 = vmatprep.subr.mxu0 0.0
    %1029 = vmatpush1.msra.mxu0 %v563
    %1030 = vmatprep.subr.mxu0 0.0
    %1031 = vmatpush1.msra.mxu0 %v562
    %1032 = vmatprep.subr.mxu0 0.0
    %1033 = vmatpush1.msra.mxu0 %v561
    %1034 = vmatprep.subr.mxu0 0.0
    %1035 = vmatpush1.msra.mxu0 %v560
    %1036 = vmatprep.subr.mxu0 0.0
    %1037 = vmatpush1.msra.mxu0 %v559
    %1038 = vmatprep.subr.mxu0 0.0
    %1039 = vmatpush1.msra.mxu0 %v558
    %1040 = vmatprep.subr.mxu0 0.0
    %1041 = vmatpush1.msra.mxu0 %v557
    %1042 = vmatprep.subr.mxu0 0.0
    %1043 = vmatpush1.msra.mxu0 %v556
    %1044 = vmatprep.subr.mxu0 0.0
    %1045 = vmatpush1.msra.mxu0 %v555
    %1046 = vmatprep.subr.mxu0 0.0
    %1047 = vmatpush1.msra.mxu0 %v554
    %1048 = vmatprep.subr.mxu0 0.0
    %1049 = vmatpush1.msra.mxu0 %v553
    %1050 = vmatprep.subr.mxu0 0.0
    %1051 = vmatpush1.msra.mxu0 %v552
    %1052 = vmatprep.subr.mxu0 0.0
    %1053 = vmatpush1.msra.mxu0 %v551
    %1054 = vmatprep.subr.mxu0 0.0
    %1055 = vmatpush1.msra.mxu0 %v550
    %1056 = vmatprep.subr.mxu0 0.0
    %1057 = vmatpush2.msra.mxu0 %v581
    %1058 = vmatprep.subr.mxu0 0.0
    %1059 = vmatpush2.msra.mxu0 %v580
    %1060 = vmatprep.subr.mxu0 0.0
    %1061 = vmatpush2.msra.mxu0 %v579
    %1062 = vmatprep.subr.mxu0 0.0
    %1063 = vmatpush2.msra.mxu0 %v578
    %1064 = vmatprep.subr.mxu0 0.0
    %1065 = vmatpush2.msra.mxu0 %v577
    %1066 = vmatprep.subr.mxu0 0.0
    %1067 = vmatpush2.msra.mxu0 %v576
    %1068 = vmatprep.subr.mxu0 0.0
    %1069 = vmatpush2.msra.mxu0 %v575
    %1070 = vmatprep.subr.mxu0 0.0
    %1071 = vmatpush2.msra.mxu0 %v574
    %1072 = vmatprep.subr.mxu0 0.0
    %1073 = vmatpush2.msra.mxu0 %v573
    %1074 = vmatprep.subr.mxu0 0.0
    %1075 = vmatpush2.msra.mxu0 %v572
    %1076 = vmatprep.subr.mxu0 0.0
    %1077 = vmatpush2.msra.mxu0 %v571
    %1078 = vmatprep.subr.mxu0 0.0
    %1079 = vmatpush2.msra.mxu0 %v570
    %1080 = vmatprep.subr.mxu0 0.0
    %1081 = vmatpush2.msra.mxu0 %v569
    %1082 = vmatprep.subr.mxu0 0.0
    %1083 = vmatpush2.msra.mxu0 %v568
    %1084 = vmatprep.subr.mxu0 0.0
    %1085 = vmatpush2.msra.mxu0 %v567
    %1086 = vmatprep.subr.mxu0 0.0
    %1087 = vmatpush2.msra.mxu0 %v566
    %1088 = vmatprep.mubr.f32.mxu0 %v438
    %1089 = vmatmul.mubr.f32.gmra.mxu0 %v422
    %v1090 = vpop.f32.mrf.mxu0
    %v1091 = vadd.f32 %v946, %v1090
    %v1092 = vpop.f32.mrf.mxu0
    %1093 = vmatprep.mubr.f32.mxu0 %v439
    %1094 = vmatmul.mubr.f32.gmra.mxu0 %v423
    %v1095 = vpop.f32.mrf.mxu0
    %v1096 = vadd.f32 %v951, %v1095
    %v1097 = vpop.f32.mrf.mxu0
    %1098 = vmatprep.mubr.f32.mxu0 %v440
    %1099 = vmatmul.mubr.f32.gmra.mxu0 %v424
    %v1100 = vpop.f32.mrf.mxu0
    %v1101 = vadd.f32 %v956, %v1100
    %v1102 = vpop.f32.mrf.mxu0
    %1103 = vmatprep.mubr.f32.mxu0 %v441
    %1104 = vmatmul.mubr.f32.gmra.mxu0 %v425
    %v1105 = vpop.f32.mrf.mxu0
    %v1106 = vadd.f32 %v961, %v1105
    %v1107 = vpop.f32.mrf.mxu0
    %1108 = vmatprep.mubr.f32.mxu0 %v442
    %1109 = vmatmul.mubr.f32.gmra.mxu0 %v426
    %v1110 = vpop.f32.mrf.mxu0
    %v1111 = vadd.f32 %v966, %v1110
    %v1112 = vpop.f32.mrf.mxu0
    %1113 = vmatprep.mubr.f32.mxu0 %v443
    %1114 = vmatmul.mubr.f32.gmra.mxu0 %v427
    %v1115 = vpop.f32.mrf.mxu0
    %v1116 = vadd.f32 %v971, %v1115
    %v1117 = vpop.f32.mrf.mxu0
    %1118 = vmatprep.mubr.f32.mxu0 %v444
    %1119 = vmatmul.mubr.f32.gmra.mxu0 %v428
    %v1120 = vpop.f32.mrf.mxu0
    %v1121 = vadd.f32 %v976, %v1120
    %v1122 = vpop.f32.mrf.mxu0
    %1123 = vmatprep.mubr.f32.mxu0 %v445
    %1124 = vmatmul.mubr.f32.gmra.mxu0 %v429
    %v1125 = vpop.f32.mrf.mxu0
    %v1126 = vadd.f32 %v981, %v1125
    %v1127 = vpop.f32.mrf.mxu0
    %1128 = vmatprep.mubr.f32.mxu0 %v446
    %1129 = vmatmul.mubr.f32.gmra.mxu0 %v430
    %v1130 = vpop.f32.mrf.mxu0
    %v1131 = vadd.f32 %v986, %v1130
    %v1132 = vpop.f32.mrf.mxu0
    %1133 = vmatprep.mubr.f32.mxu0 %v447
    %1134 = vmatmul.mubr.f32.gmra.mxu0 %v431
    %v1135 = vpop.f32.mrf.mxu0
    %v1136 = vadd.f32 %v991, %v1135
    %v1137 = vpop.f32.mrf.mxu0
    %1138 = vmatprep.mubr.f32.mxu0 %v448
    %1139 = vmatmul.mubr.f32.gmra.mxu0 %v432
    %v1140 = vpop.f32.mrf.mxu0
    %v1141 = vadd.f32 %v996, %v1140
    %v1142 = vpop.f32.mrf.mxu0
    %1143 = vmatprep.mubr.f32.mxu0 %v449
    %1144 = vmatmul.mubr.f32.gmra.mxu0 %v433
    %v1145 = vpop.f32.mrf.mxu0
    %v1146 = vadd.f32 %v1001, %v1145
    %v1147 = vpop.f32.mrf.mxu0
    %1148 = vmatprep.mubr.f32.mxu0 %v450
    %1149 = vmatmul.mubr.f32.gmra.mxu0 %v434
    %v1150 = vpop.f32.mrf.mxu0
    %v1151 = vadd.f32 %v1006, %v1150
    %v1152 = vpop.f32.mrf.mxu0
    %1153 = vmatprep.mubr.f32.mxu0 %v451
    %1154 = vmatmul.mubr.f32.gmra.mxu0 %v435
    %v1155 = vpop.f32.mrf.mxu0
    %v1156 = vadd.f32 %v1011, %v1155
    %v1157 = vpop.f32.mrf.mxu0
    %1158 = vmatprep.mubr.f32.mxu0 %v452
    %1159 = vmatmul.mubr.f32.gmra.mxu0 %v436
    %v1160 = vpop.f32.mrf.mxu0
    %v1161 = vadd.f32 %v1016, %v1160
    %v1162 = vpop.f32.mrf.mxu0
    %1163 = vmatprep.mubr.f32.mxu0 %v453
    %1164 = vmatmul.mubr.f32.gmra.mxu0 %v437
    %v1165 = vpop.f32.mrf.mxu0
    %v1166 = vadd.f32 %v1021, %v1165
    %v1167 = vpop.f32.mrf.mxu0
    %1168 = vdwg.mxu0
    %v1169 = vmax.f32 %v1091, 0.0
    %v1170 = vmax.f32 %v1096, 0.0
    %v1171 = vmax.f32 %v1101, 0.0
    %v1172 = vmax.f32 %v1106, 0.0
    %v1173 = vmax.f32 %v1111, 0.0
    %v1174 = vmax.f32 %v1116, 0.0
    %v1175 = vmax.f32 %v1121, 0.0
    %v1176 = vmax.f32 %v1126, 0.0
    %v1177 = vmax.f32 %v1131, 0.0
    %v1178 = vmax.f32 %v1136, 0.0
    %v1179 = vmax.f32 %v1141, 0.0
    %v1180 = vmax.f32 %v1146, 0.0
    %v1181 = vmax.f32 %v1151, 0.0
    %v1182 = vmax.f32 %v1156, 0.0
    %v1183 = vmax.f32 %v1161, 0.0
    %v1184 = vmax.f32 %v1166, 0.0
    %1185 = vst [vmem:[#allocation3] sm:$0xff] %v1169
    %1186 = vst [vmem:[#allocation3 + $0x8] sm:$0xff] %v1170
    %1187 = vst [vmem:[#allocation3 + $0x10] sm:$0xff] %v1171
    %1188 = vst [vmem:[#allocation3 + $0x18] sm:$0xff] %v1172
    %1189 = vst [vmem:[#allocation3 + $0x20] sm:$0xff] %v1173
    %1190 = vst [vmem:[#allocation3 + $0x28] sm:$0xff] %v1174
    %1191 = vst [vmem:[#allocation3 + $0x30] sm:$0xff] %v1175
    %1192 = vst [vmem:[#allocation3 + $0x38] sm:$0xff] %v1176
    %1193 = vst [vmem:[#allocation3 + $0x40] sm:$0xff] %v1177
    %1194 = vst [vmem:[#allocation3 + $0x48] sm:$0xff] %v1178
    %1195 = vst [vmem:[#allocation3 + $0x50] sm:$0xff] %v1179
    %1196 = vst [vmem:[#allocation3 + $0x58] sm:$0xff] %v1180
    %1197 = vst [vmem:[#allocation3 + $0x60] sm:$0xff] %v1181
    %1198 = vst [vmem:[#allocation3 + $0x68] sm:$0xff] %v1182
    %1199 = vst [vmem:[#allocation3 + $0x70] sm:$0xff] %v1183
    %1200 = vst [vmem:[#allocation3 + $0x78] sm:$0x1] %v1184
    %v1201 = vld [vmem:[#allocation3] sm:$0xff]
    %v1202 = vld [vmem:[#allocation3 + $0x8] sm:$0xff]
    %v1203 = vld [vmem:[#allocation3 + $0x10] sm:$0xff]
    %v1204 = vld [vmem:[#allocation3 + $0x18] sm:$0xff]
    %v1205 = vld [vmem:[#allocation3 + $0x20] sm:$0xff]
    %v1206 = vld [vmem:[#allocation3 + $0x28] sm:$0xff]
    %v1207 = vld [vmem:[#allocation3 + $0x30] sm:$0xff]
    %v1208 = vld [vmem:[#allocation3 + $0x38] sm:$0xff]
    %v1209 = vld [vmem:[#allocation3 + $0x40] sm:$0xff]
    %v1210 = vld [vmem:[#allocation3 + $0x48] sm:$0xff]
    %v1211 = vld [vmem:[#allocation3 + $0x50] sm:$0xff]
    %v1212 = vld [vmem:[#allocation3 + $0x58] sm:$0xff]
    %v1213 = vld [vmem:[#allocation3 + $0x60] sm:$0xff]
    %v1214 = vld [vmem:[#allocation3 + $0x68] sm:$0xff]
    %v1215 = vld [vmem:[#allocation3 + $0x70] sm:$0x3]
    %v1216 = vld [vmem:[#allocation3 + $0x1] sm:$0xff]
    %v1217 = vld [vmem:[#allocation3 + $0x9] sm:$0xff]
    %v1218 = vld [vmem:[#allocation3 + $0x11] sm:$0xff]
    %v1219 = vld [vmem:[#allocation3 + $0x19] sm:$0xff]
    %v1220 = vld [vmem:[#allocation3 + $0x21] sm:$0xff]
    %v1221 = vld [vmem:[#allocation3 + $0x29] sm:$0xff]
    %v1222 = vld [vmem:[#allocation3 + $0x31] sm:$0xff]
    %v1223 = vld [vmem:[#allocation3 + $0x39] sm:$0xff]
    %v1224 = vld [vmem:[#allocation3 + $0x41] sm:$0xff]
    %v1225 = vld [vmem:[#allocation3 + $0x49] sm:$0xff]
    %v1226 = vld [vmem:[#allocation3 + $0x51] sm:$0xff]
    %v1227 = vld [vmem:[#allocation3 + $0x59] sm:$0xff]
    %v1228 = vld [vmem:[#allocation3 + $0x61] sm:$0xff]
    %v1229 = vld [vmem:[#allocation3 + $0x69] sm:$0xff]
    %v1230 = vld [vmem:[#allocation3 + $0x71] sm:$0x3]
    %v1231 = vld [vmem:[#allocation3 + $0x2] sm:$0xff]
    %v1232 = vld [vmem:[#allocation3 + $0xa] sm:$0xff]
    %v1233 = vld [vmem:[#allocation3 + $0x12] sm:$0xff]
    %v1234 = vld [vmem:[#allocation3 + $0x1a] sm:$0xff]
    %v1235 = vld [vmem:[#allocation3 + $0x22] sm:$0xff]
    %v1236 = vld [vmem:[#allocation3 + $0x2a] sm:$0xff]
    %v1237 = vld [vmem:[#allocation3 + $0x32] sm:$0xff]
    %v1238 = vld [vmem:[#allocation3 + $0x3a] sm:$0xff]
    %v1239 = vld [vmem:[#allocation3 + $0x42] sm:$0xff]
    %v1240 = vld [vmem:[#allocation3 + $0x4a] sm:$0xff]
    %v1241 = vld [vmem:[#allocation3 + $0x52] sm:$0xff]
    %v1242 = vld [vmem:[#allocation3 + $0x5a] sm:$0xff]
    %v1243 = vld [vmem:[#allocation3 + $0x62] sm:$0xff]
    %v1244 = vld [vmem:[#allocation3 + $0x6a] sm:$0xff]
    %v1245 = vld [vmem:[#allocation3 + $0x72] sm:$0x3]
    %v1246 = vld [vmem:[#allocation3 + $0x3] sm:$0xff]
    %v1247 = vld [vmem:[#allocation3 + $0xb] sm:$0xff]
    %v1248 = vld [vmem:[#allocation3 + $0x13] sm:$0xff]
    %v1249 = vld [vmem:[#allocation3 + $0x1b] sm:$0xff]
    %v1250 = vld [vmem:[#allocation3 + $0x23] sm:$0xff]
    %v1251 = vld [vmem:[#allocation3 + $0x2b] sm:$0xff]
    %v1252 = vld [vmem:[#allocation3 + $0x33] sm:$0xff]
    %v1253 = vld [vmem:[#allocation3 + $0x3b] sm:$0xff]
    %v1254 = vld [vmem:[#allocation3 + $0x43] sm:$0xff]
    %v1255 = vld [vmem:[#allocation3 + $0x4b] sm:$0xff]
    %v1256 = vld [vmem:[#allocation3 + $0x53] sm:$0xff]
    %v1257 = vld [vmem:[#allocation3 + $0x5b] sm:$0xff]
    %v1258 = vld [vmem:[#allocation3 + $0x63] sm:$0xff]
    %v1259 = vld [vmem:[#allocation3 + $0x6b] sm:$0xff]
    %v1260 = vld [vmem:[#allocation3 + $0x73] sm:$0x3]
    %v1261 = vld [vmem:[#allocation3 + $0x4] sm:$0xff]
    %v1262 = vld [vmem:[#allocation3 + $0xc] sm:$0xff]
    %v1263 = vld [vmem:[#allocation3 + $0x14] sm:$0xff]
    %v1264 = vld [vmem:[#allocation3 + $0x1c] sm:$0xff]
    %v1265 = vld [vmem:[#allocation3 + $0x24] sm:$0xff]
    %v1266 = vld [vmem:[#allocation3 + $0x2c] sm:$0xff]
    %v1267 = vld [vmem:[#allocation3 + $0x34] sm:$0xff]
    %v1268 = vld [vmem:[#allocation3 + $0x3c] sm:$0xff]
    %v1269 = vld [vmem:[#allocation3 + $0x44] sm:$0xff]
    %v1270 = vld [vmem:[#allocation3 + $0x4c] sm:$0xff]
    %v1271 = vld [vmem:[#allocation3 + $0x54] sm:$0xff]
    %v1272 = vld [vmem:[#allocation3 + $0x5c] sm:$0xff]
    %v1273 = vld [vmem:[#allocation3 + $0x64] sm:$0xff]
    %v1274 = vld [vmem:[#allocation3 + $0x6c] sm:$0xff]
    %v1275 = vld [vmem:[#allocation3 + $0x74] sm:$0x3]
    %v1276 = vld [vmem:[#allocation3 + $0x5] sm:$0xff]
    %v1277 = vld [vmem:[#allocation3 + $0xd] sm:$0xff]
    %v1278 = vld [vmem:[#allocation3 + $0x15] sm:$0xff]
    %v1279 = vld [vmem:[#allocation3 + $0x1d] sm:$0xff]
    %v1280 = vld [vmem:[#allocation3 + $0x25] sm:$0xff]
    %v1281 = vld [vmem:[#allocation3 + $0x2d] sm:$0xff]
    %v1282 = vld [vmem:[#allocation3 + $0x35] sm:$0xff]
    %v1283 = vld [vmem:[#allocation3 + $0x3d] sm:$0xff]
    %v1284 = vld [vmem:[#allocation3 + $0x45] sm:$0xff]
    %v1285 = vld [vmem:[#allocation3 + $0x4d] sm:$0xff]
    %v1286 = vld [vmem:[#allocation3 + $0x55] sm:$0xff]
    %v1287 = vld [vmem:[#allocation3 + $0x5d] sm:$0xff]
    %v1288 = vld [vmem:[#allocation3 + $0x65] sm:$0xff]
    %v1289 = vld [vmem:[#allocation3 + $0x6d] sm:$0xff]
    %v1290 = vld [vmem:[#allocation3 + $0x75] sm:$0x3]
    %v1291 = vld [vmem:[#allocation3 + $0x6] sm:$0xff]
    %v1292 = vld [vmem:[#allocation3 + $0xe] sm:$0xff]
    %v1293 = vld [vmem:[#allocation3 + $0x16] sm:$0xff]
    %v1294 = vld [vmem:[#allocation3 + $0x1e] sm:$0xff]
    %v1295 = vld [vmem:[#allocation3 + $0x26] sm:$0xff]
    %v1296 = vld [vmem:[#allocation3 + $0x2e] sm:$0xff]
    %v1297 = vld [vmem:[#allocation3 + $0x36] sm:$0xff]
    %v1298 = vld [vmem:[#allocation3 + $0x3e] sm:$0xff]
    %v1299 = vld [vmem:[#allocation3 + $0x46] sm:$0xff]
    %v1300 = vld [vmem:[#allocation3 + $0x4e] sm:$0xff]
    %v1301 = vld [vmem:[#allocation3 + $0x56] sm:$0xff]
    %v1302 = vld [vmem:[#allocation3 + $0x5e] sm:$0xff]
    %v1303 = vld [vmem:[#allocation3 + $0x66] sm:$0xff]
    %v1304 = vld [vmem:[#allocation3 + $0x6e] sm:$0xff]
    %v1305 = vld [vmem:[#allocation3 + $0x76] sm:$0x3]
    %v1306 = vld [vmem:[#allocation3 + $0x7] sm:$0xff]
    %v1307 = vld [vmem:[#allocation3 + $0xf] sm:$0xff]
    %v1308 = vld [vmem:[#allocation3 + $0x17] sm:$0xff]
    %v1309 = vld [vmem:[#allocation3 + $0x1f] sm:$0xff]
    %v1310 = vld [vmem:[#allocation3 + $0x27] sm:$0xff]
    %v1311 = vld [vmem:[#allocation3 + $0x2f] sm:$0xff]
    %v1312 = vld [vmem:[#allocation3 + $0x37] sm:$0xff]
    %v1313 = vld [vmem:[#allocation3 + $0x3f] sm:$0xff]
    %v1314 = vld [vmem:[#allocation3 + $0x47] sm:$0xff]
    %v1315 = vld [vmem:[#allocation3 + $0x4f] sm:$0xff]
    %v1316 = vld [vmem:[#allocation3 + $0x57] sm:$0xff]
    %v1317 = vld [vmem:[#allocation3 + $0x5f] sm:$0xff]
    %v1318 = vld [vmem:[#allocation3 + $0x67] sm:$0xff]
    %v1319 = vld [vmem:[#allocation3 + $0x6f] sm:$0xff]
    %v1320 = vld [vmem:[#allocation3 + $0x77] sm:$0x3]
    %v1321 = vld [vmem:[#allocation7] sm:$0xff]
    %v1322 = vld [vmem:[#allocation7 + $0x8] sm:$0xff]
    %v1323 = vld [vmem:[#allocation7 + $0x10] sm:$0xff]
    %v1324 = vld [vmem:[#allocation7 + $0x18] sm:$0xff]
    %v1325 = vld [vmem:[#allocation7 + $0x20] sm:$0xff]
    %v1326 = vld [vmem:[#allocation7 + $0x28] sm:$0xff]
    %v1327 = vld [vmem:[#allocation7 + $0x30] sm:$0xff]
    %v1328 = vld [vmem:[#allocation7 + $0x38] sm:$0xff]
    %v1329 = vld [vmem:[#allocation7 + $0x40] sm:$0xff]
    %v1330 = vld [vmem:[#allocation7 + $0x48] sm:$0xff]
    %v1331 = vld [vmem:[#allocation7 + $0x50] sm:$0xff]
    %v1332 = vld [vmem:[#allocation7 + $0x58] sm:$0xff]
    %v1333 = vld [vmem:[#allocation7 + $0x60] sm:$0xff]
    %v1334 = vld [vmem:[#allocation7 + $0x68] sm:$0xff]
    %v1335 = vld [vmem:[#allocation7 + $0x70] sm:$0xff]
    %v1336 = vld [vmem:[#allocation7 + $0x78] sm:$0xff]
    %v1337 = vld [vmem:[#allocation7 + $0x80] sm:$0xff]
    %v1338 = vld [vmem:[#allocation7 + $0x88] sm:$0xff]
    %v1339 = vld [vmem:[#allocation7 + $0x90] sm:$0xff]
    %v1340 = vld [vmem:[#allocation7 + $0x98] sm:$0xff]
    %v1341 = vld [vmem:[#allocation7 + $0xa0] sm:$0xff]
    %v1342 = vld [vmem:[#allocation7 + $0xa8] sm:$0xff]
    %v1343 = vld [vmem:[#allocation7 + $0xb0] sm:$0xff]
    %v1344 = vld [vmem:[#allocation7 + $0xb8] sm:$0xff]
    %v1345 = vld [vmem:[#allocation7 + $0xc0] sm:$0xff]
    %v1346 = vld [vmem:[#allocation7 + $0xc8] sm:$0xff]
    %v1347 = vld [vmem:[#allocation7 + $0xd0] sm:$0xff]
    %v1348 = vld [vmem:[#allocation7 + $0xd8] sm:$0xff]
    %v1349 = vld [vmem:[#allocation7 + $0xe0] sm:$0xff]
    %v1350 = vld [vmem:[#allocation7 + $0xe8] sm:$0xff]
    %v1351 = vld [vmem:[#allocation7 + $0xf0] sm:$0xff]
    %v1352 = vld [vmem:[#allocation7 + $0xf8] sm:$0xff]
    %v1353 = vld [vmem:[#allocation7 + $0x100] sm:$0xff]
    %v1354 = vld [vmem:[#allocation7 + $0x108] sm:$0xff]
    %v1355 = vld [vmem:[#allocation7 + $0x110] sm:$0xff]
    %v1356 = vld [vmem:[#allocation7 + $0x118] sm:$0xff]
    %v1357 = vld [vmem:[#allocation7 + $0x120] sm:$0xff]
    %v1358 = vld [vmem:[#allocation7 + $0x128] sm:$0xff]
    %v1359 = vld [vmem:[#allocation7 + $0x130] sm:$0xff]
    %v1360 = vld [vmem:[#allocation7 + $0x138] sm:$0xff]
    %v1361 = vld [vmem:[#allocation7 + $0x140] sm:$0xff]
    %v1362 = vld [vmem:[#allocation7 + $0x148] sm:$0xff]
    %v1363 = vld [vmem:[#allocation7 + $0x150] sm:$0xff]
    %v1364 = vld [vmem:[#allocation7 + $0x158] sm:$0xff]
    %v1365 = vld [vmem:[#allocation7 + $0x160] sm:$0xff]
    %v1366 = vld [vmem:[#allocation7 + $0x168] sm:$0xff]
    %v1367 = vld [vmem:[#allocation7 + $0x170] sm:$0xff]
    %v1368 = vld [vmem:[#allocation7 + $0x178] sm:$0xff]
    %v1369 = vld [vmem:[#allocation7 + $0x180] sm:$0xff]
    %v1370 = vld [vmem:[#allocation7 + $0x188] sm:$0xff]
    %v1371 = vld [vmem:[#allocation7 + $0x190] sm:$0xff]
    %v1372 = vld [vmem:[#allocation7 + $0x198] sm:$0xff]
    %v1373 = vld [vmem:[#allocation7 + $0x1a0] sm:$0xff]
    %v1374 = vld [vmem:[#allocation7 + $0x1a8] sm:$0xff]
    %v1375 = vld [vmem:[#allocation7 + $0x1b0] sm:$0xff]
    %v1376 = vld [vmem:[#allocation7 + $0x1b8] sm:$0xff]
    %v1377 = vld [vmem:[#allocation7 + $0x1c0] sm:$0xff]
    %v1378 = vld [vmem:[#allocation7 + $0x1c8] sm:$0xff]
    %v1379 = vld [vmem:[#allocation7 + $0x1d0] sm:$0xff]
    %v1380 = vld [vmem:[#allocation7 + $0x1d8] sm:$0xff]
    %v1381 = vld [vmem:[#allocation7 + $0x1e0] sm:$0xff]
    %v1382 = vld [vmem:[#allocation7 + $0x1e8] sm:$0xff]
    %v1383 = vld [vmem:[#allocation7 + $0x1f0] sm:$0xff]
    %v1384 = vld [vmem:[#allocation7 + $0x1f8] sm:$0xff]
    %v1385 = vld [vmem:[#allocation7 + $0x200] sm:$0xff]
    %v1386 = vld [vmem:[#allocation7 + $0x208] sm:$0xff]
    %v1387 = vld [vmem:[#allocation7 + $0x210] sm:$0xff]
    %v1388 = vld [vmem:[#allocation7 + $0x218] sm:$0xff]
    %v1389 = vld [vmem:[#allocation7 + $0x220] sm:$0xff]
    %v1390 = vld [vmem:[#allocation7 + $0x228] sm:$0xff]
    %v1391 = vld [vmem:[#allocation7 + $0x230] sm:$0xff]
    %v1392 = vld [vmem:[#allocation7 + $0x238] sm:$0xff]
    %v1393 = vld [vmem:[#allocation7 + $0x240] sm:$0xff]
    %v1394 = vld [vmem:[#allocation7 + $0x248] sm:$0xff]
    %v1395 = vld [vmem:[#allocation7 + $0x250] sm:$0xff]
    %v1396 = vld [vmem:[#allocation7 + $0x258] sm:$0xff]
    %v1397 = vld [vmem:[#allocation7 + $0x260] sm:$0xff]
    %v1398 = vld [vmem:[#allocation7 + $0x268] sm:$0xff]
    %v1399 = vld [vmem:[#allocation7 + $0x270] sm:$0xff]
    %v1400 = vld [vmem:[#allocation7 + $0x278] sm:$0xff]
    %v1401 = vld [vmem:[#allocation7 + $0x280] sm:$0xff]
    %v1402 = vld [vmem:[#allocation7 + $0x288] sm:$0xff]
    %v1403 = vld [vmem:[#allocation7 + $0x290] sm:$0xff]
    %v1404 = vld [vmem:[#allocation7 + $0x298] sm:$0xff]
    %v1405 = vld [vmem:[#allocation7 + $0x2a0] sm:$0xff]
    %v1406 = vld [vmem:[#allocation7 + $0x2a8] sm:$0xff]
    %v1407 = vld [vmem:[#allocation7 + $0x2b0] sm:$0xff]
    %v1408 = vld [vmem:[#allocation7 + $0x2b8] sm:$0xff]
    %v1409 = vld [vmem:[#allocation7 + $0x2c0] sm:$0xff]
    %v1410 = vld [vmem:[#allocation7 + $0x2c8] sm:$0xff]
    %v1411 = vld [vmem:[#allocation7 + $0x2d0] sm:$0xff]
    %v1412 = vld [vmem:[#allocation7 + $0x2d8] sm:$0xff]
    %v1413 = vld [vmem:[#allocation7 + $0x2e0] sm:$0xff]
    %v1414 = vld [vmem:[#allocation7 + $0x2e8] sm:$0xff]
    %v1415 = vld [vmem:[#allocation7 + $0x2f0] sm:$0xff]
    %v1416 = vld [vmem:[#allocation7 + $0x2f8] sm:$0xff]
    %v1417 = vld [vmem:[#allocation7 + $0x300] sm:$0xff]
    %v1418 = vld [vmem:[#allocation7 + $0x308] sm:$0xff]
    %v1419 = vld [vmem:[#allocation7 + $0x310] sm:$0xff]
    %v1420 = vld [vmem:[#allocation7 + $0x318] sm:$0xff]
    %v1421 = vld [vmem:[#allocation7 + $0x320] sm:$0xff]
    %v1422 = vld [vmem:[#allocation7 + $0x328] sm:$0xff]
    %v1423 = vld [vmem:[#allocation7 + $0x330] sm:$0xff]
    %v1424 = vld [vmem:[#allocation7 + $0x338] sm:$0xff]
    %v1425 = vld [vmem:[#allocation7 + $0x340] sm:$0xff]
    %v1426 = vld [vmem:[#allocation7 + $0x348] sm:$0xff]
    %v1427 = vld [vmem:[#allocation7 + $0x350] sm:$0xff]
    %v1428 = vld [vmem:[#allocation7 + $0x358] sm:$0xff]
    %v1429 = vld [vmem:[#allocation7 + $0x360] sm:$0xff]
    %v1430 = vld [vmem:[#allocation7 + $0x368] sm:$0xff]
    %v1431 = vld [vmem:[#allocation7 + $0x370] sm:$0xff]
    %v1432 = vld [vmem:[#allocation7 + $0x378] sm:$0xff]
    %v1433 = vld [vmem:[#allocation7 + $0x380] sm:$0xff]
    %v1434 = vld [vmem:[#allocation7 + $0x388] sm:$0xff]
    %v1435 = vld [vmem:[#allocation7 + $0x390] sm:$0xff]
    %v1436 = vld [vmem:[#allocation7 + $0x398] sm:$0xff]
    %v1437 = vld [vmem:[#allocation7 + $0x3a0] sm:$0xff]
    %v1438 = vld [vmem:[#allocation7 + $0x3a8] sm:$0xff]
    %v1439 = vld [vmem:[#allocation7 + $0x3b0] sm:$0xff]
    %v1440 = vld [vmem:[#allocation7 + $0x3b8] sm:$0xff]
    %v1441 = vld [vmem:[#allocation7 + $0x3c0] sm:$0xff]
    %v1442 = vld [vmem:[#allocation7 + $0x3c8] sm:$0xff]
    %v1443 = vld [vmem:[#allocation7 + $0x3d0] sm:$0xff]
    %v1444 = vld [vmem:[#allocation7 + $0x3d8] sm:$0xff]
    %v1445 = vld [vmem:[#allocation7 + $0x3e0] sm:$0xff]
    %v1446 = vld [vmem:[#allocation7 + $0x3e8] sm:$0xff]
    %v1447 = vld [vmem:[#allocation7 + $0x3f0] sm:$0xff]
    %v1448 = vld [vmem:[#allocation7 + $0x3f8] sm:$0xff]
    %v1449 = vld [vmem:[%s5] sm:$0x1]
    %v1451 = vlaneseq
    %v1452 = vshrl.u32 %v1451, 7
    %v1453 = vsub.s32 0, %v1452
    %v1454 = vrot.slane %v1449, %v1453
    %1456 = vmatprep.subr.mxu0 0.0
    %1457 = vmatpush1.msra.mxu0 %v1336
    %1458 = vmatprep.subr.mxu0 0.0
    %1459 = vmatpush1.msra.mxu0 %v1335
    %1460 = vmatprep.subr.mxu0 0.0
    %1461 = vmatpush1.msra.mxu0 %v1334
    %1462 = vmatprep.subr.mxu0 0.0
    %1463 = vmatpush1.msra.mxu0 %v1333
    %1464 = vmatprep.subr.mxu0 0.0
    %1465 = vmatpush1.msra.mxu0 %v1332
    %1466 = vmatprep.subr.mxu0 0.0
    %1467 = vmatpush1.msra.mxu0 %v1331
    %1468 = vmatprep.subr.mxu0 0.0
    %1469 = vmatpush1.msra.mxu0 %v1330
    %1470 = vmatprep.subr.mxu0 0.0
    %1471 = vmatpush1.msra.mxu0 %v1329
    %1472 = vmatprep.subr.mxu0 0.0
    %1473 = vmatpush1.msra.mxu0 %v1328
    %1474 = vmatprep.subr.mxu0 0.0
    %1475 = vmatpush1.msra.mxu0 %v1327
    %1476 = vmatprep.subr.mxu0 0.0
    %1477 = vmatpush1.msra.mxu0 %v1326
    %1478 = vmatprep.subr.mxu0 0.0
    %1479 = vmatpush1.msra.mxu0 %v1325
    %1480 = vmatprep.subr.mxu0 0.0
    %1481 = vmatpush1.msra.mxu0 %v1324
    %1482 = vmatprep.subr.mxu0 0.0
    %1483 = vmatpush1.msra.mxu0 %v1323
    %1484 = vmatprep.subr.mxu0 0.0
    %1485 = vmatpush1.msra.mxu0 %v1322
    %1486 = vmatprep.subr.mxu0 0.0
    %1487 = vmatpush1.msra.mxu0 %v1321
    %1488 = vmatprep.subr.mxu0 0.0
    %1489 = vmatpush2.msra.mxu0 %v1352
    %1490 = vmatprep.subr.mxu0 0.0
    %1491 = vmatpush2.msra.mxu0 %v1351
    %1492 = vmatprep.subr.mxu0 0.0
    %1493 = vmatpush2.msra.mxu0 %v1350
    %1494 = vmatprep.subr.mxu0 0.0
    %1495 = vmatpush2.msra.mxu0 %v1349
    %1496 = vmatprep.subr.mxu0 0.0
    %1497 = vmatpush2.msra.mxu0 %v1348
    %1498 = vmatprep.subr.mxu0 0.0
    %1499 = vmatpush2.msra.mxu0 %v1347
    %1500 = vmatprep.subr.mxu0 0.0
    %1501 = vmatpush2.msra.mxu0 %v1346
    %1502 = vmatprep.subr.mxu0 0.0
    %1503 = vmatpush2.msra.mxu0 %v1345
    %1504 = vmatprep.subr.mxu0 0.0
    %1505 = vmatpush2.msra.mxu0 %v1344
    %1506 = vmatprep.subr.mxu0 0.0
    %1507 = vmatpush2.msra.mxu0 %v1343
    %1508 = vmatprep.subr.mxu0 0.0
    %1509 = vmatpush2.msra.mxu0 %v1342
    %1510 = vmatprep.subr.mxu0 0.0
    %1511 = vmatpush2.msra.mxu0 %v1341
    %1512 = vmatprep.subr.mxu0 0.0
    %1513 = vmatpush2.msra.mxu0 %v1340
    %1514 = vmatprep.subr.mxu0 0.0
    %1515 = vmatpush2.msra.mxu0 %v1339
    %1516 = vmatprep.subr.mxu0 0.0
    %1517 = vmatpush2.msra.mxu0 %v1338
    %1518 = vmatprep.subr.mxu0 0.0
    %1519 = vmatpush2.msra.mxu0 %v1337
    %1520 = vmatprep.mubr.f32.mxu0 %v1216
    %1521 = vmatmul.mubr.f32.gmra.mxu0 %v1201
    %v1522 = vpop.f32.mrf.mxu0
    %v1523 = vadd.f32 %v1454, %v1522
    %v1524 = vpop.f32.mrf.mxu0
    %1525 = vmatprep.mubr.f32.mxu0 %v1217
    %1526 = vmatmul.mubr.f32.gmra.mxu0 %v1202
    %v1527 = vpop.f32.mrf.mxu0
    %v1528 = vadd.f32 %v1454, %v1527
    %v1529 = vpop.f32.mrf.mxu0
    %1530 = vmatprep.mubr.f32.mxu0 %v1218
    %1531 = vmatmul.mubr.f32.gmra.mxu0 %v1203
    %v1532 = vpop.f32.mrf.mxu0
    %v1533 = vadd.f32 %v1454, %v1532
    %v1534 = vpop.f32.mrf.mxu0
    %1535 = vmatprep.mubr.f32.mxu0 %v1219
    %1536 = vmatmul.mubr.f32.gmra.mxu0 %v1204
    %v1537 = vpop.f32.mrf.mxu0
    %v1538 = vadd.f32 %v1454, %v1537
    %v1539 = vpop.f32.mrf.mxu0
    %1540 = vmatprep.mubr.f32.mxu0 %v1220
    %1541 = vmatmul.mubr.f32.gmra.mxu0 %v1205
    %v1542 = vpop.f32.mrf.mxu0
    %v1543 = vadd.f32 %v1454, %v1542
    %v1544 = vpop.f32.mrf.mxu0
    %1545 = vmatprep.mubr.f32.mxu0 %v1221
    %1546 = vmatmul.mubr.f32.gmra.mxu0 %v1206
    %v1547 = vpop.f32.mrf.mxu0
    %v1548 = vadd.f32 %v1454, %v1547
    %v1549 = vpop.f32.mrf.mxu0
    %1550 = vmatprep.mubr.f32.mxu0 %v1222
    %1551 = vmatmul.mubr.f32.gmra.mxu0 %v1207
    %v1552 = vpop.f32.mrf.mxu0
    %v1553 = vadd.f32 %v1454, %v1552
    %v1554 = vpop.f32.mrf.mxu0
    %1555 = vmatprep.mubr.f32.mxu0 %v1223
    %1556 = vmatmul.mubr.f32.gmra.mxu0 %v1208
    %v1557 = vpop.f32.mrf.mxu0
    %v1558 = vadd.f32 %v1454, %v1557
    %v1559 = vpop.f32.mrf.mxu0
    %1560 = vmatprep.mubr.f32.mxu0 %v1224
    %1561 = vmatmul.mubr.f32.gmra.mxu0 %v1209
    %v1562 = vpop.f32.mrf.mxu0
    %v1563 = vadd.f32 %v1454, %v1562
    %v1564 = vpop.f32.mrf.mxu0
    %1565 = vmatprep.mubr.f32.mxu0 %v1225
    %1566 = vmatmul.mubr.f32.gmra.mxu0 %v1210
    %v1567 = vpop.f32.mrf.mxu0
    %v1568 = vadd.f32 %v1454, %v1567
    %v1569 = vpop.f32.mrf.mxu0
    %1570 = vmatprep.mubr.f32.mxu0 %v1226
    %1571 = vmatmul.mubr.f32.gmra.mxu0 %v1211
    %v1572 = vpop.f32.mrf.mxu0
    %v1573 = vadd.f32 %v1454, %v1572
    %v1574 = vpop.f32.mrf.mxu0
    %1575 = vmatprep.mubr.f32.mxu0 %v1227
    %1576 = vmatmul.mubr.f32.gmra.mxu0 %v1212
    %v1577 = vpop.f32.mrf.mxu0
    %v1578 = vadd.f32 %v1454, %v1577
    %v1579 = vpop.f32.mrf.mxu0
    %1580 = vmatprep.mubr.f32.mxu0 %v1228
    %1581 = vmatmul.mubr.f32.gmra.mxu0 %v1213
    %v1582 = vpop.f32.mrf.mxu0
    %v1583 = vadd.f32 %v1454, %v1582
    %v1584 = vpop.f32.mrf.mxu0
    %1585 = vmatprep.mubr.f32.mxu0 %v1229
    %1586 = vmatmul.mubr.f32.gmra.mxu0 %v1214
    %v1587 = vpop.f32.mrf.mxu0
    %v1588 = vadd.f32 %v1454, %v1587
    %v1589 = vpop.f32.mrf.mxu0
    %1590 = vmatprep.mubr.f32.mxu0 %v1230
    %1591 = vmatmul.mubr.f32.gmra.mxu0 %v1215
    %v1592 = vpop.f32.mrf.mxu0
    %v1593 = vadd.f32 %v1454, %v1592
    %v1594 = vpop.f32.mrf.mxu0
    %1595 = vdwg.mxu0
    %1596 = vmatprep.subr.mxu0 0.0
    %1597 = vmatpush1.msra.mxu0 %v1368
    %1598 = vmatprep.subr.mxu0 0.0
    %1599 = vmatpush1.msra.mxu0 %v1367
    %1600 = vmatprep.subr.mxu0 0.0
    %1601 = vmatpush1.msra.mxu0 %v1366
    %1602 = vmatprep.subr.mxu0 0.0
    %1603 = vmatpush1.msra.mxu0 %v1365
    %1604 = vmatprep.subr.mxu0 0.0
    %1605 = vmatpush1.msra.mxu0 %v1364
    %1606 = vmatprep.subr.mxu0 0.0
    %1607 = vmatpush1.msra.mxu0 %v1363
    %1608 = vmatprep.subr.mxu0 0.0
    %1609 = vmatpush1.msra.mxu0 %v1362
    %1610 = vmatprep.subr.mxu0 0.0
    %1611 = vmatpush1.msra.mxu0 %v1361
    %1612 = vmatprep.subr.mxu0 0.0
    %1613 = vmatpush1.msra.mxu0 %v1360
    %1614 = vmatprep.subr.mxu0 0.0
    %1615 = vmatpush1.msra.mxu0 %v1359
    %1616 = vmatprep.subr.mxu0 0.0
    %1617 = vmatpush1.msra.mxu0 %v1358
    %1618 = vmatprep.subr.mxu0 0.0
    %1619 = vmatpush1.msra.mxu0 %v1357
    %1620 = vmatprep.subr.mxu0 0.0
    %1621 = vmatpush1.msra.mxu0 %v1356
    %1622 = vmatprep.subr.mxu0 0.0
    %1623 = vmatpush1.msra.mxu0 %v1355
    %1624 = vmatprep.subr.mxu0 0.0
    %1625 = vmatpush1.msra.mxu0 %v1354
    %1626 = vmatprep.subr.mxu0 0.0
    %1627 = vmatpush1.msra.mxu0 %v1353
    %1628 = vmatprep.subr.mxu0 0.0
    %1629 = vmatpush2.msra.mxu0 %v1384
    %1630 = vmatprep.subr.mxu0 0.0
    %1631 = vmatpush2.msra.mxu0 %v1383
    %1632 = vmatprep.subr.mxu0 0.0
    %1633 = vmatpush2.msra.mxu0 %v1382
    %1634 = vmatprep.subr.mxu0 0.0
    %1635 = vmatpush2.msra.mxu0 %v1381
    %1636 = vmatprep.subr.mxu0 0.0
    %1637 = vmatpush2.msra.mxu0 %v1380
    %1638 = vmatprep.subr.mxu0 0.0
    %1639 = vmatpush2.msra.mxu0 %v1379
    %1640 = vmatprep.subr.mxu0 0.0
    %1641 = vmatpush2.msra.mxu0 %v1378
    %1642 = vmatprep.subr.mxu0 0.0
    %1643 = vmatpush2.msra.mxu0 %v1377
    %1644 = vmatprep.subr.mxu0 0.0
    %1645 = vmatpush2.msra.mxu0 %v1376
    %1646 = vmatprep.subr.mxu0 0.0
    %1647 = vmatpush2.msra.mxu0 %v1375
    %1648 = vmatprep.subr.mxu0 0.0
    %1649 = vmatpush2.msra.mxu0 %v1374
    %1650 = vmatprep.subr.mxu0 0.0
    %1651 = vmatpush2.msra.mxu0 %v1373
    %1652 = vmatprep.subr.mxu0 0.0
    %1653 = vmatpush2.msra.mxu0 %v1372
    %1654 = vmatprep.subr.mxu0 0.0
    %1655 = vmatpush2.msra.mxu0 %v1371
    %1656 = vmatprep.subr.mxu0 0.0
    %1657 = vmatpush2.msra.mxu0 %v1370
    %1658 = vmatprep.subr.mxu0 0.0
    %1659 = vmatpush2.msra.mxu0 %v1369
    %1660 = vmatprep.mubr.f32.mxu0 %v1246
    %1661 = vmatmul.mubr.f32.gmra.mxu0 %v1231
    %v1662 = vpop.f32.mrf.mxu0
    %v1663 = vadd.f32 %v1523, %v1662
    %v1664 = vpop.f32.mrf.mxu0
    %1665 = vmatprep.mubr.f32.mxu0 %v1247
    %1666 = vmatmul.mubr.f32.gmra.mxu0 %v1232
    %v1667 = vpop.f32.mrf.mxu0
    %v1668 = vadd.f32 %v1528, %v1667
    %v1669 = vpop.f32.mrf.mxu0
    %1670 = vmatprep.mubr.f32.mxu0 %v1248
    %1671 = vmatmul.mubr.f32.gmra.mxu0 %v1233
    %v1672 = vpop.f32.mrf.mxu0
    %v1673 = vadd.f32 %v1533, %v1672
    %v1674 = vpop.f32.mrf.mxu0
    %1675 = vmatprep.mubr.f32.mxu0 %v1249
    %1676 = vmatmul.mubr.f32.gmra.mxu0 %v1234
    %v1677 = vpop.f32.mrf.mxu0
    %v1678 = vadd.f32 %v1538, %v1677
    %v1679 = vpop.f32.mrf.mxu0
    %1680 = vmatprep.mubr.f32.mxu0 %v1250
    %1681 = vmatmul.mubr.f32.gmra.mxu0 %v1235
    %v1682 = vpop.f32.mrf.mxu0
    %v1683 = vadd.f32 %v1543, %v1682
    %v1684 = vpop.f32.mrf.mxu0
    %1685 = vmatprep.mubr.f32.mxu0 %v1251
    %1686 = vmatmul.mubr.f32.gmra.mxu0 %v1236
    %v1687 = vpop.f32.mrf.mxu0
    %v1688 = vadd.f32 %v1548, %v1687
    %v1689 = vpop.f32.mrf.mxu0
    %1690 = vmatprep.mubr.f32.mxu0 %v1252
    %1691 = vmatmul.mubr.f32.gmra.mxu0 %v1237
    %v1692 = vpop.f32.mrf.mxu0
    %v1693 = vadd.f32 %v1553, %v1692
    %v1694 = vpop.f32.mrf.mxu0
    %1695 = vmatprep.mubr.f32.mxu0 %v1253
    %1696 = vmatmul.mubr.f32.gmra.mxu0 %v1238
    %v1697 = vpop.f32.mrf.mxu0
    %v1698 = vadd.f32 %v1558, %v1697
    %v1699 = vpop.f32.mrf.mxu0
    %1700 = vmatprep.mubr.f32.mxu0 %v1254
    %1701 = vmatmul.mubr.f32.gmra.mxu0 %v1239
    %v1702 = vpop.f32.mrf.mxu0
    %v1703 = vadd.f32 %v1563, %v1702
    %v1704 = vpop.f32.mrf.mxu0
    %1705 = vmatprep.mubr.f32.mxu0 %v1255
    %1706 = vmatmul.mubr.f32.gmra.mxu0 %v1240
    %v1707 = vpop.f32.mrf.mxu0
    %v1708 = vadd.f32 %v1568, %v1707
    %v1709 = vpop.f32.mrf.mxu0
    %1710 = vmatprep.mubr.f32.mxu0 %v1256
    %1711 = vmatmul.mubr.f32.gmra.mxu0 %v1241
    %v1712 = vpop.f32.mrf.mxu0
    %v1713 = vadd.f32 %v1573, %v1712
    %v1714 = vpop.f32.mrf.mxu0
    %1715 = vmatprep.mubr.f32.mxu0 %v1257
    %1716 = vmatmul.mubr.f32.gmra.mxu0 %v1242
    %v1717 = vpop.f32.mrf.mxu0
    %v1718 = vadd.f32 %v1578, %v1717
    %v1719 = vpop.f32.mrf.mxu0
    %1720 = vmatprep.mubr.f32.mxu0 %v1258
    %1721 = vmatmul.mubr.f32.gmra.mxu0 %v1243
    %v1722 = vpop.f32.mrf.mxu0
    %v1723 = vadd.f32 %v1583, %v1722
    %v1724 = vpop.f32.mrf.mxu0
    %1725 = vmatprep.mubr.f32.mxu0 %v1259
    %1726 = vmatmul.mubr.f32.gmra.mxu0 %v1244
    %v1727 = vpop.f32.mrf.mxu0
    %v1728 = vadd.f32 %v1588, %v1727
    %v1729 = vpop.f32.mrf.mxu0
    %1730 = vmatprep.mubr.f32.mxu0 %v1260
    %1731 = vmatmul.mubr.f32.gmra.mxu0 %v1245
    %v1732 = vpop.f32.mrf.mxu0
    %v1733 = vadd.f32 %v1593, %v1732
    %v1734 = vpop.f32.mrf.mxu0
    %1735 = vdwg.mxu0
    %1736 = vmatprep.subr.mxu0 0.0
    %1737 = vmatpush1.msra.mxu0 %v1400
    %1738 = vmatprep.subr.mxu0 0.0
    %1739 = vmatpush1.msra.mxu0 %v1399
    %1740 = vmatprep.subr.mxu0 0.0
    %1741 = vmatpush1.msra.mxu0 %v1398
    %1742 = vmatprep.subr.mxu0 0.0
    %1743 = vmatpush1.msra.mxu0 %v1397
    %1744 = vmatprep.subr.mxu0 0.0
    %1745 = vmatpush1.msra.mxu0 %v1396
    %1746 = vmatprep.subr.mxu0 0.0
    %1747 = vmatpush1.msra.mxu0 %v1395
    %1748 = vmatprep.subr.mxu0 0.0
    %1749 = vmatpush1.msra.mxu0 %v1394
    %1750 = vmatprep.subr.mxu0 0.0
    %1751 = vmatpush1.msra.mxu0 %v1393
    %1752 = vmatprep.subr.mxu0 0.0
    %1753 = vmatpush1.msra.mxu0 %v1392
    %1754 = vmatprep.subr.mxu0 0.0
    %1755 = vmatpush1.msra.mxu0 %v1391
    %1756 = vmatprep.subr.mxu0 0.0
    %1757 = vmatpush1.msra.mxu0 %v1390
    %1758 = vmatprep.subr.mxu0 0.0
    %1759 = vmatpush1.msra.mxu0 %v1389
    %1760 = vmatprep.subr.mxu0 0.0
    %1761 = vmatpush1.msra.mxu0 %v1388
    %1762 = vmatprep.subr.mxu0 0.0
    %1763 = vmatpush1.msra.mxu0 %v1387
    %1764 = vmatprep.subr.mxu0 0.0
    %1765 = vmatpush1.msra.mxu0 %v1386
    %1766 = vmatprep.subr.mxu0 0.0
    %1767 = vmatpush1.msra.mxu0 %v1385
    %1768 = vmatprep.subr.mxu0 0.0
    %1769 = vmatpush2.msra.mxu0 %v1416
    %1770 = vmatprep.subr.mxu0 0.0
    %1771 = vmatpush2.msra.mxu0 %v1415
    %1772 = vmatprep.subr.mxu0 0.0
    %1773 = vmatpush2.msra.mxu0 %v1414
    %1774 = vmatprep.subr.mxu0 0.0
    %1775 = vmatpush2.msra.mxu0 %v1413
    %1776 = vmatprep.subr.mxu0 0.0
    %1777 = vmatpush2.msra.mxu0 %v1412
    %1778 = vmatprep.subr.mxu0 0.0
    %1779 = vmatpush2.msra.mxu0 %v1411
    %1780 = vmatprep.subr.mxu0 0.0
    %1781 = vmatpush2.msra.mxu0 %v1410
    %1782 = vmatprep.subr.mxu0 0.0
    %1783 = vmatpush2.msra.mxu0 %v1409
    %1784 = vmatprep.subr.mxu0 0.0
    %1785 = vmatpush2.msra.mxu0 %v1408
    %1786 = vmatprep.subr.mxu0 0.0
    %1787 = vmatpush2.msra.mxu0 %v1407
    %1788 = vmatprep.subr.mxu0 0.0
    %1789 = vmatpush2.msra.mxu0 %v1406
    %1790 = vmatprep.subr.mxu0 0.0
    %1791 = vmatpush2.msra.mxu0 %v1405
    %1792 = vmatprep.subr.mxu0 0.0
    %1793 = vmatpush2.msra.mxu0 %v1404
    %1794 = vmatprep.subr.mxu0 0.0
    %1795 = vmatpush2.msra.mxu0 %v1403
    %1796 = vmatprep.subr.mxu0 0.0
    %1797 = vmatpush2.msra.mxu0 %v1402
    %1798 = vmatprep.subr.mxu0 0.0
    %1799 = vmatpush2.msra.mxu0 %v1401
    %1800 = vmatprep.mubr.f32.mxu0 %v1276
    %1801 = vmatmul.mubr.f32.gmra.mxu0 %v1261
    %v1802 = vpop.f32.mrf.mxu0
    %v1803 = vadd.f32 %v1663, %v1802
    %v1804 = vpop.f32.mrf.mxu0
    %1805 = vmatprep.mubr.f32.mxu0 %v1277
    %1806 = vmatmul.mubr.f32.gmra.mxu0 %v1262
    %v1807 = vpop.f32.mrf.mxu0
    %v1808 = vadd.f32 %v1668, %v1807
    %v1809 = vpop.f32.mrf.mxu0
    %1810 = vmatprep.mubr.f32.mxu0 %v1278
    %1811 = vmatmul.mubr.f32.gmra.mxu0 %v1263
    %v1812 = vpop.f32.mrf.mxu0
    %v1813 = vadd.f32 %v1673, %v1812
    %v1814 = vpop.f32.mrf.mxu0
    %1815 = vmatprep.mubr.f32.mxu0 %v1279
    %1816 = vmatmul.mubr.f32.gmra.mxu0 %v1264
    %v1817 = vpop.f32.mrf.mxu0
    %v1818 = vadd.f32 %v1678, %v1817
    %v1819 = vpop.f32.mrf.mxu0
    %1820 = vmatprep.mubr.f32.mxu0 %v1280
    %1821 = vmatmul.mubr.f32.gmra.mxu0 %v1265
    %v1822 = vpop.f32.mrf.mxu0
    %v1823 = vadd.f32 %v1683, %v1822
    %v1824 = vpop.f32.mrf.mxu0
    %1825 = vmatprep.mubr.f32.mxu0 %v1281
    %1826 = vmatmul.mubr.f32.gmra.mxu0 %v1266
    %v1827 = vpop.f32.mrf.mxu0
    %v1828 = vadd.f32 %v1688, %v1827
    %v1829 = vpop.f32.mrf.mxu0
    %1830 = vmatprep.mubr.f32.mxu0 %v1282
    %1831 = vmatmul.mubr.f32.gmra.mxu0 %v1267
    %v1832 = vpop.f32.mrf.mxu0
    %v1833 = vadd.f32 %v1693, %v1832
    %v1834 = vpop.f32.mrf.mxu0
    %1835 = vmatprep.mubr.f32.mxu0 %v1283
    %1836 = vmatmul.mubr.f32.gmra.mxu0 %v1268
    %v1837 = vpop.f32.mrf.mxu0
    %v1838 = vadd.f32 %v1698, %v1837
    %v1839 = vpop.f32.mrf.mxu0
    %1840 = vmatprep.mubr.f32.mxu0 %v1284
    %1841 = vmatmul.mubr.f32.gmra.mxu0 %v1269
    %v1842 = vpop.f32.mrf.mxu0
    %v1843 = vadd.f32 %v1703, %v1842
    %v1844 = vpop.f32.mrf.mxu0
    %1845 = vmatprep.mubr.f32.mxu0 %v1285
    %1846 = vmatmul.mubr.f32.gmra.mxu0 %v1270
    %v1847 = vpop.f32.mrf.mxu0
    %v1848 = vadd.f32 %v1708, %v1847
    %v1849 = vpop.f32.mrf.mxu0
    %1850 = vmatprep.mubr.f32.mxu0 %v1286
    %1851 = vmatmul.mubr.f32.gmra.mxu0 %v1271
    %v1852 = vpop.f32.mrf.mxu0
    %v1853 = vadd.f32 %v1713, %v1852
    %v1854 = vpop.f32.mrf.mxu0
    %1855 = vmatprep.mubr.f32.mxu0 %v1287
    %1856 = vmatmul.mubr.f32.gmra.mxu0 %v1272
    %v1857 = vpop.f32.mrf.mxu0
    %v1858 = vadd.f32 %v1718, %v1857
    %v1859 = vpop.f32.mrf.mxu0
    %1860 = vmatprep.mubr.f32.mxu0 %v1288
    %1861 = vmatmul.mubr.f32.gmra.mxu0 %v1273
    %v1862 = vpop.f32.mrf.mxu0
    %v1863 = vadd.f32 %v1723, %v1862
    %v1864 = vpop.f32.mrf.mxu0
    %1865 = vmatprep.mubr.f32.mxu0 %v1289
    %1866 = vmatmul.mubr.f32.gmra.mxu0 %v1274
    %v1867 = vpop.f32.mrf.mxu0
    %v1868 = vadd.f32 %v1728, %v1867
    %v1869 = vpop.f32.mrf.mxu0
    %1870 = vmatprep.mubr.f32.mxu0 %v1290
    %1871 = vmatmul.mubr.f32.gmra.mxu0 %v1275
    %v1872 = vpop.f32.mrf.mxu0
    %v1873 = vadd.f32 %v1733, %v1872
    %v1874 = vpop.f32.mrf.mxu0
    %1875 = vdwg.mxu0
    %1876 = vmatprep.subr.mxu0 0.0
    %1877 = vmatpush1.msra.mxu0 %v1432
    %1878 = vmatprep.subr.mxu0 0.0
    %1879 = vmatpush1.msra.mxu0 %v1431
    %1880 = vmatprep.subr.mxu0 0.0
    %1881 = vmatpush1.msra.mxu0 %v1430
    %1882 = vmatprep.subr.mxu0 0.0
    %1883 = vmatpush1.msra.mxu0 %v1429
    %1884 = vmatprep.subr.mxu0 0.0
    %1885 = vmatpush1.msra.mxu0 %v1428
    %1886 = vmatprep.subr.mxu0 0.0
    %1887 = vmatpush1.msra.mxu0 %v1427
    %1888 = vmatprep.subr.mxu0 0.0
    %1889 = vmatpush1.msra.mxu0 %v1426
    %1890 = vmatprep.subr.mxu0 0.0
    %1891 = vmatpush1.msra.mxu0 %v1425
    %1892 = vmatprep.subr.mxu0 0.0
    %1893 = vmatpush1.msra.mxu0 %v1424
    %1894 = vmatprep.subr.mxu0 0.0
    %1895 = vmatpush1.msra.mxu0 %v1423
    %1896 = vmatprep.subr.mxu0 0.0
    %1897 = vmatpush1.msra.mxu0 %v1422
    %1898 = vmatprep.subr.mxu0 0.0
    %1899 = vmatpush1.msra.mxu0 %v1421
    %1900 = vmatprep.subr.mxu0 0.0
    %1901 = vmatpush1.msra.mxu0 %v1420
    %1902 = vmatprep.subr.mxu0 0.0
    %1903 = vmatpush1.msra.mxu0 %v1419
    %1904 = vmatprep.subr.mxu0 0.0
    %1905 = vmatpush1.msra.mxu0 %v1418
    %1906 = vmatprep.subr.mxu0 0.0
    %1907 = vmatpush1.msra.mxu0 %v1417
    %1908 = vmatprep.subr.mxu0 0.0
    %1909 = vmatpush2.msra.mxu0 %v1448
    %1910 = vmatprep.subr.mxu0 0.0
    %1911 = vmatpush2.msra.mxu0 %v1447
    %1912 = vmatprep.subr.mxu0 0.0
    %1913 = vmatpush2.msra.mxu0 %v1446
    %1914 = vmatprep.subr.mxu0 0.0
    %1915 = vmatpush2.msra.mxu0 %v1445
    %1916 = vmatprep.subr.mxu0 0.0
    %1917 = vmatpush2.msra.mxu0 %v1444
    %1918 = vmatprep.subr.mxu0 0.0
    %1919 = vmatpush2.msra.mxu0 %v1443
    %1920 = vmatprep.subr.mxu0 0.0
    %1921 = vmatpush2.msra.mxu0 %v1442
    %1922 = vmatprep.subr.mxu0 0.0
    %1923 = vmatpush2.msra.mxu0 %v1441
    %1924 = vmatprep.subr.mxu0 0.0
    %1925 = vmatpush2.msra.mxu0 %v1440
    %1926 = vmatprep.subr.mxu0 0.0
    %1927 = vmatpush2.msra.mxu0 %v1439
    %1928 = vmatprep.subr.mxu0 0.0
    %1929 = vmatpush2.msra.mxu0 %v1438
    %1930 = vmatprep.subr.mxu0 0.0
    %1931 = vmatpush2.msra.mxu0 %v1437
    %1932 = vmatprep.subr.mxu0 0.0
    %1933 = vmatpush2.msra.mxu0 %v1436
    %1934 = vmatprep.subr.mxu0 0.0
    %1935 = vmatpush2.msra.mxu0 %v1435
    %1936 = vmatprep.subr.mxu0 0.0
    %1937 = vmatpush2.msra.mxu0 %v1434
    %1938 = vmatprep.subr.mxu0 0.0
    %1939 = vmatpush2.msra.mxu0 %v1433
    %1940 = vmatprep.mubr.f32.mxu0 %v1306
    %1941 = vmatmul.mubr.f32.gmra.mxu0 %v1291
    %v1942 = vpop.f32.mrf.mxu0
    %v1943 = vadd.f32 %v1803, %v1942
    %v1944 = vpop.f32.mrf.mxu0
    %1945 = vmatprep.mubr.f32.mxu0 %v1307
    %1946 = vmatmul.mubr.f32.gmra.mxu0 %v1292
    %v1947 = vpop.f32.mrf.mxu0
    %v1948 = vadd.f32 %v1808, %v1947
    %v1949 = vpop.f32.mrf.mxu0
    %1950 = vmatprep.mubr.f32.mxu0 %v1308
    %1951 = vmatmul.mubr.f32.gmra.mxu0 %v1293
    %v1952 = vpop.f32.mrf.mxu0
    %v1953 = vadd.f32 %v1813, %v1952
    %v1954 = vpop.f32.mrf.mxu0
    %1955 = vmatprep.mubr.f32.mxu0 %v1309
    %1956 = vmatmul.mubr.f32.gmra.mxu0 %v1294
    %v1957 = vpop.f32.mrf.mxu0
    %v1958 = vadd.f32 %v1818, %v1957
    %v1959 = vpop.f32.mrf.mxu0
    %1960 = vmatprep.mubr.f32.mxu0 %v1310
    %1961 = vmatmul.mubr.f32.gmra.mxu0 %v1295
    %v1962 = vpop.f32.mrf.mxu0
    %v1963 = vadd.f32 %v1823, %v1962
    %v1964 = vpop.f32.mrf.mxu0
    %1965 = vmatprep.mubr.f32.mxu0 %v1311
    %1966 = vmatmul.mubr.f32.gmra.mxu0 %v1296
    %v1967 = vpop.f32.mrf.mxu0
    %v1968 = vadd.f32 %v1828, %v1967
    %v1969 = vpop.f32.mrf.mxu0
    %1970 = vmatprep.mubr.f32.mxu0 %v1312
    %1971 = vmatmul.mubr.f32.gmra.mxu0 %v1297
    %v1972 = vpop.f32.mrf.mxu0
    %v1973 = vadd.f32 %v1833, %v1972
    %v1974 = vpop.f32.mrf.mxu0
    %1975 = vmatprep.mubr.f32.mxu0 %v1313
    %1976 = vmatmul.mubr.f32.gmra.mxu0 %v1298
    %v1977 = vpop.f32.mrf.mxu0
    %v1978 = vadd.f32 %v1838, %v1977
    %v1979 = vpop.f32.mrf.mxu0
    %1980 = vmatprep.mubr.f32.mxu0 %v1314
    %1981 = vmatmul.mubr.f32.gmra.mxu0 %v1299
    %v1982 = vpop.f32.mrf.mxu0
    %v1983 = vadd.f32 %v1843, %v1982
    %v1984 = vpop.f32.mrf.mxu0
    %1985 = vmatprep.mubr.f32.mxu0 %v1315
    %1986 = vmatmul.mubr.f32.gmra.mxu0 %v1300
    %v1987 = vpop.f32.mrf.mxu0
    %v1988 = vadd.f32 %v1848, %v1987
    %v1989 = vpop.f32.mrf.mxu0
    %1990 = vmatprep.mubr.f32.mxu0 %v1316
    %1991 = vmatmul.mubr.f32.gmra.mxu0 %v1301
    %v1992 = vpop.f32.mrf.mxu0
    %v1993 = vadd.f32 %v1853, %v1992
    %v1994 = vpop.f32.mrf.mxu0
    %1995 = vmatprep.mubr.f32.mxu0 %v1317
    %1996 = vmatmul.mubr.f32.gmra.mxu0 %v1302
    %v1997 = vpop.f32.mrf.mxu0
    %v1998 = vadd.f32 %v1858, %v1997
    %v1999 = vpop.f32.mrf.mxu0
    %2000 = vmatprep.mubr.f32.mxu0 %v1318
    %2001 = vmatmul.mubr.f32.gmra.mxu0 %v1303
    %v2002 = vpop.f32.mrf.mxu0
    %v2003 = vadd.f32 %v1863, %v2002
    %v2004 = vpop.f32.mrf.mxu0
    %2005 = vmatprep.mubr.f32.mxu0 %v1319
    %2006 = vmatmul.mubr.f32.gmra.mxu0 %v1304
    %v2007 = vpop.f32.mrf.mxu0
    %v2008 = vadd.f32 %v1868, %v2007
    %v2009 = vpop.f32.mrf.mxu0
    %2010 = vmatprep.mubr.f32.mxu0 %v1320
    %2011 = vmatmul.mubr.f32.gmra.mxu0 %v1305
    %v2012 = vpop.f32.mrf.mxu0
    %v2013 = vadd.f32 %v1873, %v2012
    %v2014 = vpop.f32.mrf.mxu0
    %2015 = vdwg.mxu0
    %v2016 = vmax.f32 %v1943, 0.0
    %v2017 = vmax.f32 %v1948, 0.0
    %v2018 = vmax.f32 %v1953, 0.0
    %v2019 = vmax.f32 %v1958, 0.0
    %v2020 = vmax.f32 %v1963, 0.0
    %v2021 = vmax.f32 %v1968, 0.0
    %v2022 = vmax.f32 %v1973, 0.0
    %v2023 = vmax.f32 %v1978, 0.0
    %v2024 = vmax.f32 %v1983, 0.0
    %v2025 = vmax.f32 %v1988, 0.0
    %v2026 = vmax.f32 %v1993, 0.0
    %v2027 = vmax.f32 %v1998, 0.0
    %v2028 = vmax.f32 %v2003, 0.0
    %v2029 = vmax.f32 %v2008, 0.0
    %v2030 = vmax.f32 %v2013, 0.0
    %2031 = vst [vmem:[#allocation4] sm:$0xff] %v2016
    %2032 = vst [vmem:[#allocation4 + $0x8] sm:$0xff] %v2017
    %2033 = vst [vmem:[#allocation4 + $0x10] sm:$0xff] %v2018
    %2034 = vst [vmem:[#allocation4 + $0x18] sm:$0xff] %v2019
    %2035 = vst [vmem:[#allocation4 + $0x20] sm:$0xff] %v2020
    %2036 = vst [vmem:[#allocation4 + $0x28] sm:$0xff] %v2021
    %2037 = vst [vmem:[#allocation4 + $0x30] sm:$0xff] %v2022
    %2038 = vst [vmem:[#allocation4 + $0x38] sm:$0xff] %v2023
    %2039 = vst [vmem:[#allocation4 + $0x40] sm:$0xff] %v2024
    %2040 = vst [vmem:[#allocation4 + $0x48] sm:$0xff] %v2025
    %2041 = vst [vmem:[#allocation4 + $0x50] sm:$0xff] %v2026
    %2042 = vst [vmem:[#allocation4 + $0x58] sm:$0xff] %v2027
    %2043 = vst [vmem:[#allocation4 + $0x60] sm:$0xff] %v2028
    %2044 = vst [vmem:[#allocation4 + $0x68] sm:$0xff] %v2029
    %2045 = vst [vmem:[#allocation4 + $0x70] sm:$0x3] %v2030
    %v2046 = vld [vmem:[#allocation4] sm:$0xff]
    %v2047 = vld [vmem:[#allocation4 + $0x8] sm:$0xff]
    %v2048 = vld [vmem:[#allocation4 + $0x10] sm:$0xff]
    %v2049 = vld [vmem:[#allocation4 + $0x18] sm:$0xff]
    %v2050 = vld [vmem:[#allocation4 + $0x20] sm:$0xff]
    %v2051 = vld [vmem:[#allocation4 + $0x28] sm:$0xff]
    %v2052 = vld [vmem:[#allocation4 + $0x30] sm:$0xff]
    %v2053 = vld [vmem:[#allocation4 + $0x38] sm:$0xff]
    %v2054 = vld [vmem:[#allocation4 + $0x40] sm:$0xff]
    %v2055 = vld [vmem:[#allocation4 + $0x48] sm:$0xff]
    %v2056 = vld [vmem:[#allocation4 + $0x50] sm:$0xff]
    %v2057 = vld [vmem:[#allocation4 + $0x58] sm:$0xff]
    %v2058 = vld [vmem:[#allocation4 + $0x60] sm:$0xff]
    %v2059 = vld [vmem:[#allocation4 + $0x68] sm:$0x7]
    %v2060 = vld [vmem:[#allocation4 + $0x1] sm:$0xff]
    %v2061 = vld [vmem:[#allocation4 + $0x9] sm:$0xff]
    %v2062 = vld [vmem:[#allocation4 + $0x11] sm:$0xff]
    %v2063 = vld [vmem:[#allocation4 + $0x19] sm:$0xff]
    %v2064 = vld [vmem:[#allocation4 + $0x21] sm:$0xff]
    %v2065 = vld [vmem:[#allocation4 + $0x29] sm:$0xff]
    %v2066 = vld [vmem:[#allocation4 + $0x31] sm:$0xff]
    %v2067 = vld [vmem:[#allocation4 + $0x39] sm:$0xff]
    %v2068 = vld [vmem:[#allocation4 + $0x41] sm:$0xff]
    %v2069 = vld [vmem:[#allocation4 + $0x49] sm:$0xff]
    %v2070 = vld [vmem:[#allocation4 + $0x51] sm:$0xff]
    %v2071 = vld [vmem:[#allocation4 + $0x59] sm:$0xff]
    %v2072 = vld [vmem:[#allocation4 + $0x61] sm:$0xff]
    %v2073 = vld [vmem:[#allocation4 + $0x69] sm:$0x7]
    %v2074 = vld [vmem:[#allocation4 + $0x2] sm:$0xff]
    %v2075 = vld [vmem:[#allocation4 + $0xa] sm:$0xff]
    %v2076 = vld [vmem:[#allocation4 + $0x12] sm:$0xff]
    %v2077 = vld [vmem:[#allocation4 + $0x1a] sm:$0xff]
    %v2078 = vld [vmem:[#allocation4 + $0x22] sm:$0xff]
    %v2079 = vld [vmem:[#allocation4 + $0x2a] sm:$0xff]
    %v2080 = vld [vmem:[#allocation4 + $0x32] sm:$0xff]
    %v2081 = vld [vmem:[#allocation4 + $0x3a] sm:$0xff]
    %v2082 = vld [vmem:[#allocation4 + $0x42] sm:$0xff]
    %v2083 = vld [vmem:[#allocation4 + $0x4a] sm:$0xff]
    %v2084 = vld [vmem:[#allocation4 + $0x52] sm:$0xff]
    %v2085 = vld [vmem:[#allocation4 + $0x5a] sm:$0xff]
    %v2086 = vld [vmem:[#allocation4 + $0x62] sm:$0xff]
    %v2087 = vld [vmem:[#allocation4 + $0x6a] sm:$0x7]
    %v2088 = vld [vmem:[#allocation4 + $0x3] sm:$0xff]
    %v2089 = vld [vmem:[#allocation4 + $0xb] sm:$0xff]
    %v2090 = vld [vmem:[#allocation4 + $0x13] sm:$0xff]
    %v2091 = vld [vmem:[#allocation4 + $0x1b] sm:$0xff]
    %v2092 = vld [vmem:[#allocation4 + $0x23] sm:$0xff]
    %v2093 = vld [vmem:[#allocation4 + $0x2b] sm:$0xff]
    %v2094 = vld [vmem:[#allocation4 + $0x33] sm:$0xff]
    %v2095 = vld [vmem:[#allocation4 + $0x3b] sm:$0xff]
    %v2096 = vld [vmem:[#allocation4 + $0x43] sm:$0xff]
    %v2097 = vld [vmem:[#allocation4 + $0x4b] sm:$0xff]
    %v2098 = vld [vmem:[#allocation4 + $0x53] sm:$0xff]
    %v2099 = vld [vmem:[#allocation4 + $0x5b] sm:$0xff]
    %v2100 = vld [vmem:[#allocation4 + $0x63] sm:$0xff]
    %v2101 = vld [vmem:[#allocation4 + $0x6b] sm:$0x7]
    %v2102 = vld [vmem:[#allocation4 + $0x4] sm:$0xff]
    %v2103 = vld [vmem:[#allocation4 + $0xc] sm:$0xff]
    %v2104 = vld [vmem:[#allocation4 + $0x14] sm:$0xff]
    %v2105 = vld [vmem:[#allocation4 + $0x1c] sm:$0xff]
    %v2106 = vld [vmem:[#allocation4 + $0x24] sm:$0xff]
    %v2107 = vld [vmem:[#allocation4 + $0x2c] sm:$0xff]
    %v2108 = vld [vmem:[#allocation4 + $0x34] sm:$0xff]
    %v2109 = vld [vmem:[#allocation4 + $0x3c] sm:$0xff]
    %v2110 = vld [vmem:[#allocation4 + $0x44] sm:$0xff]
    %v2111 = vld [vmem:[#allocation4 + $0x4c] sm:$0xff]
    %v2112 = vld [vmem:[#allocation4 + $0x54] sm:$0xff]
    %v2113 = vld [vmem:[#allocation4 + $0x5c] sm:$0xff]
    %v2114 = vld [vmem:[#allocation4 + $0x64] sm:$0xff]
    %v2115 = vld [vmem:[#allocation4 + $0x6c] sm:$0x7]
    %v2116 = vld [vmem:[#allocation4 + $0x5] sm:$0xff]
    %v2117 = vld [vmem:[#allocation4 + $0xd] sm:$0xff]
    %v2118 = vld [vmem:[#allocation4 + $0x15] sm:$0xff]
    %v2119 = vld [vmem:[#allocation4 + $0x1d] sm:$0xff]
    %v2120 = vld [vmem:[#allocation4 + $0x25] sm:$0xff]
    %v2121 = vld [vmem:[#allocation4 + $0x2d] sm:$0xff]
    %v2122 = vld [vmem:[#allocation4 + $0x35] sm:$0xff]
    %v2123 = vld [vmem:[#allocation4 + $0x3d] sm:$0xff]
    %v2124 = vld [vmem:[#allocation4 + $0x45] sm:$0xff]
    %v2125 = vld [vmem:[#allocation4 + $0x4d] sm:$0xff]
    %v2126 = vld [vmem:[#allocation4 + $0x55] sm:$0xff]
    %v2127 = vld [vmem:[#allocation4 + $0x5d] sm:$0xff]
    %v2128 = vld [vmem:[#allocation4 + $0x65] sm:$0xff]
    %v2129 = vld [vmem:[#allocation4 + $0x6d] sm:$0x7]
    %v2130 = vld [vmem:[#allocation4 + $0x6] sm:$0xff]
    %v2131 = vld [vmem:[#allocation4 + $0xe] sm:$0xff]
    %v2132 = vld [vmem:[#allocation4 + $0x16] sm:$0xff]
    %v2133 = vld [vmem:[#allocation4 + $0x1e] sm:$0xff]
    %v2134 = vld [vmem:[#allocation4 + $0x26] sm:$0xff]
    %v2135 = vld [vmem:[#allocation4 + $0x2e] sm:$0xff]
    %v2136 = vld [vmem:[#allocation4 + $0x36] sm:$0xff]
    %v2137 = vld [vmem:[#allocation4 + $0x3e] sm:$0xff]
    %v2138 = vld [vmem:[#allocation4 + $0x46] sm:$0xff]
    %v2139 = vld [vmem:[#allocation4 + $0x4e] sm:$0xff]
    %v2140 = vld [vmem:[#allocation4 + $0x56] sm:$0xff]
    %v2141 = vld [vmem:[#allocation4 + $0x5e] sm:$0xff]
    %v2142 = vld [vmem:[#allocation4 + $0x66] sm:$0xff]
    %v2143 = vld [vmem:[#allocation4 + $0x6e] sm:$0x7]
    %v2144 = vld [vmem:[#allocation4 + $0x7] sm:$0xff]
    %v2145 = vld [vmem:[#allocation4 + $0xf] sm:$0xff]
    %v2146 = vld [vmem:[#allocation4 + $0x17] sm:$0xff]
    %v2147 = vld [vmem:[#allocation4 + $0x1f] sm:$0xff]
    %v2148 = vld [vmem:[#allocation4 + $0x27] sm:$0xff]
    %v2149 = vld [vmem:[#allocation4 + $0x2f] sm:$0xff]
    %v2150 = vld [vmem:[#allocation4 + $0x37] sm:$0xff]
    %v2151 = vld [vmem:[#allocation4 + $0x3f] sm:$0xff]
    %v2152 = vld [vmem:[#allocation4 + $0x47] sm:$0xff]
    %v2153 = vld [vmem:[#allocation4 + $0x4f] sm:$0xff]
    %v2154 = vld [vmem:[#allocation4 + $0x57] sm:$0xff]
    %v2155 = vld [vmem:[#allocation4 + $0x5f] sm:$0xff]
    %v2156 = vld [vmem:[#allocation4 + $0x67] sm:$0xff]
    %v2157 = vld [vmem:[#allocation4 + $0x6f] sm:$0x7]
    %v2158 = vld [vmem:[#allocation9] sm:$0xff]
    %v2159 = vld [vmem:[#allocation9 + $0x8] sm:$0xff]
    %v2160 = vld [vmem:[#allocation9 + $0x10] sm:$0xff]
    %v2161 = vld [vmem:[#allocation9 + $0x18] sm:$0xff]
    %v2162 = vld [vmem:[#allocation9 + $0x20] sm:$0xff]
    %v2163 = vld [vmem:[#allocation9 + $0x28] sm:$0xff]
    %v2164 = vld [vmem:[#allocation9 + $0x30] sm:$0xff]
    %v2165 = vld [vmem:[#allocation9 + $0x38] sm:$0xff]
    %v2166 = vld [vmem:[#allocation9 + $0x40] sm:$0xff]
    %v2167 = vld [vmem:[#allocation9 + $0x48] sm:$0xff]
    %v2168 = vld [vmem:[#allocation9 + $0x50] sm:$0xff]
    %v2169 = vld [vmem:[#allocation9 + $0x58] sm:$0xff]
    %v2170 = vld [vmem:[#allocation9 + $0x60] sm:$0xff]
    %v2171 = vld [vmem:[#allocation9 + $0x68] sm:$0xff]
    %v2172 = vld [vmem:[#allocation9 + $0x70] sm:$0xff]
    %v2173 = vld [vmem:[#allocation9 + $0x78] sm:$0xff]
    %v2174 = vld [vmem:[#allocation9 + $0x80] sm:$0xff]
    %v2175 = vld [vmem:[#allocation9 + $0x88] sm:$0xff]
    %v2176 = vld [vmem:[#allocation9 + $0x90] sm:$0xff]
    %v2177 = vld [vmem:[#allocation9 + $0x98] sm:$0xff]
    %v2178 = vld [vmem:[#allocation9 + $0xa0] sm:$0xff]
    %v2179 = vld [vmem:[#allocation9 + $0xa8] sm:$0xff]
    %v2180 = vld [vmem:[#allocation9 + $0xb0] sm:$0xff]
    %v2181 = vld [vmem:[#allocation9 + $0xb8] sm:$0xff]
    %v2182 = vld [vmem:[#allocation9 + $0xc0] sm:$0xff]
    %v2183 = vld [vmem:[#allocation9 + $0xc8] sm:$0xff]
    %v2184 = vld [vmem:[#allocation9 + $0xd0] sm:$0xff]
    %v2185 = vld [vmem:[#allocation9 + $0xd8] sm:$0xff]
    %v2186 = vld [vmem:[#allocation9 + $0xe0] sm:$0xff]
    %v2187 = vld [vmem:[#allocation9 + $0xe8] sm:$0xff]
    %v2188 = vld [vmem:[#allocation9 + $0xf0] sm:$0xff]
    %v2189 = vld [vmem:[#allocation9 + $0xf8] sm:$0xff]
    %v2190 = vld [vmem:[#allocation9 + $0x100] sm:$0xff]
    %v2191 = vld [vmem:[#allocation9 + $0x108] sm:$0xff]
    %v2192 = vld [vmem:[#allocation9 + $0x110] sm:$0xff]
    %v2193 = vld [vmem:[#allocation9 + $0x118] sm:$0xff]
    %v2194 = vld [vmem:[#allocation9 + $0x120] sm:$0xff]
    %v2195 = vld [vmem:[#allocation9 + $0x128] sm:$0xff]
    %v2196 = vld [vmem:[#allocation9 + $0x130] sm:$0xff]
    %v2197 = vld [vmem:[#allocation9 + $0x138] sm:$0xff]
    %v2198 = vld [vmem:[#allocation9 + $0x140] sm:$0xff]
    %v2199 = vld [vmem:[#allocation9 + $0x148] sm:$0xff]
    %v2200 = vld [vmem:[#allocation9 + $0x150] sm:$0xff]
    %v2201 = vld [vmem:[#allocation9 + $0x158] sm:$0xff]
    %v2202 = vld [vmem:[#allocation9 + $0x160] sm:$0xff]
    %v2203 = vld [vmem:[#allocation9 + $0x168] sm:$0xff]
    %v2204 = vld [vmem:[#allocation9 + $0x170] sm:$0xff]
    %v2205 = vld [vmem:[#allocation9 + $0x178] sm:$0xff]
    %v2206 = vld [vmem:[#allocation9 + $0x180] sm:$0xff]
    %v2207 = vld [vmem:[#allocation9 + $0x188] sm:$0xff]
    %v2208 = vld [vmem:[#allocation9 + $0x190] sm:$0xff]
    %v2209 = vld [vmem:[#allocation9 + $0x198] sm:$0xff]
    %v2210 = vld [vmem:[#allocation9 + $0x1a0] sm:$0xff]
    %v2211 = vld [vmem:[#allocation9 + $0x1a8] sm:$0xff]
    %v2212 = vld [vmem:[#allocation9 + $0x1b0] sm:$0xff]
    %v2213 = vld [vmem:[#allocation9 + $0x1b8] sm:$0xff]
    %v2214 = vld [vmem:[#allocation9 + $0x1c0] sm:$0xff]
    %v2215 = vld [vmem:[#allocation9 + $0x1c8] sm:$0xff]
    %v2216 = vld [vmem:[#allocation9 + $0x1d0] sm:$0xff]
    %v2217 = vld [vmem:[#allocation9 + $0x1d8] sm:$0xff]
    %v2218 = vld [vmem:[#allocation9 + $0x1e0] sm:$0xff]
    %v2219 = vld [vmem:[#allocation9 + $0x1e8] sm:$0xff]
    %v2220 = vld [vmem:[#allocation9 + $0x1f0] sm:$0xff]
    %v2221 = vld [vmem:[#allocation9 + $0x1f8] sm:$0xff]
    %v2222 = vld [vmem:[#allocation9 + $0x200] sm:$0xff]
    %v2223 = vld [vmem:[#allocation9 + $0x208] sm:$0xff]
    %v2224 = vld [vmem:[#allocation9 + $0x210] sm:$0xff]
    %v2225 = vld [vmem:[#allocation9 + $0x218] sm:$0xff]
    %v2226 = vld [vmem:[#allocation9 + $0x220] sm:$0xff]
    %v2227 = vld [vmem:[#allocation9 + $0x228] sm:$0xff]
    %v2228 = vld [vmem:[#allocation9 + $0x230] sm:$0xff]
    %v2229 = vld [vmem:[#allocation9 + $0x238] sm:$0xff]
    %v2230 = vld [vmem:[#allocation9 + $0x240] sm:$0xff]
    %v2231 = vld [vmem:[#allocation9 + $0x248] sm:$0xff]
    %v2232 = vld [vmem:[#allocation9 + $0x250] sm:$0xff]
    %v2233 = vld [vmem:[#allocation9 + $0x258] sm:$0xff]
    %v2234 = vld [vmem:[#allocation9 + $0x260] sm:$0xff]
    %v2235 = vld [vmem:[#allocation9 + $0x268] sm:$0xff]
    %v2236 = vld [vmem:[#allocation9 + $0x270] sm:$0xff]
    %v2237 = vld [vmem:[#allocation9 + $0x278] sm:$0xff]
    %v2238 = vld [vmem:[#allocation9 + $0x280] sm:$0xff]
    %v2239 = vld [vmem:[#allocation9 + $0x288] sm:$0xff]
    %v2240 = vld [vmem:[#allocation9 + $0x290] sm:$0xff]
    %v2241 = vld [vmem:[#allocation9 + $0x298] sm:$0xff]
    %v2242 = vld [vmem:[#allocation9 + $0x2a0] sm:$0xff]
    %v2243 = vld [vmem:[#allocation9 + $0x2a8] sm:$0xff]
    %v2244 = vld [vmem:[#allocation9 + $0x2b0] sm:$0xff]
    %v2245 = vld [vmem:[#allocation9 + $0x2b8] sm:$0xff]
    %v2246 = vld [vmem:[#allocation9 + $0x2c0] sm:$0xff]
    %v2247 = vld [vmem:[#allocation9 + $0x2c8] sm:$0xff]
    %v2248 = vld [vmem:[#allocation9 + $0x2d0] sm:$0xff]
    %v2249 = vld [vmem:[#allocation9 + $0x2d8] sm:$0xff]
    %v2250 = vld [vmem:[#allocation9 + $0x2e0] sm:$0xff]
    %v2251 = vld [vmem:[#allocation9 + $0x2e8] sm:$0xff]
    %v2252 = vld [vmem:[#allocation9 + $0x2f0] sm:$0xff]
    %v2253 = vld [vmem:[#allocation9 + $0x2f8] sm:$0xff]
    %v2254 = vld [vmem:[#allocation9 + $0x300] sm:$0xff]
    %v2255 = vld [vmem:[#allocation9 + $0x308] sm:$0xff]
    %v2256 = vld [vmem:[#allocation9 + $0x310] sm:$0xff]
    %v2257 = vld [vmem:[#allocation9 + $0x318] sm:$0xff]
    %v2258 = vld [vmem:[#allocation9 + $0x320] sm:$0xff]
    %v2259 = vld [vmem:[#allocation9 + $0x328] sm:$0xff]
    %v2260 = vld [vmem:[#allocation9 + $0x330] sm:$0xff]
    %v2261 = vld [vmem:[#allocation9 + $0x338] sm:$0xff]
    %v2262 = vld [vmem:[#allocation9 + $0x340] sm:$0xff]
    %v2263 = vld [vmem:[#allocation9 + $0x348] sm:$0xff]
    %v2264 = vld [vmem:[#allocation9 + $0x350] sm:$0xff]
    %v2265 = vld [vmem:[#allocation9 + $0x358] sm:$0xff]
    %v2266 = vld [vmem:[#allocation9 + $0x360] sm:$0xff]
    %v2267 = vld [vmem:[#allocation9 + $0x368] sm:$0xff]
    %v2268 = vld [vmem:[#allocation9 + $0x370] sm:$0xff]
    %v2269 = vld [vmem:[#allocation9 + $0x378] sm:$0xff]
    %v2270 = vld [vmem:[#allocation9 + $0x380] sm:$0xff]
    %v2271 = vld [vmem:[#allocation9 + $0x388] sm:$0xff]
    %v2272 = vld [vmem:[#allocation9 + $0x390] sm:$0xff]
    %v2273 = vld [vmem:[#allocation9 + $0x398] sm:$0xff]
    %v2274 = vld [vmem:[#allocation9 + $0x3a0] sm:$0xff]
    %v2275 = vld [vmem:[#allocation9 + $0x3a8] sm:$0xff]
    %v2276 = vld [vmem:[#allocation9 + $0x3b0] sm:$0xff]
    %v2277 = vld [vmem:[#allocation9 + $0x3b8] sm:$0xff]
    %v2278 = vld [vmem:[#allocation9 + $0x3c0] sm:$0xff]
    %v2279 = vld [vmem:[#allocation9 + $0x3c8] sm:$0xff]
    %v2280 = vld [vmem:[#allocation9 + $0x3d0] sm:$0xff]
    %v2281 = vld [vmem:[#allocation9 + $0x3d8] sm:$0xff]
    %v2282 = vld [vmem:[#allocation9 + $0x3e0] sm:$0xff]
    %v2283 = vld [vmem:[#allocation9 + $0x3e8] sm:$0xff]
    %v2284 = vld [vmem:[#allocation9 + $0x3f0] sm:$0xff]
    %v2285 = vld [vmem:[#allocation9 + $0x3f8] sm:$0xff]
    %v2286 = vld [vmem:[%s7] sm:$0x1]
    %v2288 = vlaneseq
    %v2289 = vshrl.u32 %v2288, 7
    %v2290 = vsub.s32 0, %v2289
    %v2291 = vrot.slane %v2286, %v2290
    %2293 = vmatprep.subr.mxu0 0.0
    %2294 = vmatpush1.msra.mxu0 %v2173
    %2295 = vmatprep.subr.mxu0 0.0
    %2296 = vmatpush1.msra.mxu0 %v2172
    %2297 = vmatprep.subr.mxu0 0.0
    %2298 = vmatpush1.msra.mxu0 %v2171
    %2299 = vmatprep.subr.mxu0 0.0
    %2300 = vmatpush1.msra.mxu0 %v2170
    %2301 = vmatprep.subr.mxu0 0.0
    %2302 = vmatpush1.msra.mxu0 %v2169
    %2303 = vmatprep.subr.mxu0 0.0
    %2304 = vmatpush1.msra.mxu0 %v2168
    %2305 = vmatprep.subr.mxu0 0.0
    %2306 = vmatpush1.msra.mxu0 %v2167
    %2307 = vmatprep.subr.mxu0 0.0
    %2308 = vmatpush1.msra.mxu0 %v2166
    %2309 = vmatprep.subr.mxu0 0.0
    %2310 = vmatpush1.msra.mxu0 %v2165
    %2311 = vmatprep.subr.mxu0 0.0
    %2312 = vmatpush1.msra.mxu0 %v2164
    %2313 = vmatprep.subr.mxu0 0.0
    %2314 = vmatpush1.msra.mxu0 %v2163
    %2315 = vmatprep.subr.mxu0 0.0
    %2316 = vmatpush1.msra.mxu0 %v2162
    %2317 = vmatprep.subr.mxu0 0.0
    %2318 = vmatpush1.msra.mxu0 %v2161
    %2319 = vmatprep.subr.mxu0 0.0
    %2320 = vmatpush1.msra.mxu0 %v2160
    %2321 = vmatprep.subr.mxu0 0.0
    %2322 = vmatpush1.msra.mxu0 %v2159
    %2323 = vmatprep.subr.mxu0 0.0
    %2324 = vmatpush1.msra.mxu0 %v2158
    %2325 = vmatprep.subr.mxu0 0.0
    %2326 = vmatpush2.msra.mxu0 %v2189
    %2327 = vmatprep.subr.mxu0 0.0
    %2328 = vmatpush2.msra.mxu0 %v2188
    %2329 = vmatprep.subr.mxu0 0.0
    %2330 = vmatpush2.msra.mxu0 %v2187
    %2331 = vmatprep.subr.mxu0 0.0
    %2332 = vmatpush2.msra.mxu0 %v2186
    %2333 = vmatprep.subr.mxu0 0.0
    %2334 = vmatpush2.msra.mxu0 %v2185
    %2335 = vmatprep.subr.mxu0 0.0
    %2336 = vmatpush2.msra.mxu0 %v2184
    %2337 = vmatprep.subr.mxu0 0.0
    %2338 = vmatpush2.msra.mxu0 %v2183
    %2339 = vmatprep.subr.mxu0 0.0
    %2340 = vmatpush2.msra.mxu0 %v2182
    %2341 = vmatprep.subr.mxu0 0.0
    %2342 = vmatpush2.msra.mxu0 %v2181
    %2343 = vmatprep.subr.mxu0 0.0
    %2344 = vmatpush2.msra.mxu0 %v2180
    %2345 = vmatprep.subr.mxu0 0.0
    %2346 = vmatpush2.msra.mxu0 %v2179
    %2347 = vmatprep.subr.mxu0 0.0
    %2348 = vmatpush2.msra.mxu0 %v2178
    %2349 = vmatprep.subr.mxu0 0.0
    %2350 = vmatpush2.msra.mxu0 %v2177
    %2351 = vmatprep.subr.mxu0 0.0
    %2352 = vmatpush2.msra.mxu0 %v2176
    %2353 = vmatprep.subr.mxu0 0.0
    %2354 = vmatpush2.msra.mxu0 %v2175
    %2355 = vmatprep.subr.mxu0 0.0
    %2356 = vmatpush2.msra.mxu0 %v2174
    %2357 = vmatprep.mubr.f32.mxu0 %v2060
    %2358 = vmatmul.mubr.f32.gmra.mxu0 %v2046
    %v2359 = vpop.f32.mrf.mxu0
    %v2360 = vadd.f32 %v2291, %v2359
    %v2361 = vpop.f32.mrf.mxu0
    %2362 = vmatprep.mubr.f32.mxu0 %v2061
    %2363 = vmatmul.mubr.f32.gmra.mxu0 %v2047
    %v2364 = vpop.f32.mrf.mxu0
    %v2365 = vadd.f32 %v2291, %v2364
    %v2366 = vpop.f32.mrf.mxu0
    %2367 = vmatprep.mubr.f32.mxu0 %v2062
    %2368 = vmatmul.mubr.f32.gmra.mxu0 %v2048
    %v2369 = vpop.f32.mrf.mxu0
    %v2370 = vadd.f32 %v2291, %v2369
    %v2371 = vpop.f32.mrf.mxu0
    %2372 = vmatprep.mubr.f32.mxu0 %v2063
    %2373 = vmatmul.mubr.f32.gmra.mxu0 %v2049
    %v2374 = vpop.f32.mrf.mxu0
    %v2375 = vadd.f32 %v2291, %v2374
    %v2376 = vpop.f32.mrf.mxu0
    %2377 = vmatprep.mubr.f32.mxu0 %v2064
    %2378 = vmatmul.mubr.f32.gmra.mxu0 %v2050
    %v2379 = vpop.f32.mrf.mxu0
    %v2380 = vadd.f32 %v2291, %v2379
    %v2381 = vpop.f32.mrf.mxu0
    %2382 = vmatprep.mubr.f32.mxu0 %v2065
    %2383 = vmatmul.mubr.f32.gmra.mxu0 %v2051
    %v2384 = vpop.f32.mrf.mxu0
    %v2385 = vadd.f32 %v2291, %v2384
    %v2386 = vpop.f32.mrf.mxu0
    %2387 = vmatprep.mubr.f32.mxu0 %v2066
    %2388 = vmatmul.mubr.f32.gmra.mxu0 %v2052
    %v2389 = vpop.f32.mrf.mxu0
    %v2390 = vadd.f32 %v2291, %v2389
    %v2391 = vpop.f32.mrf.mxu0
    %2392 = vmatprep.mubr.f32.mxu0 %v2067
    %2393 = vmatmul.mubr.f32.gmra.mxu0 %v2053
    %v2394 = vpop.f32.mrf.mxu0
    %v2395 = vadd.f32 %v2291, %v2394
    %v2396 = vpop.f32.mrf.mxu0
    %2397 = vmatprep.mubr.f32.mxu0 %v2068
    %2398 = vmatmul.mubr.f32.gmra.mxu0 %v2054
    %v2399 = vpop.f32.mrf.mxu0
    %v2400 = vadd.f32 %v2291, %v2399
    %v2401 = vpop.f32.mrf.mxu0
    %2402 = vmatprep.mubr.f32.mxu0 %v2069
    %2403 = vmatmul.mubr.f32.gmra.mxu0 %v2055
    %v2404 = vpop.f32.mrf.mxu0
    %v2405 = vadd.f32 %v2291, %v2404
    %v2406 = vpop.f32.mrf.mxu0
    %2407 = vmatprep.mubr.f32.mxu0 %v2070
    %2408 = vmatmul.mubr.f32.gmra.mxu0 %v2056
    %v2409 = vpop.f32.mrf.mxu0
    %v2410 = vadd.f32 %v2291, %v2409
    %v2411 = vpop.f32.mrf.mxu0
    %2412 = vmatprep.mubr.f32.mxu0 %v2071
    %2413 = vmatmul.mubr.f32.gmra.mxu0 %v2057
    %v2414 = vpop.f32.mrf.mxu0
    %v2415 = vadd.f32 %v2291, %v2414
    %v2416 = vpop.f32.mrf.mxu0
    %2417 = vmatprep.mubr.f32.mxu0 %v2072
    %2418 = vmatmul.mubr.f32.gmra.mxu0 %v2058
    %v2419 = vpop.f32.mrf.mxu0
    %v2420 = vadd.f32 %v2291, %v2419
    %v2421 = vpop.f32.mrf.mxu0
    %2422 = vmatprep.mubr.f32.mxu0 %v2073
    %2423 = vmatmul.mubr.f32.gmra.mxu0 %v2059
    %v2424 = vpop.f32.mrf.mxu0
    %v2425 = vadd.f32 %v2291, %v2424
    %v2426 = vpop.f32.mrf.mxu0
    %2427 = vdwg.mxu0
    %2428 = vmatprep.subr.mxu0 0.0
    %2429 = vmatpush1.msra.mxu0 %v2205
    %2430 = vmatprep.subr.mxu0 0.0
    %2431 = vmatpush1.msra.mxu0 %v2204
    %2432 = vmatprep.subr.mxu0 0.0
    %2433 = vmatpush1.msra.mxu0 %v2203
    %2434 = vmatprep.subr.mxu0 0.0
    %2435 = vmatpush1.msra.mxu0 %v2202
    %2436 = vmatprep.subr.mxu0 0.0
    %2437 = vmatpush1.msra.mxu0 %v2201
    %2438 = vmatprep.subr.mxu0 0.0
    %2439 = vmatpush1.msra.mxu0 %v2200
    %2440 = vmatprep.subr.mxu0 0.0
    %2441 = vmatpush1.msra.mxu0 %v2199
    %2442 = vmatprep.subr.mxu0 0.0
    %2443 = vmatpush1.msra.mxu0 %v2198
    %2444 = vmatprep.subr.mxu0 0.0
    %2445 = vmatpush1.msra.mxu0 %v2197
    %2446 = vmatprep.subr.mxu0 0.0
    %2447 = vmatpush1.msra.mxu0 %v2196
    %2448 = vmatprep.subr.mxu0 0.0
    %2449 = vmatpush1.msra.mxu0 %v2195
    %2450 = vmatprep.subr.mxu0 0.0
    %2451 = vmatpush1.msra.mxu0 %v2194
    %2452 = vmatprep.subr.mxu0 0.0
    %2453 = vmatpush1.msra.mxu0 %v2193
    %2454 = vmatprep.subr.mxu0 0.0
    %2455 = vmatpush1.msra.mxu0 %v2192
    %2456 = vmatprep.subr.mxu0 0.0
    %2457 = vmatpush1.msra.mxu0 %v2191
    %2458 = vmatprep.subr.mxu0 0.0
    %2459 = vmatpush1.msra.mxu0 %v2190
    %2460 = vmatprep.subr.mxu0 0.0
    %2461 = vmatpush2.msra.mxu0 %v2221
    %2462 = vmatprep.subr.mxu0 0.0
    %2463 = vmatpush2.msra.mxu0 %v2220
    %2464 = vmatprep.subr.mxu0 0.0
    %2465 = vmatpush2.msra.mxu0 %v2219
    %2466 = vmatprep.subr.mxu0 0.0
    %2467 = vmatpush2.msra.mxu0 %v2218
    %2468 = vmatprep.subr.mxu0 0.0
    %2469 = vmatpush2.msra.mxu0 %v2217
    %2470 = vmatprep.subr.mxu0 0.0
    %2471 = vmatpush2.msra.mxu0 %v2216
    %2472 = vmatprep.subr.mxu0 0.0
    %2473 = vmatpush2.msra.mxu0 %v2215
    %2474 = vmatprep.subr.mxu0 0.0
    %2475 = vmatpush2.msra.mxu0 %v2214
    %2476 = vmatprep.subr.mxu0 0.0
    %2477 = vmatpush2.msra.mxu0 %v2213
    %2478 = vmatprep.subr.mxu0 0.0
    %2479 = vmatpush2.msra.mxu0 %v2212
    %2480 = vmatprep.subr.mxu0 0.0
    %2481 = vmatpush2.msra.mxu0 %v2211
    %2482 = vmatprep.subr.mxu0 0.0
    %2483 = vmatpush2.msra.mxu0 %v2210
    %2484 = vmatprep.subr.mxu0 0.0
    %2485 = vmatpush2.msra.mxu0 %v2209
    %2486 = vmatprep.subr.mxu0 0.0
    %2487 = vmatpush2.msra.mxu0 %v2208
    %2488 = vmatprep.subr.mxu0 0.0
    %2489 = vmatpush2.msra.mxu0 %v2207
    %2490 = vmatprep.subr.mxu0 0.0
    %2491 = vmatpush2.msra.mxu0 %v2206
    %2492 = vmatprep.mubr.f32.mxu0 %v2088
    %2493 = vmatmul.mubr.f32.gmra.mxu0 %v2074
    %v2494 = vpop.f32.mrf.mxu0
    %v2495 = vadd.f32 %v2360, %v2494
    %v2496 = vpop.f32.mrf.mxu0
    %2497 = vmatprep.mubr.f32.mxu0 %v2089
    %2498 = vmatmul.mubr.f32.gmra.mxu0 %v2075
    %v2499 = vpop.f32.mrf.mxu0
    %v2500 = vadd.f32 %v2365, %v2499
    %v2501 = vpop.f32.mrf.mxu0
    %2502 = vmatprep.mubr.f32.mxu0 %v2090
    %2503 = vmatmul.mubr.f32.gmra.mxu0 %v2076
    %v2504 = vpop.f32.mrf.mxu0
    %v2505 = vadd.f32 %v2370, %v2504
    %v2506 = vpop.f32.mrf.mxu0
    %2507 = vmatprep.mubr.f32.mxu0 %v2091
    %2508 = vmatmul.mubr.f32.gmra.mxu0 %v2077
    %v2509 = vpop.f32.mrf.mxu0
    %v2510 = vadd.f32 %v2375, %v2509
    %v2511 = vpop.f32.mrf.mxu0
    %2512 = vmatprep.mubr.f32.mxu0 %v2092
    %2513 = vmatmul.mubr.f32.gmra.mxu0 %v2078
    %v2514 = vpop.f32.mrf.mxu0
    %v2515 = vadd.f32 %v2380, %v2514
    %v2516 = vpop.f32.mrf.mxu0
    %2517 = vmatprep.mubr.f32.mxu0 %v2093
    %2518 = vmatmul.mubr.f32.gmra.mxu0 %v2079
    %v2519 = vpop.f32.mrf.mxu0
    %v2520 = vadd.f32 %v2385, %v2519
    %v2521 = vpop.f32.mrf.mxu0
    %2522 = vmatprep.mubr.f32.mxu0 %v2094
    %2523 = vmatmul.mubr.f32.gmra.mxu0 %v2080
    %v2524 = vpop.f32.mrf.mxu0
    %v2525 = vadd.f32 %v2390, %v2524
    %v2526 = vpop.f32.mrf.mxu0
    %2527 = vmatprep.mubr.f32.mxu0 %v2095
    %2528 = vmatmul.mubr.f32.gmra.mxu0 %v2081
    %v2529 = vpop.f32.mrf.mxu0
    %v2530 = vadd.f32 %v2395, %v2529
    %v2531 = vpop.f32.mrf.mxu0
    %2532 = vmatprep.mubr.f32.mxu0 %v2096
    %2533 = vmatmul.mubr.f32.gmra.mxu0 %v2082
    %v2534 = vpop.f32.mrf.mxu0
    %v2535 = vadd.f32 %v2400, %v2534
    %v2536 = vpop.f32.mrf.mxu0
    %2537 = vmatprep.mubr.f32.mxu0 %v2097
    %2538 = vmatmul.mubr.f32.gmra.mxu0 %v2083
    %v2539 = vpop.f32.mrf.mxu0
    %v2540 = vadd.f32 %v2405, %v2539
    %v2541 = vpop.f32.mrf.mxu0
    %2542 = vmatprep.mubr.f32.mxu0 %v2098
    %2543 = vmatmul.mubr.f32.gmra.mxu0 %v2084
    %v2544 = vpop.f32.mrf.mxu0
    %v2545 = vadd.f32 %v2410, %v2544
    %v2546 = vpop.f32.mrf.mxu0
    %2547 = vmatprep.mubr.f32.mxu0 %v2099
    %2548 = vmatmul.mubr.f32.gmra.mxu0 %v2085
    %v2549 = vpop.f32.mrf.mxu0
    %v2550 = vadd.f32 %v2415, %v2549
    %v2551 = vpop.f32.mrf.mxu0
    %2552 = vmatprep.mubr.f32.mxu0 %v2100
    %2553 = vmatmul.mubr.f32.gmra.mxu0 %v2086
    %v2554 = vpop.f32.mrf.mxu0
    %v2555 = vadd.f32 %v2420, %v2554
    %v2556 = vpop.f32.mrf.mxu0
    %2557 = vmatprep.mubr.f32.mxu0 %v2101
    %2558 = vmatmul.mubr.f32.gmra.mxu0 %v2087
    %v2559 = vpop.f32.mrf.mxu0
    %v2560 = vadd.f32 %v2425, %v2559
    %v2561 = vpop.f32.mrf.mxu0
    %2562 = vdwg.mxu0
    %2563 = vmatprep.subr.mxu0 0.0
    %2564 = vmatpush1.msra.mxu0 %v2237
    %2565 = vmatprep.subr.mxu0 0.0
    %2566 = vmatpush1.msra.mxu0 %v2236
    %2567 = vmatprep.subr.mxu0 0.0
    %2568 = vmatpush1.msra.mxu0 %v2235
    %2569 = vmatprep.subr.mxu0 0.0
    %2570 = vmatpush1.msra.mxu0 %v2234
    %2571 = vmatprep.subr.mxu0 0.0
    %2572 = vmatpush1.msra.mxu0 %v2233
    %2573 = vmatprep.subr.mxu0 0.0
    %2574 = vmatpush1.msra.mxu0 %v2232
    %2575 = vmatprep.subr.mxu0 0.0
    %2576 = vmatpush1.msra.mxu0 %v2231
    %2577 = vmatprep.subr.mxu0 0.0
    %2578 = vmatpush1.msra.mxu0 %v2230
    %2579 = vmatprep.subr.mxu0 0.0
    %2580 = vmatpush1.msra.mxu0 %v2229
    %2581 = vmatprep.subr.mxu0 0.0
    %2582 = vmatpush1.msra.mxu0 %v2228
    %2583 = vmatprep.subr.mxu0 0.0
    %2584 = vmatpush1.msra.mxu0 %v2227
    %2585 = vmatprep.subr.mxu0 0.0
    %2586 = vmatpush1.msra.mxu0 %v2226
    %2587 = vmatprep.subr.mxu0 0.0
    %2588 = vmatpush1.msra.mxu0 %v2225
    %2589 = vmatprep.subr.mxu0 0.0
    %2590 = vmatpush1.msra.mxu0 %v2224
    %2591 = vmatprep.subr.mxu0 0.0
    %2592 = vmatpush1.msra.mxu0 %v2223
    %2593 = vmatprep.subr.mxu0 0.0
    %2594 = vmatpush1.msra.mxu0 %v2222
    %2595 = vmatprep.subr.mxu0 0.0
    %2596 = vmatpush2.msra.mxu0 %v2253
    %2597 = vmatprep.subr.mxu0 0.0
    %2598 = vmatpush2.msra.mxu0 %v2252
    %2599 = vmatprep.subr.mxu0 0.0
    %2600 = vmatpush2.msra.mxu0 %v2251
    %2601 = vmatprep.subr.mxu0 0.0
    %2602 = vmatpush2.msra.mxu0 %v2250
    %2603 = vmatprep.subr.mxu0 0.0
    %2604 = vmatpush2.msra.mxu0 %v2249
    %2605 = vmatprep.subr.mxu0 0.0
    %2606 = vmatpush2.msra.mxu0 %v2248
    %2607 = vmatprep.subr.mxu0 0.0
    %2608 = vmatpush2.msra.mxu0 %v2247
    %2609 = vmatprep.subr.mxu0 0.0
    %2610 = vmatpush2.msra.mxu0 %v2246
    %2611 = vmatprep.subr.mxu0 0.0
    %2612 = vmatpush2.msra.mxu0 %v2245
    %2613 = vmatprep.subr.mxu0 0.0
    %2614 = vmatpush2.msra.mxu0 %v2244
    %2615 = vmatprep.subr.mxu0 0.0
    %2616 = vmatpush2.msra.mxu0 %v2243
    %2617 = vmatprep.subr.mxu0 0.0
    %2618 = vmatpush2.msra.mxu0 %v2242
    %2619 = vmatprep.subr.mxu0 0.0
    %2620 = vmatpush2.msra.mxu0 %v2241
    %2621 = vmatprep.subr.mxu0 0.0
    %2622 = vmatpush2.msra.mxu0 %v2240
    %2623 = vmatprep.subr.mxu0 0.0
    %2624 = vmatpush2.msra.mxu0 %v2239
    %2625 = vmatprep.subr.mxu0 0.0
    %2626 = vmatpush2.msra.mxu0 %v2238
    %2627 = vmatprep.mubr.f32.mxu0 %v2116
    %2628 = vmatmul.mubr.f32.gmra.mxu0 %v2102
    %v2629 = vpop.f32.mrf.mxu0
    %v2630 = vadd.f32 %v2495, %v2629
    %v2631 = vpop.f32.mrf.mxu0
    %2632 = vmatprep.mubr.f32.mxu0 %v2117
    %2633 = vmatmul.mubr.f32.gmra.mxu0 %v2103
    %v2634 = vpop.f32.mrf.mxu0
    %v2635 = vadd.f32 %v2500, %v2634
    %v2636 = vpop.f32.mrf.mxu0
    %2637 = vmatprep.mubr.f32.mxu0 %v2118
    %2638 = vmatmul.mubr.f32.gmra.mxu0 %v2104
    %v2639 = vpop.f32.mrf.mxu0
    %v2640 = vadd.f32 %v2505, %v2639
    %v2641 = vpop.f32.mrf.mxu0
    %2642 = vmatprep.mubr.f32.mxu0 %v2119
    %2643 = vmatmul.mubr.f32.gmra.mxu0 %v2105
    %v2644 = vpop.f32.mrf.mxu0
    %v2645 = vadd.f32 %v2510, %v2644
    %v2646 = vpop.f32.mrf.mxu0
    %2647 = vmatprep.mubr.f32.mxu0 %v2120
    %2648 = vmatmul.mubr.f32.gmra.mxu0 %v2106
    %v2649 = vpop.f32.mrf.mxu0
    %v2650 = vadd.f32 %v2515, %v2649
    %v2651 = vpop.f32.mrf.mxu0
    %2652 = vmatprep.mubr.f32.mxu0 %v2121
    %2653 = vmatmul.mubr.f32.gmra.mxu0 %v2107
    %v2654 = vpop.f32.mrf.mxu0
    %v2655 = vadd.f32 %v2520, %v2654
    %v2656 = vpop.f32.mrf.mxu0
    %2657 = vmatprep.mubr.f32.mxu0 %v2122
    %2658 = vmatmul.mubr.f32.gmra.mxu0 %v2108
    %v2659 = vpop.f32.mrf.mxu0
    %v2660 = vadd.f32 %v2525, %v2659
    %v2661 = vpop.f32.mrf.mxu0
    %2662 = vmatprep.mubr.f32.mxu0 %v2123
    %2663 = vmatmul.mubr.f32.gmra.mxu0 %v2109
    %v2664 = vpop.f32.mrf.mxu0
    %v2665 = vadd.f32 %v2530, %v2664
    %v2666 = vpop.f32.mrf.mxu0
    %2667 = vmatprep.mubr.f32.mxu0 %v2124
    %2668 = vmatmul.mubr.f32.gmra.mxu0 %v2110
    %v2669 = vpop.f32.mrf.mxu0
    %v2670 = vadd.f32 %v2535, %v2669
    %v2671 = vpop.f32.mrf.mxu0
    %2672 = vmatprep.mubr.f32.mxu0 %v2125
    %2673 = vmatmul.mubr.f32.gmra.mxu0 %v2111
    %v2674 = vpop.f32.mrf.mxu0
    %v2675 = vadd.f32 %v2540, %v2674
    %v2676 = vpop.f32.mrf.mxu0
    %2677 = vmatprep.mubr.f32.mxu0 %v2126
    %2678 = vmatmul.mubr.f32.gmra.mxu0 %v2112
    %v2679 = vpop.f32.mrf.mxu0
    %v2680 = vadd.f32 %v2545, %v2679
    %v2681 = vpop.f32.mrf.mxu0
    %2682 = vmatprep.mubr.f32.mxu0 %v2127
    %2683 = vmatmul.mubr.f32.gmra.mxu0 %v2113
    %v2684 = vpop.f32.mrf.mxu0
    %v2685 = vadd.f32 %v2550, %v2684
    %v2686 = vpop.f32.mrf.mxu0
    %2687 = vmatprep.mubr.f32.mxu0 %v2128
    %2688 = vmatmul.mubr.f32.gmra.mxu0 %v2114
    %v2689 = vpop.f32.mrf.mxu0
    %v2690 = vadd.f32 %v2555, %v2689
    %v2691 = vpop.f32.mrf.mxu0
    %2692 = vmatprep.mubr.f32.mxu0 %v2129
    %2693 = vmatmul.mubr.f32.gmra.mxu0 %v2115
    %v2694 = vpop.f32.mrf.mxu0
    %v2695 = vadd.f32 %v2560, %v2694
    %v2696 = vpop.f32.mrf.mxu0
    %2697 = vdwg.mxu0
    %2698 = vmatprep.subr.mxu0 0.0
    %2699 = vmatpush1.msra.mxu0 %v2269
    %2700 = vmatprep.subr.mxu0 0.0
    %2701 = vmatpush1.msra.mxu0 %v2268
    %2702 = vmatprep.subr.mxu0 0.0
    %2703 = vmatpush1.msra.mxu0 %v2267
    %2704 = vmatprep.subr.mxu0 0.0
    %2705 = vmatpush1.msra.mxu0 %v2266
    %2706 = vmatprep.subr.mxu0 0.0
    %2707 = vmatpush1.msra.mxu0 %v2265
    %2708 = vmatprep.subr.mxu0 0.0
    %2709 = vmatpush1.msra.mxu0 %v2264
    %2710 = vmatprep.subr.mxu0 0.0
    %2711 = vmatpush1.msra.mxu0 %v2263
    %2712 = vmatprep.subr.mxu0 0.0
    %2713 = vmatpush1.msra.mxu0 %v2262
    %2714 = vmatprep.subr.mxu0 0.0
    %2715 = vmatpush1.msra.mxu0 %v2261
    %2716 = vmatprep.subr.mxu0 0.0
    %2717 = vmatpush1.msra.mxu0 %v2260
    %2718 = vmatprep.subr.mxu0 0.0
    %2719 = vmatpush1.msra.mxu0 %v2259
    %2720 = vmatprep.subr.mxu0 0.0
    %2721 = vmatpush1.msra.mxu0 %v2258
    %2722 = vmatprep.subr.mxu0 0.0
    %2723 = vmatpush1.msra.mxu0 %v2257
    %2724 = vmatprep.subr.mxu0 0.0
    %2725 = vmatpush1.msra.mxu0 %v2256
    %2726 = vmatprep.subr.mxu0 0.0
    %2727 = vmatpush1.msra.mxu0 %v2255
    %2728 = vmatprep.subr.mxu0 0.0
    %2729 = vmatpush1.msra.mxu0 %v2254
    %2730 = vmatprep.subr.mxu0 0.0
    %2731 = vmatpush2.msra.mxu0 %v2285
    %2732 = vmatprep.subr.mxu0 0.0
    %2733 = vmatpush2.msra.mxu0 %v2284
    %2734 = vmatprep.subr.mxu0 0.0
    %2735 = vmatpush2.msra.mxu0 %v2283
    %2736 = vmatprep.subr.mxu0 0.0
    %2737 = vmatpush2.msra.mxu0 %v2282
    %2738 = vmatprep.subr.mxu0 0.0
    %2739 = vmatpush2.msra.mxu0 %v2281
    %2740 = vmatprep.subr.mxu0 0.0
    %2741 = vmatpush2.msra.mxu0 %v2280
    %2742 = vmatprep.subr.mxu0 0.0
    %2743 = vmatpush2.msra.mxu0 %v2279
    %2744 = vmatprep.subr.mxu0 0.0
    %2745 = vmatpush2.msra.mxu0 %v2278
    %2746 = vmatprep.subr.mxu0 0.0
    %2747 = vmatpush2.msra.mxu0 %v2277
    %2748 = vmatprep.subr.mxu0 0.0
    %2749 = vmatpush2.msra.mxu0 %v2276
    %2750 = vmatprep.subr.mxu0 0.0
    %2751 = vmatpush2.msra.mxu0 %v2275
    %2752 = vmatprep.subr.mxu0 0.0
    %2753 = vmatpush2.msra.mxu0 %v2274
    %2754 = vmatprep.subr.mxu0 0.0
    %2755 = vmatpush2.msra.mxu0 %v2273
    %2756 = vmatprep.subr.mxu0 0.0
    %2757 = vmatpush2.msra.mxu0 %v2272
    %2758 = vmatprep.subr.mxu0 0.0
    %2759 = vmatpush2.msra.mxu0 %v2271
    %2760 = vmatprep.subr.mxu0 0.0
    %2761 = vmatpush2.msra.mxu0 %v2270
    %2762 = vmatprep.mubr.f32.mxu0 %v2144
    %2763 = vmatmul.mubr.f32.gmra.mxu0 %v2130
    %v2764 = vpop.f32.mrf.mxu0
    %v2765 = vadd.f32 %v2630, %v2764
    %v2766 = vpop.f32.mrf.mxu0
    %2767 = vmatprep.mubr.f32.mxu0 %v2145
    %2768 = vmatmul.mubr.f32.gmra.mxu0 %v2131
    %v2769 = vpop.f32.mrf.mxu0
    %v2770 = vadd.f32 %v2635, %v2769
    %v2771 = vpop.f32.mrf.mxu0
    %2772 = vmatprep.mubr.f32.mxu0 %v2146
    %2773 = vmatmul.mubr.f32.gmra.mxu0 %v2132
    %v2774 = vpop.f32.mrf.mxu0
    %v2775 = vadd.f32 %v2640, %v2774
    %v2776 = vpop.f32.mrf.mxu0
    %2777 = vmatprep.mubr.f32.mxu0 %v2147
    %2778 = vmatmul.mubr.f32.gmra.mxu0 %v2133
    %v2779 = vpop.f32.mrf.mxu0
    %v2780 = vadd.f32 %v2645, %v2779
    %v2781 = vpop.f32.mrf.mxu0
    %2782 = vmatprep.mubr.f32.mxu0 %v2148
    %2783 = vmatmul.mubr.f32.gmra.mxu0 %v2134
    %v2784 = vpop.f32.mrf.mxu0
    %v2785 = vadd.f32 %v2650, %v2784
    %v2786 = vpop.f32.mrf.mxu0
    %2787 = vmatprep.mubr.f32.mxu0 %v2149
    %2788 = vmatmul.mubr.f32.gmra.mxu0 %v2135
    %v2789 = vpop.f32.mrf.mxu0
    %v2790 = vadd.f32 %v2655, %v2789
    %v2791 = vpop.f32.mrf.mxu0
    %2792 = vmatprep.mubr.f32.mxu0 %v2150
    %2793 = vmatmul.mubr.f32.gmra.mxu0 %v2136
    %v2794 = vpop.f32.mrf.mxu0
    %v2795 = vadd.f32 %v2660, %v2794
    %v2796 = vpop.f32.mrf.mxu0
    %2797 = vmatprep.mubr.f32.mxu0 %v2151
    %2798 = vmatmul.mubr.f32.gmra.mxu0 %v2137
    %v2799 = vpop.f32.mrf.mxu0
    %v2800 = vadd.f32 %v2665, %v2799
    %v2801 = vpop.f32.mrf.mxu0
    %2802 = vmatprep.mubr.f32.mxu0 %v2152
    %2803 = vmatmul.mubr.f32.gmra.mxu0 %v2138
    %v2804 = vpop.f32.mrf.mxu0
    %v2805 = vadd.f32 %v2670, %v2804
    %v2806 = vpop.f32.mrf.mxu0
    %2807 = vmatprep.mubr.f32.mxu0 %v2153
    %2808 = vmatmul.mubr.f32.gmra.mxu0 %v2139
    %v2809 = vpop.f32.mrf.mxu0
    %v2810 = vadd.f32 %v2675, %v2809
    %v2811 = vpop.f32.mrf.mxu0
    %2812 = vmatprep.mubr.f32.mxu0 %v2154
    %2813 = vmatmul.mubr.f32.gmra.mxu0 %v2140
    %v2814 = vpop.f32.mrf.mxu0
    %v2815 = vadd.f32 %v2680, %v2814
    %v2816 = vpop.f32.mrf.mxu0
    %2817 = vmatprep.mubr.f32.mxu0 %v2155
    %2818 = vmatmul.mubr.f32.gmra.mxu0 %v2141
    %v2819 = vpop.f32.mrf.mxu0
    %v2820 = vadd.f32 %v2685, %v2819
    %v2821 = vpop.f32.mrf.mxu0
    %2822 = vmatprep.mubr.f32.mxu0 %v2156
    %2823 = vmatmul.mubr.f32.gmra.mxu0 %v2142
    %v2824 = vpop.f32.mrf.mxu0
    %v2825 = vadd.f32 %v2690, %v2824
    %v2826 = vpop.f32.mrf.mxu0
    %2827 = vmatprep.mubr.f32.mxu0 %v2157
    %2828 = vmatmul.mubr.f32.gmra.mxu0 %v2143
    %v2829 = vpop.f32.mrf.mxu0
    %v2830 = vadd.f32 %v2695, %v2829
    %v2831 = vpop.f32.mrf.mxu0
    %2832 = vdwg.mxu0
    %v2833 = vmax.f32 %v2765, 0.0
    %v2834 = vmax.f32 %v2770, 0.0
    %v2835 = vmax.f32 %v2775, 0.0
    %v2836 = vmax.f32 %v2780, 0.0
    %v2837 = vmax.f32 %v2785, 0.0
    %v2838 = vmax.f32 %v2790, 0.0
    %v2839 = vmax.f32 %v2795, 0.0
    %v2840 = vmax.f32 %v2800, 0.0
    %v2841 = vmax.f32 %v2805, 0.0
    %v2842 = vmax.f32 %v2810, 0.0
    %v2843 = vmax.f32 %v2815, 0.0
    %v2844 = vmax.f32 %v2820, 0.0
    %v2845 = vmax.f32 %v2825, 0.0
    %v2846 = vmax.f32 %v2830, 0.0
    %2847 = vst [vmem:[%s8] sm:$0xff] %v2833
    %2848 = vst [vmem:[%s8 + $0x8] sm:$0xff] %v2834
    %2849 = vst [vmem:[%s8 + $0x10] sm:$0xff] %v2835
    %2850 = vst [vmem:[%s8 + $0x18] sm:$0xff] %v2836
    %2851 = vst [vmem:[%s8 + $0x20] sm:$0xff] %v2837
    %2852 = vst [vmem:[%s8 + $0x28] sm:$0xff] %v2838
    %2853 = vst [vmem:[%s8 + $0x30] sm:$0xff] %v2839
    %2854 = vst [vmem:[%s8 + $0x38] sm:$0xff] %v2840
    %2855 = vst [vmem:[%s8 + $0x40] sm:$0xff] %v2841
    %2856 = vst [vmem:[%s8 + $0x48] sm:$0xff] %v2842
    %2857 = vst [vmem:[%s8 + $0x50] sm:$0xff] %v2843
    %2858 = vst [vmem:[%s8 + $0x58] sm:$0xff] %v2844
    %2859 = vst [vmem:[%s8 + $0x60] sm:$0xff] %v2845
    %2860 = vst [vmem:[%s8 + $0x68] sm:$0x7] %v2846
    %v2861 = vld [vmem:[%s0 + $0x1] sm:$0x1]
    %v2862 = vlaneseq
    %v2863 = vshrl.u32 %v2862, 7
    %v2864 = vsub.s32 0, %v2863
    %v2865 = vrot.slane %v2861, %v2864
    %vm2866 = vcmp.eq.s32.totalorder %v71, %v2865
    %vm2867 = vcmp.eq.s32.totalorder %v72, %v2865
    %vm2868 = vcmp.eq.s32.totalorder %v73, %v2865
    %vm2869 = vcmp.eq.s32.totalorder %v74, %v2865
    %vm2870 = vcmp.eq.s32.totalorder %v75, %v2865
    %vm2871 = vcmp.eq.s32.totalorder %v76, %v2865
    %vm2872 = vcmp.eq.s32.totalorder %v77, %v2865
    %vm2873 = vcmp.eq.s32.totalorder %v78, %v2865
    %v2874 = vsel %vm2866, 1.0, 0.0
    %v2875 = vsel %vm2867, 1.0, 0.0
    %v2876 = vsel %vm2868, 1.0, 0.0
    %v2877 = vsel %vm2869, 1.0, 0.0
    %v2878 = vsel %vm2870, 1.0, 0.0
    %v2879 = vsel %vm2871, 1.0, 0.0
    %v2880 = vsel %vm2872, 1.0, 0.0
    %v2881 = vsel %vm2873, 1.0, 0.0
    %v2882 = vld [vmem:[%s1] sm:$0xff]
    %v2883 = vld [vmem:[%s1 + $0x8] sm:$0xff]
    %v2884 = vld [vmem:[%s1 + $0x10] sm:$0xff]
    %v2885 = vld [vmem:[%s1 + $0x18] sm:$0xff]
    %v2886 = vld [vmem:[%s1 + $0x20] sm:$0xff]
    %v2887 = vld [vmem:[%s1 + $0x28] sm:$0xff]
    %v2888 = vld [vmem:[%s1 + $0x30] sm:$0xff]
    %v2889 = vld [vmem:[%s1 + $0x38] sm:$0xff]
    %v2890 = vld [vmem:[%s1 + $0x40] sm:$0xff]
    %v2891 = vld [vmem:[%s1 + $0x48] sm:$0xff]
    %v2892 = vld [vmem:[%s1 + $0x50] sm:$0xff]
    %v2893 = vld [vmem:[%s1 + $0x58] sm:$0xff]
    %v2894 = vld [vmem:[%s1 + $0x60] sm:$0xff]
    %v2895 = vld [vmem:[%s1 + $0x68] sm:$0xff]
    %v2896 = vld [vmem:[%s1 + $0x70] sm:$0xff]
    %v2897 = vld [vmem:[%s1 + $0x78] sm:$0xff]
    %v2899 = vsel %vm116, %v2882, 0
    %v2902 = vsel %vm116, %v2883, 0
    %v2905 = vsel %vm116, %v2884, 0
    %v2908 = vsel %vm116, %v2885, 0
    %v2911 = vsel %vm116, %v2886, 0
    %v2914 = vsel %vm116, %v2887, 0
    %v2917 = vsel %vm116, %v2888, 0
    %v2920 = vsel %vm116, %v2889, 0
    %v2923 = vsel %vm116, %v2890, 0
    %v2926 = vsel %vm116, %v2891, 0
    %v2929 = vsel %vm116, %v2892, 0
    %v2932 = vsel %vm116, %v2893, 0
    %v2935 = vsel %vm116, %v2894, 0
    %v2938 = vsel %vm116, %v2895, 0
    %v2941 = vsel %vm116, %v2896, 0
    %v2944 = vsel %vm116, %v2897, 0
    %2946 = vmatprep.subr.mxu0 0.0
    %2947 = vmatpush1.msra.mxu0 0.0
    %2948 = vmatprep.subr.mxu0 0.0
    %2949 = vmatpush1.msra.mxu0 0.0
    %2950 = vmatprep.subr.mxu0 0.0
    %2951 = vmatpush1.msra.mxu0 0.0
    %2952 = vmatprep.subr.mxu0 0.0
    %2953 = vmatpush1.msra.mxu0 0.0
    %2954 = vmatprep.subr.mxu0 0.0
    %2955 = vmatpush1.msra.mxu0 0.0
    %2956 = vmatprep.subr.mxu0 0.0
    %2957 = vmatpush1.msra.mxu0 0.0
    %2958 = vmatprep.subr.mxu0 0.0
    %2959 = vmatpush1.msra.mxu0 0.0
    %2960 = vmatprep.subr.mxu0 0.0
    %2961 = vmatpush1.msra.mxu0 0.0
    %2962 = vmatprep.subr.mxu0 0.0
    %2963 = vmatpush1.msra.mxu0 %v2881
    %2964 = vmatprep.subr.mxu0 0.0
    %2965 = vmatpush1.msra.mxu0 %v2880
    %2966 = vmatprep.subr.mxu0 0.0
    %2967 = vmatpush1.msra.mxu0 %v2879
    %2968 = vmatprep.subr.mxu0 0.0
    %2969 = vmatpush1.msra.mxu0 %v2878
    %2970 = vmatprep.subr.mxu0 0.0
    %2971 = vmatpush1.msra.mxu0 %v2877
    %2972 = vmatprep.subr.mxu0 0.0
    %2973 = vmatpush1.msra.mxu0 %v2876
    %2974 = vmatprep.subr.mxu0 0.0
    %2975 = vmatpush1.msra.mxu0 %v2875
    %2976 = vmatprep.subr.mxu0 0.0
    %2977 = vmatpush1.msra.mxu0 %v2874
    %2978 = vmatprep.subr.mxu0 0.0
    %2979 = vmatpush2.msra.mxu0 0.0
    %2980 = vmatprep.subr.mxu0 0.0
    %2981 = vmatpush2.msra.mxu0 0.0
    %2982 = vmatprep.subr.mxu0 0.0
    %2983 = vmatpush2.msra.mxu0 0.0
    %2984 = vmatprep.subr.mxu0 0.0
    %2985 = vmatpush2.msra.mxu0 0.0
    %2986 = vmatprep.subr.mxu0 0.0
    %2987 = vmatpush2.msra.mxu0 0.0
    %2988 = vmatprep.subr.mxu0 0.0
    %2989 = vmatpush2.msra.mxu0 0.0
    %2990 = vmatprep.subr.mxu0 0.0
    %2991 = vmatpush2.msra.mxu0 0.0
    %2992 = vmatprep.subr.mxu0 0.0
    %2993 = vmatpush2.msra.mxu0 0.0
    %2994 = vmatprep.subr.mxu0 0.0
    %2995 = vmatpush2.msra.mxu0 0.0
    %2996 = vmatprep.subr.mxu0 0.0
    %2997 = vmatpush2.msra.mxu0 0.0
    %2998 = vmatprep.subr.mxu0 0.0
    %2999 = vmatpush2.msra.mxu0 0.0
    %3000 = vmatprep.subr.mxu0 0.0
    %3001 = vmatpush2.msra.mxu0 0.0
    %3002 = vmatprep.subr.mxu0 0.0
    %3003 = vmatpush2.msra.mxu0 0.0
    %3004 = vmatprep.subr.mxu0 0.0
    %3005 = vmatpush2.msra.mxu0 0.0
    %3006 = vmatprep.subr.mxu0 0.0
    %3007 = vmatpush2.msra.mxu0 0.0
    %3008 = vmatprep.subr.mxu0 0.0
    %3009 = vmatpush2.msra.mxu0 0.0
    %3010 = vmatprep.mubr.f32.mxu0 0.0
    %3011 = vmatmul.mubr.f32.gmra.mxu0 %v2899
    %v3012 = vpop.f32.mrf.mxu0
    %v3013 = vadd.f32 0.0, %v3012
    %v3014 = vpop.f32.mrf.mxu0
    %3015 = vmatprep.mubr.f32.mxu0 0.0
    %3016 = vmatmul.mubr.f32.gmra.mxu0 %v2902
    %v3017 = vpop.f32.mrf.mxu0
    %v3018 = vadd.f32 0.0, %v3017
    %v3019 = vpop.f32.mrf.mxu0
    %3020 = vmatprep.mubr.f32.mxu0 0.0
    %3021 = vmatmul.mubr.f32.gmra.mxu0 %v2905
    %v3022 = vpop.f32.mrf.mxu0
    %v3023 = vadd.f32 0.0, %v3022
    %v3024 = vpop.f32.mrf.mxu0
    %3025 = vmatprep.mubr.f32.mxu0 0.0
    %3026 = vmatmul.mubr.f32.gmra.mxu0 %v2908
    %v3027 = vpop.f32.mrf.mxu0
    %v3028 = vadd.f32 0.0, %v3027
    %v3029 = vpop.f32.mrf.mxu0
    %3030 = vmatprep.mubr.f32.mxu0 0.0
    %3031 = vmatmul.mubr.f32.gmra.mxu0 %v2911
    %v3032 = vpop.f32.mrf.mxu0
    %v3033 = vadd.f32 0.0, %v3032
    %v3034 = vpop.f32.mrf.mxu0
    %3035 = vmatprep.mubr.f32.mxu0 0.0
    %3036 = vmatmul.mubr.f32.gmra.mxu0 %v2914
    %v3037 = vpop.f32.mrf.mxu0
    %v3038 = vadd.f32 0.0, %v3037
    %v3039 = vpop.f32.mrf.mxu0
    %3040 = vmatprep.mubr.f32.mxu0 0.0
    %3041 = vmatmul.mubr.f32.gmra.mxu0 %v2917
    %v3042 = vpop.f32.mrf.mxu0
    %v3043 = vadd.f32 0.0, %v3042
    %v3044 = vpop.f32.mrf.mxu0
    %3045 = vmatprep.mubr.f32.mxu0 0.0
    %3046 = vmatmul.mubr.f32.gmra.mxu0 %v2920
    %v3047 = vpop.f32.mrf.mxu0
    %v3048 = vadd.f32 0.0, %v3047
    %v3049 = vpop.f32.mrf.mxu0
    %3050 = vmatprep.mubr.f32.mxu0 0.0
    %3051 = vmatmul.mubr.f32.gmra.mxu0 %v2923
    %v3052 = vpop.f32.mrf.mxu0
    %v3053 = vadd.f32 0.0, %v3052
    %v3054 = vpop.f32.mrf.mxu0
    %3055 = vmatprep.mubr.f32.mxu0 0.0
    %3056 = vmatmul.mubr.f32.gmra.mxu0 %v2926
    %v3057 = vpop.f32.mrf.mxu0
    %v3058 = vadd.f32 0.0, %v3057
    %v3059 = vpop.f32.mrf.mxu0
    %3060 = vmatprep.mubr.f32.mxu0 0.0
    %3061 = vmatmul.mubr.f32.gmra.mxu0 %v2929
    %v3062 = vpop.f32.mrf.mxu0
    %v3063 = vadd.f32 0.0, %v3062
    %v3064 = vpop.f32.mrf.mxu0
    %3065 = vmatprep.mubr.f32.mxu0 0.0
    %3066 = vmatmul.mubr.f32.gmra.mxu0 %v2932
    %v3067 = vpop.f32.mrf.mxu0
    %v3068 = vadd.f32 0.0, %v3067
    %v3069 = vpop.f32.mrf.mxu0
    %3070 = vmatprep.mubr.f32.mxu0 0.0
    %3071 = vmatmul.mubr.f32.gmra.mxu0 %v2935
    %v3072 = vpop.f32.mrf.mxu0
    %v3073 = vadd.f32 0.0, %v3072
    %v3074 = vpop.f32.mrf.mxu0
    %3075 = vmatprep.mubr.f32.mxu0 0.0
    %3076 = vmatmul.mubr.f32.gmra.mxu0 %v2938
    %v3077 = vpop.f32.mrf.mxu0
    %v3078 = vadd.f32 0.0, %v3077
    %v3079 = vpop.f32.mrf.mxu0
    %3080 = vmatprep.mubr.f32.mxu0 0.0
    %3081 = vmatmul.mubr.f32.gmra.mxu0 %v2941
    %v3082 = vpop.f32.mrf.mxu0
    %v3083 = vadd.f32 0.0, %v3082
    %v3084 = vpop.f32.mrf.mxu0
    %3085 = vmatprep.mubr.f32.mxu0 0.0
    %3086 = vmatmul.mubr.f32.gmra.mxu0 %v2944
    %v3087 = vpop.f32.mrf.mxu0
    %v3088 = vadd.f32 0.0, %v3087
    %v3089 = vpop.f32.mrf.mxu0
    %3090 = vdwg.mxu0
    %3091 = vst [vmem:[#allocation2] sm:$0xff] %v3013
    %3092 = vst [vmem:[#allocation2 + $0x8] sm:$0xff] %v3018
    %3093 = vst [vmem:[#allocation2 + $0x10] sm:$0xff] %v3023
    %3094 = vst [vmem:[#allocation2 + $0x18] sm:$0xff] %v3028
    %3095 = vst [vmem:[#allocation2 + $0x20] sm:$0xff] %v3033
    %3096 = vst [vmem:[#allocation2 + $0x28] sm:$0xff] %v3038
    %3097 = vst [vmem:[#allocation2 + $0x30] sm:$0xff] %v3043
    %3098 = vst [vmem:[#allocation2 + $0x38] sm:$0xff] %v3048
    %3099 = vst [vmem:[#allocation2 + $0x40] sm:$0xff] %v3053
    %3100 = vst [vmem:[#allocation2 + $0x48] sm:$0xff] %v3058
    %3101 = vst [vmem:[#allocation2 + $0x50] sm:$0xff] %v3063
    %3102 = vst [vmem:[#allocation2 + $0x58] sm:$0xff] %v3068
    %3103 = vst [vmem:[#allocation2 + $0x60] sm:$0xff] %v3073
    %3104 = vst [vmem:[#allocation2 + $0x68] sm:$0xff] %v3078
    %3105 = vst [vmem:[#allocation2 + $0x70] sm:$0xff] %v3083
    %3106 = vst [vmem:[#allocation2 + $0x78] sm:$0xff] %v3088
    %v3107 = vld [vmem:[#allocation2] sm:$0xff]
    %v3108 = vld [vmem:[#allocation2 + $0x8] sm:$0xff]
    %v3109 = vld [vmem:[#allocation2 + $0x10] sm:$0xff]
    %v3110 = vld [vmem:[#allocation2 + $0x18] sm:$0xff]
    %v3111 = vld [vmem:[#allocation2 + $0x20] sm:$0xff]
    %v3112 = vld [vmem:[#allocation2 + $0x28] sm:$0xff]
    %v3113 = vld [vmem:[#allocation2 + $0x30] sm:$0xff]
    %v3114 = vld [vmem:[#allocation2 + $0x38] sm:$0xff]
    %v3115 = vld [vmem:[#allocation2 + $0x40] sm:$0xff]
    %v3116 = vld [vmem:[#allocation2 + $0x48] sm:$0xff]
    %v3117 = vld [vmem:[#allocation2 + $0x50] sm:$0xff]
    %v3118 = vld [vmem:[#allocation2 + $0x58] sm:$0xff]
    %v3119 = vld [vmem:[#allocation2 + $0x60] sm:$0xff]
    %v3120 = vld [vmem:[#allocation2 + $0x68] sm:$0xff]
    %v3121 = vld [vmem:[#allocation2 + $0x70] sm:$0xff]
    %v3122 = vld [vmem:[#allocation2 + $0x78] sm:$0x1]
    %v3123 = vld [vmem:[#allocation2 + $0x1] sm:$0xff]
    %v3124 = vld [vmem:[#allocation2 + $0x9] sm:$0xff]
    %v3125 = vld [vmem:[#allocation2 + $0x11] sm:$0xff]
    %v3126 = vld [vmem:[#allocation2 + $0x19] sm:$0xff]
    %v3127 = vld [vmem:[#allocation2 + $0x21] sm:$0xff]
    %v3128 = vld [vmem:[#allocation2 + $0x29] sm:$0xff]
    %v3129 = vld [vmem:[#allocation2 + $0x31] sm:$0xff]
    %v3130 = vld [vmem:[#allocation2 + $0x39] sm:$0xff]
    %v3131 = vld [vmem:[#allocation2 + $0x41] sm:$0xff]
    %v3132 = vld [vmem:[#allocation2 + $0x49] sm:$0xff]
    %v3133 = vld [vmem:[#allocation2 + $0x51] sm:$0xff]
    %v3134 = vld [vmem:[#allocation2 + $0x59] sm:$0xff]
    %v3135 = vld [vmem:[#allocation2 + $0x61] sm:$0xff]
    %v3136 = vld [vmem:[#allocation2 + $0x69] sm:$0xff]
    %v3137 = vld [vmem:[#allocation2 + $0x71] sm:$0xff]
    %v3138 = vld [vmem:[#allocation2 + $0x79] sm:$0x1]
    %v3139 = vld [vmem:[#allocation2 + $0x2] sm:$0xff]
    %v3140 = vld [vmem:[#allocation2 + $0xa] sm:$0xff]
    %v3141 = vld [vmem:[#allocation2 + $0x12] sm:$0xff]
    %v3142 = vld [vmem:[#allocation2 + $0x1a] sm:$0xff]
    %v3143 = vld [vmem:[#allocation2 + $0x22] sm:$0xff]
    %v3144 = vld [vmem:[#allocation2 + $0x2a] sm:$0xff]
    %v3145 = vld [vmem:[#allocation2 + $0x32] sm:$0xff]
    %v3146 = vld [vmem:[#allocation2 + $0x3a] sm:$0xff]
    %v3147 = vld [vmem:[#allocation2 + $0x42] sm:$0xff]
    %v3148 = vld [vmem:[#allocation2 + $0x4a] sm:$0xff]
    %v3149 = vld [vmem:[#allocation2 + $0x52] sm:$0xff]
    %v3150 = vld [vmem:[#allocation2 + $0x5a] sm:$0xff]
    %v3151 = vld [vmem:[#allocation2 + $0x62] sm:$0xff]
    %v3152 = vld [vmem:[#allocation2 + $0x6a] sm:$0xff]
    %v3153 = vld [vmem:[#allocation2 + $0x72] sm:$0xff]
    %v3154 = vld [vmem:[#allocation2 + $0x7a] sm:$0x1]
    %v3155 = vld [vmem:[#allocation2 + $0x3] sm:$0xff]
    %v3156 = vld [vmem:[#allocation2 + $0xb] sm:$0xff]
    %v3157 = vld [vmem:[#allocation2 + $0x13] sm:$0xff]
    %v3158 = vld [vmem:[#allocation2 + $0x1b] sm:$0xff]
    %v3159 = vld [vmem:[#allocation2 + $0x23] sm:$0xff]
    %v3160 = vld [vmem:[#allocation2 + $0x2b] sm:$0xff]
    %v3161 = vld [vmem:[#allocation2 + $0x33] sm:$0xff]
    %v3162 = vld [vmem:[#allocation2 + $0x3b] sm:$0xff]
    %v3163 = vld [vmem:[#allocation2 + $0x43] sm:$0xff]
    %v3164 = vld [vmem:[#allocation2 + $0x4b] sm:$0xff]
    %v3165 = vld [vmem:[#allocation2 + $0x53] sm:$0xff]
    %v3166 = vld [vmem:[#allocation2 + $0x5b] sm:$0xff]
    %v3167 = vld [vmem:[#allocation2 + $0x63] sm:$0xff]
    %v3168 = vld [vmem:[#allocation2 + $0x6b] sm:$0xff]
    %v3169 = vld [vmem:[#allocation2 + $0x73] sm:$0xff]
    %v3170 = vld [vmem:[#allocation2 + $0x7b] sm:$0x1]
    %v3171 = vld [vmem:[#allocation2 + $0x4] sm:$0xff]
    %v3172 = vld [vmem:[#allocation2 + $0xc] sm:$0xff]
    %v3173 = vld [vmem:[#allocation2 + $0x14] sm:$0xff]
    %v3174 = vld [vmem:[#allocation2 + $0x1c] sm:$0xff]
    %v3175 = vld [vmem:[#allocation2 + $0x24] sm:$0xff]
    %v3176 = vld [vmem:[#allocation2 + $0x2c] sm:$0xff]
    %v3177 = vld [vmem:[#allocation2 + $0x34] sm:$0xff]
    %v3178 = vld [vmem:[#allocation2 + $0x3c] sm:$0xff]
    %v3179 = vld [vmem:[#allocation2 + $0x44] sm:$0xff]
    %v3180 = vld [vmem:[#allocation2 + $0x4c] sm:$0xff]
    %v3181 = vld [vmem:[#allocation2 + $0x54] sm:$0xff]
    %v3182 = vld [vmem:[#allocation2 + $0x5c] sm:$0xff]
    %v3183 = vld [vmem:[#allocation2 + $0x64] sm:$0xff]
    %v3184 = vld [vmem:[#allocation2 + $0x6c] sm:$0xff]
    %v3185 = vld [vmem:[#allocation2 + $0x74] sm:$0xff]
    %v3186 = vld [vmem:[#allocation2 + $0x7c] sm:$0x1]
    %v3187 = vld [vmem:[#allocation2 + $0x5] sm:$0xff]
    %v3188 = vld [vmem:[#allocation2 + $0xd] sm:$0xff]
    %v3189 = vld [vmem:[#allocation2 + $0x15] sm:$0xff]
    %v3190 = vld [vmem:[#allocation2 + $0x1d] sm:$0xff]
    %v3191 = vld [vmem:[#allocation2 + $0x25] sm:$0xff]
    %v3192 = vld [vmem:[#allocation2 + $0x2d] sm:$0xff]
    %v3193 = vld [vmem:[#allocation2 + $0x35] sm:$0xff]
    %v3194 = vld [vmem:[#allocation2 + $0x3d] sm:$0xff]
    %v3195 = vld [vmem:[#allocation2 + $0x45] sm:$0xff]
    %v3196 = vld [vmem:[#allocation2 + $0x4d] sm:$0xff]
    %v3197 = vld [vmem:[#allocation2 + $0x55] sm:$0xff]
    %v3198 = vld [vmem:[#allocation2 + $0x5d] sm:$0xff]
    %v3199 = vld [vmem:[#allocation2 + $0x65] sm:$0xff]
    %v3200 = vld [vmem:[#allocation2 + $0x6d] sm:$0xff]
    %v3201 = vld [vmem:[#allocation2 + $0x75] sm:$0xff]
    %v3202 = vld [vmem:[#allocation2 + $0x7d] sm:$0x1]
    %v3203 = vld [vmem:[#allocation2 + $0x6] sm:$0xff]
    %v3204 = vld [vmem:[#allocation2 + $0xe] sm:$0xff]
    %v3205 = vld [vmem:[#allocation2 + $0x16] sm:$0xff]
    %v3206 = vld [vmem:[#allocation2 + $0x1e] sm:$0xff]
    %v3207 = vld [vmem:[#allocation2 + $0x26] sm:$0xff]
    %v3208 = vld [vmem:[#allocation2 + $0x2e] sm:$0xff]
    %v3209 = vld [vmem:[#allocation2 + $0x36] sm:$0xff]
    %v3210 = vld [vmem:[#allocation2 + $0x3e] sm:$0xff]
    %v3211 = vld [vmem:[#allocation2 + $0x46] sm:$0xff]
    %v3212 = vld [vmem:[#allocation2 + $0x4e] sm:$0xff]
    %v3213 = vld [vmem:[#allocation2 + $0x56] sm:$0xff]
    %v3214 = vld [vmem:[#allocation2 + $0x5e] sm:$0xff]
    %v3215 = vld [vmem:[#allocation2 + $0x66] sm:$0xff]
    %v3216 = vld [vmem:[#allocation2 + $0x6e] sm:$0xff]
    %v3217 = vld [vmem:[#allocation2 + $0x76] sm:$0xff]
    %v3218 = vld [vmem:[#allocation2 + $0x7e] sm:$0x1]
    %v3219 = vld [vmem:[#allocation2 + $0x7] sm:$0xff]
    %v3220 = vld [vmem:[#allocation2 + $0xf] sm:$0xff]
    %v3221 = vld [vmem:[#allocation2 + $0x17] sm:$0xff]
    %v3222 = vld [vmem:[#allocation2 + $0x1f] sm:$0xff]
    %v3223 = vld [vmem:[#allocation2 + $0x27] sm:$0xff]
    %v3224 = vld [vmem:[#allocation2 + $0x2f] sm:$0xff]
    %v3225 = vld [vmem:[#allocation2 + $0x37] sm:$0xff]
    %v3226 = vld [vmem:[#allocation2 + $0x3f] sm:$0xff]
    %v3227 = vld [vmem:[#allocation2 + $0x47] sm:$0xff]
    %v3228 = vld [vmem:[#allocation2 + $0x4f] sm:$0xff]
    %v3229 = vld [vmem:[#allocation2 + $0x57] sm:$0xff]
    %v3230 = vld [vmem:[#allocation2 + $0x5f] sm:$0xff]
    %v3231 = vld [vmem:[#allocation2 + $0x67] sm:$0xff]
    %v3232 = vld [vmem:[#allocation2 + $0x6f] sm:$0xff]
    %v3233 = vld [vmem:[#allocation2 + $0x77] sm:$0xff]
    %v3234 = vld [vmem:[#allocation2 + $0x7f] sm:$0x1]
    %v3235 = vld [vmem:[#allocation5] sm:$0xff]
    %v3236 = vld [vmem:[#allocation5 + $0x8] sm:$0xff]
    %v3237 = vld [vmem:[#allocation5 + $0x10] sm:$0xff]
    %v3238 = vld [vmem:[#allocation5 + $0x18] sm:$0xff]
    %v3239 = vld [vmem:[#allocation5 + $0x20] sm:$0xff]
    %v3240 = vld [vmem:[#allocation5 + $0x28] sm:$0xff]
    %v3241 = vld [vmem:[#allocation5 + $0x30] sm:$0xff]
    %v3242 = vld [vmem:[#allocation5 + $0x38] sm:$0xff]
    %v3243 = vld [vmem:[#allocation5 + $0x40] sm:$0xff]
    %v3244 = vld [vmem:[#allocation5 + $0x48] sm:$0xff]
    %v3245 = vld [vmem:[#allocation5 + $0x50] sm:$0xff]
    %v3246 = vld [vmem:[#allocation5 + $0x58] sm:$0xff]
    %v3247 = vld [vmem:[#allocation5 + $0x60] sm:$0xff]
    %v3248 = vld [vmem:[#allocation5 + $0x68] sm:$0xff]
    %v3249 = vld [vmem:[#allocation5 + $0x70] sm:$0xff]
    %v3250 = vld [vmem:[#allocation5 + $0x78] sm:$0xff]
    %v3251 = vld [vmem:[#allocation5 + $0x80] sm:$0xff]
    %v3252 = vld [vmem:[#allocation5 + $0x88] sm:$0xff]
    %v3253 = vld [vmem:[#allocation5 + $0x90] sm:$0xff]
    %v3254 = vld [vmem:[#allocation5 + $0x98] sm:$0xff]
    %v3255 = vld [vmem:[#allocation5 + $0xa0] sm:$0xff]
    %v3256 = vld [vmem:[#allocation5 + $0xa8] sm:$0xff]
    %v3257 = vld [vmem:[#allocation5 + $0xb0] sm:$0xff]
    %v3258 = vld [vmem:[#allocation5 + $0xb8] sm:$0xff]
    %v3259 = vld [vmem:[#allocation5 + $0xc0] sm:$0xff]
    %v3260 = vld [vmem:[#allocation5 + $0xc8] sm:$0xff]
    %v3261 = vld [vmem:[#allocation5 + $0xd0] sm:$0xff]
    %v3262 = vld [vmem:[#allocation5 + $0xd8] sm:$0xff]
    %v3263 = vld [vmem:[#allocation5 + $0xe0] sm:$0xff]
    %v3264 = vld [vmem:[#allocation5 + $0xe8] sm:$0xff]
    %v3265 = vld [vmem:[#allocation5 + $0xf0] sm:$0xff]
    %v3266 = vld [vmem:[#allocation5 + $0xf8] sm:$0xff]
    %v3267 = vld [vmem:[#allocation5 + $0x100] sm:$0xff]
    %v3268 = vld [vmem:[#allocation5 + $0x108] sm:$0xff]
    %v3269 = vld [vmem:[#allocation5 + $0x110] sm:$0xff]
    %v3270 = vld [vmem:[#allocation5 + $0x118] sm:$0xff]
    %v3271 = vld [vmem:[#allocation5 + $0x120] sm:$0xff]
    %v3272 = vld [vmem:[#allocation5 + $0x128] sm:$0xff]
    %v3273 = vld [vmem:[#allocation5 + $0x130] sm:$0xff]
    %v3274 = vld [vmem:[#allocation5 + $0x138] sm:$0xff]
    %v3275 = vld [vmem:[#allocation5 + $0x140] sm:$0xff]
    %v3276 = vld [vmem:[#allocation5 + $0x148] sm:$0xff]
    %v3277 = vld [vmem:[#allocation5 + $0x150] sm:$0xff]
    %v3278 = vld [vmem:[#allocation5 + $0x158] sm:$0xff]
    %v3279 = vld [vmem:[#allocation5 + $0x160] sm:$0xff]
    %v3280 = vld [vmem:[#allocation5 + $0x168] sm:$0xff]
    %v3281 = vld [vmem:[#allocation5 + $0x170] sm:$0xff]
    %v3282 = vld [vmem:[#allocation5 + $0x178] sm:$0xff]
    %v3283 = vld [vmem:[#allocation5 + $0x180] sm:$0xff]
    %v3284 = vld [vmem:[#allocation5 + $0x188] sm:$0xff]
    %v3285 = vld [vmem:[#allocation5 + $0x190] sm:$0xff]
    %v3286 = vld [vmem:[#allocation5 + $0x198] sm:$0xff]
    %v3287 = vld [vmem:[#allocation5 + $0x1a0] sm:$0xff]
    %v3288 = vld [vmem:[#allocation5 + $0x1a8] sm:$0xff]
    %v3289 = vld [vmem:[#allocation5 + $0x1b0] sm:$0xff]
    %v3290 = vld [vmem:[#allocation5 + $0x1b8] sm:$0xff]
    %v3291 = vld [vmem:[#allocation5 + $0x1c0] sm:$0xff]
    %v3292 = vld [vmem:[#allocation5 + $0x1c8] sm:$0xff]
    %v3293 = vld [vmem:[#allocation5 + $0x1d0] sm:$0xff]
    %v3294 = vld [vmem:[#allocation5 + $0x1d8] sm:$0xff]
    %v3295 = vld [vmem:[#allocation5 + $0x1e0] sm:$0xff]
    %v3296 = vld [vmem:[#allocation5 + $0x1e8] sm:$0xff]
    %v3297 = vld [vmem:[#allocation5 + $0x1f0] sm:$0xff]
    %v3298 = vld [vmem:[#allocation5 + $0x1f8] sm:$0xff]
    %v3299 = vld [vmem:[#allocation5 + $0x200] sm:$0xff]
    %v3300 = vld [vmem:[#allocation5 + $0x208] sm:$0xff]
    %v3301 = vld [vmem:[#allocation5 + $0x210] sm:$0xff]
    %v3302 = vld [vmem:[#allocation5 + $0x218] sm:$0xff]
    %v3303 = vld [vmem:[#allocation5 + $0x220] sm:$0xff]
    %v3304 = vld [vmem:[#allocation5 + $0x228] sm:$0xff]
    %v3305 = vld [vmem:[#allocation5 + $0x230] sm:$0xff]
    %v3306 = vld [vmem:[#allocation5 + $0x238] sm:$0xff]
    %v3307 = vld [vmem:[#allocation5 + $0x240] sm:$0xff]
    %v3308 = vld [vmem:[#allocation5 + $0x248] sm:$0xff]
    %v3309 = vld [vmem:[#allocation5 + $0x250] sm:$0xff]
    %v3310 = vld [vmem:[#allocation5 + $0x258] sm:$0xff]
    %v3311 = vld [vmem:[#allocation5 + $0x260] sm:$0xff]
    %v3312 = vld [vmem:[#allocation5 + $0x268] sm:$0xff]
    %v3313 = vld [vmem:[#allocation5 + $0x270] sm:$0xff]
    %v3314 = vld [vmem:[#allocation5 + $0x278] sm:$0xff]
    %v3315 = vld [vmem:[#allocation5 + $0x280] sm:$0xff]
    %v3316 = vld [vmem:[#allocation5 + $0x288] sm:$0xff]
    %v3317 = vld [vmem:[#allocation5 + $0x290] sm:$0xff]
    %v3318 = vld [vmem:[#allocation5 + $0x298] sm:$0xff]
    %v3319 = vld [vmem:[#allocation5 + $0x2a0] sm:$0xff]
    %v3320 = vld [vmem:[#allocation5 + $0x2a8] sm:$0xff]
    %v3321 = vld [vmem:[#allocation5 + $0x2b0] sm:$0xff]
    %v3322 = vld [vmem:[#allocation5 + $0x2b8] sm:$0xff]
    %v3323 = vld [vmem:[#allocation5 + $0x2c0] sm:$0xff]
    %v3324 = vld [vmem:[#allocation5 + $0x2c8] sm:$0xff]
    %v3325 = vld [vmem:[#allocation5 + $0x2d0] sm:$0xff]
    %v3326 = vld [vmem:[#allocation5 + $0x2d8] sm:$0xff]
    %v3327 = vld [vmem:[#allocation5 + $0x2e0] sm:$0xff]
    %v3328 = vld [vmem:[#allocation5 + $0x2e8] sm:$0xff]
    %v3329 = vld [vmem:[#allocation5 + $0x2f0] sm:$0xff]
    %v3330 = vld [vmem:[#allocation5 + $0x2f8] sm:$0xff]
    %v3331 = vld [vmem:[#allocation5 + $0x300] sm:$0xff]
    %v3332 = vld [vmem:[#allocation5 + $0x308] sm:$0xff]
    %v3333 = vld [vmem:[#allocation5 + $0x310] sm:$0xff]
    %v3334 = vld [vmem:[#allocation5 + $0x318] sm:$0xff]
    %v3335 = vld [vmem:[#allocation5 + $0x320] sm:$0xff]
    %v3336 = vld [vmem:[#allocation5 + $0x328] sm:$0xff]
    %v3337 = vld [vmem:[#allocation5 + $0x330] sm:$0xff]
    %v3338 = vld [vmem:[#allocation5 + $0x338] sm:$0xff]
    %v3339 = vld [vmem:[#allocation5 + $0x340] sm:$0xff]
    %v3340 = vld [vmem:[#allocation5 + $0x348] sm:$0xff]
    %v3341 = vld [vmem:[#allocation5 + $0x350] sm:$0xff]
    %v3342 = vld [vmem:[#allocation5 + $0x358] sm:$0xff]
    %v3343 = vld [vmem:[#allocation5 + $0x360] sm:$0xff]
    %v3344 = vld [vmem:[#allocation5 + $0x368] sm:$0xff]
    %v3345 = vld [vmem:[#allocation5 + $0x370] sm:$0xff]
    %v3346 = vld [vmem:[#allocation5 + $0x378] sm:$0xff]
    %v3347 = vld [vmem:[#allocation5 + $0x380] sm:$0xff]
    %v3348 = vld [vmem:[#allocation5 + $0x388] sm:$0xff]
    %v3349 = vld [vmem:[#allocation5 + $0x390] sm:$0xff]
    %v3350 = vld [vmem:[#allocation5 + $0x398] sm:$0xff]
    %v3351 = vld [vmem:[#allocation5 + $0x3a0] sm:$0xff]
    %v3352 = vld [vmem:[#allocation5 + $0x3a8] sm:$0xff]
    %v3353 = vld [vmem:[#allocation5 + $0x3b0] sm:$0xff]
    %v3354 = vld [vmem:[#allocation5 + $0x3b8] sm:$0xff]
    %v3355 = vld [vmem:[#allocation5 + $0x3c0] sm:$0xff]
    %v3356 = vld [vmem:[#allocation5 + $0x3c8] sm:$0xff]
    %v3357 = vld [vmem:[#allocation5 + $0x3d0] sm:$0xff]
    %v3358 = vld [vmem:[#allocation5 + $0x3d8] sm:$0xff]
    %v3359 = vld [vmem:[#allocation5 + $0x3e0] sm:$0xff]
    %v3360 = vld [vmem:[#allocation5 + $0x3e8] sm:$0xff]
    %v3361 = vld [vmem:[#allocation5 + $0x3f0] sm:$0xff]
    %v3362 = vld [vmem:[#allocation5 + $0x3f8] sm:$0xff]
    %v3363 = vld [vmem:[%s3] sm:$0x1]
    %v3365 = vlaneseq
    %v3366 = vshrl.u32 %v3365, 7
    %v3367 = vsub.s32 0, %v3366
    %v3368 = vrot.slane %v3363, %v3367
    %3370 = vmatprep.subr.mxu0 0.0
    %3371 = vmatpush1.msra.mxu0 %v3250
    %3372 = vmatprep.subr.mxu0 0.0
    %3373 = vmatpush1.msra.mxu0 %v3249
    %3374 = vmatprep.subr.mxu0 0.0
    %3375 = vmatpush1.msra.mxu0 %v3248
    %3376 = vmatprep.subr.mxu0 0.0
    %3377 = vmatpush1.msra.mxu0 %v3247
    %3378 = vmatprep.subr.mxu0 0.0
    %3379 = vmatpush1.msra.mxu0 %v3246
    %3380 = vmatprep.subr.mxu0 0.0
    %3381 = vmatpush1.msra.mxu0 %v3245
    %3382 = vmatprep.subr.mxu0 0.0
    %3383 = vmatpush1.msra.mxu0 %v3244
    %3384 = vmatprep.subr.mxu0 0.0
    %3385 = vmatpush1.msra.mxu0 %v3243
    %3386 = vmatprep.subr.mxu0 0.0
    %3387 = vmatpush1.msra.mxu0 %v3242
    %3388 = vmatprep.subr.mxu0 0.0
    %3389 = vmatpush1.msra.mxu0 %v3241
    %3390 = vmatprep.subr.mxu0 0.0
    %3391 = vmatpush1.msra.mxu0 %v3240
    %3392 = vmatprep.subr.mxu0 0.0
    %3393 = vmatpush1.msra.mxu0 %v3239
    %3394 = vmatprep.subr.mxu0 0.0
    %3395 = vmatpush1.msra.mxu0 %v3238
    %3396 = vmatprep.subr.mxu0 0.0
    %3397 = vmatpush1.msra.mxu0 %v3237
    %3398 = vmatprep.subr.mxu0 0.0
    %3399 = vmatpush1.msra.mxu0 %v3236
    %3400 = vmatprep.subr.mxu0 0.0
    %3401 = vmatpush1.msra.mxu0 %v3235
    %3402 = vmatprep.subr.mxu0 0.0
    %3403 = vmatpush2.msra.mxu0 %v3266
    %3404 = vmatprep.subr.mxu0 0.0
    %3405 = vmatpush2.msra.mxu0 %v3265
    %3406 = vmatprep.subr.mxu0 0.0
    %3407 = vmatpush2.msra.mxu0 %v3264
    %3408 = vmatprep.subr.mxu0 0.0
    %3409 = vmatpush2.msra.mxu0 %v3263
    %3410 = vmatprep.subr.mxu0 0.0
    %3411 = vmatpush2.msra.mxu0 %v3262
    %3412 = vmatprep.subr.mxu0 0.0
    %3413 = vmatpush2.msra.mxu0 %v3261
    %3414 = vmatprep.subr.mxu0 0.0
    %3415 = vmatpush2.msra.mxu0 %v3260
    %3416 = vmatprep.subr.mxu0 0.0
    %3417 = vmatpush2.msra.mxu0 %v3259
    %3418 = vmatprep.subr.mxu0 0.0
    %3419 = vmatpush2.msra.mxu0 %v3258
    %3420 = vmatprep.subr.mxu0 0.0
    %3421 = vmatpush2.msra.mxu0 %v3257
    %3422 = vmatprep.subr.mxu0 0.0
    %3423 = vmatpush2.msra.mxu0 %v3256
    %3424 = vmatprep.subr.mxu0 0.0
    %3425 = vmatpush2.msra.mxu0 %v3255
    %3426 = vmatprep.subr.mxu0 0.0
    %3427 = vmatpush2.msra.mxu0 %v3254
    %3428 = vmatprep.subr.mxu0 0.0
    %3429 = vmatpush2.msra.mxu0 %v3253
    %3430 = vmatprep.subr.mxu0 0.0
    %3431 = vmatpush2.msra.mxu0 %v3252
    %3432 = vmatprep.subr.mxu0 0.0
    %3433 = vmatpush2.msra.mxu0 %v3251
    %3434 = vmatprep.mubr.f32.mxu0 %v3123
    %3435 = vmatmul.mubr.f32.gmra.mxu0 %v3107
    %v3436 = vpop.f32.mrf.mxu0
    %v3437 = vadd.f32 %v3368, %v3436
    %v3438 = vpop.f32.mrf.mxu0
    %3439 = vmatprep.mubr.f32.mxu0 %v3124
    %3440 = vmatmul.mubr.f32.gmra.mxu0 %v3108
    %v3441 = vpop.f32.mrf.mxu0
    %v3442 = vadd.f32 %v3368, %v3441
    %v3443 = vpop.f32.mrf.mxu0
    %3444 = vmatprep.mubr.f32.mxu0 %v3125
    %3445 = vmatmul.mubr.f32.gmra.mxu0 %v3109
    %v3446 = vpop.f32.mrf.mxu0
    %v3447 = vadd.f32 %v3368, %v3446
    %v3448 = vpop.f32.mrf.mxu0
    %3449 = vmatprep.mubr.f32.mxu0 %v3126
    %3450 = vmatmul.mubr.f32.gmra.mxu0 %v3110
    %v3451 = vpop.f32.mrf.mxu0
    %v3452 = vadd.f32 %v3368, %v3451
    %v3453 = vpop.f32.mrf.mxu0
    %3454 = vmatprep.mubr.f32.mxu0 %v3127
    %3455 = vmatmul.mubr.f32.gmra.mxu0 %v3111
    %v3456 = vpop.f32.mrf.mxu0
    %v3457 = vadd.f32 %v3368, %v3456
    %v3458 = vpop.f32.mrf.mxu0
    %3459 = vmatprep.mubr.f32.mxu0 %v3128
    %3460 = vmatmul.mubr.f32.gmra.mxu0 %v3112
    %v3461 = vpop.f32.mrf.mxu0
    %v3462 = vadd.f32 %v3368, %v3461
    %v3463 = vpop.f32.mrf.mxu0
    %3464 = vmatprep.mubr.f32.mxu0 %v3129
    %3465 = vmatmul.mubr.f32.gmra.mxu0 %v3113
    %v3466 = vpop.f32.mrf.mxu0
    %v3467 = vadd.f32 %v3368, %v3466
    %v3468 = vpop.f32.mrf.mxu0
    %3469 = vmatprep.mubr.f32.mxu0 %v3130
    %3470 = vmatmul.mubr.f32.gmra.mxu0 %v3114
    %v3471 = vpop.f32.mrf.mxu0
    %v3472 = vadd.f32 %v3368, %v3471
    %v3473 = vpop.f32.mrf.mxu0
    %3474 = vmatprep.mubr.f32.mxu0 %v3131
    %3475 = vmatmul.mubr.f32.gmra.mxu0 %v3115
    %v3476 = vpop.f32.mrf.mxu0
    %v3477 = vadd.f32 %v3368, %v3476
    %v3478 = vpop.f32.mrf.mxu0
    %3479 = vmatprep.mubr.f32.mxu0 %v3132
    %3480 = vmatmul.mubr.f32.gmra.mxu0 %v3116
    %v3481 = vpop.f32.mrf.mxu0
    %v3482 = vadd.f32 %v3368, %v3481
    %v3483 = vpop.f32.mrf.mxu0
    %3484 = vmatprep.mubr.f32.mxu0 %v3133
    %3485 = vmatmul.mubr.f32.gmra.mxu0 %v3117
    %v3486 = vpop.f32.mrf.mxu0
    %v3487 = vadd.f32 %v3368, %v3486
    %v3488 = vpop.f32.mrf.mxu0
    %3489 = vmatprep.mubr.f32.mxu0 %v3134
    %3490 = vmatmul.mubr.f32.gmra.mxu0 %v3118
    %v3491 = vpop.f32.mrf.mxu0
    %v3492 = vadd.f32 %v3368, %v3491
    %v3493 = vpop.f32.mrf.mxu0
    %3494 = vmatprep.mubr.f32.mxu0 %v3135
    %3495 = vmatmul.mubr.f32.gmra.mxu0 %v3119
    %v3496 = vpop.f32.mrf.mxu0
    %v3497 = vadd.f32 %v3368, %v3496
    %v3498 = vpop.f32.mrf.mxu0
    %3499 = vmatprep.mubr.f32.mxu0 %v3136
    %3500 = vmatmul.mubr.f32.gmra.mxu0 %v3120
    %v3501 = vpop.f32.mrf.mxu0
    %v3502 = vadd.f32 %v3368, %v3501
    %v3503 = vpop.f32.mrf.mxu0
    %3504 = vmatprep.mubr.f32.mxu0 %v3137
    %3505 = vmatmul.mubr.f32.gmra.mxu0 %v3121
    %v3506 = vpop.f32.mrf.mxu0
    %v3507 = vadd.f32 %v3368, %v3506
    %v3508 = vpop.f32.mrf.mxu0
    %3509 = vmatprep.mubr.f32.mxu0 %v3138
    %3510 = vmatmul.mubr.f32.gmra.mxu0 %v3122
    %v3511 = vpop.f32.mrf.mxu0
    %v3512 = vadd.f32 %v3368, %v3511
    %v3513 = vpop.f32.mrf.mxu0
    %3514 = vdwg.mxu0
    %3515 = vmatprep.subr.mxu0 0.0
    %3516 = vmatpush1.msra.mxu0 %v3282
    %3517 = vmatprep.subr.mxu0 0.0
    %3518 = vmatpush1.msra.mxu0 %v3281
    %3519 = vmatprep.subr.mxu0 0.0
    %3520 = vmatpush1.msra.mxu0 %v3280
    %3521 = vmatprep.subr.mxu0 0.0
    %3522 = vmatpush1.msra.mxu0 %v3279
    %3523 = vmatprep.subr.mxu0 0.0
    %3524 = vmatpush1.msra.mxu0 %v3278
    %3525 = vmatprep.subr.mxu0 0.0
    %3526 = vmatpush1.msra.mxu0 %v3277
    %3527 = vmatprep.subr.mxu0 0.0
    %3528 = vmatpush1.msra.mxu0 %v3276
    %3529 = vmatprep.subr.mxu0 0.0
    %3530 = vmatpush1.msra.mxu0 %v3275
    %3531 = vmatprep.subr.mxu0 0.0
    %3532 = vmatpush1.msra.mxu0 %v3274
    %3533 = vmatprep.subr.mxu0 0.0
    %3534 = vmatpush1.msra.mxu0 %v3273
    %3535 = vmatprep.subr.mxu0 0.0
    %3536 = vmatpush1.msra.mxu0 %v3272
    %3537 = vmatprep.subr.mxu0 0.0
    %3538 = vmatpush1.msra.mxu0 %v3271
    %3539 = vmatprep.subr.mxu0 0.0
    %3540 = vmatpush1.msra.mxu0 %v3270
    %3541 = vmatprep.subr.mxu0 0.0
    %3542 = vmatpush1.msra.mxu0 %v3269
    %3543 = vmatprep.subr.mxu0 0.0
    %3544 = vmatpush1.msra.mxu0 %v3268
    %3545 = vmatprep.subr.mxu0 0.0
    %3546 = vmatpush1.msra.mxu0 %v3267
    %3547 = vmatprep.subr.mxu0 0.0
    %3548 = vmatpush2.msra.mxu0 %v3298
    %3549 = vmatprep.subr.mxu0 0.0
    %3550 = vmatpush2.msra.mxu0 %v3297
    %3551 = vmatprep.subr.mxu0 0.0
    %3552 = vmatpush2.msra.mxu0 %v3296
    %3553 = vmatprep.subr.mxu0 0.0
    %3554 = vmatpush2.msra.mxu0 %v3295
    %3555 = vmatprep.subr.mxu0 0.0
    %3556 = vmatpush2.msra.mxu0 %v3294
    %3557 = vmatprep.subr.mxu0 0.0
    %3558 = vmatpush2.msra.mxu0 %v3293
    %3559 = vmatprep.subr.mxu0 0.0
    %3560 = vmatpush2.msra.mxu0 %v3292
    %3561 = vmatprep.subr.mxu0 0.0
    %3562 = vmatpush2.msra.mxu0 %v3291
    %3563 = vmatprep.subr.mxu0 0.0
    %3564 = vmatpush2.msra.mxu0 %v3290
    %3565 = vmatprep.subr.mxu0 0.0
    %3566 = vmatpush2.msra.mxu0 %v3289
    %3567 = vmatprep.subr.mxu0 0.0
    %3568 = vmatpush2.msra.mxu0 %v3288
    %3569 = vmatprep.subr.mxu0 0.0
    %3570 = vmatpush2.msra.mxu0 %v3287
    %3571 = vmatprep.subr.mxu0 0.0
    %3572 = vmatpush2.msra.mxu0 %v3286
    %3573 = vmatprep.subr.mxu0 0.0
    %3574 = vmatpush2.msra.mxu0 %v3285
    %3575 = vmatprep.subr.mxu0 0.0
    %3576 = vmatpush2.msra.mxu0 %v3284
    %3577 = vmatprep.subr.mxu0 0.0
    %3578 = vmatpush2.msra.mxu0 %v3283
    %3579 = vmatprep.mubr.f32.mxu0 %v3155
    %3580 = vmatmul.mubr.f32.gmra.mxu0 %v3139
    %v3581 = vpop.f32.mrf.mxu0
    %v3582 = vadd.f32 %v3437, %v3581
    %v3583 = vpop.f32.mrf.mxu0
    %3584 = vmatprep.mubr.f32.mxu0 %v3156
    %3585 = vmatmul.mubr.f32.gmra.mxu0 %v3140
    %v3586 = vpop.f32.mrf.mxu0
    %v3587 = vadd.f32 %v3442, %v3586
    %v3588 = vpop.f32.mrf.mxu0
    %3589 = vmatprep.mubr.f32.mxu0 %v3157
    %3590 = vmatmul.mubr.f32.gmra.mxu0 %v3141
    %v3591 = vpop.f32.mrf.mxu0
    %v3592 = vadd.f32 %v3447, %v3591
    %v3593 = vpop.f32.mrf.mxu0
    %3594 = vmatprep.mubr.f32.mxu0 %v3158
    %3595 = vmatmul.mubr.f32.gmra.mxu0 %v3142
    %v3596 = vpop.f32.mrf.mxu0
    %v3597 = vadd.f32 %v3452, %v3596
    %v3598 = vpop.f32.mrf.mxu0
    %3599 = vmatprep.mubr.f32.mxu0 %v3159
    %3600 = vmatmul.mubr.f32.gmra.mxu0 %v3143
    %v3601 = vpop.f32.mrf.mxu0
    %v3602 = vadd.f32 %v3457, %v3601
    %v3603 = vpop.f32.mrf.mxu0
    %3604 = vmatprep.mubr.f32.mxu0 %v3160
    %3605 = vmatmul.mubr.f32.gmra.mxu0 %v3144
    %v3606 = vpop.f32.mrf.mxu0
    %v3607 = vadd.f32 %v3462, %v3606
    %v3608 = vpop.f32.mrf.mxu0
    %3609 = vmatprep.mubr.f32.mxu0 %v3161
    %3610 = vmatmul.mubr.f32.gmra.mxu0 %v3145
    %v3611 = vpop.f32.mrf.mxu0
    %v3612 = vadd.f32 %v3467, %v3611
    %v3613 = vpop.f32.mrf.mxu0
    %3614 = vmatprep.mubr.f32.mxu0 %v3162
    %3615 = vmatmul.mubr.f32.gmra.mxu0 %v3146
    %v3616 = vpop.f32.mrf.mxu0
    %v3617 = vadd.f32 %v3472, %v3616
    %v3618 = vpop.f32.mrf.mxu0
    %3619 = vmatprep.mubr.f32.mxu0 %v3163
    %3620 = vmatmul.mubr.f32.gmra.mxu0 %v3147
    %v3621 = vpop.f32.mrf.mxu0
    %v3622 = vadd.f32 %v3477, %v3621
    %v3623 = vpop.f32.mrf.mxu0
    %3624 = vmatprep.mubr.f32.mxu0 %v3164
    %3625 = vmatmul.mubr.f32.gmra.mxu0 %v3148
    %v3626 = vpop.f32.mrf.mxu0
    %v3627 = vadd.f32 %v3482, %v3626
    %v3628 = vpop.f32.mrf.mxu0
    %3629 = vmatprep.mubr.f32.mxu0 %v3165
    %3630 = vmatmul.mubr.f32.gmra.mxu0 %v3149
    %v3631 = vpop.f32.mrf.mxu0
    %v3632 = vadd.f32 %v3487, %v3631
    %v3633 = vpop.f32.mrf.mxu0
    %3634 = vmatprep.mubr.f32.mxu0 %v3166
    %3635 = vmatmul.mubr.f32.gmra.mxu0 %v3150
    %v3636 = vpop.f32.mrf.mxu0
    %v3637 = vadd.f32 %v3492, %v3636
    %v3638 = vpop.f32.mrf.mxu0
    %3639 = vmatprep.mubr.f32.mxu0 %v3167
    %3640 = vmatmul.mubr.f32.gmra.mxu0 %v3151
    %v3641 = vpop.f32.mrf.mxu0
    %v3642 = vadd.f32 %v3497, %v3641
    %v3643 = vpop.f32.mrf.mxu0
    %3644 = vmatprep.mubr.f32.mxu0 %v3168
    %3645 = vmatmul.mubr.f32.gmra.mxu0 %v3152
    %v3646 = vpop.f32.mrf.mxu0
    %v3647 = vadd.f32 %v3502, %v3646
    %v3648 = vpop.f32.mrf.mxu0
    %3649 = vmatprep.mubr.f32.mxu0 %v3169
    %3650 = vmatmul.mubr.f32.gmra.mxu0 %v3153
    %v3651 = vpop.f32.mrf.mxu0
    %v3652 = vadd.f32 %v3507, %v3651
    %v3653 = vpop.f32.mrf.mxu0
    %3654 = vmatprep.mubr.f32.mxu0 %v3170
    %3655 = vmatmul.mubr.f32.gmra.mxu0 %v3154
    %v3656 = vpop.f32.mrf.mxu0
    %v3657 = vadd.f32 %v3512, %v3656
    %v3658 = vpop.f32.mrf.mxu0
    %3659 = vdwg.mxu0
    %3660 = vmatprep.subr.mxu0 0.0
    %3661 = vmatpush1.msra.mxu0 %v3314
    %3662 = vmatprep.subr.mxu0 0.0
    %3663 = vmatpush1.msra.mxu0 %v3313
    %3664 = vmatprep.subr.mxu0 0.0
    %3665 = vmatpush1.msra.mxu0 %v3312
    %3666 = vmatprep.subr.mxu0 0.0
    %3667 = vmatpush1.msra.mxu0 %v3311
    %3668 = vmatprep.subr.mxu0 0.0
    %3669 = vmatpush1.msra.mxu0 %v3310
    %3670 = vmatprep.subr.mxu0 0.0
    %3671 = vmatpush1.msra.mxu0 %v3309
    %3672 = vmatprep.subr.mxu0 0.0
    %3673 = vmatpush1.msra.mxu0 %v3308
    %3674 = vmatprep.subr.mxu0 0.0
    %3675 = vmatpush1.msra.mxu0 %v3307
    %3676 = vmatprep.subr.mxu0 0.0
    %3677 = vmatpush1.msra.mxu0 %v3306
    %3678 = vmatprep.subr.mxu0 0.0
    %3679 = vmatpush1.msra.mxu0 %v3305
    %3680 = vmatprep.subr.mxu0 0.0
    %3681 = vmatpush1.msra.mxu0 %v3304
    %3682 = vmatprep.subr.mxu0 0.0
    %3683 = vmatpush1.msra.mxu0 %v3303
    %3684 = vmatprep.subr.mxu0 0.0
    %3685 = vmatpush1.msra.mxu0 %v3302
    %3686 = vmatprep.subr.mxu0 0.0
    %3687 = vmatpush1.msra.mxu0 %v3301
    %3688 = vmatprep.subr.mxu0 0.0
    %3689 = vmatpush1.msra.mxu0 %v3300
    %3690 = vmatprep.subr.mxu0 0.0
    %3691 = vmatpush1.msra.mxu0 %v3299
    %3692 = vmatprep.subr.mxu0 0.0
    %3693 = vmatpush2.msra.mxu0 %v3330
    %3694 = vmatprep.subr.mxu0 0.0
    %3695 = vmatpush2.msra.mxu0 %v3329
    %3696 = vmatprep.subr.mxu0 0.0
    %3697 = vmatpush2.msra.mxu0 %v3328
    %3698 = vmatprep.subr.mxu0 0.0
    %3699 = vmatpush2.msra.mxu0 %v3327
    %3700 = vmatprep.subr.mxu0 0.0
    %3701 = vmatpush2.msra.mxu0 %v3326
    %3702 = vmatprep.subr.mxu0 0.0
    %3703 = vmatpush2.msra.mxu0 %v3325
    %3704 = vmatprep.subr.mxu0 0.0
    %3705 = vmatpush2.msra.mxu0 %v3324
    %3706 = vmatprep.subr.mxu0 0.0
    %3707 = vmatpush2.msra.mxu0 %v3323
    %3708 = vmatprep.subr.mxu0 0.0
    %3709 = vmatpush2.msra.mxu0 %v3322
    %3710 = vmatprep.subr.mxu0 0.0
    %3711 = vmatpush2.msra.mxu0 %v3321
    %3712 = vmatprep.subr.mxu0 0.0
    %3713 = vmatpush2.msra.mxu0 %v3320
    %3714 = vmatprep.subr.mxu0 0.0
    %3715 = vmatpush2.msra.mxu0 %v3319
    %3716 = vmatprep.subr.mxu0 0.0
    %3717 = vmatpush2.msra.mxu0 %v3318
    %3718 = vmatprep.subr.mxu0 0.0
    %3719 = vmatpush2.msra.mxu0 %v3317
    %3720 = vmatprep.subr.mxu0 0.0
    %3721 = vmatpush2.msra.mxu0 %v3316
    %3722 = vmatprep.subr.mxu0 0.0
    %3723 = vmatpush2.msra.mxu0 %v3315
    %3724 = vmatprep.mubr.f32.mxu0 %v3187
    %3725 = vmatmul.mubr.f32.gmra.mxu0 %v3171
    %v3726 = vpop.f32.mrf.mxu0
    %v3727 = vadd.f32 %v3582, %v3726
    %v3728 = vpop.f32.mrf.mxu0
    %3729 = vmatprep.mubr.f32.mxu0 %v3188
    %3730 = vmatmul.mubr.f32.gmra.mxu0 %v3172
    %v3731 = vpop.f32.mrf.mxu0
    %v3732 = vadd.f32 %v3587, %v3731
    %v3733 = vpop.f32.mrf.mxu0
    %3734 = vmatprep.mubr.f32.mxu0 %v3189
    %3735 = vmatmul.mubr.f32.gmra.mxu0 %v3173
    %v3736 = vpop.f32.mrf.mxu0
    %v3737 = vadd.f32 %v3592, %v3736
    %v3738 = vpop.f32.mrf.mxu0
    %3739 = vmatprep.mubr.f32.mxu0 %v3190
    %3740 = vmatmul.mubr.f32.gmra.mxu0 %v3174
    %v3741 = vpop.f32.mrf.mxu0
    %v3742 = vadd.f32 %v3597, %v3741
    %v3743 = vpop.f32.mrf.mxu0
    %3744 = vmatprep.mubr.f32.mxu0 %v3191
    %3745 = vmatmul.mubr.f32.gmra.mxu0 %v3175
    %v3746 = vpop.f32.mrf.mxu0
    %v3747 = vadd.f32 %v3602, %v3746
    %v3748 = vpop.f32.mrf.mxu0
    %3749 = vmatprep.mubr.f32.mxu0 %v3192
    %3750 = vmatmul.mubr.f32.gmra.mxu0 %v3176
    %v3751 = vpop.f32.mrf.mxu0
    %v3752 = vadd.f32 %v3607, %v3751
    %v3753 = vpop.f32.mrf.mxu0
    %3754 = vmatprep.mubr.f32.mxu0 %v3193
    %3755 = vmatmul.mubr.f32.gmra.mxu0 %v3177
    %v3756 = vpop.f32.mrf.mxu0
    %v3757 = vadd.f32 %v3612, %v3756
    %v3758 = vpop.f32.mrf.mxu0
    %3759 = vmatprep.mubr.f32.mxu0 %v3194
    %3760 = vmatmul.mubr.f32.gmra.mxu0 %v3178
    %v3761 = vpop.f32.mrf.mxu0
    %v3762 = vadd.f32 %v3617, %v3761
    %v3763 = vpop.f32.mrf.mxu0
    %3764 = vmatprep.mubr.f32.mxu0 %v3195
    %3765 = vmatmul.mubr.f32.gmra.mxu0 %v3179
    %v3766 = vpop.f32.mrf.mxu0
    %v3767 = vadd.f32 %v3622, %v3766
    %v3768 = vpop.f32.mrf.mxu0
    %3769 = vmatprep.mubr.f32.mxu0 %v3196
    %3770 = vmatmul.mubr.f32.gmra.mxu0 %v3180
    %v3771 = vpop.f32.mrf.mxu0
    %v3772 = vadd.f32 %v3627, %v3771
    %v3773 = vpop.f32.mrf.mxu0
    %3774 = vmatprep.mubr.f32.mxu0 %v3197
    %3775 = vmatmul.mubr.f32.gmra.mxu0 %v3181
    %v3776 = vpop.f32.mrf.mxu0
    %v3777 = vadd.f32 %v3632, %v3776
    %v3778 = vpop.f32.mrf.mxu0
    %3779 = vmatprep.mubr.f32.mxu0 %v3198
    %3780 = vmatmul.mubr.f32.gmra.mxu0 %v3182
    %v3781 = vpop.f32.mrf.mxu0
    %v3782 = vadd.f32 %v3637, %v3781
    %v3783 = vpop.f32.mrf.mxu0
    %3784 = vmatprep.mubr.f32.mxu0 %v3199
    %3785 = vmatmul.mubr.f32.gmra.mxu0 %v3183
    %v3786 = vpop.f32.mrf.mxu0
    %v3787 = vadd.f32 %v3642, %v3786
    %v3788 = vpop.f32.mrf.mxu0
    %3789 = vmatprep.mubr.f32.mxu0 %v3200
    %3790 = vmatmul.mubr.f32.gmra.mxu0 %v3184
    %v3791 = vpop.f32.mrf.mxu0
    %v3792 = vadd.f32 %v3647, %v3791
    %v3793 = vpop.f32.mrf.mxu0
    %3794 = vmatprep.mubr.f32.mxu0 %v3201
    %3795 = vmatmul.mubr.f32.gmra.mxu0 %v3185
    %v3796 = vpop.f32.mrf.mxu0
    %v3797 = vadd.f32 %v3652, %v3796
    %v3798 = vpop.f32.mrf.mxu0
    %3799 = vmatprep.mubr.f32.mxu0 %v3202
    %3800 = vmatmul.mubr.f32.gmra.mxu0 %v3186
    %v3801 = vpop.f32.mrf.mxu0
    %v3802 = vadd.f32 %v3657, %v3801
    %v3803 = vpop.f32.mrf.mxu0
    %3804 = vdwg.mxu0
    %3805 = vmatprep.subr.mxu0 0.0
    %3806 = vmatpush1.msra.mxu0 %v3346
    %3807 = vmatprep.subr.mxu0 0.0
    %3808 = vmatpush1.msra.mxu0 %v3345
    %3809 = vmatprep.subr.mxu0 0.0
    %3810 = vmatpush1.msra.mxu0 %v3344
    %3811 = vmatprep.subr.mxu0 0.0
    %3812 = vmatpush1.msra.mxu0 %v3343
    %3813 = vmatprep.subr.mxu0 0.0
    %3814 = vmatpush1.msra.mxu0 %v3342
    %3815 = vmatprep.subr.mxu0 0.0
    %3816 = vmatpush1.msra.mxu0 %v3341
    %3817 = vmatprep.subr.mxu0 0.0
    %3818 = vmatpush1.msra.mxu0 %v3340
    %3819 = vmatprep.subr.mxu0 0.0
    %3820 = vmatpush1.msra.mxu0 %v3339
    %3821 = vmatprep.subr.mxu0 0.0
    %3822 = vmatpush1.msra.mxu0 %v3338
    %3823 = vmatprep.subr.mxu0 0.0
    %3824 = vmatpush1.msra.mxu0 %v3337
    %3825 = vmatprep.subr.mxu0 0.0
    %3826 = vmatpush1.msra.mxu0 %v3336
    %3827 = vmatprep.subr.mxu0 0.0
    %3828 = vmatpush1.msra.mxu0 %v3335
    %3829 = vmatprep.subr.mxu0 0.0
    %3830 = vmatpush1.msra.mxu0 %v3334
    %3831 = vmatprep.subr.mxu0 0.0
    %3832 = vmatpush1.msra.mxu0 %v3333
    %3833 = vmatprep.subr.mxu0 0.0
    %3834 = vmatpush1.msra.mxu0 %v3332
    %3835 = vmatprep.subr.mxu0 0.0
    %3836 = vmatpush1.msra.mxu0 %v3331
    %3837 = vmatprep.subr.mxu0 0.0
    %3838 = vmatpush2.msra.mxu0 %v3362
    %3839 = vmatprep.subr.mxu0 0.0
    %3840 = vmatpush2.msra.mxu0 %v3361
    %3841 = vmatprep.subr.mxu0 0.0
    %3842 = vmatpush2.msra.mxu0 %v3360
    %3843 = vmatprep.subr.mxu0 0.0
    %3844 = vmatpush2.msra.mxu0 %v3359
    %3845 = vmatprep.subr.mxu0 0.0
    %3846 = vmatpush2.msra.mxu0 %v3358
    %3847 = vmatprep.subr.mxu0 0.0
    %3848 = vmatpush2.msra.mxu0 %v3357
    %3849 = vmatprep.subr.mxu0 0.0
    %3850 = vmatpush2.msra.mxu0 %v3356
    %3851 = vmatprep.subr.mxu0 0.0
    %3852 = vmatpush2.msra.mxu0 %v3355
    %3853 = vmatprep.subr.mxu0 0.0
    %3854 = vmatpush2.msra.mxu0 %v3354
    %3855 = vmatprep.subr.mxu0 0.0
    %3856 = vmatpush2.msra.mxu0 %v3353
    %3857 = vmatprep.subr.mxu0 0.0
    %3858 = vmatpush2.msra.mxu0 %v3352
    %3859 = vmatprep.subr.mxu0 0.0
    %3860 = vmatpush2.msra.mxu0 %v3351
    %3861 = vmatprep.subr.mxu0 0.0
    %3862 = vmatpush2.msra.mxu0 %v3350
    %3863 = vmatprep.subr.mxu0 0.0
    %3864 = vmatpush2.msra.mxu0 %v3349
    %3865 = vmatprep.subr.mxu0 0.0
    %3866 = vmatpush2.msra.mxu0 %v3348
    %3867 = vmatprep.subr.mxu0 0.0
    %3868 = vmatpush2.msra.mxu0 %v3347
    %3869 = vmatprep.mubr.f32.mxu0 %v3219
    %3870 = vmatmul.mubr.f32.gmra.mxu0 %v3203
    %v3871 = vpop.f32.mrf.mxu0
    %v3872 = vadd.f32 %v3727, %v3871
    %v3873 = vpop.f32.mrf.mxu0
    %3874 = vmatprep.mubr.f32.mxu0 %v3220
    %3875 = vmatmul.mubr.f32.gmra.mxu0 %v3204
    %v3876 = vpop.f32.mrf.mxu0
    %v3877 = vadd.f32 %v3732, %v3876
    %v3878 = vpop.f32.mrf.mxu0
    %3879 = vmatprep.mubr.f32.mxu0 %v3221
    %3880 = vmatmul.mubr.f32.gmra.mxu0 %v3205
    %v3881 = vpop.f32.mrf.mxu0
    %v3882 = vadd.f32 %v3737, %v3881
    %v3883 = vpop.f32.mrf.mxu0
    %3884 = vmatprep.mubr.f32.mxu0 %v3222
    %3885 = vmatmul.mubr.f32.gmra.mxu0 %v3206
    %v3886 = vpop.f32.mrf.mxu0
    %v3887 = vadd.f32 %v3742, %v3886
    %v3888 = vpop.f32.mrf.mxu0
    %3889 = vmatprep.mubr.f32.mxu0 %v3223
    %3890 = vmatmul.mubr.f32.gmra.mxu0 %v3207
    %v3891 = vpop.f32.mrf.mxu0
    %v3892 = vadd.f32 %v3747, %v3891
    %v3893 = vpop.f32.mrf.mxu0
    %3894 = vmatprep.mubr.f32.mxu0 %v3224
    %3895 = vmatmul.mubr.f32.gmra.mxu0 %v3208
    %v3896 = vpop.f32.mrf.mxu0
    %v3897 = vadd.f32 %v3752, %v3896
    %v3898 = vpop.f32.mrf.mxu0
    %3899 = vmatprep.mubr.f32.mxu0 %v3225
    %3900 = vmatmul.mubr.f32.gmra.mxu0 %v3209
    %v3901 = vpop.f32.mrf.mxu0
    %v3902 = vadd.f32 %v3757, %v3901
    %v3903 = vpop.f32.mrf.mxu0
    %3904 = vmatprep.mubr.f32.mxu0 %v3226
    %3905 = vmatmul.mubr.f32.gmra.mxu0 %v3210
    %v3906 = vpop.f32.mrf.mxu0
    %v3907 = vadd.f32 %v3762, %v3906
    %v3908 = vpop.f32.mrf.mxu0
    %3909 = vmatprep.mubr.f32.mxu0 %v3227
    %3910 = vmatmul.mubr.f32.gmra.mxu0 %v3211
    %v3911 = vpop.f32.mrf.mxu0
    %v3912 = vadd.f32 %v3767, %v3911
    %v3913 = vpop.f32.mrf.mxu0
    %3914 = vmatprep.mubr.f32.mxu0 %v3228
    %3915 = vmatmul.mubr.f32.gmra.mxu0 %v3212
    %v3916 = vpop.f32.mrf.mxu0
    %v3917 = vadd.f32 %v3772, %v3916
    %v3918 = vpop.f32.mrf.mxu0
    %3919 = vmatprep.mubr.f32.mxu0 %v3229
    %3920 = vmatmul.mubr.f32.gmra.mxu0 %v3213
    %v3921 = vpop.f32.mrf.mxu0
    %v3922 = vadd.f32 %v3777, %v3921
    %v3923 = vpop.f32.mrf.mxu0
    %3924 = vmatprep.mubr.f32.mxu0 %v3230
    %3925 = vmatmul.mubr.f32.gmra.mxu0 %v3214
    %v3926 = vpop.f32.mrf.mxu0
    %v3927 = vadd.f32 %v3782, %v3926
    %v3928 = vpop.f32.mrf.mxu0
    %3929 = vmatprep.mubr.f32.mxu0 %v3231
    %3930 = vmatmul.mubr.f32.gmra.mxu0 %v3215
    %v3931 = vpop.f32.mrf.mxu0
    %v3932 = vadd.f32 %v3787, %v3931
    %v3933 = vpop.f32.mrf.mxu0
    %3934 = vmatprep.mubr.f32.mxu0 %v3232
    %3935 = vmatmul.mubr.f32.gmra.mxu0 %v3216
    %v3936 = vpop.f32.mrf.mxu0
    %v3937 = vadd.f32 %v3792, %v3936
    %v3938 = vpop.f32.mrf.mxu0
    %3939 = vmatprep.mubr.f32.mxu0 %v3233
    %3940 = vmatmul.mubr.f32.gmra.mxu0 %v3217
    %v3941 = vpop.f32.mrf.mxu0
    %v3942 = vadd.f32 %v3797, %v3941
    %v3943 = vpop.f32.mrf.mxu0
    %3944 = vmatprep.mubr.f32.mxu0 %v3234
    %3945 = vmatmul.mubr.f32.gmra.mxu0 %v3218
    %v3946 = vpop.f32.mrf.mxu0
    %v3947 = vadd.f32 %v3802, %v3946
    %v3948 = vpop.f32.mrf.mxu0
    %3949 = vdwg.mxu0
    %v3950 = vmax.f32 %v3872, 0.0
    %v3951 = vmax.f32 %v3877, 0.0
    %v3952 = vmax.f32 %v3882, 0.0
    %v3953 = vmax.f32 %v3887, 0.0
    %v3954 = vmax.f32 %v3892, 0.0
    %v3955 = vmax.f32 %v3897, 0.0
    %v3956 = vmax.f32 %v3902, 0.0
    %v3957 = vmax.f32 %v3907, 0.0
    %v3958 = vmax.f32 %v3912, 0.0
    %v3959 = vmax.f32 %v3917, 0.0
    %v3960 = vmax.f32 %v3922, 0.0
    %v3961 = vmax.f32 %v3927, 0.0
    %v3962 = vmax.f32 %v3932, 0.0
    %v3963 = vmax.f32 %v3937, 0.0
    %v3964 = vmax.f32 %v3942, 0.0
    %v3965 = vmax.f32 %v3947, 0.0
    %3966 = vst [vmem:[#allocation3] sm:$0xff] %v3950
    %3967 = vst [vmem:[#allocation3 + $0x8] sm:$0xff] %v3951
    %3968 = vst [vmem:[#allocation3 + $0x10] sm:$0xff] %v3952
    %3969 = vst [vmem:[#allocation3 + $0x18] sm:$0xff] %v3953
    %3970 = vst [vmem:[#allocation3 + $0x20] sm:$0xff] %v3954
    %3971 = vst [vmem:[#allocation3 + $0x28] sm:$0xff] %v3955
    %3972 = vst [vmem:[#allocation3 + $0x30] sm:$0xff] %v3956
    %3973 = vst [vmem:[#allocation3 + $0x38] sm:$0xff] %v3957
    %3974 = vst [vmem:[#allocation3 + $0x40] sm:$0xff] %v3958
    %3975 = vst [vmem:[#allocation3 + $0x48] sm:$0xff] %v3959
    %3976 = vst [vmem:[#allocation3 + $0x50] sm:$0xff] %v3960
    %3977 = vst [vmem:[#allocation3 + $0x58] sm:$0xff] %v3961
    %3978 = vst [vmem:[#allocation3 + $0x60] sm:$0xff] %v3962
    %3979 = vst [vmem:[#allocation3 + $0x68] sm:$0xff] %v3963
    %3980 = vst [vmem:[#allocation3 + $0x70] sm:$0xff] %v3964
    %3981 = vst [vmem:[#allocation3 + $0x78] sm:$0x1] %v3965
    %v3982 = vld [vmem:[#allocation3] sm:$0xff]
    %v3983 = vld [vmem:[#allocation3 + $0x8] sm:$0xff]
    %v3984 = vld [vmem:[#allocation3 + $0x10] sm:$0xff]
    %v3985 = vld [vmem:[#allocation3 + $0x18] sm:$0xff]
    %v3986 = vld [vmem:[#allocation3 + $0x20] sm:$0xff]
    %v3987 = vld [vmem:[#allocation3 + $0x28] sm:$0xff]
    %v3988 = vld [vmem:[#allocation3 + $0x30] sm:$0xff]
    %v3989 = vld [vmem:[#allocation3 + $0x38] sm:$0xff]
    %v3990 = vld [vmem:[#allocation3 + $0x40] sm:$0xff]
    %v3991 = vld [vmem:[#allocation3 + $0x48] sm:$0xff]
    %v3992 = vld [vmem:[#allocation3 + $0x50] sm:$0xff]
    %v3993 = vld [vmem:[#allocation3 + $0x58] sm:$0xff]
    %v3994 = vld [vmem:[#allocation3 + $0x60] sm:$0xff]
    %v3995 = vld [vmem:[#allocation3 + $0x68] sm:$0xff]
    %v3996 = vld [vmem:[#allocation3 + $0x70] sm:$0x3]
    %v3997 = vld [vmem:[#allocation3 + $0x1] sm:$0xff]
    %v3998 = vld [vmem:[#allocation3 + $0x9] sm:$0xff]
    %v3999 = vld [vmem:[#allocation3 + $0x11] sm:$0xff]
    %v4000 = vld [vmem:[#allocation3 + $0x19] sm:$0xff]
    %v4001 = vld [vmem:[#allocation3 + $0x21] sm:$0xff]
    %v4002 = vld [vmem:[#allocation3 + $0x29] sm:$0xff]
    %v4003 = vld [vmem:[#allocation3 + $0x31] sm:$0xff]
    %v4004 = vld [vmem:[#allocation3 + $0x39] sm:$0xff]
    %v4005 = vld [vmem:[#allocation3 + $0x41] sm:$0xff]
    %v4006 = vld [vmem:[#allocation3 + $0x49] sm:$0xff]
    %v4007 = vld [vmem:[#allocation3 + $0x51] sm:$0xff]
    %v4008 = vld [vmem:[#allocation3 + $0x59] sm:$0xff]
    %v4009 = vld [vmem:[#allocation3 + $0x61] sm:$0xff]
    %v4010 = vld [vmem:[#allocation3 + $0x69] sm:$0xff]
    %v4011 = vld [vmem:[#allocation3 + $0x71] sm:$0x3]
    %v4012 = vld [vmem:[#allocation3 + $0x2] sm:$0xff]
    %v4013 = vld [vmem:[#allocation3 + $0xa] sm:$0xff]
    %v4014 = vld [vmem:[#allocation3 + $0x12] sm:$0xff]
    %v4015 = vld [vmem:[#allocation3 + $0x1a] sm:$0xff]
    %v4016 = vld [vmem:[#allocation3 + $0x22] sm:$0xff]
    %v4017 = vld [vmem:[#allocation3 + $0x2a] sm:$0xff]
    %v4018 = vld [vmem:[#allocation3 + $0x32] sm:$0xff]
    %v4019 = vld [vmem:[#allocation3 + $0x3a] sm:$0xff]
    %v4020 = vld [vmem:[#allocation3 + $0x42] sm:$0xff]
    %v4021 = vld [vmem:[#allocation3 + $0x4a] sm:$0xff]
    %v4022 = vld [vmem:[#allocation3 + $0x52] sm:$0xff]
    %v4023 = vld [vmem:[#allocation3 + $0x5a] sm:$0xff]
    %v4024 = vld [vmem:[#allocation3 + $0x62] sm:$0xff]
    %v4025 = vld [vmem:[#allocation3 + $0x6a] sm:$0xff]
    %v4026 = vld [vmem:[#allocation3 + $0x72] sm:$0x3]
    %v4027 = vld [vmem:[#allocation3 + $0x3] sm:$0xff]
    %v4028 = vld [vmem:[#allocation3 + $0xb] sm:$0xff]
    %v4029 = vld [vmem:[#allocation3 + $0x13] sm:$0xff]
    %v4030 = vld [vmem:[#allocation3 + $0x1b] sm:$0xff]
    %v4031 = vld [vmem:[#allocation3 + $0x23] sm:$0xff]
    %v4032 = vld [vmem:[#allocation3 + $0x2b] sm:$0xff]
    %v4033 = vld [vmem:[#allocation3 + $0x33] sm:$0xff]
    %v4034 = vld [vmem:[#allocation3 + $0x3b] sm:$0xff]
    %v4035 = vld [vmem:[#allocation3 + $0x43] sm:$0xff]
    %v4036 = vld [vmem:[#allocation3 + $0x4b] sm:$0xff]
    %v4037 = vld [vmem:[#allocation3 + $0x53] sm:$0xff]
    %v4038 = vld [vmem:[#allocation3 + $0x5b] sm:$0xff]
    %v4039 = vld [vmem:[#allocation3 + $0x63] sm:$0xff]
    %v4040 = vld [vmem:[#allocation3 + $0x6b] sm:$0xff]
    %v4041 = vld [vmem:[#allocation3 + $0x73] sm:$0x3]
    %v4042 = vld [vmem:[#allocation3 + $0x4] sm:$0xff]
    %v4043 = vld [vmem:[#allocation3 + $0xc] sm:$0xff]
    %v4044 = vld [vmem:[#allocation3 + $0x14] sm:$0xff]
    %v4045 = vld [vmem:[#allocation3 + $0x1c] sm:$0xff]
    %v4046 = vld [vmem:[#allocation3 + $0x24] sm:$0xff]
    %v4047 = vld [vmem:[#allocation3 + $0x2c] sm:$0xff]
    %v4048 = vld [vmem:[#allocation3 + $0x34] sm:$0xff]
    %v4049 = vld [vmem:[#allocation3 + $0x3c] sm:$0xff]
    %v4050 = vld [vmem:[#allocation3 + $0x44] sm:$0xff]
    %v4051 = vld [vmem:[#allocation3 + $0x4c] sm:$0xff]
    %v4052 = vld [vmem:[#allocation3 + $0x54] sm:$0xff]
    %v4053 = vld [vmem:[#allocation3 + $0x5c] sm:$0xff]
    %v4054 = vld [vmem:[#allocation3 + $0x64] sm:$0xff]
    %v4055 = vld [vmem:[#allocation3 + $0x6c] sm:$0xff]
    %v4056 = vld [vmem:[#allocation3 + $0x74] sm:$0x3]
    %v4057 = vld [vmem:[#allocation3 + $0x5] sm:$0xff]
    %v4058 = vld [vmem:[#allocation3 + $0xd] sm:$0xff]
    %v4059 = vld [vmem:[#allocation3 + $0x15] sm:$0xff]
    %v4060 = vld [vmem:[#allocation3 + $0x1d] sm:$0xff]
    %v4061 = vld [vmem:[#allocation3 + $0x25] sm:$0xff]
    %v4062 = vld [vmem:[#allocation3 + $0x2d] sm:$0xff]
    %v4063 = vld [vmem:[#allocation3 + $0x35] sm:$0xff]
    %v4064 = vld [vmem:[#allocation3 + $0x3d] sm:$0xff]
    %v4065 = vld [vmem:[#allocation3 + $0x45] sm:$0xff]
    %v4066 = vld [vmem:[#allocation3 + $0x4d] sm:$0xff]
    %v4067 = vld [vmem:[#allocation3 + $0x55] sm:$0xff]
    %v4068 = vld [vmem:[#allocation3 + $0x5d] sm:$0xff]
    %v4069 = vld [vmem:[#allocation3 + $0x65] sm:$0xff]
    %v4070 = vld [vmem:[#allocation3 + $0x6d] sm:$0xff]
    %v4071 = vld [vmem:[#allocation3 + $0x75] sm:$0x3]
    %v4072 = vld [vmem:[#allocation3 + $0x6] sm:$0xff]
    %v4073 = vld [vmem:[#allocation3 + $0xe] sm:$0xff]
    %v4074 = vld [vmem:[#allocation3 + $0x16] sm:$0xff]
    %v4075 = vld [vmem:[#allocation3 + $0x1e] sm:$0xff]
    %v4076 = vld [vmem:[#allocation3 + $0x26] sm:$0xff]
    %v4077 = vld [vmem:[#allocation3 + $0x2e] sm:$0xff]
    %v4078 = vld [vmem:[#allocation3 + $0x36] sm:$0xff]
    %v4079 = vld [vmem:[#allocation3 + $0x3e] sm:$0xff]
    %v4080 = vld [vmem:[#allocation3 + $0x46] sm:$0xff]
    %v4081 = vld [vmem:[#allocation3 + $0x4e] sm:$0xff]
    %v4082 = vld [vmem:[#allocation3 + $0x56] sm:$0xff]
    %v4083 = vld [vmem:[#allocation3 + $0x5e] sm:$0xff]
    %v4084 = vld [vmem:[#allocation3 + $0x66] sm:$0xff]
    %v4085 = vld [vmem:[#allocation3 + $0x6e] sm:$0xff]
    %v4086 = vld [vmem:[#allocation3 + $0x76] sm:$0x3]
    %v4087 = vld [vmem:[#allocation3 + $0x7] sm:$0xff]
    %v4088 = vld [vmem:[#allocation3 + $0xf] sm:$0xff]
    %v4089 = vld [vmem:[#allocation3 + $0x17] sm:$0xff]
    %v4090 = vld [vmem:[#allocation3 + $0x1f] sm:$0xff]
    %v4091 = vld [vmem:[#allocation3 + $0x27] sm:$0xff]
    %v4092 = vld [vmem:[#allocation3 + $0x2f] sm:$0xff]
    %v4093 = vld [vmem:[#allocation3 + $0x37] sm:$0xff]
    %v4094 = vld [vmem:[#allocation3 + $0x3f] sm:$0xff]
    %v4095 = vld [vmem:[#allocation3 + $0x47] sm:$0xff]
    %v4096 = vld [vmem:[#allocation3 + $0x4f] sm:$0xff]
    %v4097 = vld [vmem:[#allocation3 + $0x57] sm:$0xff]
    %v4098 = vld [vmem:[#allocation3 + $0x5f] sm:$0xff]
    %v4099 = vld [vmem:[#allocation3 + $0x67] sm:$0xff]
    %v4100 = vld [vmem:[#allocation3 + $0x6f] sm:$0xff]
    %v4101 = vld [vmem:[#allocation3 + $0x77] sm:$0x3]
    %v4102 = vld [vmem:[#allocation7] sm:$0xff]
    %v4103 = vld [vmem:[#allocation7 + $0x8] sm:$0xff]
    %v4104 = vld [vmem:[#allocation7 + $0x10] sm:$0xff]
    %v4105 = vld [vmem:[#allocation7 + $0x18] sm:$0xff]
    %v4106 = vld [vmem:[#allocation7 + $0x20] sm:$0xff]
    %v4107 = vld [vmem:[#allocation7 + $0x28] sm:$0xff]
    %v4108 = vld [vmem:[#allocation7 + $0x30] sm:$0xff]
    %v4109 = vld [vmem:[#allocation7 + $0x38] sm:$0xff]
    %v4110 = vld [vmem:[#allocation7 + $0x40] sm:$0xff]
    %v4111 = vld [vmem:[#allocation7 + $0x48] sm:$0xff]
    %v4112 = vld [vmem:[#allocation7 + $0x50] sm:$0xff]
    %v4113 = vld [vmem:[#allocation7 + $0x58] sm:$0xff]
    %v4114 = vld [vmem:[#allocation7 + $0x60] sm:$0xff]
    %v4115 = vld [vmem:[#allocation7 + $0x68] sm:$0xff]
    %v4116 = vld [vmem:[#allocation7 + $0x70] sm:$0xff]
    %v4117 = vld [vmem:[#allocation7 + $0x78] sm:$0xff]
    %v4118 = vld [vmem:[#allocation7 + $0x80] sm:$0xff]
    %v4119 = vld [vmem:[#allocation7 + $0x88] sm:$0xff]
    %v4120 = vld [vmem:[#allocation7 + $0x90] sm:$0xff]
    %v4121 = vld [vmem:[#allocation7 + $0x98] sm:$0xff]
    %v4122 = vld [vmem:[#allocation7 + $0xa0] sm:$0xff]
    %v4123 = vld [vmem:[#allocation7 + $0xa8] sm:$0xff]
    %v4124 = vld [vmem:[#allocation7 + $0xb0] sm:$0xff]
    %v4125 = vld [vmem:[#allocation7 + $0xb8] sm:$0xff]
    %v4126 = vld [vmem:[#allocation7 + $0xc0] sm:$0xff]
    %v4127 = vld [vmem:[#allocation7 + $0xc8] sm:$0xff]
    %v4128 = vld [vmem:[#allocation7 + $0xd0] sm:$0xff]
    %v4129 = vld [vmem:[#allocation7 + $0xd8] sm:$0xff]
    %v4130 = vld [vmem:[#allocation7 + $0xe0] sm:$0xff]
    %v4131 = vld [vmem:[#allocation7 + $0xe8] sm:$0xff]
    %v4132 = vld [vmem:[#allocation7 + $0xf0] sm:$0xff]
    %v4133 = vld [vmem:[#allocation7 + $0xf8] sm:$0xff]
    %v4134 = vld [vmem:[#allocation7 + $0x100] sm:$0xff]
    %v4135 = vld [vmem:[#allocation7 + $0x108] sm:$0xff]
    %v4136 = vld [vmem:[#allocation7 + $0x110] sm:$0xff]
    %v4137 = vld [vmem:[#allocation7 + $0x118] sm:$0xff]
    %v4138 = vld [vmem:[#allocation7 + $0x120] sm:$0xff]
    %v4139 = vld [vmem:[#allocation7 + $0x128] sm:$0xff]
    %v4140 = vld [vmem:[#allocation7 + $0x130] sm:$0xff]
    %v4141 = vld [vmem:[#allocation7 + $0x138] sm:$0xff]
    %v4142 = vld [vmem:[#allocation7 + $0x140] sm:$0xff]
    %v4143 = vld [vmem:[#allocation7 + $0x148] sm:$0xff]
    %v4144 = vld [vmem:[#allocation7 + $0x150] sm:$0xff]
    %v4145 = vld [vmem:[#allocation7 + $0x158] sm:$0xff]
    %v4146 = vld [vmem:[#allocation7 + $0x160] sm:$0xff]
    %v4147 = vld [vmem:[#allocation7 + $0x168] sm:$0xff]
    %v4148 = vld [vmem:[#allocation7 + $0x170] sm:$0xff]
    %v4149 = vld [vmem:[#allocation7 + $0x178] sm:$0xff]
    %v4150 = vld [vmem:[#allocation7 + $0x180] sm:$0xff]
    %v4151 = vld [vmem:[#allocation7 + $0x188] sm:$0xff]
    %v4152 = vld [vmem:[#allocation7 + $0x190] sm:$0xff]
    %v4153 = vld [vmem:[#allocation7 + $0x198] sm:$0xff]
    %v4154 = vld [vmem:[#allocation7 + $0x1a0] sm:$0xff]
    %v4155 = vld [vmem:[#allocation7 + $0x1a8] sm:$0xff]
    %v4156 = vld [vmem:[#allocation7 + $0x1b0] sm:$0xff]
    %v4157 = vld [vmem:[#allocation7 + $0x1b8] sm:$0xff]
    %v4158 = vld [vmem:[#allocation7 + $0x1c0] sm:$0xff]
    %v4159 = vld [vmem:[#allocation7 + $0x1c8] sm:$0xff]
    %v4160 = vld [vmem:[#allocation7 + $0x1d0] sm:$0xff]
    %v4161 = vld [vmem:[#allocation7 + $0x1d8] sm:$0xff]
    %v4162 = vld [vmem:[#allocation7 + $0x1e0] sm:$0xff]
    %v4163 = vld [vmem:[#allocation7 + $0x1e8] sm:$0xff]
    %v4164 = vld [vmem:[#allocation7 + $0x1f0] sm:$0xff]
    %v4165 = vld [vmem:[#allocation7 + $0x1f8] sm:$0xff]
    %v4166 = vld [vmem:[#allocation7 + $0x200] sm:$0xff]
    %v4167 = vld [vmem:[#allocation7 + $0x208] sm:$0xff]
    %v4168 = vld [vmem:[#allocation7 + $0x210] sm:$0xff]
    %v4169 = vld [vmem:[#allocation7 + $0x218] sm:$0xff]
    %v4170 = vld [vmem:[#allocation7 + $0x220] sm:$0xff]
    %v4171 = vld [vmem:[#allocation7 + $0x228] sm:$0xff]
    %v4172 = vld [vmem:[#allocation7 + $0x230] sm:$0xff]
    %v4173 = vld [vmem:[#allocation7 + $0x238] sm:$0xff]
    %v4174 = vld [vmem:[#allocation7 + $0x240] sm:$0xff]
    %v4175 = vld [vmem:[#allocation7 + $0x248] sm:$0xff]
    %v4176 = vld [vmem:[#allocation7 + $0x250] sm:$0xff]
    %v4177 = vld [vmem:[#allocation7 + $0x258] sm:$0xff]
    %v4178 = vld [vmem:[#allocation7 + $0x260] sm:$0xff]
    %v4179 = vld [vmem:[#allocation7 + $0x268] sm:$0xff]
    %v4180 = vld [vmem:[#allocation7 + $0x270] sm:$0xff]
    %v4181 = vld [vmem:[#allocation7 + $0x278] sm:$0xff]
    %v4182 = vld [vmem:[#allocation7 + $0x280] sm:$0xff]
    %v4183 = vld [vmem:[#allocation7 + $0x288] sm:$0xff]
    %v4184 = vld [vmem:[#allocation7 + $0x290] sm:$0xff]
    %v4185 = vld [vmem:[#allocation7 + $0x298] sm:$0xff]
    %v4186 = vld [vmem:[#allocation7 + $0x2a0] sm:$0xff]
    %v4187 = vld [vmem:[#allocation7 + $0x2a8] sm:$0xff]
    %v4188 = vld [vmem:[#allocation7 + $0x2b0] sm:$0xff]
    %v4189 = vld [vmem:[#allocation7 + $0x2b8] sm:$0xff]
    %v4190 = vld [vmem:[#allocation7 + $0x2c0] sm:$0xff]
    %v4191 = vld [vmem:[#allocation7 + $0x2c8] sm:$0xff]
    %v4192 = vld [vmem:[#allocation7 + $0x2d0] sm:$0xff]
    %v4193 = vld [vmem:[#allocation7 + $0x2d8] sm:$0xff]
    %v4194 = vld [vmem:[#allocation7 + $0x2e0] sm:$0xff]
    %v4195 = vld [vmem:[#allocation7 + $0x2e8] sm:$0xff]
    %v4196 = vld [vmem:[#allocation7 + $0x2f0] sm:$0xff]
    %v4197 = vld [vmem:[#allocation7 + $0x2f8] sm:$0xff]
    %v4198 = vld [vmem:[#allocation7 + $0x300] sm:$0xff]
    %v4199 = vld [vmem:[#allocation7 + $0x308] sm:$0xff]
    %v4200 = vld [vmem:[#allocation7 + $0x310] sm:$0xff]
    %v4201 = vld [vmem:[#allocation7 + $0x318] sm:$0xff]
    %v4202 = vld [vmem:[#allocation7 + $0x320] sm:$0xff]
    %v4203 = vld [vmem:[#allocation7 + $0x328] sm:$0xff]
    %v4204 = vld [vmem:[#allocation7 + $0x330] sm:$0xff]
    %v4205 = vld [vmem:[#allocation7 + $0x338] sm:$0xff]
    %v4206 = vld [vmem:[#allocation7 + $0x340] sm:$0xff]
    %v4207 = vld [vmem:[#allocation7 + $0x348] sm:$0xff]
    %v4208 = vld [vmem:[#allocation7 + $0x350] sm:$0xff]
    %v4209 = vld [vmem:[#allocation7 + $0x358] sm:$0xff]
    %v4210 = vld [vmem:[#allocation7 + $0x360] sm:$0xff]
    %v4211 = vld [vmem:[#allocation7 + $0x368] sm:$0xff]
    %v4212 = vld [vmem:[#allocation7 + $0x370] sm:$0xff]
    %v4213 = vld [vmem:[#allocation7 + $0x378] sm:$0xff]
    %v4214 = vld [vmem:[#allocation7 + $0x380] sm:$0xff]
    %v4215 = vld [vmem:[#allocation7 + $0x388] sm:$0xff]
    %v4216 = vld [vmem:[#allocation7 + $0x390] sm:$0xff]
    %v4217 = vld [vmem:[#allocation7 + $0x398] sm:$0xff]
    %v4218 = vld [vmem:[#allocation7 + $0x3a0] sm:$0xff]
    %v4219 = vld [vmem:[#allocation7 + $0x3a8] sm:$0xff]
    %v4220 = vld [vmem:[#allocation7 + $0x3b0] sm:$0xff]
    %v4221 = vld [vmem:[#allocation7 + $0x3b8] sm:$0xff]
    %v4222 = vld [vmem:[#allocation7 + $0x3c0] sm:$0xff]
    %v4223 = vld [vmem:[#allocation7 + $0x3c8] sm:$0xff]
    %v4224 = vld [vmem:[#allocation7 + $0x3d0] sm:$0xff]
    %v4225 = vld [vmem:[#allocation7 + $0x3d8] sm:$0xff]
    %v4226 = vld [vmem:[#allocation7 + $0x3e0] sm:$0xff]
    %v4227 = vld [vmem:[#allocation7 + $0x3e8] sm:$0xff]
    %v4228 = vld [vmem:[#allocation7 + $0x3f0] sm:$0xff]
    %v4229 = vld [vmem:[#allocation7 + $0x3f8] sm:$0xff]
    %v4230 = vld [vmem:[%s5] sm:$0x1]
    %v4232 = vlaneseq
    %v4233 = vshrl.u32 %v4232, 7
    %v4234 = vsub.s32 0, %v4233
    %v4235 = vrot.slane %v4230, %v4234
    %4237 = vmatprep.subr.mxu0 0.0
    %4238 = vmatpush1.msra.mxu0 %v4117
    %4239 = vmatprep.subr.mxu0 0.0
    %4240 = vmatpush1.msra.mxu0 %v4116
    %4241 = vmatprep.subr.mxu0 0.0
    %4242 = vmatpush1.msra.mxu0 %v4115
    %4243 = vmatprep.subr.mxu0 0.0
    %4244 = vmatpush1.msra.mxu0 %v4114
    %4245 = vmatprep.subr.mxu0 0.0
    %4246 = vmatpush1.msra.mxu0 %v4113
    %4247 = vmatprep.subr.mxu0 0.0
    %4248 = vmatpush1.msra.mxu0 %v4112
    %4249 = vmatprep.subr.mxu0 0.0
    %4250 = vmatpush1.msra.mxu0 %v4111
    %4251 = vmatprep.subr.mxu0 0.0
    %4252 = vmatpush1.msra.mxu0 %v4110
    %4253 = vmatprep.subr.mxu0 0.0
    %4254 = vmatpush1.msra.mxu0 %v4109
    %4255 = vmatprep.subr.mxu0 0.0
    %4256 = vmatpush1.msra.mxu0 %v4108
    %4257 = vmatprep.subr.mxu0 0.0
    %4258 = vmatpush1.msra.mxu0 %v4107
    %4259 = vmatprep.subr.mxu0 0.0
    %4260 = vmatpush1.msra.mxu0 %v4106
    %4261 = vmatprep.subr.mxu0 0.0
    %4262 = vmatpush1.msra.mxu0 %v4105
    %4263 = vmatprep.subr.mxu0 0.0
    %4264 = vmatpush1.msra.mxu0 %v4104
    %4265 = vmatprep.subr.mxu0 0.0
    %4266 = vmatpush1.msra.mxu0 %v4103
    %4267 = vmatprep.subr.mxu0 0.0
    %4268 = vmatpush1.msra.mxu0 %v4102
    %4269 = vmatprep.subr.mxu0 0.0
    %4270 = vmatpush2.msra.mxu0 %v4133
    %4271 = vmatprep.subr.mxu0 0.0
    %4272 = vmatpush2.msra.mxu0 %v4132
    %4273 = vmatprep.subr.mxu0 0.0
    %4274 = vmatpush2.msra.mxu0 %v4131
    %4275 = vmatprep.subr.mxu0 0.0
    %4276 = vmatpush2.msra.mxu0 %v4130
    %4277 = vmatprep.subr.mxu0 0.0
    %4278 = vmatpush2.msra.mxu0 %v4129
    %4279 = vmatprep.subr.mxu0 0.0
    %4280 = vmatpush2.msra.mxu0 %v4128
    %4281 = vmatprep.subr.mxu0 0.0
    %4282 = vmatpush2.msra.mxu0 %v4127
    %4283 = vmatprep.subr.mxu0 0.0
    %4284 = vmatpush2.msra.mxu0 %v4126
    %4285 = vmatprep.subr.mxu0 0.0
    %4286 = vmatpush2.msra.mxu0 %v4125
    %4287 = vmatprep.subr.mxu0 0.0
    %4288 = vmatpush2.msra.mxu0 %v4124
    %4289 = vmatprep.subr.mxu0 0.0
    %4290 = vmatpush2.msra.mxu0 %v4123
    %4291 = vmatprep.subr.mxu0 0.0
    %4292 = vmatpush2.msra.mxu0 %v4122
    %4293 = vmatprep.subr.mxu0 0.0
    %4294 = vmatpush2.msra.mxu0 %v4121
    %4295 = vmatprep.subr.mxu0 0.0
    %4296 = vmatpush2.msra.mxu0 %v4120
    %4297 = vmatprep.subr.mxu0 0.0
    %4298 = vmatpush2.msra.mxu0 %v4119
    %4299 = vmatprep.subr.mxu0 0.0
    %4300 = vmatpush2.msra.mxu0 %v4118
    %4301 = vmatprep.mubr.f32.mxu0 %v3997
    %4302 = vmatmul.mubr.f32.gmra.mxu0 %v3982
    %v4303 = vpop.f32.mrf.mxu0
    %v4304 = vadd.f32 %v4235, %v4303
    %v4305 = vpop.f32.mrf.mxu0
    %4306 = vmatprep.mubr.f32.mxu0 %v3998
    %4307 = vmatmul.mubr.f32.gmra.mxu0 %v3983
    %v4308 = vpop.f32.mrf.mxu0
    %v4309 = vadd.f32 %v4235, %v4308
    %v4310 = vpop.f32.mrf.mxu0
    %4311 = vmatprep.mubr.f32.mxu0 %v3999
    %4312 = vmatmul.mubr.f32.gmra.mxu0 %v3984
    %v4313 = vpop.f32.mrf.mxu0
    %v4314 = vadd.f32 %v4235, %v4313
    %v4315 = vpop.f32.mrf.mxu0
    %4316 = vmatprep.mubr.f32.mxu0 %v4000
    %4317 = vmatmul.mubr.f32.gmra.mxu0 %v3985
    %v4318 = vpop.f32.mrf.mxu0
    %v4319 = vadd.f32 %v4235, %v4318
    %v4320 = vpop.f32.mrf.mxu0
    %4321 = vmatprep.mubr.f32.mxu0 %v4001
    %4322 = vmatmul.mubr.f32.gmra.mxu0 %v3986
    %v4323 = vpop.f32.mrf.mxu0
    %v4324 = vadd.f32 %v4235, %v4323
    %v4325 = vpop.f32.mrf.mxu0
    %4326 = vmatprep.mubr.f32.mxu0 %v4002
    %4327 = vmatmul.mubr.f32.gmra.mxu0 %v3987
    %v4328 = vpop.f32.mrf.mxu0
    %v4329 = vadd.f32 %v4235, %v4328
    %v4330 = vpop.f32.mrf.mxu0
    %4331 = vmatprep.mubr.f32.mxu0 %v4003
    %4332 = vmatmul.mubr.f32.gmra.mxu0 %v3988
    %v4333 = vpop.f32.mrf.mxu0
    %v4334 = vadd.f32 %v4235, %v4333
    %v4335 = vpop.f32.mrf.mxu0
    %4336 = vmatprep.mubr.f32.mxu0 %v4004
    %4337 = vmatmul.mubr.f32.gmra.mxu0 %v3989
    %v4338 = vpop.f32.mrf.mxu0
    %v4339 = vadd.f32 %v4235, %v4338
    %v4340 = vpop.f32.mrf.mxu0
    %4341 = vmatprep.mubr.f32.mxu0 %v4005
    %4342 = vmatmul.mubr.f32.gmra.mxu0 %v3990
    %v4343 = vpop.f32.mrf.mxu0
    %v4344 = vadd.f32 %v4235, %v4343
    %v4345 = vpop.f32.mrf.mxu0
    %4346 = vmatprep.mubr.f32.mxu0 %v4006
    %4347 = vmatmul.mubr.f32.gmra.mxu0 %v3991
    %v4348 = vpop.f32.mrf.mxu0
    %v4349 = vadd.f32 %v4235, %v4348
    %v4350 = vpop.f32.mrf.mxu0
    %4351 = vmatprep.mubr.f32.mxu0 %v4007
    %4352 = vmatmul.mubr.f32.gmra.mxu0 %v3992
    %v4353 = vpop.f32.mrf.mxu0
    %v4354 = vadd.f32 %v4235, %v4353
    %v4355 = vpop.f32.mrf.mxu0
    %4356 = vmatprep.mubr.f32.mxu0 %v4008
    %4357 = vmatmul.mubr.f32.gmra.mxu0 %v3993
    %v4358 = vpop.f32.mrf.mxu0
    %v4359 = vadd.f32 %v4235, %v4358
    %v4360 = vpop.f32.mrf.mxu0
    %4361 = vmatprep.mubr.f32.mxu0 %v4009
    %4362 = vmatmul.mubr.f32.gmra.mxu0 %v3994
    %v4363 = vpop.f32.mrf.mxu0
    %v4364 = vadd.f32 %v4235, %v4363
    %v4365 = vpop.f32.mrf.mxu0
    %4366 = vmatprep.mubr.f32.mxu0 %v4010
    %4367 = vmatmul.mubr.f32.gmra.mxu0 %v3995
    %v4368 = vpop.f32.mrf.mxu0
    %v4369 = vadd.f32 %v4235, %v4368
    %v4370 = vpop.f32.mrf.mxu0
    %4371 = vmatprep.mubr.f32.mxu0 %v4011
    %4372 = vmatmul.mubr.f32.gmra.mxu0 %v3996
    %v4373 = vpop.f32.mrf.mxu0
    %v4374 = vadd.f32 %v4235, %v4373
    %v4375 = vpop.f32.mrf.mxu0
    %4376 = vdwg.mxu0
    %4377 = vmatprep.subr.mxu0 0.0
    %4378 = vmatpush1.msra.mxu0 %v4149
    %4379 = vmatprep.subr.mxu0 0.0
    %4380 = vmatpush1.msra.mxu0 %v4148
    %4381 = vmatprep.subr.mxu0 0.0
    %4382 = vmatpush1.msra.mxu0 %v4147
    %4383 = vmatprep.subr.mxu0 0.0
    %4384 = vmatpush1.msra.mxu0 %v4146
    %4385 = vmatprep.subr.mxu0 0.0
    %4386 = vmatpush1.msra.mxu0 %v4145
    %4387 = vmatprep.subr.mxu0 0.0
    %4388 = vmatpush1.msra.mxu0 %v4144
    %4389 = vmatprep.subr.mxu0 0.0
    %4390 = vmatpush1.msra.mxu0 %v4143
    %4391 = vmatprep.subr.mxu0 0.0
    %4392 = vmatpush1.msra.mxu0 %v4142
    %4393 = vmatprep.subr.mxu0 0.0
    %4394 = vmatpush1.msra.mxu0 %v4141
    %4395 = vmatprep.subr.mxu0 0.0
    %4396 = vmatpush1.msra.mxu0 %v4140
    %4397 = vmatprep.subr.mxu0 0.0
    %4398 = vmatpush1.msra.mxu0 %v4139
    %4399 = vmatprep.subr.mxu0 0.0
    %4400 = vmatpush1.msra.mxu0 %v4138
    %4401 = vmatprep.subr.mxu0 0.0
    %4402 = vmatpush1.msra.mxu0 %v4137
    %4403 = vmatprep.subr.mxu0 0.0
    %4404 = vmatpush1.msra.mxu0 %v4136
    %4405 = vmatprep.subr.mxu0 0.0
    %4406 = vmatpush1.msra.mxu0 %v4135
    %4407 = vmatprep.subr.mxu0 0.0
    %4408 = vmatpush1.msra.mxu0 %v4134
    %4409 = vmatprep.subr.mxu0 0.0
    %4410 = vmatpush2.msra.mxu0 %v4165
    %4411 = vmatprep.subr.mxu0 0.0
    %4412 = vmatpush2.msra.mxu0 %v4164
    %4413 = vmatprep.subr.mxu0 0.0
    %4414 = vmatpush2.msra.mxu0 %v4163
    %4415 = vmatprep.subr.mxu0 0.0
    %4416 = vmatpush2.msra.mxu0 %v4162
    %4417 = vmatprep.subr.mxu0 0.0
    %4418 = vmatpush2.msra.mxu0 %v4161
    %4419 = vmatprep.subr.mxu0 0.0
    %4420 = vmatpush2.msra.mxu0 %v4160
    %4421 = vmatprep.subr.mxu0 0.0
    %4422 = vmatpush2.msra.mxu0 %v4159
    %4423 = vmatprep.subr.mxu0 0.0
    %4424 = vmatpush2.msra.mxu0 %v4158
    %4425 = vmatprep.subr.mxu0 0.0
    %4426 = vmatpush2.msra.mxu0 %v4157
    %4427 = vmatprep.subr.mxu0 0.0
    %4428 = vmatpush2.msra.mxu0 %v4156
    %4429 = vmatprep.subr.mxu0 0.0
    %4430 = vmatpush2.msra.mxu0 %v4155
    %4431 = vmatprep.subr.mxu0 0.0
    %4432 = vmatpush2.msra.mxu0 %v4154
    %4433 = vmatprep.subr.mxu0 0.0
    %4434 = vmatpush2.msra.mxu0 %v4153
    %4435 = vmatprep.subr.mxu0 0.0
    %4436 = vmatpush2.msra.mxu0 %v4152
    %4437 = vmatprep.subr.mxu0 0.0
    %4438 = vmatpush2.msra.mxu0 %v4151
    %4439 = vmatprep.subr.mxu0 0.0
    %4440 = vmatpush2.msra.mxu0 %v4150
    %4441 = vmatprep.mubr.f32.mxu0 %v4027
    %4442 = vmatmul.mubr.f32.gmra.mxu0 %v4012
    %v4443 = vpop.f32.mrf.mxu0
    %v4444 = vadd.f32 %v4304, %v4443
    %v4445 = vpop.f32.mrf.mxu0
    %4446 = vmatprep.mubr.f32.mxu0 %v4028
    %4447 = vmatmul.mubr.f32.gmra.mxu0 %v4013
    %v4448 = vpop.f32.mrf.mxu0
    %v4449 = vadd.f32 %v4309, %v4448
    %v4450 = vpop.f32.mrf.mxu0
    %4451 = vmatprep.mubr.f32.mxu0 %v4029
    %4452 = vmatmul.mubr.f32.gmra.mxu0 %v4014
    %v4453 = vpop.f32.mrf.mxu0
    %v4454 = vadd.f32 %v4314, %v4453
    %v4455 = vpop.f32.mrf.mxu0
    %4456 = vmatprep.mubr.f32.mxu0 %v4030
    %4457 = vmatmul.mubr.f32.gmra.mxu0 %v4015
    %v4458 = vpop.f32.mrf.mxu0
    %v4459 = vadd.f32 %v4319, %v4458
    %v4460 = vpop.f32.mrf.mxu0
    %4461 = vmatprep.mubr.f32.mxu0 %v4031
    %4462 = vmatmul.mubr.f32.gmra.mxu0 %v4016
    %v4463 = vpop.f32.mrf.mxu0
    %v4464 = vadd.f32 %v4324, %v4463
    %v4465 = vpop.f32.mrf.mxu0
    %4466 = vmatprep.mubr.f32.mxu0 %v4032
    %4467 = vmatmul.mubr.f32.gmra.mxu0 %v4017
    %v4468 = vpop.f32.mrf.mxu0
    %v4469 = vadd.f32 %v4329, %v4468
    %v4470 = vpop.f32.mrf.mxu0
    %4471 = vmatprep.mubr.f32.mxu0 %v4033
    %4472 = vmatmul.mubr.f32.gmra.mxu0 %v4018
    %v4473 = vpop.f32.mrf.mxu0
    %v4474 = vadd.f32 %v4334, %v4473
    %v4475 = vpop.f32.mrf.mxu0
    %4476 = vmatprep.mubr.f32.mxu0 %v4034
    %4477 = vmatmul.mubr.f32.gmra.mxu0 %v4019
    %v4478 = vpop.f32.mrf.mxu0
    %v4479 = vadd.f32 %v4339, %v4478
    %v4480 = vpop.f32.mrf.mxu0
    %4481 = vmatprep.mubr.f32.mxu0 %v4035
    %4482 = vmatmul.mubr.f32.gmra.mxu0 %v4020
    %v4483 = vpop.f32.mrf.mxu0
    %v4484 = vadd.f32 %v4344, %v4483
    %v4485 = vpop.f32.mrf.mxu0
    %4486 = vmatprep.mubr.f32.mxu0 %v4036
    %4487 = vmatmul.mubr.f32.gmra.mxu0 %v4021
    %v4488 = vpop.f32.mrf.mxu0
    %v4489 = vadd.f32 %v4349, %v4488
    %v4490 = vpop.f32.mrf.mxu0
    %4491 = vmatprep.mubr.f32.mxu0 %v4037
    %4492 = vmatmul.mubr.f32.gmra.mxu0 %v4022
    %v4493 = vpop.f32.mrf.mxu0
    %v4494 = vadd.f32 %v4354, %v4493
    %v4495 = vpop.f32.mrf.mxu0
    %4496 = vmatprep.mubr.f32.mxu0 %v4038
    %4497 = vmatmul.mubr.f32.gmra.mxu0 %v4023
    %v4498 = vpop.f32.mrf.mxu0
    %v4499 = vadd.f32 %v4359, %v4498
    %v4500 = vpop.f32.mrf.mxu0
    %4501 = vmatprep.mubr.f32.mxu0 %v4039
    %4502 = vmatmul.mubr.f32.gmra.mxu0 %v4024
    %v4503 = vpop.f32.mrf.mxu0
    %v4504 = vadd.f32 %v4364, %v4503
    %v4505 = vpop.f32.mrf.mxu0
    %4506 = vmatprep.mubr.f32.mxu0 %v4040
    %4507 = vmatmul.mubr.f32.gmra.mxu0 %v4025
    %v4508 = vpop.f32.mrf.mxu0
    %v4509 = vadd.f32 %v4369, %v4508
    %v4510 = vpop.f32.mrf.mxu0
    %4511 = vmatprep.mubr.f32.mxu0 %v4041
    %4512 = vmatmul.mubr.f32.gmra.mxu0 %v4026
    %v4513 = vpop.f32.mrf.mxu0
    %v4514 = vadd.f32 %v4374, %v4513
    %v4515 = vpop.f32.mrf.mxu0
    %4516 = vdwg.mxu0
    %4517 = vmatprep.subr.mxu0 0.0
    %4518 = vmatpush1.msra.mxu0 %v4181
    %4519 = vmatprep.subr.mxu0 0.0
    %4520 = vmatpush1.msra.mxu0 %v4180
    %4521 = vmatprep.subr.mxu0 0.0
    %4522 = vmatpush1.msra.mxu0 %v4179
    %4523 = vmatprep.subr.mxu0 0.0
    %4524 = vmatpush1.msra.mxu0 %v4178
    %4525 = vmatprep.subr.mxu0 0.0
    %4526 = vmatpush1.msra.mxu0 %v4177
    %4527 = vmatprep.subr.mxu0 0.0
    %4528 = vmatpush1.msra.mxu0 %v4176
    %4529 = vmatprep.subr.mxu0 0.0
    %4530 = vmatpush1.msra.mxu0 %v4175
    %4531 = vmatprep.subr.mxu0 0.0
    %4532 = vmatpush1.msra.mxu0 %v4174
    %4533 = vmatprep.subr.mxu0 0.0
    %4534 = vmatpush1.msra.mxu0 %v4173
    %4535 = vmatprep.subr.mxu0 0.0
    %4536 = vmatpush1.msra.mxu0 %v4172
    %4537 = vmatprep.subr.mxu0 0.0
    %4538 = vmatpush1.msra.mxu0 %v4171
    %4539 = vmatprep.subr.mxu0 0.0
    %4540 = vmatpush1.msra.mxu0 %v4170
    %4541 = vmatprep.subr.mxu0 0.0
    %4542 = vmatpush1.msra.mxu0 %v4169
    %4543 = vmatprep.subr.mxu0 0.0
    %4544 = vmatpush1.msra.mxu0 %v4168
    %4545 = vmatprep.subr.mxu0 0.0
    %4546 = vmatpush1.msra.mxu0 %v4167
    %4547 = vmatprep.subr.mxu0 0.0
    %4548 = vmatpush1.msra.mxu0 %v4166
    %4549 = vmatprep.subr.mxu0 0.0
    %4550 = vmatpush2.msra.mxu0 %v4197
    %4551 = vmatprep.subr.mxu0 0.0
    %4552 = vmatpush2.msra.mxu0 %v4196
    %4553 = vmatprep.subr.mxu0 0.0
    %4554 = vmatpush2.msra.mxu0 %v4195
    %4555 = vmatprep.subr.mxu0 0.0
    %4556 = vmatpush2.msra.mxu0 %v4194
    %4557 = vmatprep.subr.mxu0 0.0
    %4558 = vmatpush2.msra.mxu0 %v4193
    %4559 = vmatprep.subr.mxu0 0.0
    %4560 = vmatpush2.msra.mxu0 %v4192
    %4561 = vmatprep.subr.mxu0 0.0
    %4562 = vmatpush2.msra.mxu0 %v4191
    %4563 = vmatprep.subr.mxu0 0.0
    %4564 = vmatpush2.msra.mxu0 %v4190
    %4565 = vmatprep.subr.mxu0 0.0
    %4566 = vmatpush2.msra.mxu0 %v4189
    %4567 = vmatprep.subr.mxu0 0.0
    %4568 = vmatpush2.msra.mxu0 %v4188
    %4569 = vmatprep.subr.mxu0 0.0
    %4570 = vmatpush2.msra.mxu0 %v4187
    %4571 = vmatprep.subr.mxu0 0.0
    %4572 = vmatpush2.msra.mxu0 %v4186
    %4573 = vmatprep.subr.mxu0 0.0
    %4574 = vmatpush2.msra.mxu0 %v4185
    %4575 = vmatprep.subr.mxu0 0.0
    %4576 = vmatpush2.msra.mxu0 %v4184
    %4577 = vmatprep.subr.mxu0 0.0
    %4578 = vmatpush2.msra.mxu0 %v4183
    %4579 = vmatprep.subr.mxu0 0.0
    %4580 = vmatpush2.msra.mxu0 %v4182
    %4581 = vmatprep.mubr.f32.mxu0 %v4057
    %4582 = vmatmul.mubr.f32.gmra.mxu0 %v4042
    %v4583 = vpop.f32.mrf.mxu0
    %v4584 = vadd.f32 %v4444, %v4583
    %v4585 = vpop.f32.mrf.mxu0
    %4586 = vmatprep.mubr.f32.mxu0 %v4058
    %4587 = vmatmul.mubr.f32.gmra.mxu0 %v4043
    %v4588 = vpop.f32.mrf.mxu0
    %v4589 = vadd.f32 %v4449, %v4588
    %v4590 = vpop.f32.mrf.mxu0
    %4591 = vmatprep.mubr.f32.mxu0 %v4059
    %4592 = vmatmul.mubr.f32.gmra.mxu0 %v4044
    %v4593 = vpop.f32.mrf.mxu0
    %v4594 = vadd.f32 %v4454, %v4593
    %v4595 = vpop.f32.mrf.mxu0
    %4596 = vmatprep.mubr.f32.mxu0 %v4060
    %4597 = vmatmul.mubr.f32.gmra.mxu0 %v4045
    %v4598 = vpop.f32.mrf.mxu0
    %v4599 = vadd.f32 %v4459, %v4598
    %v4600 = vpop.f32.mrf.mxu0
    %4601 = vmatprep.mubr.f32.mxu0 %v4061
    %4602 = vmatmul.mubr.f32.gmra.mxu0 %v4046
    %v4603 = vpop.f32.mrf.mxu0
    %v4604 = vadd.f32 %v4464, %v4603
    %v4605 = vpop.f32.mrf.mxu0
    %4606 = vmatprep.mubr.f32.mxu0 %v4062
    %4607 = vmatmul.mubr.f32.gmra.mxu0 %v4047
    %v4608 = vpop.f32.mrf.mxu0
    %v4609 = vadd.f32 %v4469, %v4608
    %v4610 = vpop.f32.mrf.mxu0
    %4611 = vmatprep.mubr.f32.mxu0 %v4063
    %4612 = vmatmul.mubr.f32.gmra.mxu0 %v4048
    %v4613 = vpop.f32.mrf.mxu0
    %v4614 = vadd.f32 %v4474, %v4613
    %v4615 = vpop.f32.mrf.mxu0
    %4616 = vmatprep.mubr.f32.mxu0 %v4064
    %4617 = vmatmul.mubr.f32.gmra.mxu0 %v4049
    %v4618 = vpop.f32.mrf.mxu0
    %v4619 = vadd.f32 %v4479, %v4618
    %v4620 = vpop.f32.mrf.mxu0
    %4621 = vmatprep.mubr.f32.mxu0 %v4065
    %4622 = vmatmul.mubr.f32.gmra.mxu0 %v4050
    %v4623 = vpop.f32.mrf.mxu0
    %v4624 = vadd.f32 %v4484, %v4623
    %v4625 = vpop.f32.mrf.mxu0
    %4626 = vmatprep.mubr.f32.mxu0 %v4066
    %4627 = vmatmul.mubr.f32.gmra.mxu0 %v4051
    %v4628 = vpop.f32.mrf.mxu0
    %v4629 = vadd.f32 %v4489, %v4628
    %v4630 = vpop.f32.mrf.mxu0
    %4631 = vmatprep.mubr.f32.mxu0 %v4067
    %4632 = vmatmul.mubr.f32.gmra.mxu0 %v4052
    %v4633 = vpop.f32.mrf.mxu0
    %v4634 = vadd.f32 %v4494, %v4633
    %v4635 = vpop.f32.mrf.mxu0
    %4636 = vmatprep.mubr.f32.mxu0 %v4068
    %4637 = vmatmul.mubr.f32.gmra.mxu0 %v4053
    %v4638 = vpop.f32.mrf.mxu0
    %v4639 = vadd.f32 %v4499, %v4638
    %v4640 = vpop.f32.mrf.mxu0
    %4641 = vmatprep.mubr.f32.mxu0 %v4069
    %4642 = vmatmul.mubr.f32.gmra.mxu0 %v4054
    %v4643 = vpop.f32.mrf.mxu0
    %v4644 = vadd.f32 %v4504, %v4643
    %v4645 = vpop.f32.mrf.mxu0
    %4646 = vmatprep.mubr.f32.mxu0 %v4070
    %4647 = vmatmul.mubr.f32.gmra.mxu0 %v4055
    %v4648 = vpop.f32.mrf.mxu0
    %v4649 = vadd.f32 %v4509, %v4648
    %v4650 = vpop.f32.mrf.mxu0
    %4651 = vmatprep.mubr.f32.mxu0 %v4071
    %4652 = vmatmul.mubr.f32.gmra.mxu0 %v4056
    %v4653 = vpop.f32.mrf.mxu0
    %v4654 = vadd.f32 %v4514, %v4653
    %v4655 = vpop.f32.mrf.mxu0
    %4656 = vdwg.mxu0
    %4657 = vmatprep.subr.mxu0 0.0
    %4658 = vmatpush1.msra.mxu0 %v4213
    %4659 = vmatprep.subr.mxu0 0.0
    %4660 = vmatpush1.msra.mxu0 %v4212
    %4661 = vmatprep.subr.mxu0 0.0
    %4662 = vmatpush1.msra.mxu0 %v4211
    %4663 = vmatprep.subr.mxu0 0.0
    %4664 = vmatpush1.msra.mxu0 %v4210
    %4665 = vmatprep.subr.mxu0 0.0
    %4666 = vmatpush1.msra.mxu0 %v4209
    %4667 = vmatprep.subr.mxu0 0.0
    %4668 = vmatpush1.msra.mxu0 %v4208
    %4669 = vmatprep.subr.mxu0 0.0
    %4670 = vmatpush1.msra.mxu0 %v4207
    %4671 = vmatprep.subr.mxu0 0.0
    %4672 = vmatpush1.msra.mxu0 %v4206
    %4673 = vmatprep.subr.mxu0 0.0
    %4674 = vmatpush1.msra.mxu0 %v4205
    %4675 = vmatprep.subr.mxu0 0.0
    %4676 = vmatpush1.msra.mxu0 %v4204
    %4677 = vmatprep.subr.mxu0 0.0
    %4678 = vmatpush1.msra.mxu0 %v4203
    %4679 = vmatprep.subr.mxu0 0.0
    %4680 = vmatpush1.msra.mxu0 %v4202
    %4681 = vmatprep.subr.mxu0 0.0
    %4682 = vmatpush1.msra.mxu0 %v4201
    %4683 = vmatprep.subr.mxu0 0.0
    %4684 = vmatpush1.msra.mxu0 %v4200
    %4685 = vmatprep.subr.mxu0 0.0
    %4686 = vmatpush1.msra.mxu0 %v4199
    %4687 = vmatprep.subr.mxu0 0.0
    %4688 = vmatpush1.msra.mxu0 %v4198
    %4689 = vmatprep.subr.mxu0 0.0
    %4690 = vmatpush2.msra.mxu0 %v4229
    %4691 = vmatprep.subr.mxu0 0.0
    %4692 = vmatpush2.msra.mxu0 %v4228
    %4693 = vmatprep.subr.mxu0 0.0
    %4694 = vmatpush2.msra.mxu0 %v4227
    %4695 = vmatprep.subr.mxu0 0.0
    %4696 = vmatpush2.msra.mxu0 %v4226
    %4697 = vmatprep.subr.mxu0 0.0
    %4698 = vmatpush2.msra.mxu0 %v4225
    %4699 = vmatprep.subr.mxu0 0.0
    %4700 = vmatpush2.msra.mxu0 %v4224
    %4701 = vmatprep.subr.mxu0 0.0
    %4702 = vmatpush2.msra.mxu0 %v4223
    %4703 = vmatprep.subr.mxu0 0.0
    %4704 = vmatpush2.msra.mxu0 %v4222
    %4705 = vmatprep.subr.mxu0 0.0
    %4706 = vmatpush2.msra.mxu0 %v4221
    %4707 = vmatprep.subr.mxu0 0.0
    %4708 = vmatpush2.msra.mxu0 %v4220
    %4709 = vmatprep.subr.mxu0 0.0
    %4710 = vmatpush2.msra.mxu0 %v4219
    %4711 = vmatprep.subr.mxu0 0.0
    %4712 = vmatpush2.msra.mxu0 %v4218
    %4713 = vmatprep.subr.mxu0 0.0
    %4714 = vmatpush2.msra.mxu0 %v4217
    %4715 = vmatprep.subr.mxu0 0.0
    %4716 = vmatpush2.msra.mxu0 %v4216
    %4717 = vmatprep.subr.mxu0 0.0
    %4718 = vmatpush2.msra.mxu0 %v4215
    %4719 = vmatprep.subr.mxu0 0.0
    %4720 = vmatpush2.msra.mxu0 %v4214
    %4721 = vmatprep.mubr.f32.mxu0 %v4087
    %4722 = vmatmul.mubr.f32.gmra.mxu0 %v4072
    %v4723 = vpop.f32.mrf.mxu0
    %v4724 = vadd.f32 %v4584, %v4723
    %v4725 = vpop.f32.mrf.mxu0
    %4726 = vmatprep.mubr.f32.mxu0 %v4088
    %4727 = vmatmul.mubr.f32.gmra.mxu0 %v4073
    %v4728 = vpop.f32.mrf.mxu0
    %v4729 = vadd.f32 %v4589, %v4728
    %v4730 = vpop.f32.mrf.mxu0
    %4731 = vmatprep.mubr.f32.mxu0 %v4089
    %4732 = vmatmul.mubr.f32.gmra.mxu0 %v4074
    %v4733 = vpop.f32.mrf.mxu0
    %v4734 = vadd.f32 %v4594, %v4733
    %v4735 = vpop.f32.mrf.mxu0
    %4736 = vmatprep.mubr.f32.mxu0 %v4090
    %4737 = vmatmul.mubr.f32.gmra.mxu0 %v4075
    %v4738 = vpop.f32.mrf.mxu0
    %v4739 = vadd.f32 %v4599, %v4738
    %v4740 = vpop.f32.mrf.mxu0
    %4741 = vmatprep.mubr.f32.mxu0 %v4091
    %4742 = vmatmul.mubr.f32.gmra.mxu0 %v4076
    %v4743 = vpop.f32.mrf.mxu0
    %v4744 = vadd.f32 %v4604, %v4743
    %v4745 = vpop.f32.mrf.mxu0
    %4746 = vmatprep.mubr.f32.mxu0 %v4092
    %4747 = vmatmul.mubr.f32.gmra.mxu0 %v4077
    %v4748 = vpop.f32.mrf.mxu0
    %v4749 = vadd.f32 %v4609, %v4748
    %v4750 = vpop.f32.mrf.mxu0
    %4751 = vmatprep.mubr.f32.mxu0 %v4093
    %4752 = vmatmul.mubr.f32.gmra.mxu0 %v4078
    %v4753 = vpop.f32.mrf.mxu0
    %v4754 = vadd.f32 %v4614, %v4753
    %v4755 = vpop.f32.mrf.mxu0
    %4756 = vmatprep.mubr.f32.mxu0 %v4094
    %4757 = vmatmul.mubr.f32.gmra.mxu0 %v4079
    %v4758 = vpop.f32.mrf.mxu0
    %v4759 = vadd.f32 %v4619, %v4758
    %v4760 = vpop.f32.mrf.mxu0
    %4761 = vmatprep.mubr.f32.mxu0 %v4095
    %4762 = vmatmul.mubr.f32.gmra.mxu0 %v4080
    %v4763 = vpop.f32.mrf.mxu0
    %v4764 = vadd.f32 %v4624, %v4763
    %v4765 = vpop.f32.mrf.mxu0
    %4766 = vmatprep.mubr.f32.mxu0 %v4096
    %4767 = vmatmul.mubr.f32.gmra.mxu0 %v4081
    %v4768 = vpop.f32.mrf.mxu0
    %v4769 = vadd.f32 %v4629, %v4768
    %v4770 = vpop.f32.mrf.mxu0
    %4771 = vmatprep.mubr.f32.mxu0 %v4097
    %4772 = vmatmul.mubr.f32.gmra.mxu0 %v4082
    %v4773 = vpop.f32.mrf.mxu0
    %v4774 = vadd.f32 %v4634, %v4773
    %v4775 = vpop.f32.mrf.mxu0
    %4776 = vmatprep.mubr.f32.mxu0 %v4098
    %4777 = vmatmul.mubr.f32.gmra.mxu0 %v4083
    %v4778 = vpop.f32.mrf.mxu0
    %v4779 = vadd.f32 %v4639, %v4778
    %v4780 = vpop.f32.mrf.mxu0
    %4781 = vmatprep.mubr.f32.mxu0 %v4099
    %4782 = vmatmul.mubr.f32.gmra.mxu0 %v4084
    %v4783 = vpop.f32.mrf.mxu0
    %v4784 = vadd.f32 %v4644, %v4783
    %v4785 = vpop.f32.mrf.mxu0
    %4786 = vmatprep.mubr.f32.mxu0 %v4100
    %4787 = vmatmul.mubr.f32.gmra.mxu0 %v4085
    %v4788 = vpop.f32.mrf.mxu0
    %v4789 = vadd.f32 %v4649, %v4788
    %v4790 = vpop.f32.mrf.mxu0
    %4791 = vmatprep.mubr.f32.mxu0 %v4101
    %4792 = vmatmul.mubr.f32.gmra.mxu0 %v4086
    %v4793 = vpop.f32.mrf.mxu0
    %v4794 = vadd.f32 %v4654, %v4793
    %v4795 = vpop.f32.mrf.mxu0
    %4796 = vdwg.mxu0
    %v4797 = vmax.f32 %v4724, 0.0
    %v4798 = vmax.f32 %v4729, 0.0
    %v4799 = vmax.f32 %v4734, 0.0
    %v4800 = vmax.f32 %v4739, 0.0
    %v4801 = vmax.f32 %v4744, 0.0
    %v4802 = vmax.f32 %v4749, 0.0
    %v4803 = vmax.f32 %v4754, 0.0
    %v4804 = vmax.f32 %v4759, 0.0
    %v4805 = vmax.f32 %v4764, 0.0
    %v4806 = vmax.f32 %v4769, 0.0
    %v4807 = vmax.f32 %v4774, 0.0
    %v4808 = vmax.f32 %v4779, 0.0
    %v4809 = vmax.f32 %v4784, 0.0
    %v4810 = vmax.f32 %v4789, 0.0
    %v4811 = vmax.f32 %v4794, 0.0
    %4812 = vst [vmem:[#allocation4] sm:$0xff] %v4797
    %4813 = vst [vmem:[#allocation4 + $0x8] sm:$0xff] %v4798
    %4814 = vst [vmem:[#allocation4 + $0x10] sm:$0xff] %v4799
    %4815 = vst [vmem:[#allocation4 + $0x18] sm:$0xff] %v4800
    %4816 = vst [vmem:[#allocation4 + $0x20] sm:$0xff] %v4801
    %4817 = vst [vmem:[#allocation4 + $0x28] sm:$0xff] %v4802
    %4818 = vst [vmem:[#allocation4 + $0x30] sm:$0xff] %v4803
    %4819 = vst [vmem:[#allocation4 + $0x38] sm:$0xff] %v4804
    %4820 = vst [vmem:[#allocation4 + $0x40] sm:$0xff] %v4805
    %4821 = vst [vmem:[#allocation4 + $0x48] sm:$0xff] %v4806
    %4822 = vst [vmem:[#allocation4 + $0x50] sm:$0xff] %v4807
    %4823 = vst [vmem:[#allocation4 + $0x58] sm:$0xff] %v4808
    %4824 = vst [vmem:[#allocation4 + $0x60] sm:$0xff] %v4809
    %4825 = vst [vmem:[#allocation4 + $0x68] sm:$0xff] %v4810
    %4826 = vst [vmem:[#allocation4 + $0x70] sm:$0x3] %v4811
    %v4827 = vld [vmem:[#allocation4] sm:$0xff]
    %v4828 = vld [vmem:[#allocation4 + $0x8] sm:$0xff]
    %v4829 = vld [vmem:[#allocation4 + $0x10] sm:$0xff]
    %v4830 = vld [vmem:[#allocation4 + $0x18] sm:$0xff]
    %v4831 = vld [vmem:[#allocation4 + $0x20] sm:$0xff]
    %v4832 = vld [vmem:[#allocation4 + $0x28] sm:$0xff]
    %v4833 = vld [vmem:[#allocation4 + $0x30] sm:$0xff]
    %v4834 = vld [vmem:[#allocation4 + $0x38] sm:$0xff]
    %v4835 = vld [vmem:[#allocation4 + $0x40] sm:$0xff]
    %v4836 = vld [vmem:[#allocation4 + $0x48] sm:$0xff]
    %v4837 = vld [vmem:[#allocation4 + $0x50] sm:$0xff]
    %v4838 = vld [vmem:[#allocation4 + $0x58] sm:$0xff]
    %v4839 = vld [vmem:[#allocation4 + $0x60] sm:$0xff]
    %v4840 = vld [vmem:[#allocation4 + $0x68] sm:$0x7]
    %v4841 = vld [vmem:[#allocation4 + $0x1] sm:$0xff]
    %v4842 = vld [vmem:[#allocation4 + $0x9] sm:$0xff]
    %v4843 = vld [vmem:[#allocation4 + $0x11] sm:$0xff]
    %v4844 = vld [vmem:[#allocation4 + $0x19] sm:$0xff]
    %v4845 = vld [vmem:[#allocation4 + $0x21] sm:$0xff]
    %v4846 = vld [vmem:[#allocation4 + $0x29] sm:$0xff]
    %v4847 = vld [vmem:[#allocation4 + $0x31] sm:$0xff]
    %v4848 = vld [vmem:[#allocation4 + $0x39] sm:$0xff]
    %v4849 = vld [vmem:[#allocation4 + $0x41] sm:$0xff]
    %v4850 = vld [vmem:[#allocation4 + $0x49] sm:$0xff]
    %v4851 = vld [vmem:[#allocation4 + $0x51] sm:$0xff]
    %v4852 = vld [vmem:[#allocation4 + $0x59] sm:$0xff]
    %v4853 = vld [vmem:[#allocation4 + $0x61] sm:$0xff]
    %v4854 = vld [vmem:[#allocation4 + $0x69] sm:$0x7]
    %v4855 = vld [vmem:[#allocation4 + $0x2] sm:$0xff]
    %v4856 = vld [vmem:[#allocation4 + $0xa] sm:$0xff]
    %v4857 = vld [vmem:[#allocation4 + $0x12] sm:$0xff]
    %v4858 = vld [vmem:[#allocation4 + $0x1a] sm:$0xff]
    %v4859 = vld [vmem:[#allocation4 + $0x22] sm:$0xff]
    %v4860 = vld [vmem:[#allocation4 + $0x2a] sm:$0xff]
    %v4861 = vld [vmem:[#allocation4 + $0x32] sm:$0xff]
    %v4862 = vld [vmem:[#allocation4 + $0x3a] sm:$0xff]
    %v4863 = vld [vmem:[#allocation4 + $0x42] sm:$0xff]
    %v4864 = vld [vmem:[#allocation4 + $0x4a] sm:$0xff]
    %v4865 = vld [vmem:[#allocation4 + $0x52] sm:$0xff]
    %v4866 = vld [vmem:[#allocation4 + $0x5a] sm:$0xff]
    %v4867 = vld [vmem:[#allocation4 + $0x62] sm:$0xff]
    %v4868 = vld [vmem:[#allocation4 + $0x6a] sm:$0x7]
    %v4869 = vld [vmem:[#allocation4 + $0x3] sm:$0xff]
    %v4870 = vld [vmem:[#allocation4 + $0xb] sm:$0xff]
    %v4871 = vld [vmem:[#allocation4 + $0x13] sm:$0xff]
    %v4872 = vld [vmem:[#allocation4 + $0x1b] sm:$0xff]
    %v4873 = vld [vmem:[#allocation4 + $0x23] sm:$0xff]
    %v4874 = vld [vmem:[#allocation4 + $0x2b] sm:$0xff]
    %v4875 = vld [vmem:[#allocation4 + $0x33] sm:$0xff]
    %v4876 = vld [vmem:[#allocation4 + $0x3b] sm:$0xff]
    %v4877 = vld [vmem:[#allocation4 + $0x43] sm:$0xff]
    %v4878 = vld [vmem:[#allocation4 + $0x4b] sm:$0xff]
    %v4879 = vld [vmem:[#allocation4 + $0x53] sm:$0xff]
    %v4880 = vld [vmem:[#allocation4 + $0x5b] sm:$0xff]
    %v4881 = vld [vmem:[#allocation4 + $0x63] sm:$0xff]
    %v4882 = vld [vmem:[#allocation4 + $0x6b] sm:$0x7]
    %v4883 = vld [vmem:[#allocation4 + $0x4] sm:$0xff]
    %v4884 = vld [vmem:[#allocation4 + $0xc] sm:$0xff]
    %v4885 = vld [vmem:[#allocation4 + $0x14] sm:$0xff]
    %v4886 = vld [vmem:[#allocation4 + $0x1c] sm:$0xff]
    %v4887 = vld [vmem:[#allocation4 + $0x24] sm:$0xff]
    %v4888 = vld [vmem:[#allocation4 + $0x2c] sm:$0xff]
    %v4889 = vld [vmem:[#allocation4 + $0x34] sm:$0xff]
    %v4890 = vld [vmem:[#allocation4 + $0x3c] sm:$0xff]
    %v4891 = vld [vmem:[#allocation4 + $0x44] sm:$0xff]
    %v4892 = vld [vmem:[#allocation4 + $0x4c] sm:$0xff]
    %v4893 = vld [vmem:[#allocation4 + $0x54] sm:$0xff]
    %v4894 = vld [vmem:[#allocation4 + $0x5c] sm:$0xff]
    %v4895 = vld [vmem:[#allocation4 + $0x64] sm:$0xff]
    %v4896 = vld [vmem:[#allocation4 + $0x6c] sm:$0x7]
    %v4897 = vld [vmem:[#allocation4 + $0x5] sm:$0xff]
    %v4898 = vld [vmem:[#allocation4 + $0xd] sm:$0xff]
    %v4899 = vld [vmem:[#allocation4 + $0x15] sm:$0xff]
    %v4900 = vld [vmem:[#allocation4 + $0x1d] sm:$0xff]
    %v4901 = vld [vmem:[#allocation4 + $0x25] sm:$0xff]
    %v4902 = vld [vmem:[#allocation4 + $0x2d] sm:$0xff]
    %v4903 = vld [vmem:[#allocation4 + $0x35] sm:$0xff]
    %v4904 = vld [vmem:[#allocation4 + $0x3d] sm:$0xff]
    %v4905 = vld [vmem:[#allocation4 + $0x45] sm:$0xff]
    %v4906 = vld [vmem:[#allocation4 + $0x4d] sm:$0xff]
    %v4907 = vld [vmem:[#allocation4 + $0x55] sm:$0xff]
    %v4908 = vld [vmem:[#allocation4 + $0x5d] sm:$0xff]
    %v4909 = vld [vmem:[#allocation4 + $0x65] sm:$0xff]
    %v4910 = vld [vmem:[#allocation4 + $0x6d] sm:$0x7]
    %v4911 = vld [vmem:[#allocation4 + $0x6] sm:$0xff]
    %v4912 = vld [vmem:[#allocation4 + $0xe] sm:$0xff]
    %v4913 = vld [vmem:[#allocation4 + $0x16] sm:$0xff]
    %v4914 = vld [vmem:[#allocation4 + $0x1e] sm:$0xff]
    %v4915 = vld [vmem:[#allocation4 + $0x26] sm:$0xff]
    %v4916 = vld [vmem:[#allocation4 + $0x2e] sm:$0xff]
    %v4917 = vld [vmem:[#allocation4 + $0x36] sm:$0xff]
    %v4918 = vld [vmem:[#allocation4 + $0x3e] sm:$0xff]
    %v4919 = vld [vmem:[#allocation4 + $0x46] sm:$0xff]
    %v4920 = vld [vmem:[#allocation4 + $0x4e] sm:$0xff]
    %v4921 = vld [vmem:[#allocation4 + $0x56] sm:$0xff]
    %v4922 = vld [vmem:[#allocation4 + $0x5e] sm:$0xff]
    %v4923 = vld [vmem:[#allocation4 + $0x66] sm:$0xff]
    %v4924 = vld [vmem:[#allocation4 + $0x6e] sm:$0x7]
    %v4925 = vld [vmem:[#allocation4 + $0x7] sm:$0xff]
    %v4926 = vld [vmem:[#allocation4 + $0xf] sm:$0xff]
    %v4927 = vld [vmem:[#allocation4 + $0x17] sm:$0xff]
    %v4928 = vld [vmem:[#allocation4 + $0x1f] sm:$0xff]
    %v4929 = vld [vmem:[#allocation4 + $0x27] sm:$0xff]
    %v4930 = vld [vmem:[#allocation4 + $0x2f] sm:$0xff]
    %v4931 = vld [vmem:[#allocation4 + $0x37] sm:$0xff]
    %v4932 = vld [vmem:[#allocation4 + $0x3f] sm:$0xff]
    %v4933 = vld [vmem:[#allocation4 + $0x47] sm:$0xff]
    %v4934 = vld [vmem:[#allocation4 + $0x4f] sm:$0xff]
    %v4935 = vld [vmem:[#allocation4 + $0x57] sm:$0xff]
    %v4936 = vld [vmem:[#allocation4 + $0x5f] sm:$0xff]
    %v4937 = vld [vmem:[#allocation4 + $0x67] sm:$0xff]
    %v4938 = vld [vmem:[#allocation4 + $0x6f] sm:$0x7]
    %v4939 = vld [vmem:[#allocation9] sm:$0xff]
    %v4940 = vld [vmem:[#allocation9 + $0x8] sm:$0xff]
    %v4941 = vld [vmem:[#allocation9 + $0x10] sm:$0xff]
    %v4942 = vld [vmem:[#allocation9 + $0x18] sm:$0xff]
    %v4943 = vld [vmem:[#allocation9 + $0x20] sm:$0xff]
    %v4944 = vld [vmem:[#allocation9 + $0x28] sm:$0xff]
    %v4945 = vld [vmem:[#allocation9 + $0x30] sm:$0xff]
    %v4946 = vld [vmem:[#allocation9 + $0x38] sm:$0xff]
    %v4947 = vld [vmem:[#allocation9 + $0x40] sm:$0xff]
    %v4948 = vld [vmem:[#allocation9 + $0x48] sm:$0xff]
    %v4949 = vld [vmem:[#allocation9 + $0x50] sm:$0xff]
    %v4950 = vld [vmem:[#allocation9 + $0x58] sm:$0xff]
    %v4951 = vld [vmem:[#allocation9 + $0x60] sm:$0xff]
    %v4952 = vld [vmem:[#allocation9 + $0x68] sm:$0xff]
    %v4953 = vld [vmem:[#allocation9 + $0x70] sm:$0xff]
    %v4954 = vld [vmem:[#allocation9 + $0x78] sm:$0xff]
    %v4955 = vld [vmem:[#allocation9 + $0x80] sm:$0xff]
    %v4956 = vld [vmem:[#allocation9 + $0x88] sm:$0xff]
    %v4957 = vld [vmem:[#allocation9 + $0x90] sm:$0xff]
    %v4958 = vld [vmem:[#allocation9 + $0x98] sm:$0xff]
    %v4959 = vld [vmem:[#allocation9 + $0xa0] sm:$0xff]
    %v4960 = vld [vmem:[#allocation9 + $0xa8] sm:$0xff]
    %v4961 = vld [vmem:[#allocation9 + $0xb0] sm:$0xff]
    %v4962 = vld [vmem:[#allocation9 + $0xb8] sm:$0xff]
    %v4963 = vld [vmem:[#allocation9 + $0xc0] sm:$0xff]
    %v4964 = vld [vmem:[#allocation9 + $0xc8] sm:$0xff]
    %v4965 = vld [vmem:[#allocation9 + $0xd0] sm:$0xff]
    %v4966 = vld [vmem:[#allocation9 + $0xd8] sm:$0xff]
    %v4967 = vld [vmem:[#allocation9 + $0xe0] sm:$0xff]
    %v4968 = vld [vmem:[#allocation9 + $0xe8] sm:$0xff]
    %v4969 = vld [vmem:[#allocation9 + $0xf0] sm:$0xff]
    %v4970 = vld [vmem:[#allocation9 + $0xf8] sm:$0xff]
    %v4971 = vld [vmem:[#allocation9 + $0x100] sm:$0xff]
    %v4972 = vld [vmem:[#allocation9 + $0x108] sm:$0xff]
    %v4973 = vld [vmem:[#allocation9 + $0x110] sm:$0xff]
    %v4974 = vld [vmem:[#allocation9 + $0x118] sm:$0xff]
    %v4975 = vld [vmem:[#allocation9 + $0x120] sm:$0xff]
    %v4976 = vld [vmem:[#allocation9 + $0x128] sm:$0xff]
    %v4977 = vld [vmem:[#allocation9 + $0x130] sm:$0xff]
    %v4978 = vld [vmem:[#allocation9 + $0x138] sm:$0xff]
    %v4979 = vld [vmem:[#allocation9 + $0x140] sm:$0xff]
    %v4980 = vld [vmem:[#allocation9 + $0x148] sm:$0xff]
    %v4981 = vld [vmem:[#allocation9 + $0x150] sm:$0xff]
    %v4982 = vld [vmem:[#allocation9 + $0x158] sm:$0xff]
    %v4983 = vld [vmem:[#allocation9 + $0x160] sm:$0xff]
    %v4984 = vld [vmem:[#allocation9 + $0x168] sm:$0xff]
    %v4985 = vld [vmem:[#allocation9 + $0x170] sm:$0xff]
    %v4986 = vld [vmem:[#allocation9 + $0x178] sm:$0xff]
    %v4987 = vld [vmem:[#allocation9 + $0x180] sm:$0xff]
    %v4988 = vld [vmem:[#allocation9 + $0x188] sm:$0xff]
    %v4989 = vld [vmem:[#allocation9 + $0x190] sm:$0xff]
    %v4990 = vld [vmem:[#allocation9 + $0x198] sm:$0xff]
    %v4991 = vld [vmem:[#allocation9 + $0x1a0] sm:$0xff]
    %v4992 = vld [vmem:[#allocation9 + $0x1a8] sm:$0xff]
    %v4993 = vld [vmem:[#allocation9 + $0x1b0] sm:$0xff]
    %v4994 = vld [vmem:[#allocation9 + $0x1b8] sm:$0xff]
    %v4995 = vld [vmem:[#allocation9 + $0x1c0] sm:$0xff]
    %v4996 = vld [vmem:[#allocation9 + $0x1c8] sm:$0xff]
    %v4997 = vld [vmem:[#allocation9 + $0x1d0] sm:$0xff]
    %v4998 = vld [vmem:[#allocation9 + $0x1d8] sm:$0xff]
    %v4999 = vld [vmem:[#allocation9 + $0x1e0] sm:$0xff]
    %v5000 = vld [vmem:[#allocation9 + $0x1e8] sm:$0xff]
    %v5001 = vld [vmem:[#allocation9 + $0x1f0] sm:$0xff]
    %v5002 = vld [vmem:[#allocation9 + $0x1f8] sm:$0xff]
    %v5003 = vld [vmem:[#allocation9 + $0x200] sm:$0xff]
    %v5004 = vld [vmem:[#allocation9 + $0x208] sm:$0xff]
    %v5005 = vld [vmem:[#allocation9 + $0x210] sm:$0xff]
    %v5006 = vld [vmem:[#allocation9 + $0x218] sm:$0xff]
    %v5007 = vld [vmem:[#allocation9 + $0x220] sm:$0xff]
    %v5008 = vld [vmem:[#allocation9 + $0x228] sm:$0xff]
    %v5009 = vld [vmem:[#allocation9 + $0x230] sm:$0xff]
    %v5010 = vld [vmem:[#allocation9 + $0x238] sm:$0xff]
    %v5011 = vld [vmem:[#allocation9 + $0x240] sm:$0xff]
    %v5012 = vld [vmem:[#allocation9 + $0x248] sm:$0xff]
    %v5013 = vld [vmem:[#allocation9 + $0x250] sm:$0xff]
    %v5014 = vld [vmem:[#allocation9 + $0x258] sm:$0xff]
    %v5015 = vld [vmem:[#allocation9 + $0x260] sm:$0xff]
    %v5016 = vld [vmem:[#allocation9 + $0x268] sm:$0xff]
    %v5017 = vld [vmem:[#allocation9 + $0x270] sm:$0xff]
    %v5018 = vld [vmem:[#allocation9 + $0x278] sm:$0xff]
    %v5019 = vld [vmem:[#allocation9 + $0x280] sm:$0xff]
    %v5020 = vld [vmem:[#allocation9 + $0x288] sm:$0xff]
    %v5021 = vld [vmem:[#allocation9 + $0x290] sm:$0xff]
    %v5022 = vld [vmem:[#allocation9 + $0x298] sm:$0xff]
    %v5023 = vld [vmem:[#allocation9 + $0x2a0] sm:$0xff]
    %v5024 = vld [vmem:[#allocation9 + $0x2a8] sm:$0xff]
    %v5025 = vld [vmem:[#allocation9 + $0x2b0] sm:$0xff]
    %v5026 = vld [vmem:[#allocation9 + $0x2b8] sm:$0xff]
    %v5027 = vld [vmem:[#allocation9 + $0x2c0] sm:$0xff]
    %v5028 = vld [vmem:[#allocation9 + $0x2c8] sm:$0xff]
    %v5029 = vld [vmem:[#allocation9 + $0x2d0] sm:$0xff]
    %v5030 = vld [vmem:[#allocation9 + $0x2d8] sm:$0xff]
    %v5031 = vld [vmem:[#allocation9 + $0x2e0] sm:$0xff]
    %v5032 = vld [vmem:[#allocation9 + $0x2e8] sm:$0xff]
    %v5033 = vld [vmem:[#allocation9 + $0x2f0] sm:$0xff]
    %v5034 = vld [vmem:[#allocation9 + $0x2f8] sm:$0xff]
    %v5035 = vld [vmem:[#allocation9 + $0x300] sm:$0xff]
    %v5036 = vld [vmem:[#allocation9 + $0x308] sm:$0xff]
    %v5037 = vld [vmem:[#allocation9 + $0x310] sm:$0xff]
    %v5038 = vld [vmem:[#allocation9 + $0x318] sm:$0xff]
    %v5039 = vld [vmem:[#allocation9 + $0x320] sm:$0xff]
    %v5040 = vld [vmem:[#allocation9 + $0x328] sm:$0xff]
    %v5041 = vld [vmem:[#allocation9 + $0x330] sm:$0xff]
    %v5042 = vld [vmem:[#allocation9 + $0x338] sm:$0xff]
    %v5043 = vld [vmem:[#allocation9 + $0x340] sm:$0xff]
    %v5044 = vld [vmem:[#allocation9 + $0x348] sm:$0xff]
    %v5045 = vld [vmem:[#allocation9 + $0x350] sm:$0xff]
    %v5046 = vld [vmem:[#allocation9 + $0x358] sm:$0xff]
    %v5047 = vld [vmem:[#allocation9 + $0x360] sm:$0xff]
    %v5048 = vld [vmem:[#allocation9 + $0x368] sm:$0xff]
    %v5049 = vld [vmem:[#allocation9 + $0x370] sm:$0xff]
    %v5050 = vld [vmem:[#allocation9 + $0x378] sm:$0xff]
    %v5051 = vld [vmem:[#allocation9 + $0x380] sm:$0xff]
    %v5052 = vld [vmem:[#allocation9 + $0x388] sm:$0xff]
    %v5053 = vld [vmem:[#allocation9 + $0x390] sm:$0xff]
    %v5054 = vld [vmem:[#allocation9 + $0x398] sm:$0xff]
    %v5055 = vld [vmem:[#allocation9 + $0x3a0] sm:$0xff]
    %v5056 = vld [vmem:[#allocation9 + $0x3a8] sm:$0xff]
    %v5057 = vld [vmem:[#allocation9 + $0x3b0] sm:$0xff]
    %v5058 = vld [vmem:[#allocation9 + $0x3b8] sm:$0xff]
    %v5059 = vld [vmem:[#allocation9 + $0x3c0] sm:$0xff]
    %v5060 = vld [vmem:[#allocation9 + $0x3c8] sm:$0xff]
    %v5061 = vld [vmem:[#allocation9 + $0x3d0] sm:$0xff]
    %v5062 = vld [vmem:[#allocation9 + $0x3d8] sm:$0xff]
    %v5063 = vld [vmem:[#allocation9 + $0x3e0] sm:$0xff]
    %v5064 = vld [vmem:[#allocation9 + $0x3e8] sm:$0xff]
    %v5065 = vld [vmem:[#allocation9 + $0x3f0] sm:$0xff]
    %v5066 = vld [vmem:[#allocation9 + $0x3f8] sm:$0xff]
    %v5067 = vld [vmem:[%s7] sm:$0x1]
    %v5069 = vlaneseq
    %v5070 = vshrl.u32 %v5069, 7
    %v5071 = vsub.s32 0, %v5070
    %v5072 = vrot.slane %v5067, %v5071
    %5074 = vmatprep.subr.mxu0 0.0
    %5075 = vmatpush1.msra.mxu0 %v4954
    %5076 = vmatprep.subr.mxu0 0.0
    %5077 = vmatpush1.msra.mxu0 %v4953
    %5078 = vmatprep.subr.mxu0 0.0
    %5079 = vmatpush1.msra.mxu0 %v4952
    %5080 = vmatprep.subr.mxu0 0.0
    %5081 = vmatpush1.msra.mxu0 %v4951
    %5082 = vmatprep.subr.mxu0 0.0
    %5083 = vmatpush1.msra.mxu0 %v4950
    %5084 = vmatprep.subr.mxu0 0.0
    %5085 = vmatpush1.msra.mxu0 %v4949
    %5086 = vmatprep.subr.mxu0 0.0
    %5087 = vmatpush1.msra.mxu0 %v4948
    %5088 = vmatprep.subr.mxu0 0.0
    %5089 = vmatpush1.msra.mxu0 %v4947
    %5090 = vmatprep.subr.mxu0 0.0
    %5091 = vmatpush1.msra.mxu0 %v4946
    %5092 = vmatprep.subr.mxu0 0.0
    %5093 = vmatpush1.msra.mxu0 %v4945
    %5094 = vmatprep.subr.mxu0 0.0
    %5095 = vmatpush1.msra.mxu0 %v4944
    %5096 = vmatprep.subr.mxu0 0.0
    %5097 = vmatpush1.msra.mxu0 %v4943
    %5098 = vmatprep.subr.mxu0 0.0
    %5099 = vmatpush1.msra.mxu0 %v4942
    %5100 = vmatprep.subr.mxu0 0.0
    %5101 = vmatpush1.msra.mxu0 %v4941
    %5102 = vmatprep.subr.mxu0 0.0
    %5103 = vmatpush1.msra.mxu0 %v4940
    %5104 = vmatprep.subr.mxu0 0.0
    %5105 = vmatpush1.msra.mxu0 %v4939
    %5106 = vmatprep.subr.mxu0 0.0
    %5107 = vmatpush2.msra.mxu0 %v4970
    %5108 = vmatprep.subr.mxu0 0.0
    %5109 = vmatpush2.msra.mxu0 %v4969
    %5110 = vmatprep.subr.mxu0 0.0
    %5111 = vmatpush2.msra.mxu0 %v4968
    %5112 = vmatprep.subr.mxu0 0.0
    %5113 = vmatpush2.msra.mxu0 %v4967
    %5114 = vmatprep.subr.mxu0 0.0
    %5115 = vmatpush2.msra.mxu0 %v4966
    %5116 = vmatprep.subr.mxu0 0.0
    %5117 = vmatpush2.msra.mxu0 %v4965
    %5118 = vmatprep.subr.mxu0 0.0
    %5119 = vmatpush2.msra.mxu0 %v4964
    %5120 = vmatprep.subr.mxu0 0.0
    %5121 = vmatpush2.msra.mxu0 %v4963
    %5122 = vmatprep.subr.mxu0 0.0
    %5123 = vmatpush2.msra.mxu0 %v4962
    %5124 = vmatprep.subr.mxu0 0.0
    %5125 = vmatpush2.msra.mxu0 %v4961
    %5126 = vmatprep.subr.mxu0 0.0
    %5127 = vmatpush2.msra.mxu0 %v4960
    %5128 = vmatprep.subr.mxu0 0.0
    %5129 = vmatpush2.msra.mxu0 %v4959
    %5130 = vmatprep.subr.mxu0 0.0
    %5131 = vmatpush2.msra.mxu0 %v4958
    %5132 = vmatprep.subr.mxu0 0.0
    %5133 = vmatpush2.msra.mxu0 %v4957
    %5134 = vmatprep.subr.mxu0 0.0
    %5135 = vmatpush2.msra.mxu0 %v4956
    %5136 = vmatprep.subr.mxu0 0.0
    %5137 = vmatpush2.msra.mxu0 %v4955
    %5138 = vmatprep.mubr.f32.mxu0 %v4841
    %5139 = vmatmul.mubr.f32.gmra.mxu0 %v4827
    %v5140 = vpop.f32.mrf.mxu0
    %v5141 = vadd.f32 %v5072, %v5140
    %v5142 = vpop.f32.mrf.mxu0
    %5143 = vmatprep.mubr.f32.mxu0 %v4842
    %5144 = vmatmul.mubr.f32.gmra.mxu0 %v4828
    %v5145 = vpop.f32.mrf.mxu0
    %v5146 = vadd.f32 %v5072, %v5145
    %v5147 = vpop.f32.mrf.mxu0
    %5148 = vmatprep.mubr.f32.mxu0 %v4843
    %5149 = vmatmul.mubr.f32.gmra.mxu0 %v4829
    %v5150 = vpop.f32.mrf.mxu0
    %v5151 = vadd.f32 %v5072, %v5150
    %v5152 = vpop.f32.mrf.mxu0
    %5153 = vmatprep.mubr.f32.mxu0 %v4844
    %5154 = vmatmul.mubr.f32.gmra.mxu0 %v4830
    %v5155 = vpop.f32.mrf.mxu0
    %v5156 = vadd.f32 %v5072, %v5155
    %v5157 = vpop.f32.mrf.mxu0
    %5158 = vmatprep.mubr.f32.mxu0 %v4845
    %5159 = vmatmul.mubr.f32.gmra.mxu0 %v4831
    %v5160 = vpop.f32.mrf.mxu0
    %v5161 = vadd.f32 %v5072, %v5160
    %v5162 = vpop.f32.mrf.mxu0
    %5163 = vmatprep.mubr.f32.mxu0 %v4846
    %5164 = vmatmul.mubr.f32.gmra.mxu0 %v4832
    %v5165 = vpop.f32.mrf.mxu0
    %v5166 = vadd.f32 %v5072, %v5165
    %v5167 = vpop.f32.mrf.mxu0
    %5168 = vmatprep.mubr.f32.mxu0 %v4847
    %5169 = vmatmul.mubr.f32.gmra.mxu0 %v4833
    %v5170 = vpop.f32.mrf.mxu0
    %v5171 = vadd.f32 %v5072, %v5170
    %v5172 = vpop.f32.mrf.mxu0
    %5173 = vmatprep.mubr.f32.mxu0 %v4848
    %5174 = vmatmul.mubr.f32.gmra.mxu0 %v4834
    %v5175 = vpop.f32.mrf.mxu0
    %v5176 = vadd.f32 %v5072, %v5175
    %v5177 = vpop.f32.mrf.mxu0
    %5178 = vmatprep.mubr.f32.mxu0 %v4849
    %5179 = vmatmul.mubr.f32.gmra.mxu0 %v4835
    %v5180 = vpop.f32.mrf.mxu0
    %v5181 = vadd.f32 %v5072, %v5180
    %v5182 = vpop.f32.mrf.mxu0
    %5183 = vmatprep.mubr.f32.mxu0 %v4850
    %5184 = vmatmul.mubr.f32.gmra.mxu0 %v4836
    %v5185 = vpop.f32.mrf.mxu0
    %v5186 = vadd.f32 %v5072, %v5185
    %v5187 = vpop.f32.mrf.mxu0
    %5188 = vmatprep.mubr.f32.mxu0 %v4851
    %5189 = vmatmul.mubr.f32.gmra.mxu0 %v4837
    %v5190 = vpop.f32.mrf.mxu0
    %v5191 = vadd.f32 %v5072, %v5190
    %v5192 = vpop.f32.mrf.mxu0
    %5193 = vmatprep.mubr.f32.mxu0 %v4852
    %5194 = vmatmul.mubr.f32.gmra.mxu0 %v4838
    %v5195 = vpop.f32.mrf.mxu0
    %v5196 = vadd.f32 %v5072, %v5195
    %v5197 = vpop.f32.mrf.mxu0
    %5198 = vmatprep.mubr.f32.mxu0 %v4853
    %5199 = vmatmul.mubr.f32.gmra.mxu0 %v4839
    %v5200 = vpop.f32.mrf.mxu0
    %v5201 = vadd.f32 %v5072, %v5200
    %v5202 = vpop.f32.mrf.mxu0
    %5203 = vmatprep.mubr.f32.mxu0 %v4854
    %5204 = vmatmul.mubr.f32.gmra.mxu0 %v4840
    %v5205 = vpop.f32.mrf.mxu0
    %v5206 = vadd.f32 %v5072, %v5205
    %v5207 = vpop.f32.mrf.mxu0
    %5208 = vdwg.mxu0
    %5209 = vmatprep.subr.mxu0 0.0
    %5210 = vmatpush1.msra.mxu0 %v4986
    %5211 = vmatprep.subr.mxu0 0.0
    %5212 = vmatpush1.msra.mxu0 %v4985
    %5213 = vmatprep.subr.mxu0 0.0
    %5214 = vmatpush1.msra.mxu0 %v4984
    %5215 = vmatprep.subr.mxu0 0.0
    %5216 = vmatpush1.msra.mxu0 %v4983
    %5217 = vmatprep.subr.mxu0 0.0
    %5218 = vmatpush1.msra.mxu0 %v4982
    %5219 = vmatprep.subr.mxu0 0.0
    %5220 = vmatpush1.msra.mxu0 %v4981
    %5221 = vmatprep.subr.mxu0 0.0
    %5222 = vmatpush1.msra.mxu0 %v4980
    %5223 = vmatprep.subr.mxu0 0.0
    %5224 = vmatpush1.msra.mxu0 %v4979
    %5225 = vmatprep.subr.mxu0 0.0
    %5226 = vmatpush1.msra.mxu0 %v4978
    %5227 = vmatprep.subr.mxu0 0.0
    %5228 = vmatpush1.msra.mxu0 %v4977
    %5229 = vmatprep.subr.mxu0 0.0
    %5230 = vmatpush1.msra.mxu0 %v4976
    %5231 = vmatprep.subr.mxu0 0.0
    %5232 = vmatpush1.msra.mxu0 %v4975
    %5233 = vmatprep.subr.mxu0 0.0
    %5234 = vmatpush1.msra.mxu0 %v4974
    %5235 = vmatprep.subr.mxu0 0.0
    %5236 = vmatpush1.msra.mxu0 %v4973
    %5237 = vmatprep.subr.mxu0 0.0
    %5238 = vmatpush1.msra.mxu0 %v4972
    %5239 = vmatprep.subr.mxu0 0.0
    %5240 = vmatpush1.msra.mxu0 %v4971
    %5241 = vmatprep.subr.mxu0 0.0
    %5242 = vmatpush2.msra.mxu0 %v5002
    %5243 = vmatprep.subr.mxu0 0.0
    %5244 = vmatpush2.msra.mxu0 %v5001
    %5245 = vmatprep.subr.mxu0 0.0
    %5246 = vmatpush2.msra.mxu0 %v5000
    %5247 = vmatprep.subr.mxu0 0.0
    %5248 = vmatpush2.msra.mxu0 %v4999
    %5249 = vmatprep.subr.mxu0 0.0
    %5250 = vmatpush2.msra.mxu0 %v4998
    %5251 = vmatprep.subr.mxu0 0.0
    %5252 = vmatpush2.msra.mxu0 %v4997
    %5253 = vmatprep.subr.mxu0 0.0
    %5254 = vmatpush2.msra.mxu0 %v4996
    %5255 = vmatprep.subr.mxu0 0.0
    %5256 = vmatpush2.msra.mxu0 %v4995
    %5257 = vmatprep.subr.mxu0 0.0
    %5258 = vmatpush2.msra.mxu0 %v4994
    %5259 = vmatprep.subr.mxu0 0.0
    %5260 = vmatpush2.msra.mxu0 %v4993
    %5261 = vmatprep.subr.mxu0 0.0
    %5262 = vmatpush2.msra.mxu0 %v4992
    %5263 = vmatprep.subr.mxu0 0.0
    %5264 = vmatpush2.msra.mxu0 %v4991
    %5265 = vmatprep.subr.mxu0 0.0
    %5266 = vmatpush2.msra.mxu0 %v4990
    %5267 = vmatprep.subr.mxu0 0.0
    %5268 = vmatpush2.msra.mxu0 %v4989
    %5269 = vmatprep.subr.mxu0 0.0
    %5270 = vmatpush2.msra.mxu0 %v4988
    %5271 = vmatprep.subr.mxu0 0.0
    %5272 = vmatpush2.msra.mxu0 %v4987
    %5273 = vmatprep.mubr.f32.mxu0 %v4869
    %5274 = vmatmul.mubr.f32.gmra.mxu0 %v4855
    %v5275 = vpop.f32.mrf.mxu0
    %v5276 = vadd.f32 %v5141, %v5275
    %v5277 = vpop.f32.mrf.mxu0
    %5278 = vmatprep.mubr.f32.mxu0 %v4870
    %5279 = vmatmul.mubr.f32.gmra.mxu0 %v4856
    %v5280 = vpop.f32.mrf.mxu0
    %v5281 = vadd.f32 %v5146, %v5280
    %v5282 = vpop.f32.mrf.mxu0
    %5283 = vmatprep.mubr.f32.mxu0 %v4871
    %5284 = vmatmul.mubr.f32.gmra.mxu0 %v4857
    %v5285 = vpop.f32.mrf.mxu0
    %v5286 = vadd.f32 %v5151, %v5285
    %v5287 = vpop.f32.mrf.mxu0
    %5288 = vmatprep.mubr.f32.mxu0 %v4872
    %5289 = vmatmul.mubr.f32.gmra.mxu0 %v4858
    %v5290 = vpop.f32.mrf.mxu0
    %v5291 = vadd.f32 %v5156, %v5290
    %v5292 = vpop.f32.mrf.mxu0
    %5293 = vmatprep.mubr.f32.mxu0 %v4873
    %5294 = vmatmul.mubr.f32.gmra.mxu0 %v4859
    %v5295 = vpop.f32.mrf.mxu0
    %v5296 = vadd.f32 %v5161, %v5295
    %v5297 = vpop.f32.mrf.mxu0
    %5298 = vmatprep.mubr.f32.mxu0 %v4874
    %5299 = vmatmul.mubr.f32.gmra.mxu0 %v4860
    %v5300 = vpop.f32.mrf.mxu0
    %v5301 = vadd.f32 %v5166, %v5300
    %v5302 = vpop.f32.mrf.mxu0
    %5303 = vmatprep.mubr.f32.mxu0 %v4875
    %5304 = vmatmul.mubr.f32.gmra.mxu0 %v4861
    %v5305 = vpop.f32.mrf.mxu0
    %v5306 = vadd.f32 %v5171, %v5305
    %v5307 = vpop.f32.mrf.mxu0
    %5308 = vmatprep.mubr.f32.mxu0 %v4876
    %5309 = vmatmul.mubr.f32.gmra.mxu0 %v4862
    %v5310 = vpop.f32.mrf.mxu0
    %v5311 = vadd.f32 %v5176, %v5310
    %v5312 = vpop.f32.mrf.mxu0
    %5313 = vmatprep.mubr.f32.mxu0 %v4877
    %5314 = vmatmul.mubr.f32.gmra.mxu0 %v4863
    %v5315 = vpop.f32.mrf.mxu0
    %v5316 = vadd.f32 %v5181, %v5315
    %v5317 = vpop.f32.mrf.mxu0
    %5318 = vmatprep.mubr.f32.mxu0 %v4878
    %5319 = vmatmul.mubr.f32.gmra.mxu0 %v4864
    %v5320 = vpop.f32.mrf.mxu0
    %v5321 = vadd.f32 %v5186, %v5320
    %v5322 = vpop.f32.mrf.mxu0
    %5323 = vmatprep.mubr.f32.mxu0 %v4879
    %5324 = vmatmul.mubr.f32.gmra.mxu0 %v4865
    %v5325 = vpop.f32.mrf.mxu0
    %v5326 = vadd.f32 %v5191, %v5325
    %v5327 = vpop.f32.mrf.mxu0
    %5328 = vmatprep.mubr.f32.mxu0 %v4880
    %5329 = vmatmul.mubr.f32.gmra.mxu0 %v4866
    %v5330 = vpop.f32.mrf.mxu0
    %v5331 = vadd.f32 %v5196, %v5330
    %v5332 = vpop.f32.mrf.mxu0
    %5333 = vmatprep.mubr.f32.mxu0 %v4881
    %5334 = vmatmul.mubr.f32.gmra.mxu0 %v4867
    %v5335 = vpop.f32.mrf.mxu0
    %v5336 = vadd.f32 %v5201, %v5335
    %v5337 = vpop.f32.mrf.mxu0
    %5338 = vmatprep.mubr.f32.mxu0 %v4882
    %5339 = vmatmul.mubr.f32.gmra.mxu0 %v4868
    %v5340 = vpop.f32.mrf.mxu0
    %v5341 = vadd.f32 %v5206, %v5340
    %v5342 = vpop.f32.mrf.mxu0
    %5343 = vdwg.mxu0
    %5344 = vmatprep.subr.mxu0 0.0
    %5345 = vmatpush1.msra.mxu0 %v5018
    %5346 = vmatprep.subr.mxu0 0.0
    %5347 = vmatpush1.msra.mxu0 %v5017
    %5348 = vmatprep.subr.mxu0 0.0
    %5349 = vmatpush1.msra.mxu0 %v5016
    %5350 = vmatprep.subr.mxu0 0.0
    %5351 = vmatpush1.msra.mxu0 %v5015
    %5352 = vmatprep.subr.mxu0 0.0
    %5353 = vmatpush1.msra.mxu0 %v5014
    %5354 = vmatprep.subr.mxu0 0.0
    %5355 = vmatpush1.msra.mxu0 %v5013
    %5356 = vmatprep.subr.mxu0 0.0
    %5357 = vmatpush1.msra.mxu0 %v5012
    %5358 = vmatprep.subr.mxu0 0.0
    %5359 = vmatpush1.msra.mxu0 %v5011
    %5360 = vmatprep.subr.mxu0 0.0
    %5361 = vmatpush1.msra.mxu0 %v5010
    %5362 = vmatprep.subr.mxu0 0.0
    %5363 = vmatpush1.msra.mxu0 %v5009
    %5364 = vmatprep.subr.mxu0 0.0
    %5365 = vmatpush1.msra.mxu0 %v5008
    %5366 = vmatprep.subr.mxu0 0.0
    %5367 = vmatpush1.msra.mxu0 %v5007
    %5368 = vmatprep.subr.mxu0 0.0
    %5369 = vmatpush1.msra.mxu0 %v5006
    %5370 = vmatprep.subr.mxu0 0.0
    %5371 = vmatpush1.msra.mxu0 %v5005
    %5372 = vmatprep.subr.mxu0 0.0
    %5373 = vmatpush1.msra.mxu0 %v5004
    %5374 = vmatprep.subr.mxu0 0.0
    %5375 = vmatpush1.msra.mxu0 %v5003
    %5376 = vmatprep.subr.mxu0 0.0
    %5377 = vmatpush2.msra.mxu0 %v5034
    %5378 = vmatprep.subr.mxu0 0.0
    %5379 = vmatpush2.msra.mxu0 %v5033
    %5380 = vmatprep.subr.mxu0 0.0
    %5381 = vmatpush2.msra.mxu0 %v5032
    %5382 = vmatprep.subr.mxu0 0.0
    %5383 = vmatpush2.msra.mxu0 %v5031
    %5384 = vmatprep.subr.mxu0 0.0
    %5385 = vmatpush2.msra.mxu0 %v5030
    %5386 = vmatprep.subr.mxu0 0.0
    %5387 = vmatpush2.msra.mxu0 %v5029
    %5388 = vmatprep.subr.mxu0 0.0
    %5389 = vmatpush2.msra.mxu0 %v5028
    %5390 = vmatprep.subr.mxu0 0.0
    %5391 = vmatpush2.msra.mxu0 %v5027
    %5392 = vmatprep.subr.mxu0 0.0
    %5393 = vmatpush2.msra.mxu0 %v5026
    %5394 = vmatprep.subr.mxu0 0.0
    %5395 = vmatpush2.msra.mxu0 %v5025
    %5396 = vmatprep.subr.mxu0 0.0
    %5397 = vmatpush2.msra.mxu0 %v5024
    %5398 = vmatprep.subr.mxu0 0.0
    %5399 = vmatpush2.msra.mxu0 %v5023
    %5400 = vmatprep.subr.mxu0 0.0
    %5401 = vmatpush2.msra.mxu0 %v5022
    %5402 = vmatprep.subr.mxu0 0.0
    %5403 = vmatpush2.msra.mxu0 %v5021
    %5404 = vmatprep.subr.mxu0 0.0
    %5405 = vmatpush2.msra.mxu0 %v5020
    %5406 = vmatprep.subr.mxu0 0.0
    %5407 = vmatpush2.msra.mxu0 %v5019
    %5408 = vmatprep.mubr.f32.mxu0 %v4897
    %5409 = vmatmul.mubr.f32.gmra.mxu0 %v4883
    %v5410 = vpop.f32.mrf.mxu0
    %v5411 = vadd.f32 %v5276, %v5410
    %v5412 = vpop.f32.mrf.mxu0
    %5413 = vmatprep.mubr.f32.mxu0 %v4898
    %5414 = vmatmul.mubr.f32.gmra.mxu0 %v4884
    %v5415 = vpop.f32.mrf.mxu0
    %v5416 = vadd.f32 %v5281, %v5415
    %v5417 = vpop.f32.mrf.mxu0
    %5418 = vmatprep.mubr.f32.mxu0 %v4899
    %5419 = vmatmul.mubr.f32.gmra.mxu0 %v4885
    %v5420 = vpop.f32.mrf.mxu0
    %v5421 = vadd.f32 %v5286, %v5420
    %v5422 = vpop.f32.mrf.mxu0
    %5423 = vmatprep.mubr.f32.mxu0 %v4900
    %5424 = vmatmul.mubr.f32.gmra.mxu0 %v4886
    %v5425 = vpop.f32.mrf.mxu0
    %v5426 = vadd.f32 %v5291, %v5425
    %v5427 = vpop.f32.mrf.mxu0
    %5428 = vmatprep.mubr.f32.mxu0 %v4901
    %5429 = vmatmul.mubr.f32.gmra.mxu0 %v4887
    %v5430 = vpop.f32.mrf.mxu0
    %v5431 = vadd.f32 %v5296, %v5430
    %v5432 = vpop.f32.mrf.mxu0
    %5433 = vmatprep.mubr.f32.mxu0 %v4902
    %5434 = vmatmul.mubr.f32.gmra.mxu0 %v4888
    %v5435 = vpop.f32.mrf.mxu0
    %v5436 = vadd.f32 %v5301, %v5435
    %v5437 = vpop.f32.mrf.mxu0
    %5438 = vmatprep.mubr.f32.mxu0 %v4903
    %5439 = vmatmul.mubr.f32.gmra.mxu0 %v4889
    %v5440 = vpop.f32.mrf.mxu0
    %v5441 = vadd.f32 %v5306, %v5440
    %v5442 = vpop.f32.mrf.mxu0
    %5443 = vmatprep.mubr.f32.mxu0 %v4904
    %5444 = vmatmul.mubr.f32.gmra.mxu0 %v4890
    %v5445 = vpop.f32.mrf.mxu0
    %v5446 = vadd.f32 %v5311, %v5445
    %v5447 = vpop.f32.mrf.mxu0
    %5448 = vmatprep.mubr.f32.mxu0 %v4905
    %5449 = vmatmul.mubr.f32.gmra.mxu0 %v4891
    %v5450 = vpop.f32.mrf.mxu0
    %v5451 = vadd.f32 %v5316, %v5450
    %v5452 = vpop.f32.mrf.mxu0
    %5453 = vmatprep.mubr.f32.mxu0 %v4906
    %5454 = vmatmul.mubr.f32.gmra.mxu0 %v4892
    %v5455 = vpop.f32.mrf.mxu0
    %v5456 = vadd.f32 %v5321, %v5455
    %v5457 = vpop.f32.mrf.mxu0
    %5458 = vmatprep.mubr.f32.mxu0 %v4907
    %5459 = vmatmul.mubr.f32.gmra.mxu0 %v4893
    %v5460 = vpop.f32.mrf.mxu0
    %v5461 = vadd.f32 %v5326, %v5460
    %v5462 = vpop.f32.mrf.mxu0
    %5463 = vmatprep.mubr.f32.mxu0 %v4908
    %5464 = vmatmul.mubr.f32.gmra.mxu0 %v4894
    %v5465 = vpop.f32.mrf.mxu0
    %v5466 = vadd.f32 %v5331, %v5465
    %v5467 = vpop.f32.mrf.mxu0
    %5468 = vmatprep.mubr.f32.mxu0 %v4909
    %5469 = vmatmul.mubr.f32.gmra.mxu0 %v4895
    %v5470 = vpop.f32.mrf.mxu0
    %v5471 = vadd.f32 %v5336, %v5470
    %v5472 = vpop.f32.mrf.mxu0
    %5473 = vmatprep.mubr.f32.mxu0 %v4910
    %5474 = vmatmul.mubr.f32.gmra.mxu0 %v4896
    %v5475 = vpop.f32.mrf.mxu0
    %v5476 = vadd.f32 %v5341, %v5475
    %v5477 = vpop.f32.mrf.mxu0
    %5478 = vdwg.mxu0
    %5479 = vmatprep.subr.mxu0 0.0
    %5480 = vmatpush1.msra.mxu0 %v5050
    %5481 = vmatprep.subr.mxu0 0.0
    %5482 = vmatpush1.msra.mxu0 %v5049
    %5483 = vmatprep.subr.mxu0 0.0
    %5484 = vmatpush1.msra.mxu0 %v5048
    %5485 = vmatprep.subr.mxu0 0.0
    %5486 = vmatpush1.msra.mxu0 %v5047
    %5487 = vmatprep.subr.mxu0 0.0
    %5488 = vmatpush1.msra.mxu0 %v5046
    %5489 = vmatprep.subr.mxu0 0.0
    %5490 = vmatpush1.msra.mxu0 %v5045
    %5491 = vmatprep.subr.mxu0 0.0
    %5492 = vmatpush1.msra.mxu0 %v5044
    %5493 = vmatprep.subr.mxu0 0.0
    %5494 = vmatpush1.msra.mxu0 %v5043
    %5495 = vmatprep.subr.mxu0 0.0
    %5496 = vmatpush1.msra.mxu0 %v5042
    %5497 = vmatprep.subr.mxu0 0.0
    %5498 = vmatpush1.msra.mxu0 %v5041
    %5499 = vmatprep.subr.mxu0 0.0
    %5500 = vmatpush1.msra.mxu0 %v5040
    %5501 = vmatprep.subr.mxu0 0.0
    %5502 = vmatpush1.msra.mxu0 %v5039
    %5503 = vmatprep.subr.mxu0 0.0
    %5504 = vmatpush1.msra.mxu0 %v5038
    %5505 = vmatprep.subr.mxu0 0.0
    %5506 = vmatpush1.msra.mxu0 %v5037
    %5507 = vmatprep.subr.mxu0 0.0
    %5508 = vmatpush1.msra.mxu0 %v5036
    %5509 = vmatprep.subr.mxu0 0.0
    %5510 = vmatpush1.msra.mxu0 %v5035
    %5511 = vmatprep.subr.mxu0 0.0
    %5512 = vmatpush2.msra.mxu0 %v5066
    %5513 = vmatprep.subr.mxu0 0.0
    %5514 = vmatpush2.msra.mxu0 %v5065
    %5515 = vmatprep.subr.mxu0 0.0
    %5516 = vmatpush2.msra.mxu0 %v5064
    %5517 = vmatprep.subr.mxu0 0.0
    %5518 = vmatpush2.msra.mxu0 %v5063
    %5519 = vmatprep.subr.mxu0 0.0
    %5520 = vmatpush2.msra.mxu0 %v5062
    %5521 = vmatprep.subr.mxu0 0.0
    %5522 = vmatpush2.msra.mxu0 %v5061
    %5523 = vmatprep.subr.mxu0 0.0
    %5524 = vmatpush2.msra.mxu0 %v5060
    %5525 = vmatprep.subr.mxu0 0.0
    %5526 = vmatpush2.msra.mxu0 %v5059
    %5527 = vmatprep.subr.mxu0 0.0
    %5528 = vmatpush2.msra.mxu0 %v5058
    %5529 = vmatprep.subr.mxu0 0.0
    %5530 = vmatpush2.msra.mxu0 %v5057
    %5531 = vmatprep.subr.mxu0 0.0
    %5532 = vmatpush2.msra.mxu0 %v5056
    %5533 = vmatprep.subr.mxu0 0.0
    %5534 = vmatpush2.msra.mxu0 %v5055
    %5535 = vmatprep.subr.mxu0 0.0
    %5536 = vmatpush2.msra.mxu0 %v5054
    %5537 = vmatprep.subr.mxu0 0.0
    %5538 = vmatpush2.msra.mxu0 %v5053
    %5539 = vmatprep.subr.mxu0 0.0
    %5540 = vmatpush2.msra.mxu0 %v5052
    %5541 = vmatprep.subr.mxu0 0.0
    %5542 = vmatpush2.msra.mxu0 %v5051
    %5543 = vmatprep.mubr.f32.mxu0 %v4925
    %5544 = vmatmul.mubr.f32.gmra.mxu0 %v4911
    %v5545 = vpop.f32.mrf.mxu0
    %v5546 = vadd.f32 %v5411, %v5545
    %v5547 = vpop.f32.mrf.mxu0
    %5548 = vmatprep.mubr.f32.mxu0 %v4926
    %5549 = vmatmul.mubr.f32.gmra.mxu0 %v4912
    %v5550 = vpop.f32.mrf.mxu0
    %v5551 = vadd.f32 %v5416, %v5550
    %v5552 = vpop.f32.mrf.mxu0
    %5553 = vmatprep.mubr.f32.mxu0 %v4927
    %5554 = vmatmul.mubr.f32.gmra.mxu0 %v4913
    %v5555 = vpop.f32.mrf.mxu0
    %v5556 = vadd.f32 %v5421, %v5555
    %v5557 = vpop.f32.mrf.mxu0
    %5558 = vmatprep.mubr.f32.mxu0 %v4928
    %5559 = vmatmul.mubr.f32.gmra.mxu0 %v4914
    %v5560 = vpop.f32.mrf.mxu0
    %v5561 = vadd.f32 %v5426, %v5560
    %v5562 = vpop.f32.mrf.mxu0
    %5563 = vmatprep.mubr.f32.mxu0 %v4929
    %5564 = vmatmul.mubr.f32.gmra.mxu0 %v4915
    %v5565 = vpop.f32.mrf.mxu0
    %v5566 = vadd.f32 %v5431, %v5565
    %v5567 = vpop.f32.mrf.mxu0
    %5568 = vmatprep.mubr.f32.mxu0 %v4930
    %5569 = vmatmul.mubr.f32.gmra.mxu0 %v4916
    %v5570 = vpop.f32.mrf.mxu0
    %v5571 = vadd.f32 %v5436, %v5570
    %v5572 = vpop.f32.mrf.mxu0
    %5573 = vmatprep.mubr.f32.mxu0 %v4931
    %5574 = vmatmul.mubr.f32.gmra.mxu0 %v4917
    %v5575 = vpop.f32.mrf.mxu0
    %v5576 = vadd.f32 %v5441, %v5575
    %v5577 = vpop.f32.mrf.mxu0
    %5578 = vmatprep.mubr.f32.mxu0 %v4932
    %5579 = vmatmul.mubr.f32.gmra.mxu0 %v4918
    %v5580 = vpop.f32.mrf.mxu0
    %v5581 = vadd.f32 %v5446, %v5580
    %v5582 = vpop.f32.mrf.mxu0
    %5583 = vmatprep.mubr.f32.mxu0 %v4933
    %5584 = vmatmul.mubr.f32.gmra.mxu0 %v4919
    %v5585 = vpop.f32.mrf.mxu0
    %v5586 = vadd.f32 %v5451, %v5585
    %v5587 = vpop.f32.mrf.mxu0
    %5588 = vmatprep.mubr.f32.mxu0 %v4934
    %5589 = vmatmul.mubr.f32.gmra.mxu0 %v4920
    %v5590 = vpop.f32.mrf.mxu0
    %v5591 = vadd.f32 %v5456, %v5590
    %v5592 = vpop.f32.mrf.mxu0
    %5593 = vmatprep.mubr.f32.mxu0 %v4935
    %5594 = vmatmul.mubr.f32.gmra.mxu0 %v4921
    %v5595 = vpop.f32.mrf.mxu0
    %v5596 = vadd.f32 %v5461, %v5595
    %v5597 = vpop.f32.mrf.mxu0
    %5598 = vmatprep.mubr.f32.mxu0 %v4936
    %5599 = vmatmul.mubr.f32.gmra.mxu0 %v4922
    %v5600 = vpop.f32.mrf.mxu0
    %v5601 = vadd.f32 %v5466, %v5600
    %v5602 = vpop.f32.mrf.mxu0
    %5603 = vmatprep.mubr.f32.mxu0 %v4937
    %5604 = vmatmul.mubr.f32.gmra.mxu0 %v4923
    %v5605 = vpop.f32.mrf.mxu0
    %v5606 = vadd.f32 %v5471, %v5605
    %v5607 = vpop.f32.mrf.mxu0
    %5608 = vmatprep.mubr.f32.mxu0 %v4938
    %5609 = vmatmul.mubr.f32.gmra.mxu0 %v4924
    %v5610 = vpop.f32.mrf.mxu0
    %v5611 = vadd.f32 %v5476, %v5610
    %v5612 = vpop.f32.mrf.mxu0
    %5613 = vdwg.mxu0
    %v5614 = vmax.f32 %v5546, 0.0
    %v5615 = vmax.f32 %v5551, 0.0
    %v5616 = vmax.f32 %v5556, 0.0
    %v5617 = vmax.f32 %v5561, 0.0
    %v5618 = vmax.f32 %v5566, 0.0
    %v5619 = vmax.f32 %v5571, 0.0
    %v5620 = vmax.f32 %v5576, 0.0
    %v5621 = vmax.f32 %v5581, 0.0
    %v5622 = vmax.f32 %v5586, 0.0
    %v5623 = vmax.f32 %v5591, 0.0
    %v5624 = vmax.f32 %v5596, 0.0
    %v5625 = vmax.f32 %v5601, 0.0
    %v5626 = vmax.f32 %v5606, 0.0
    %v5627 = vmax.f32 %v5611, 0.0
    %s5628 = scalar_lea.vmem %s8, 112
    %5629 = vst [vmem:[%s5628] sm:$0xff] %v5614
    %5630 = vst [vmem:[%s5628 + $0x8] sm:$0xff] %v5615
    %5631 = vst [vmem:[%s5628 + $0x10] sm:$0xff] %v5616
    %5632 = vst [vmem:[%s5628 + $0x18] sm:$0xff] %v5617
    %5633 = vst [vmem:[%s5628 + $0x20] sm:$0xff] %v5618
    %5634 = vst [vmem:[%s5628 + $0x28] sm:$0xff] %v5619
    %5635 = vst [vmem:[%s5628 + $0x30] sm:$0xff] %v5620
    %5636 = vst [vmem:[%s5628 + $0x38] sm:$0xff] %v5621
    %5637 = vst [vmem:[%s5628 + $0x40] sm:$0xff] %v5622
    %5638 = vst [vmem:[%s5628 + $0x48] sm:$0xff] %v5623
    %5639 = vst [vmem:[%s5628 + $0x50] sm:$0xff] %v5624
    %5640 = vst [vmem:[%s5628 + $0x58] sm:$0xff] %v5625
    %5641 = vst [vmem:[%s5628 + $0x60] sm:$0xff] %v5626
    %5642 = vst [vmem:[%s5628 + $0x68] sm:$0x7] %v5627
    // Predicated region
    $region46: #{tpu_custom_call.1} parent=1 // pred_check
      _
    $region47: #{tpu_custom_call.1} parent=1 // pred_check_branch
      %5644 = sbr.rel (0) target = $region49
    $region48: #{tpu_custom_call.1} parent=1 // pred_region
      _
    $region49: #{tpu_custom_call.1} parent=1 // pred_fallthru
      _
    // Predicated region
    $region50: #{tpu_custom_call.1} parent=1 // pred_check
      _
    $region51: #{tpu_custom_call.1} parent=1 // pred_check_branch
      %5646 = sbr.rel (0) target = $region53
    $region52: #{tpu_custom_call.1} parent=1 // pred_region
      _
    $region53: #{tpu_custom_call.1} parent=1 // pred_fallthru
      _
    %5647 = vsyncpa [#allocation6], 1
    %5648 = vsyncpa [#allocation8], 1

</llo_original>
